<compile_context>
chip_gen: v6e
topology: v6e:2x2x1
jax: 0.10.0
libtpu: 0.0.40
codegen_flags: <defaults>
</compile_context>

<pallas_src>
import functools

import jax
import jax.numpy as jnp
from jax.experimental import pallas as pl
from jax.experimental.pallas import tpu as pltpu

_VMEM = pl.BlockSpec(memory_space=pltpu.MemorySpace.VMEM)
_EPS = 1e-5
_COMPILER_PARAMS = pltpu.CompilerParams(vmem_limit_bytes=48 * 1024 * 1024)


# ----------------------------------------------------------------------------
# In-kernel helpers (all value-level, operate on VMEM-resident arrays)
# ----------------------------------------------------------------------------
def _mxu(lhs_bf16, rhs_bf16):
    """(rows, K) @ (K, N) on the MXU, f32 accumulation."""
    return jax.lax.dot_general(
        lhs_bf16, rhs_bf16,
        dimension_numbers=(((1,), (0,)), ((), ())),
        preferred_element_type=jnp.float32,
    )


def _pad_halo(xb):
    """(n,h,w,c) -> (n,h+2,w+2,c): symmetric 1-px zero halo, built in VMEM."""
    n, h, w, c = xb.shape
    zc = jnp.zeros((n, h, 1, c), xb.dtype)
    xb = jnp.concatenate([zc, xb, zc], axis=2)
    zr = jnp.zeros((n, 1, w + 2, c), xb.dtype)
    return jnp.concatenate([zr, xb, zr], axis=1)


def _im2col3x3(xp, h, w):
    """Padded (n,h+2,w+2,c) -> (n*h*w, 9*c) tap-concatenated LHS (K widening)."""
    n, c = xp.shape[0], xp.shape[-1]
    rows = n * h * w
    return jnp.concatenate(
        [xp[:, dy:dy + h, dx:dx + w, :].reshape(rows, c)
         for dy in range(3) for dx in range(3)], axis=-1)


def _bn_scale_shift(acc, gamma, beta):
    """Training-mode BN (biased batch var), one pass, folded into scale/shift."""
    mean = jnp.mean(acc, axis=0, keepdims=True)
    var = jnp.maximum(jnp.mean(acc * acc, axis=0, keepdims=True) - mean * mean, 0.0)
    scale = gamma * jax.lax.rsqrt(var + _EPS)
    shift = beta - mean * scale
    return scale, shift


# ----------------------------------------------------------------------------
# Fused Pallas kernels
# ----------------------------------------------------------------------------
def _enc_stage_kernel(x_ref, w_ref, g_ref, b_ref, o_ref):
    """conv3x3 (in-kernel halo pad) + BN(batch stats) + ReLU + maxpool 2x2.

    x_ref: (N, H, W, Cin);  w_ref: (9*Cin, Cout) bf16;  g/b: (1, Cout) f32
    o_ref: (N, H//2, W//2, Cout) bf16
    """
    n, h, w, cin = x_ref.shape
    cout = o_ref.shape[-1]

    xb = x_ref[...].astype(jnp.bfloat16)            # single cast pass
    cols = _im2col3x3(_pad_halo(xb), h, w)          # (rows, 9*Cin)
    acc = _mxu(cols, w_ref[...])                    # ONE matmul, K = 9*Cin

    scale, shift = _bn_scale_shift(acc, g_ref[...], b_ref[...])
    y = jnp.maximum(acc * scale + shift, 0.0)       # one VPU pass over acc

    # MaxPool 2x2 stride 2: pairwise max of reshaped halves (no strided slices)
    yw = y.reshape(n * h * (w // 2), 2, cout)
    yw = jnp.maximum(yw[:, 0, :], yw[:, 1, :])      # pooled along W
    yh = yw.reshape(n, h // 2, 2, w // 2, cout)
    o_ref[...] = jnp.maximum(yh[:, :, 0], yh[:, :, 1]).astype(o_ref.dtype)


def _res_apply(x_f32, w_bf16, gamma, beta):
    """relu(BN(conv3x3(x)) + x) - effective computation of the PyTorch resblock."""
    n, h, w, c = x_f32.shape
    rows = n * h * w
    cols = _im2col3x3(_pad_halo(x_f32.astype(jnp.bfloat16)), h, w)
    acc = _mxu(cols, w_bf16)                        # (rows, C), K = 9*C
    scale, shift = _bn_scale_shift(acc, gamma, beta)
    y = acc * scale + shift + x_f32.reshape(rows, c)   # residual kept in f32
    return jnp.maximum(y, 0.0).reshape(n, h, w, c)


def _resblocks_kernel(x_ref, w1_ref, g1_ref, b1_ref, w2_ref, g2_ref, b2_ref, o_ref):
    """Both resblocks fused; the intermediate never leaves VMEM."""
    x = x_ref[...].astype(jnp.float32)
    y = _res_apply(x, w1_ref[...], g1_ref[...], b1_ref[...])
    y = _res_apply(y, w2_ref[...], g2_ref[...], b2_ref[...])
    o_ref[...] = y.astype(o_ref.dtype)


def _dec_stage_kernel(x_ref, w_ref, g_ref, b_ref, o_ref, *, bn_relu):
    """Polyphase ConvTranspose2d(3, s=2, p=1, op=1) + (BN + ReLU) or Sigmoid.

    x_ref: (N, H, W, Cin);  w_ref: (4*Cin, 4*Cout) bf16 packed block matrix
           (row blocks: x00,x01,x10,x11; col blocks / phases: ee,eo,oe,oo)
    o_ref: (N, H, W, 4*Cout) lane-dense packed phases; the caller interleaves
           them to (N, 2H, 2W, Cout).
    """
    n, h, w, cin = x_ref.shape
    cout4 = o_ref.shape[-1]
    cout = cout4 // 4
    rows = n * h * w

    xb = x_ref[...].astype(jnp.bfloat16)
    # Zero-pad bottom row and right column only (value-level, in VMEM).
    zr = jnp.zeros((n, 1, w, cin), jnp.bfloat16)
    xp = jnp.concatenate([xb, zr], axis=1)                       # (n, h+1, w, cin)
    zc = jnp.zeros((n, h + 1, 1, cin), jnp.bfloat16)
    xp = jnp.concatenate([xp, zc], axis=2)                       # (n, h+1, w+1, cin)

    cols = jnp.concatenate(
        [xb.reshape(rows, cin),                                  # x[m,   n  ]
         xp[:, 0:h, 1:w + 1, :].reshape(rows, cin),              # x[m,   n+1]
         xp[:, 1:h + 1, 0:w, :].reshape(rows, cin),              # x[m+1, n  ]
         xp[:, 1:h + 1, 1:w + 1, :].reshape(rows, cin)],         # x[m+1, n+1]
        axis=-1)                                                 # (rows, 4*Cin)

    acc = _mxu(cols, w_ref[...])                 # ONE matmul -> (rows, 4*Cout)

    if bn_relu:
        # BN stats pooled over all 4 phases == stats over the full (N,2H,2W)
        # transposed-conv output, per channel.
        colm = jnp.mean(acc, axis=0, keepdims=True)              # (1, 4*Cout)
        colsq = jnp.mean(acc * acc, axis=0, keepdims=True)

        def pool4(v):
            return 0.25 * (v[:, 0:cout] + v[:, cout:2 * cout]
                           + v[:, 2 * cout:3 * cout] + v[:, 3 * cout:4 * cout])

        mean = pool4(colm)
        var = jnp.maximum(pool4(colsq) - mean * mean, 0.0)
        scale = g_ref[...] * jax.lax.rsqrt(var + _EPS)           # (1, Cout)
        shift = b_ref[...] - mean * scale
        scale4 = jnp.concatenate([scale, scale, scale, scale], axis=-1)
        shift4 = jnp.concatenate([shift, shift, shift, shift], axis=-1)
        y = jnp.maximum(acc * scale4 + shift4, 0.0)
    else:
        y = jax.nn.sigmoid(acc)

    o_ref[...] = y.reshape(n, h, w, cout4).astype(o_ref.dtype)


# ----------------------------------------------------------------------------
# pallas_call wrappers (whole-array VMEM blocks; activations are tiny here)
# ----------------------------------------------------------------------------
def encoder_stage(x, w_packed, gamma, beta):
    n, h, wd, _ = x.shape
    cout = w_packed.shape[-1]
    return pl.pallas_call(
        _enc_stage_kernel,
        out_shape=jax.ShapeDtypeStruct((n, h // 2, wd // 2, cout), jnp.bfloat16),
        in_specs=[_VMEM, _VMEM, _VMEM, _VMEM],
        out_specs=_VMEM,
        compiler_params=_COMPILER_PARAMS,
    )(x, w_packed, gamma, beta)


def resblocks(x, w1, g1, b1, w2, g2, b2):
    n, h, wd, c = x.shape
    return pl.pallas_call(
        _resblocks_kernel,
        out_shape=jax.ShapeDtypeStruct((n, h, wd, c), jnp.bfloat16),
        in_specs=[_VMEM] * 7,
        out_specs=_VMEM,
        compiler_params=_COMPILER_PARAMS,
    )(x, w1, g1, b1, w2, g2, b2)


def decoder_stage(x, w_packed, gamma=None, beta=None, *, bn_relu):
    n, h, wd, _ = x.shape
    cout4 = w_packed.shape[-1]
    cout = cout4 // 4
    if gamma is None:  # final stage: sigmoid, no BN (dummies keep arity fixed)
        gamma = jnp.ones((1, cout), jnp.float32)
        beta = jnp.zeros((1, cout), jnp.float32)
    out_dtype = jnp.bfloat16 if bn_relu else jnp.float32
    y4 = pl.pallas_call(
        functools.partial(_dec_stage_kernel, bn_relu=bn_relu),
        out_shape=jax.ShapeDtypeStruct((n, h, wd, cout4), out_dtype),
        in_specs=[_VMEM, _VMEM, _VMEM, _VMEM],
        out_specs=_VMEM,
        compiler_params=_COMPILER_PARAMS,
    )(x, w_packed, gamma, beta)
    # Phase -> space pixel shuffle (tiny XLA glue): channels [ee|eo|oe|oo].
    y4 = y4.reshape(n, h, wd, 2, 2, cout)
    return jnp.transpose(y4, (0, 1, 3, 2, 4, 5)).reshape(n, 2 * h, 2 * wd, cout)


# ----------------------------------------------------------------------------
# Parameters (deterministic, synthetic - shapes match the PyTorch __init__)
# ----------------------------------------------------------------------------
def init_params(key):
    ks = jax.random.split(key, 8)

    def conv_w(k, cout, cin):
        # nn.Conv2d weight (Cout, Cin, 3, 3) -> tap-concatenated (9*Cin, Cout)
        # in bf16; K ordering (dy, dx, cin) matches _im2col3x3.
        w = 0.1 * jax.random.normal(k, (cout, cin, 3, 3), jnp.float32)
        return jnp.transpose(w, (2, 3, 1, 0)).reshape(9 * cin, cout).astype(jnp.bfloat16)

    def deconv_w(k, cin, cout):
        # nn.ConvTranspose2d weight (Cin, Cout, 3, 3) -> packed (4*Cin, 4*Cout):
        # row blocks = [x00, x01, x10, x11], col blocks (phases) = [ee,eo,oe,oo].
        w = 0.1 * jax.random.normal(k, (cin, cout, 3, 3), jnp.float32)
        t = jnp.transpose(w, (2, 3, 0, 1))  # (kh, kw, cin, cout)
        blk = jnp.zeros((4, cin, 4, cout), jnp.float32)
        blk = blk.at[0, :, 0].set(t[1, 1])   # ee <- x00
        blk = blk.at[0, :, 1].set(t[1, 2])   # eo <- x00
        blk = blk.at[0, :, 2].set(t[2, 1])   # oe <- x00
        blk = blk.at[0, :, 3].set(t[2, 2])   # oo <- x00
        blk = blk.at[1, :, 1].set(t[1, 0])   # eo <- x01
        blk = blk.at[1, :, 3].set(t[2, 0])   # oo <- x01
        blk = blk.at[2, :, 2].set(t[0, 1])   # oe <- x10
        blk = blk.at[2, :, 3].set(t[0, 2])   # oo <- x10
        blk = blk.at[3, :, 3].set(t[0, 0])   # oo <- x11
        return blk.reshape(4 * cin, 4 * cout).astype(jnp.bfloat16)

    def bn(c):  # PyTorch default init: weight=1, bias=0
        return jnp.ones((1, c), jnp.float32), jnp.zeros((1, c), jnp.float32)

    p = {}
    p["conv1_w"] = conv_w(ks[0], 16, 3)
    p["conv2_w"] = conv_w(ks[1], 32, 16)
    p["conv3_w"] = conv_w(ks[2], 64, 32)
    p["res1_w"] = conv_w(ks[3], 64, 64)
    p["res2_w"] = conv_w(ks[4], 64, 64)
    p["deconv1_w"] = deconv_w(ks[5], 64, 32)
    p["deconv2_w"] = deconv_w(ks[6], 32, 16)
    p["deconv3_w"] = deconv_w(ks[7], 16, 3)
    p["bn1_g"], p["bn1_b"] = bn(16)
    p["bn2_g"], p["bn2_b"] = bn(32)
    p["bn3_g"], p["bn3_b"] = bn(64)
    p["res1_g"], p["res1_b"] = bn(64)
    p["res2_g"], p["res2_b"] = bn(64)
    p["debn1_g"], p["debn1_b"] = bn(32)
    p["debn2_g"], p["debn2_b"] = bn(16)
    return p


# ----------------------------------------------------------------------------
# Forward pass (mirrors FasterStyleTransfer.forward)
# ----------------------------------------------------------------------------
# TODO(synk): self.vgg (pretrained VGG19 features) and self.select are never
# used inside forward(); they are intentionally not instantiated here.
def faster_style_transfer(x_nchw, p):
    x = jnp.transpose(x_nchw.astype(jnp.float32), (0, 2, 3, 1))  # NCHW -> NHWC

    out = encoder_stage(x, p["conv1_w"], p["bn1_g"], p["bn1_b"])
    out = encoder_stage(out, p["conv2_w"], p["bn2_g"], p["bn2_b"])
    out = encoder_stage(out, p["conv3_w"], p["bn3_g"], p["bn3_b"])

    # NOTE: in the PyTorch source the first conv/bn/relu of resblock is dead
    # code (its result is overwritten); effective op is relu(BN(conv(x)) + x).
    out = resblocks(out, p["res1_w"], p["res1_g"], p["res1_b"],
                    p["res2_w"], p["res2_g"], p["res2_b"])

    out = decoder_stage(out, p["deconv1_w"], p["debn1_g"], p["debn1_b"], bn_relu=True)
    out = decoder_stage(out, p["deconv2_w"], p["debn2_g"], p["debn2_b"], bn_relu=True)
    out = decoder_stage(out, p["deconv3_w"], bn_relu=False)  # deconv3 + sigmoid

    return jnp.transpose(out, (0, 3, 1, 2)).astype(jnp.float32)  # NHWC -> NCHW


if __name__ == "__main__":
    key = jax.random.PRNGKey(0)
    k_params, k_input = jax.random.split(key)
    params = init_params(k_params)

    # Small shape consistent with the module: N=2, C=3 (RGB), H=W=16.
    x = jax.random.normal(k_input, (2, 3, 16, 16), jnp.float32)

    y = jax.jit(faster_style_transfer)(x, params)
    y = jax.block_until_ready(y)

    assert y.shape == (2, 3, 16, 16), y.shape
    assert bool(jnp.all(jnp.isfinite(y)))
    assert bool(jnp.all((y >= 0.0) & (y <= 1.0)))  # sigmoid output range
    print("KERNEL_OK")
</pallas_src>

<mosaic_0001>
module attributes {stable_mosaic.version = 11 : i64} {
  func.func @_enc_stage_kernel(%arg0: memref<2x16x16x3xf32, #tpu.memory_space<vmem>>, %arg1: memref<27x16xbf16, #tpu.memory_space<vmem>>, %arg2: memref<1x16xf32, #tpu.memory_space<vmem>>, %arg3: memref<1x16xf32, #tpu.memory_space<vmem>>, %arg4: memref<2x8x8x16xbf16, #tpu.memory_space<vmem>>) attributes {dimension_semantics = [], scalar_prefetch = 0 : i64, scratch_operands = 0 : i64, tpu.core_type = #tpu.core_type<tc>} {
    %c0 = arith.constant 0 : index
    %c0_0 = arith.constant 0 : index
    %c0_1 = arith.constant 0 : index
    %c0_2 = arith.constant 0 : index
    %0 = vector.load %arg0[%c0, %c0_0, %c0_1, %c0_2] : memref<2x16x16x3xf32, #tpu.memory_space<vmem>>, vector<2x16x16x3xf32>
    %1 = arith.truncf %0 : vector<2x16x16x3xf32> to vector<2x16x16x3xbf16>
    %cst = arith.constant 0.000000e+00 : bf16
    %2 = vector.broadcast %cst : bf16 to vector<2x16x1x3xbf16>
    %3 = tpu.concatenate %2, %1, %2 in 2 : vector<2x16x1x3xbf16>, vector<2x16x16x3xbf16>, vector<2x16x1x3xbf16> -> vector<2x16x18x3xbf16>
    %cst_3 = arith.constant 0.000000e+00 : bf16
    %4 = vector.broadcast %cst_3 : bf16 to vector<2x1x18x3xbf16>
    %5 = tpu.concatenate %4, %3, %4 in 1 : vector<2x1x18x3xbf16>, vector<2x16x18x3xbf16>, vector<2x1x18x3xbf16> -> vector<2x18x18x3xbf16>
    %6 = vector.extract_strided_slice %5 {offsets = [0, 0, 0, 0], sizes = [2, 16, 16, 3], strides = [1, 1, 1, 1]} : vector<2x18x18x3xbf16> to vector<2x16x16x3xbf16>
    %7 = vector.shape_cast %6 : vector<2x16x16x3xbf16> to vector<512x3xbf16>
    %8 = vector.extract_strided_slice %5 {offsets = [0, 0, 1, 0], sizes = [2, 16, 16, 3], strides = [1, 1, 1, 1]} : vector<2x18x18x3xbf16> to vector<2x16x16x3xbf16>
    %9 = vector.shape_cast %8 : vector<2x16x16x3xbf16> to vector<512x3xbf16>
    %10 = vector.extract_strided_slice %5 {offsets = [0, 0, 2, 0], sizes = [2, 16, 16, 3], strides = [1, 1, 1, 1]} : vector<2x18x18x3xbf16> to vector<2x16x16x3xbf16>
    %11 = vector.shape_cast %10 : vector<2x16x16x3xbf16> to vector<512x3xbf16>
    %12 = vector.extract_strided_slice %5 {offsets = [0, 1, 0, 0], sizes = [2, 16, 16, 3], strides = [1, 1, 1, 1]} : vector<2x18x18x3xbf16> to vector<2x16x16x3xbf16>
    %13 = vector.shape_cast %12 : vector<2x16x16x3xbf16> to vector<512x3xbf16>
    %14 = vector.extract_strided_slice %5 {offsets = [0, 1, 1, 0], sizes = [2, 16, 16, 3], strides = [1, 1, 1, 1]} : vector<2x18x18x3xbf16> to vector<2x16x16x3xbf16>
    %15 = vector.shape_cast %14 : vector<2x16x16x3xbf16> to vector<512x3xbf16>
    %16 = vector.extract_strided_slice %5 {offsets = [0, 1, 2, 0], sizes = [2, 16, 16, 3], strides = [1, 1, 1, 1]} : vector<2x18x18x3xbf16> to vector<2x16x16x3xbf16>
    %17 = vector.shape_cast %16 : vector<2x16x16x3xbf16> to vector<512x3xbf16>
    %18 = vector.extract_strided_slice %5 {offsets = [0, 2, 0, 0], sizes = [2, 16, 16, 3], strides = [1, 1, 1, 1]} : vector<2x18x18x3xbf16> to vector<2x16x16x3xbf16>
    %19 = vector.shape_cast %18 : vector<2x16x16x3xbf16> to vector<512x3xbf16>
    %20 = vector.extract_strided_slice %5 {offsets = [0, 2, 1, 0], sizes = [2, 16, 16, 3], strides = [1, 1, 1, 1]} : vector<2x18x18x3xbf16> to vector<2x16x16x3xbf16>
    %21 = vector.shape_cast %20 : vector<2x16x16x3xbf16> to vector<512x3xbf16>
    %22 = vector.extract_strided_slice %5 {offsets = [0, 2, 2, 0], sizes = [2, 16, 16, 3], strides = [1, 1, 1, 1]} : vector<2x18x18x3xbf16> to vector<2x16x16x3xbf16>
    %23 = vector.shape_cast %22 : vector<2x16x16x3xbf16> to vector<512x3xbf16>
    %24 = tpu.concatenate %7, %9, %11, %13, %15, %17, %19, %21, %23 in 1 : vector<512x3xbf16>, vector<512x3xbf16>, vector<512x3xbf16>, vector<512x3xbf16>, vector<512x3xbf16>, vector<512x3xbf16>, vector<512x3xbf16>, vector<512x3xbf16>, vector<512x3xbf16> -> vector<512x27xbf16>
    %c0_4 = arith.constant 0 : index
    %c0_5 = arith.constant 0 : index
    %25 = vector.load %arg1[%c0_4, %c0_5] : memref<27x16xbf16, #tpu.memory_space<vmem>>, vector<27x16xbf16>
    %cst_6 = arith.constant dense<0.000000e+00> : vector<512x16xf32>
    %26 = tpu.matmul %24, %25, %cst_6 {dimension_numbers = #tpu.dot_dimension_numbers<[1], [0], [0], [1], [0, 0, 1, 1], [], []>} : vector<512x27xbf16>, vector<27x16xbf16>, vector<512x16xf32> -> vector<512x16xf32>
    %c0_7 = arith.constant 0 : index
    %c0_8 = arith.constant 0 : index
    %27 = vector.load %arg2[%c0_7, %c0_8] : memref<1x16xf32, #tpu.memory_space<vmem>>, vector<1x16xf32>
    %c0_9 = arith.constant 0 : index
    %c0_10 = arith.constant 0 : index
    %28 = vector.load %arg3[%c0_9, %c0_10] : memref<1x16xf32, #tpu.memory_space<vmem>>, vector<1x16xf32>
    %cst_11 = arith.constant dense<0.000000e+00> : vector<16xf32>
    %29 = vector.multi_reduction <add>, %26, %cst_11 [0] : vector<512x16xf32> to vector<16xf32>
    %30 = vector.shape_cast %29 : vector<16xf32> to vector<1x16xf32>
    %cst_12 = arith.constant 5.120000e+02 : f32
    %31 = vector.broadcast %cst_12 : f32 to vector<1x16xf32>
    %32 = arith.divf %30, %31 : vector<1x16xf32>
    %33 = arith.mulf %26, %26 : vector<512x16xf32>
    %cst_13 = arith.constant dense<0.000000e+00> : vector<16xf32>
    %34 = vector.multi_reduction <add>, %33, %cst_13 [0] : vector<512x16xf32> to vector<16xf32>
    %35 = vector.shape_cast %34 : vector<16xf32> to vector<1x16xf32>
    %cst_14 = arith.constant 5.120000e+02 : f32
    %36 = vector.broadcast %cst_14 : f32 to vector<1x16xf32>
    %37 = arith.divf %35, %36 : vector<1x16xf32>
    %38 = arith.mulf %32, %32 : vector<1x16xf32>
    %39 = arith.subf %37, %38 : vector<1x16xf32>
    %cst_15 = arith.constant 0.000000e+00 : f32
    %40 = vector.broadcast %cst_15 : f32 to vector<1x16xf32>
    %41 = arith.maximumf %39, %40 : vector<1x16xf32>
    %cst_16 = arith.constant 9.99999974E-6 : f32
    %42 = vector.broadcast %cst_16 : f32 to vector<1x16xf32>
    %43 = arith.addf %41, %42 : vector<1x16xf32>
    %44 = math.rsqrt %43 : vector<1x16xf32>
    %45 = arith.mulf %27, %44 : vector<1x16xf32>
    %46 = arith.mulf %32, %45 : vector<1x16xf32>
    %47 = arith.subf %28, %46 : vector<1x16xf32>
    %48 = vector.broadcast %45 : vector<1x16xf32> to vector<512x16xf32>
    %49 = arith.mulf %26, %48 : vector<512x16xf32>
    %50 = vector.broadcast %47 : vector<1x16xf32> to vector<512x16xf32>
    %51 = arith.addf %49, %50 : vector<512x16xf32>
    %cst_17 = arith.constant 0.000000e+00 : f32
    %52 = vector.broadcast %cst_17 : f32 to vector<512x16xf32>
    %53 = arith.maximumf %51, %52 : vector<512x16xf32>
    %54 = vector.shape_cast %53 : vector<512x16xf32> to vector<256x2x16xf32>
    %55 = vector.extract_strided_slice %54 {offsets = [0, 0, 0], sizes = [256, 1, 16], strides = [1, 1, 1]} : vector<256x2x16xf32> to vector<256x1x16xf32>
    %56 = vector.shape_cast %55 : vector<256x1x16xf32> to vector<256x16xf32>
    %57 = vector.extract_strided_slice %54 {offsets = [0, 1, 0], sizes = [256, 1, 16], strides = [1, 1, 1]} : vector<256x2x16xf32> to vector<256x1x16xf32>
    %58 = vector.shape_cast %57 : vector<256x1x16xf32> to vector<256x16xf32>
    %59 = arith.maximumf %56, %58 : vector<256x16xf32>
    %60 = vector.shape_cast %59 : vector<256x16xf32> to vector<2x8x2x8x16xf32>
    %61 = vector.extract_strided_slice %60 {offsets = [0, 0, 0, 0, 0], sizes = [2, 8, 1, 8, 16], strides = [1, 1, 1, 1, 1]} : vector<2x8x2x8x16xf32> to vector<2x8x1x8x16xf32>
    %62 = vector.shape_cast %61 : vector<2x8x1x8x16xf32> to vector<2x8x8x16xf32>
    %63 = vector.extract_strided_slice %60 {offsets = [0, 0, 1, 0, 0], sizes = [2, 8, 1, 8, 16], strides = [1, 1, 1, 1, 1]} : vector<2x8x2x8x16xf32> to vector<2x8x1x8x16xf32>
    %64 = vector.shape_cast %63 : vector<2x8x1x8x16xf32> to vector<2x8x8x16xf32>
    %65 = arith.maximumf %62, %64 : vector<2x8x8x16xf32>
    %66 = arith.truncf %65 : vector<2x8x8x16xf32> to vector<2x8x8x16xbf16>
    %c0_18 = arith.constant 0 : index
    %c0_19 = arith.constant 0 : index
    %c0_20 = arith.constant 0 : index
    %c0_21 = arith.constant 0 : index
    %67 = vector.load %arg4[%c0_18, %c0_19, %c0_20, %c0_21] : memref<2x8x8x16xbf16, #tpu.memory_space<vmem>>, vector<2x8x8x16xbf16>
    tpu.vector_store %arg4[%c0_18, %c0_19, %c0_20, %c0_21], %66 {strides = array<i32>} : memref<2x8x8x16xbf16, #tpu.memory_space<vmem>>, vector<2x8x8x16xbf16>,
    return
  }
}

module attributes {stable_mosaic.version = 11 : i64} {
  func.func @_enc_stage_kernel(%arg0: memref<2x4x4x32xbf16, #tpu.memory_space<vmem>>, %arg1: memref<288x64xbf16, #tpu.memory_space<vmem>>, %arg2: memref<1x64xf32, #tpu.memory_space<vmem>>, %arg3: memref<1x64xf32, #tpu.memory_space<vmem>>, %arg4: memref<2x2x2x64xbf16, #tpu.memory_space<vmem>>) attributes {dimension_semantics = [], scalar_prefetch = 0 : i64, scratch_operands = 0 : i64, tpu.core_type = #tpu.core_type<tc>} {
    %c0 = arith.constant 0 : index
    %c0_0 = arith.constant 0 : index
    %c0_1 = arith.constant 0 : index
    %c0_2 = arith.constant 0 : index
    %0 = vector.load %arg0[%c0, %c0_0, %c0_1, %c0_2] : memref<2x4x4x32xbf16, #tpu.memory_space<vmem>>, vector<2x4x4x32xbf16>
    %cst = arith.constant 0.000000e+00 : bf16
    %1 = vector.broadcast %cst : bf16 to vector<2x4x1x32xbf16>
    %2 = tpu.concatenate %1, %0, %1 in 2 : vector<2x4x1x32xbf16>, vector<2x4x4x32xbf16>, vector<2x4x1x32xbf16> -> vector<2x4x6x32xbf16>
    %cst_3 = arith.constant 0.000000e+00 : bf16
    %3 = vector.broadcast %cst_3 : bf16 to vector<2x1x6x32xbf16>
    %4 = tpu.concatenate %3, %2, %3 in 1 : vector<2x1x6x32xbf16>, vector<2x4x6x32xbf16>, vector<2x1x6x32xbf16> -> vector<2x6x6x32xbf16>
    %5 = vector.extract_strided_slice %4 {offsets = [0, 0, 0, 0], sizes = [2, 4, 4, 32], strides = [1, 1, 1, 1]} : vector<2x6x6x32xbf16> to vector<2x4x4x32xbf16>
    %6 = vector.shape_cast %5 : vector<2x4x4x32xbf16> to vector<32x32xbf16>
    %7 = vector.extract_strided_slice %4 {offsets = [0, 0, 1, 0], sizes = [2, 4, 4, 32], strides = [1, 1, 1, 1]} : vector<2x6x6x32xbf16> to vector<2x4x4x32xbf16>
    %8 = vector.shape_cast %7 : vector<2x4x4x32xbf16> to vector<32x32xbf16>
    %9 = vector.extract_strided_slice %4 {offsets = [0, 0, 2, 0], sizes = [2, 4, 4, 32], strides = [1, 1, 1, 1]} : vector<2x6x6x32xbf16> to vector<2x4x4x32xbf16>
    %10 = vector.shape_cast %9 : vector<2x4x4x32xbf16> to vector<32x32xbf16>
    %11 = vector.extract_strided_slice %4 {offsets = [0, 1, 0, 0], sizes = [2, 4, 4, 32], strides = [1, 1, 1, 1]} : vector<2x6x6x32xbf16> to vector<2x4x4x32xbf16>
    %12 = vector.shape_cast %11 : vector<2x4x4x32xbf16> to vector<32x32xbf16>
    %13 = vector.extract_strided_slice %4 {offsets = [0, 1, 1, 0], sizes = [2, 4, 4, 32], strides = [1, 1, 1, 1]} : vector<2x6x6x32xbf16> to vector<2x4x4x32xbf16>
    %14 = vector.shape_cast %13 : vector<2x4x4x32xbf16> to vector<32x32xbf16>
    %15 = vector.extract_strided_slice %4 {offsets = [0, 1, 2, 0], sizes = [2, 4, 4, 32], strides = [1, 1, 1, 1]} : vector<2x6x6x32xbf16> to vector<2x4x4x32xbf16>
    %16 = vector.shape_cast %15 : vector<2x4x4x32xbf16> to vector<32x32xbf16>
    %17 = vector.extract_strided_slice %4 {offsets = [0, 2, 0, 0], sizes = [2, 4, 4, 32], strides = [1, 1, 1, 1]} : vector<2x6x6x32xbf16> to vector<2x4x4x32xbf16>
    %18 = vector.shape_cast %17 : vector<2x4x4x32xbf16> to vector<32x32xbf16>
    %19 = vector.extract_strided_slice %4 {offsets = [0, 2, 1, 0], sizes = [2, 4, 4, 32], strides = [1, 1, 1, 1]} : vector<2x6x6x32xbf16> to vector<2x4x4x32xbf16>
    %20 = vector.shape_cast %19 : vector<2x4x4x32xbf16> to vector<32x32xbf16>
    %21 = vector.extract_strided_slice %4 {offsets = [0, 2, 2, 0], sizes = [2, 4, 4, 32], strides = [1, 1, 1, 1]} : vector<2x6x6x32xbf16> to vector<2x4x4x32xbf16>
    %22 = vector.shape_cast %21 : vector<2x4x4x32xbf16> to vector<32x32xbf16>
    %23 = tpu.concatenate %6, %8, %10, %12, %14, %16, %18, %20, %22 in 1 : vector<32x32xbf16>, vector<32x32xbf16>, vector<32x32xbf16>, vector<32x32xbf16>, vector<32x32xbf16>, vector<32x32xbf16>, vector<32x32xbf16>, vector<32x32xbf16>, vector<32x32xbf16> -> vector<32x288xbf16>
    %c0_4 = arith.constant 0 : index
    %c0_5 = arith.constant 0 : index
    %24 = vector.load %arg1[%c0_4, %c0_5] : memref<288x64xbf16, #tpu.memory_space<vmem>>, vector<288x64xbf16>
    %cst_6 = arith.constant dense<0.000000e+00> : vector<32x64xf32>
    %25 = tpu.matmul %23, %24, %cst_6 {dimension_numbers = #tpu.dot_dimension_numbers<[1], [0], [0], [1], [0, 0, 1, 1], [], []>} : vector<32x288xbf16>, vector<288x64xbf16>, vector<32x64xf32> -> vector<32x64xf32>
    %c0_7 = arith.constant 0 : index
    %c0_8 = arith.constant 0 : index
    %26 = vector.load %arg2[%c0_7, %c0_8] : memref<1x64xf32, #tpu.memory_space<vmem>>, vector<1x64xf32>
    %c0_9 = arith.constant 0 : index
    %c0_10 = arith.constant 0 : index
    %27 = vector.load %arg3[%c0_9, %c0_10] : memref<1x64xf32, #tpu.memory_space<vmem>>, vector<1x64xf32>
    %cst_11 = arith.constant dense<0.000000e+00> : vector<64xf32>
    %28 = vector.multi_reduction <add>, %25, %cst_11 [0] : vector<32x64xf32> to vector<64xf32>
    %29 = vector.shape_cast %28 : vector<64xf32> to vector<1x64xf32>
    %cst_12 = arith.constant 3.200000e+01 : f32
    %30 = vector.broadcast %cst_12 : f32 to vector<1x64xf32>
    %31 = arith.divf %29, %30 : vector<1x64xf32>
    %32 = arith.mulf %25, %25 : vector<32x64xf32>
    %cst_13 = arith.constant dense<0.000000e+00> : vector<64xf32>
    %33 = vector.multi_reduction <add>, %32, %cst_13 [0] : vector<32x64xf32> to vector<64xf32>
    %34 = vector.shape_cast %33 : vector<64xf32> to vector<1x64xf32>
    %cst_14 = arith.constant 3.200000e+01 : f32
    %35 = vector.broadcast %cst_14 : f32 to vector<1x64xf32>
    %36 = arith.divf %34, %35 : vector<1x64xf32>
    %37 = arith.mulf %31, %31 : vector<1x64xf32>
    %38 = arith.subf %36, %37 : vector<1x64xf32>
    %cst_15 = arith.constant 0.000000e+00 : f32
    %39 = vector.broadcast %cst_15 : f32 to vector<1x64xf32>
    %40 = arith.maximumf %38, %39 : vector<1x64xf32>
    %cst_16 = arith.constant 9.99999974E-6 : f32
    %41 = vector.broadcast %cst_16 : f32 to vector<1x64xf32>
    %42 = arith.addf %40, %41 : vector<1x64xf32>
    %43 = math.rsqrt %42 : vector<1x64xf32>
    %44 = arith.mulf %26, %43 : vector<1x64xf32>
    %45 = arith.mulf %31, %44 : vector<1x64xf32>
    %46 = arith.subf %27, %45 : vector<1x64xf32>
    %47 = vector.broadcast %44 : vector<1x64xf32> to vector<32x64xf32>
    %48 = arith.mulf %25, %47 : vector<32x64xf32>
    %49 = vector.broadcast %46 : vector<1x64xf32> to vector<32x64xf32>
    %50 = arith.addf %48, %49 : vector<32x64xf32>
    %cst_17 = arith.constant 0.000000e+00 : f32
    %51 = vector.broadcast %cst_17 : f32 to vector<32x64xf32>
    %52 = arith.maximumf %50, %51 : vector<32x64xf32>
    %53 = vector.shape_cast %52 : vector<32x64xf32> to vector<16x2x64xf32>
    %54 = vector.extract_strided_slice %53 {offsets = [0, 0, 0], sizes = [16, 1, 64], strides = [1, 1, 1]} : vector<16x2x64xf32> to vector<16x1x64xf32>
    %55 = vector.shape_cast %54 : vector<16x1x64xf32> to vector<16x64xf32>
    %56 = vector.extract_strided_slice %53 {offsets = [0, 1, 0], sizes = [16, 1, 64], strides = [1, 1, 1]} : vector<16x2x64xf32> to vector<16x1x64xf32>
    %57 = vector.shape_cast %56 : vector<16x1x64xf32> to vector<16x64xf32>
    %58 = arith.maximumf %55, %57 : vector<16x64xf32>
    %59 = vector.shape_cast %58 : vector<16x64xf32> to vector<2x2x2x2x64xf32>
    %60 = vector.extract_strided_slice %59 {offsets = [0, 0, 0, 0, 0], sizes = [2, 2, 1, 2, 64], strides = [1, 1, 1, 1, 1]} : vector<2x2x2x2x64xf32> to vector<2x2x1x2x64xf32>
    %61 = vector.shape_cast %60 : vector<2x2x1x2x64xf32> to vector<2x2x2x64xf32>
    %62 = vector.extract_strided_slice %59 {offsets = [0, 0, 1, 0, 0], sizes = [2, 2, 1, 2, 64], strides = [1, 1, 1, 1, 1]} : vector<2x2x2x2x64xf32> to vector<2x2x1x2x64xf32>
    %63 = vector.shape_cast %62 : vector<2x2x1x2x64xf32> to vector<2x2x2x64xf32>
    %64 = arith.maximumf %61, %63 : vector<2x2x2x64xf32>
    %65 = arith.truncf %64 : vector<2x2x2x64xf32> to vector<2x2x2x64xbf16>
    %c0_18 = arith.constant 0 : index
    %c0_19 = arith.constant 0 : index
    %c0_20 = arith.constant 0 : index
    %c0_21 = arith.constant 0 : index
    %66 = vector.load %arg4[%c0_18, %c0_19, %c0_20, %c0_21] : memref<2x2x2x64xbf16, #tpu.memory_space<vmem>>, vector<2x2x2x64xbf16>
    tpu.vector_store %arg4[%c0_18, %c0_19, %c0_20, %c0_21], %65 {strides = array<i32>} : memref<2x2x2x64xbf16, #tpu.memory_space<vmem>>, vector<2x2x2x64xbf16>,
    return
  }
}

module attributes {stable_mosaic.version = 11 : i64} {
  func.func @_enc_stage_kernel(%arg0: memref<2x8x8x16xbf16, #tpu.memory_space<vmem>>, %arg1: memref<144x32xbf16, #tpu.memory_space<vmem>>, %arg2: memref<1x32xf32, #tpu.memory_space<vmem>>, %arg3: memref<1x32xf32, #tpu.memory_space<vmem>>, %arg4: memref<2x4x4x32xbf16, #tpu.memory_space<vmem>>) attributes {dimension_semantics = [], scalar_prefetch = 0 : i64, scratch_operands = 0 : i64, tpu.core_type = #tpu.core_type<tc>} {
    %c0 = arith.constant 0 : index
    %c0_0 = arith.constant 0 : index
    %c0_1 = arith.constant 0 : index
    %c0_2 = arith.constant 0 : index
    %0 = vector.load %arg0[%c0, %c0_0, %c0_1, %c0_2] : memref<2x8x8x16xbf16, #tpu.memory_space<vmem>>, vector<2x8x8x16xbf16>
    %cst = arith.constant 0.000000e+00 : bf16
    %1 = vector.broadcast %cst : bf16 to vector<2x8x1x16xbf16>
    %2 = tpu.concatenate %1, %0, %1 in 2 : vector<2x8x1x16xbf16>, vector<2x8x8x16xbf16>, vector<2x8x1x16xbf16> -> vector<2x8x10x16xbf16>
    %cst_3 = arith.constant 0.000000e+00 : bf16
    %3 = vector.broadcast %cst_3 : bf16 to vector<2x1x10x16xbf16>
    %4 = tpu.concatenate %3, %2, %3 in 1 : vector<2x1x10x16xbf16>, vector<2x8x10x16xbf16>, vector<2x1x10x16xbf16> -> vector<2x10x10x16xbf16>
    %5 = vector.extract_strided_slice %4 {offsets = [0, 0, 0, 0], sizes = [2, 8, 8, 16], strides = [1, 1, 1, 1]} : vector<2x10x10x16xbf16> to vector<2x8x8x16xbf16>
    %6 = vector.shape_cast %5 : vector<2x8x8x16xbf16> to vector<128x16xbf16>
    %7 = vector.extract_strided_slice %4 {offsets = [0, 0, 1, 0], sizes = [2, 8, 8, 16], strides = [1, 1, 1, 1]} : vector<2x10x10x16xbf16> to vector<2x8x8x16xbf16>
    %8 = vector.shape_cast %7 : vector<2x8x8x16xbf16> to vector<128x16xbf16>
    %9 = vector.extract_strided_slice %4 {offsets = [0, 0, 2, 0], sizes = [2, 8, 8, 16], strides = [1, 1, 1, 1]} : vector<2x10x10x16xbf16> to vector<2x8x8x16xbf16>
    %10 = vector.shape_cast %9 : vector<2x8x8x16xbf16> to vector<128x16xbf16>
    %11 = vector.extract_strided_slice %4 {offsets = [0, 1, 0, 0], sizes = [2, 8, 8, 16], strides = [1, 1, 1, 1]} : vector<2x10x10x16xbf16> to vector<2x8x8x16xbf16>
    %12 = vector.shape_cast %11 : vector<2x8x8x16xbf16> to vector<128x16xbf16>
    %13 = vector.extract_strided_slice %4 {offsets = [0, 1, 1, 0], sizes = [2, 8, 8, 16], strides = [1, 1, 1, 1]} : vector<2x10x10x16xbf16> to vector<2x8x8x16xbf16>
    %14 = vector.shape_cast %13 : vector<2x8x8x16xbf16> to vector<128x16xbf16>
    %15 = vector.extract_strided_slice %4 {offsets = [0, 1, 2, 0], sizes = [2, 8, 8, 16], strides = [1, 1, 1, 1]} : vector<2x10x10x16xbf16> to vector<2x8x8x16xbf16>
    %16 = vector.shape_cast %15 : vector<2x8x8x16xbf16> to vector<128x16xbf16>
    %17 = vector.extract_strided_slice %4 {offsets = [0, 2, 0, 0], sizes = [2, 8, 8, 16], strides = [1, 1, 1, 1]} : vector<2x10x10x16xbf16> to vector<2x8x8x16xbf16>
    %18 = vector.shape_cast %17 : vector<2x8x8x16xbf16> to vector<128x16xbf16>
    %19 = vector.extract_strided_slice %4 {offsets = [0, 2, 1, 0], sizes = [2, 8, 8, 16], strides = [1, 1, 1, 1]} : vector<2x10x10x16xbf16> to vector<2x8x8x16xbf16>
    %20 = vector.shape_cast %19 : vector<2x8x8x16xbf16> to vector<128x16xbf16>
    %21 = vector.extract_strided_slice %4 {offsets = [0, 2, 2, 0], sizes = [2, 8, 8, 16], strides = [1, 1, 1, 1]} : vector<2x10x10x16xbf16> to vector<2x8x8x16xbf16>
    %22 = vector.shape_cast %21 : vector<2x8x8x16xbf16> to vector<128x16xbf16>
    %23 = tpu.concatenate %6, %8, %10, %12, %14, %16, %18, %20, %22 in 1 : vector<128x16xbf16>, vector<128x16xbf16>, vector<128x16xbf16>, vector<128x16xbf16>, vector<128x16xbf16>, vector<128x16xbf16>, vector<128x16xbf16>, vector<128x16xbf16>, vector<128x16xbf16> -> vector<128x144xbf16>
    %c0_4 = arith.constant 0 : index
    %c0_5 = arith.constant 0 : index
    %24 = vector.load %arg1[%c0_4, %c0_5] : memref<144x32xbf16, #tpu.memory_space<vmem>>, vector<144x32xbf16>
    %cst_6 = arith.constant dense<0.000000e+00> : vector<128x32xf32>
    %25 = tpu.matmul %23, %24, %cst_6 {dimension_numbers = #tpu.dot_dimension_numbers<[1], [0], [0], [1], [0, 0, 1, 1], [], []>} : vector<128x144xbf16>, vector<144x32xbf16>, vector<128x32xf32> -> vector<128x32xf32>
    %c0_7 = arith.constant 0 : index
    %c0_8 = arith.constant 0 : index
    %26 = vector.load %arg2[%c0_7, %c0_8] : memref<1x32xf32, #tpu.memory_space<vmem>>, vector<1x32xf32>
    %c0_9 = arith.constant 0 : index
    %c0_10 = arith.constant 0 : index
    %27 = vector.load %arg3[%c0_9, %c0_10] : memref<1x32xf32, #tpu.memory_space<vmem>>, vector<1x32xf32>
    %cst_11 = arith.constant dense<0.000000e+00> : vector<32xf32>
    %28 = vector.multi_reduction <add>, %25, %cst_11 [0] : vector<128x32xf32> to vector<32xf32>
    %29 = vector.shape_cast %28 : vector<32xf32> to vector<1x32xf32>
    %cst_12 = arith.constant 1.280000e+02 : f32
    %30 = vector.broadcast %cst_12 : f32 to vector<1x32xf32>
    %31 = arith.divf %29, %30 : vector<1x32xf32>
    %32 = arith.mulf %25, %25 : vector<128x32xf32>
    %cst_13 = arith.constant dense<0.000000e+00> : vector<32xf32>
    %33 = vector.multi_reduction <add>, %32, %cst_13 [0] : vector<128x32xf32> to vector<32xf32>
    %34 = vector.shape_cast %33 : vector<32xf32> to vector<1x32xf32>
    %cst_14 = arith.constant 1.280000e+02 : f32
    %35 = vector.broadcast %cst_14 : f32 to vector<1x32xf32>
    %36 = arith.divf %34, %35 : vector<1x32xf32>
    %37 = arith.mulf %31, %31 : vector<1x32xf32>
    %38 = arith.subf %36, %37 : vector<1x32xf32>
    %cst_15 = arith.constant 0.000000e+00 : f32
    %39 = vector.broadcast %cst_15 : f32 to vector<1x32xf32>
    %40 = arith.maximumf %38, %39 : vector<1x32xf32>
    %cst_16 = arith.constant 9.99999974E-6 : f32
    %41 = vector.broadcast %cst_16 : f32 to vector<1x32xf32>
    %42 = arith.addf %40, %41 : vector<1x32xf32>
    %43 = math.rsqrt %42 : vector<1x32xf32>
    %44 = arith.mulf %26, %43 : vector<1x32xf32>
    %45 = arith.mulf %31, %44 : vector<1x32xf32>
    %46 = arith.subf %27, %45 : vector<1x32xf32>
    %47 = vector.broadcast %44 : vector<1x32xf32> to vector<128x32xf32>
    %48 = arith.mulf %25, %47 : vector<128x32xf32>
    %49 = vector.broadcast %46 : vector<1x32xf32> to vector<128x32xf32>
    %50 = arith.addf %48, %49 : vector<128x32xf32>
    %cst_17 = arith.constant 0.000000e+00 : f32
    %51 = vector.broadcast %cst_17 : f32 to vector<128x32xf32>
    %52 = arith.maximumf %50, %51 : vector<128x32xf32>
    %53 = vector.shape_cast %52 : vector<128x32xf32> to vector<64x2x32xf32>
    %54 = vector.extract_strided_slice %53 {offsets = [0, 0, 0], sizes = [64, 1, 32], strides = [1, 1, 1]} : vector<64x2x32xf32> to vector<64x1x32xf32>
    %55 = vector.shape_cast %54 : vector<64x1x32xf32> to vector<64x32xf32>
    %56 = vector.extract_strided_slice %53 {offsets = [0, 1, 0], sizes = [64, 1, 32], strides = [1, 1, 1]} : vector<64x2x32xf32> to vector<64x1x32xf32>
    %57 = vector.shape_cast %56 : vector<64x1x32xf32> to vector<64x32xf32>
    %58 = arith.maximumf %55, %57 : vector<64x32xf32>
    %59 = vector.shape_cast %58 : vector<64x32xf32> to vector<2x4x2x4x32xf32>
    %60 = vector.extract_strided_slice %59 {offsets = [0, 0, 0, 0, 0], sizes = [2, 4, 1, 4, 32], strides = [1, 1, 1, 1, 1]} : vector<2x4x2x4x32xf32> to vector<2x4x1x4x32xf32>
    %61 = vector.shape_cast %60 : vector<2x4x1x4x32xf32> to vector<2x4x4x32xf32>
    %62 = vector.extract_strided_slice %59 {offsets = [0, 0, 1, 0, 0], sizes = [2, 4, 1, 4, 32], strides = [1, 1, 1, 1, 1]} : vector<2x4x2x4x32xf32> to vector<2x4x1x4x32xf32>
    %63 = vector.shape_cast %62 : vector<2x4x1x4x32xf32> to vector<2x4x4x32xf32>
    %64 = arith.maximumf %61, %63 : vector<2x4x4x32xf32>
    %65 = arith.truncf %64 : vector<2x4x4x32xf32> to vector<2x4x4x32xbf16>
    %c0_18 = arith.constant 0 : index
    %c0_19 = arith.constant 0 : index
    %c0_20 = arith.constant 0 : index
    %c0_21 = arith.constant 0 : index
    %66 = vector.load %arg4[%c0_18, %c0_19, %c0_20, %c0_21] : memref<2x4x4x32xbf16, #tpu.memory_space<vmem>>, vector<2x4x4x32xbf16>
    tpu.vector_store %arg4[%c0_18, %c0_19, %c0_20, %c0_21], %65 {strides = array<i32>} : memref<2x4x4x32xbf16, #tpu.memory_space<vmem>>, vector<2x4x4x32xbf16>,
    return
  }
}

module attributes {stable_mosaic.version = 11 : i64} {
  func.func @_resblocks_kernel(%arg0: memref<2x2x2x64xbf16, #tpu.memory_space<vmem>>, %arg1: memref<576x64xbf16, #tpu.memory_space<vmem>>, %arg2: memref<1x64xf32, #tpu.memory_space<vmem>>, %arg3: memref<1x64xf32, #tpu.memory_space<vmem>>, %arg4: memref<576x64xbf16, #tpu.memory_space<vmem>>, %arg5: memref<1x64xf32, #tpu.memory_space<vmem>>, %arg6: memref<1x64xf32, #tpu.memory_space<vmem>>, %arg7: memref<2x2x2x64xbf16, #tpu.memory_space<vmem>>) attributes {dimension_semantics = [], scalar_prefetch = 0 : i64, scratch_operands = 0 : i64, tpu.core_type = #tpu.core_type<tc>} {
    %c0 = arith.constant 0 : index
    %c0_0 = arith.constant 0 : index
    %c0_1 = arith.constant 0 : index
    %c0_2 = arith.constant 0 : index
    %0 = vector.load %arg0[%c0, %c0_0, %c0_1, %c0_2] : memref<2x2x2x64xbf16, #tpu.memory_space<vmem>>, vector<2x2x2x64xbf16>
    %1 = arith.extf %0 : vector<2x2x2x64xbf16> to vector<2x2x2x64xf32>
    %c0_3 = arith.constant 0 : index
    %c0_4 = arith.constant 0 : index
    %2 = vector.load %arg1[%c0_3, %c0_4] : memref<576x64xbf16, #tpu.memory_space<vmem>>, vector<576x64xbf16>
    %c0_5 = arith.constant 0 : index
    %c0_6 = arith.constant 0 : index
    %3 = vector.load %arg2[%c0_5, %c0_6] : memref<1x64xf32, #tpu.memory_space<vmem>>, vector<1x64xf32>
    %c0_7 = arith.constant 0 : index
    %c0_8 = arith.constant 0 : index
    %4 = vector.load %arg3[%c0_7, %c0_8] : memref<1x64xf32, #tpu.memory_space<vmem>>, vector<1x64xf32>
    %5 = arith.truncf %1 : vector<2x2x2x64xf32> to vector<2x2x2x64xbf16>
    %cst = arith.constant 0.000000e+00 : bf16
    %6 = vector.broadcast %cst : bf16 to vector<2x2x1x64xbf16>
    %7 = tpu.concatenate %6, %5, %6 in 2 : vector<2x2x1x64xbf16>, vector<2x2x2x64xbf16>, vector<2x2x1x64xbf16> -> vector<2x2x4x64xbf16>
    %cst_9 = arith.constant 0.000000e+00 : bf16
    %8 = vector.broadcast %cst_9 : bf16 to vector<2x1x4x64xbf16>
    %9 = tpu.concatenate %8, %7, %8 in 1 : vector<2x1x4x64xbf16>, vector<2x2x4x64xbf16>, vector<2x1x4x64xbf16> -> vector<2x4x4x64xbf16>
    %10 = vector.extract_strided_slice %9 {offsets = [0, 0, 0, 0], sizes = [2, 2, 2, 64], strides = [1, 1, 1, 1]} : vector<2x4x4x64xbf16> to vector<2x2x2x64xbf16>
    %11 = vector.shape_cast %10 : vector<2x2x2x64xbf16> to vector<8x64xbf16>
    %12 = vector.extract_strided_slice %9 {offsets = [0, 0, 1, 0], sizes = [2, 2, 2, 64], strides = [1, 1, 1, 1]} : vector<2x4x4x64xbf16> to vector<2x2x2x64xbf16>
    %13 = vector.shape_cast %12 : vector<2x2x2x64xbf16> to vector<8x64xbf16>
    %14 = vector.extract_strided_slice %9 {offsets = [0, 0, 2, 0], sizes = [2, 2, 2, 64], strides = [1, 1, 1, 1]} : vector<2x4x4x64xbf16> to vector<2x2x2x64xbf16>
    %15 = vector.shape_cast %14 : vector<2x2x2x64xbf16> to vector<8x64xbf16>
    %16 = vector.extract_strided_slice %9 {offsets = [0, 1, 0, 0], sizes = [2, 2, 2, 64], strides = [1, 1, 1, 1]} : vector<2x4x4x64xbf16> to vector<2x2x2x64xbf16>
    %17 = vector.shape_cast %16 : vector<2x2x2x64xbf16> to vector<8x64xbf16>
    %18 = vector.extract_strided_slice %9 {offsets = [0, 1, 1, 0], sizes = [2, 2, 2, 64], strides = [1, 1, 1, 1]} : vector<2x4x4x64xbf16> to vector<2x2x2x64xbf16>
    %19 = vector.shape_cast %18 : vector<2x2x2x64xbf16> to vector<8x64xbf16>
    %20 = vector.extract_strided_slice %9 {offsets = [0, 1, 2, 0], sizes = [2, 2, 2, 64], strides = [1, 1, 1, 1]} : vector<2x4x4x64xbf16> to vector<2x2x2x64xbf16>
    %21 = vector.shape_cast %20 : vector<2x2x2x64xbf16> to vector<8x64xbf16>
    %22 = vector.extract_strided_slice %9 {offsets = [0, 2, 0, 0], sizes = [2, 2, 2, 64], strides = [1, 1, 1, 1]} : vector<2x4x4x64xbf16> to vector<2x2x2x64xbf16>
    %23 = vector.shape_cast %22 : vector<2x2x2x64xbf16> to vector<8x64xbf16>
    %24 = vector.extract_strided_slice %9 {offsets = [0, 2, 1, 0], sizes = [2, 2, 2, 64], strides = [1, 1, 1, 1]} : vector<2x4x4x64xbf16> to vector<2x2x2x64xbf16>
    %25 = vector.shape_cast %24 : vector<2x2x2x64xbf16> to vector<8x64xbf16>
    %26 = vector.extract_strided_slice %9 {offsets = [0, 2, 2, 0], sizes = [2, 2, 2, 64], strides = [1, 1, 1, 1]} : vector<2x4x4x64xbf16> to vector<2x2x2x64xbf16>
    %27 = vector.shape_cast %26 : vector<2x2x2x64xbf16> to vector<8x64xbf16>
    %28 = tpu.concatenate %11, %13, %15, %17, %19, %21, %23, %25, %27 in 1 : vector<8x64xbf16>, vector<8x64xbf16>, vector<8x64xbf16>, vector<8x64xbf16>, vector<8x64xbf16>, vector<8x64xbf16>, vector<8x64xbf16>, vector<8x64xbf16>, vector<8x64xbf16> -> vector<8x576xbf16>
    %cst_10 = arith.constant dense<0.000000e+00> : vector<8x64xf32>
    %29 = tpu.matmul %28, %2, %cst_10 {dimension_numbers = #tpu.dot_dimension_numbers<[1], [0], [0], [1], [0, 0, 1, 1], [], []>} : vector<8x576xbf16>, vector<576x64xbf16>, vector<8x64xf32> -> vector<8x64xf32>
    %cst_11 = arith.constant dense<0.000000e+00> : vector<64xf32>
    %30 = vector.multi_reduction <add>, %29, %cst_11 [0] : vector<8x64xf32> to vector<64xf32>
    %31 = vector.shape_cast %30 : vector<64xf32> to vector<1x64xf32>
    %cst_12 = arith.constant 8.000000e+00 : f32
    %32 = vector.broadcast %cst_12 : f32 to vector<1x64xf32>
    %33 = arith.divf %31, %32 : vector<1x64xf32>
    %34 = arith.mulf %29, %29 : vector<8x64xf32>
    %cst_13 = arith.constant dense<0.000000e+00> : vector<64xf32>
    %35 = vector.multi_reduction <add>, %34, %cst_13 [0] : vector<8x64xf32> to vector<64xf32>
    %36 = vector.shape_cast %35 : vector<64xf32> to vector<1x64xf32>
    %cst_14 = arith.constant 8.000000e+00 : f32
    %37 = vector.broadcast %cst_14 : f32 to vector<1x64xf32>
    %38 = arith.divf %36, %37 : vector<1x64xf32>
    %39 = arith.mulf %33, %33 : vector<1x64xf32>
    %40 = arith.subf %38, %39 : vector<1x64xf32>
    %cst_15 = arith.constant 0.000000e+00 : f32
    %41 = vector.broadcast %cst_15 : f32 to vector<1x64xf32>
    %42 = arith.maximumf %40, %41 : vector<1x64xf32>
    %cst_16 = arith.constant 9.99999974E-6 : f32
    %43 = vector.broadcast %cst_16 : f32 to vector<1x64xf32>
    %44 = arith.addf %42, %43 : vector<1x64xf32>
    %45 = math.rsqrt %44 : vector<1x64xf32>
    %46 = arith.mulf %3, %45 : vector<1x64xf32>
    %47 = arith.mulf %33, %46 : vector<1x64xf32>
    %48 = arith.subf %4, %47 : vector<1x64xf32>
    %49 = vector.broadcast %46 : vector<1x64xf32> to vector<8x64xf32>
    %50 = arith.mulf %29, %49 : vector<8x64xf32>
    %51 = vector.broadcast %48 : vector<1x64xf32> to vector<8x64xf32>
    %52 = arith.addf %50, %51 : vector<8x64xf32>
    %53 = vector.shape_cast %1 : vector<2x2x2x64xf32> to vector<8x64xf32>
    %54 = arith.addf %52, %53 : vector<8x64xf32>
    %cst_17 = arith.constant 0.000000e+00 : f32
    %55 = vector.broadcast %cst_17 : f32 to vector<8x64xf32>
    %56 = arith.maximumf %54, %55 : vector<8x64xf32>
    %57 = vector.shape_cast %56 : vector<8x64xf32> to vector<2x2x2x64xf32>
    %c0_18 = arith.constant 0 : index
    %c0_19 = arith.constant 0 : index
    %58 = vector.load %arg4[%c0_18, %c0_19] : memref<576x64xbf16, #tpu.memory_space<vmem>>, vector<576x64xbf16>
    %c0_20 = arith.constant 0 : index
    %c0_21 = arith.constant 0 : index
    %59 = vector.load %arg5[%c0_20, %c0_21] : memref<1x64xf32, #tpu.memory_space<vmem>>, vector<1x64xf32>
    %c0_22 = arith.constant 0 : index
    %c0_23 = arith.constant 0 : index
    %60 = vector.load %arg6[%c0_22, %c0_23] : memref<1x64xf32, #tpu.memory_space<vmem>>, vector<1x64xf32>
    %61 = arith.truncf %57 : vector<2x2x2x64xf32> to vector<2x2x2x64xbf16>
    %cst_24 = arith.constant 0.000000e+00 : bf16
    %62 = vector.broadcast %cst_24 : bf16 to vector<2x2x1x64xbf16>
    %63 = tpu.concatenate %62, %61, %62 in 2 : vector<2x2x1x64xbf16>, vector<2x2x2x64xbf16>, vector<2x2x1x64xbf16> -> vector<2x2x4x64xbf16>
    %cst_25 = arith.constant 0.000000e+00 : bf16
    %64 = vector.broadcast %cst_25 : bf16 to vector<2x1x4x64xbf16>
    %65 = tpu.concatenate %64, %63, %64 in 1 : vector<2x1x4x64xbf16>, vector<2x2x4x64xbf16>, vector<2x1x4x64xbf16> -> vector<2x4x4x64xbf16>
    %66 = vector.extract_strided_slice %65 {offsets = [0, 0, 0, 0], sizes = [2, 2, 2, 64], strides = [1, 1, 1, 1]} : vector<2x4x4x64xbf16> to vector<2x2x2x64xbf16>
    %67 = vector.shape_cast %66 : vector<2x2x2x64xbf16> to vector<8x64xbf16>
    %68 = vector.extract_strided_slice %65 {offsets = [0, 0, 1, 0], sizes = [2, 2, 2, 64], strides = [1, 1, 1, 1]} : vector<2x4x4x64xbf16> to vector<2x2x2x64xbf16>
    %69 = vector.shape_cast %68 : vector<2x2x2x64xbf16> to vector<8x64xbf16>
    %70 = vector.extract_strided_slice %65 {offsets = [0, 0, 2, 0], sizes = [2, 2, 2, 64], strides = [1, 1, 1, 1]} : vector<2x4x4x64xbf16> to vector<2x2x2x64xbf16>
    %71 = vector.shape_cast %70 : vector<2x2x2x64xbf16> to vector<8x64xbf16>
    %72 = vector.extract_strided_slice %65 {offsets = [0, 1, 0, 0], sizes = [2, 2, 2, 64], strides = [1, 1, 1, 1]} : vector<2x4x4x64xbf16> to vector<2x2x2x64xbf16>
    %73 = vector.shape_cast %72 : vector<2x2x2x64xbf16> to vector<8x64xbf16>
    %74 = vector.extract_strided_slice %65 {offsets = [0, 1, 1, 0], sizes = [2, 2, 2, 64], strides = [1, 1, 1, 1]} : vector<2x4x4x64xbf16> to vector<2x2x2x64xbf16>
    %75 = vector.shape_cast %74 : vector<2x2x2x64xbf16> to vector<8x64xbf16>
    %76 = vector.extract_strided_slice %65 {offsets = [0, 1, 2, 0], sizes = [2, 2, 2, 64], strides = [1, 1, 1, 1]} : vector<2x4x4x64xbf16> to vector<2x2x2x64xbf16>
    %77 = vector.shape_cast %76 : vector<2x2x2x64xbf16> to vector<8x64xbf16>
    %78 = vector.extract_strided_slice %65 {offsets = [0, 2, 0, 0], sizes = [2, 2, 2, 64], strides = [1, 1, 1, 1]} : vector<2x4x4x64xbf16> to vector<2x2x2x64xbf16>
    %79 = vector.shape_cast %78 : vector<2x2x2x64xbf16> to vector<8x64xbf16>
    %80 = vector.extract_strided_slice %65 {offsets = [0, 2, 1, 0], sizes = [2, 2, 2, 64], strides = [1, 1, 1, 1]} : vector<2x4x4x64xbf16> to vector<2x2x2x64xbf16>
    %81 = vector.shape_cast %80 : vector<2x2x2x64xbf16> to vector<8x64xbf16>
    %82 = vector.extract_strided_slice %65 {offsets = [0, 2, 2, 0], sizes = [2, 2, 2, 64], strides = [1, 1, 1, 1]} : vector<2x4x4x64xbf16> to vector<2x2x2x64xbf16>
    %83 = vector.shape_cast %82 : vector<2x2x2x64xbf16> to vector<8x64xbf16>
    %84 = tpu.concatenate %67, %69, %71, %73, %75, %77, %79, %81, %83 in 1 : vector<8x64xbf16>, vector<8x64xbf16>, vector<8x64xbf16>, vector<8x64xbf16>, vector<8x64xbf16>, vector<8x64xbf16>, vector<8x64xbf16>, vector<8x64xbf16>, vector<8x64xbf16> -> vector<8x576xbf16>
    %cst_26 = arith.constant dense<0.000000e+00> : vector<8x64xf32>
    %85 = tpu.matmul %84, %58, %cst_26 {dimension_numbers = #tpu.dot_dimension_numbers<[1], [0], [0], [1], [0, 0, 1, 1], [], []>} : vector<8x576xbf16>, vector<576x64xbf16>, vector<8x64xf32> -> vector<8x64xf32>
    %cst_27 = arith.constant dense<0.000000e+00> : vector<64xf32>
    %86 = vector.multi_reduction <add>, %85, %cst_27 [0] : vector<8x64xf32> to vector<64xf32>
    %87 = vector.shape_cast %86 : vector<64xf32> to vector<1x64xf32>
    %cst_28 = arith.constant 8.000000e+00 : f32
    %88 = vector.broadcast %cst_28 : f32 to vector<1x64xf32>
    %89 = arith.divf %87, %88 : vector<1x64xf32>
    %90 = arith.mulf %85, %85 : vector<8x64xf32>
    %cst_29 = arith.constant dense<0.000000e+00> : vector<64xf32>
    %91 = vector.multi_reduction <add>, %90, %cst_29 [0] : vector<8x64xf32> to vector<64xf32>
    %92 = vector.shape_cast %91 : vector<64xf32> to vector<1x64xf32>
    %cst_30 = arith.constant 8.000000e+00 : f32
    %93 = vector.broadcast %cst_30 : f32 to vector<1x64xf32>
    %94 = arith.divf %92, %93 : vector<1x64xf32>
    %95 = arith.mulf %89, %89 : vector<1x64xf32>
    %96 = arith.subf %94, %95 : vector<1x64xf32>
    %cst_31 = arith.constant 0.000000e+00 : f32
    %97 = vector.broadcast %cst_31 : f32 to vector<1x64xf32>
    %98 = arith.maximumf %96, %97 : vector<1x64xf32>
    %cst_32 = arith.constant 9.99999974E-6 : f32
    %99 = vector.broadcast %cst_32 : f32 to vector<1x64xf32>
    %100 = arith.addf %98, %99 : vector<1x64xf32>
    %101 = math.rsqrt %100 : vector<1x64xf32>
    %102 = arith.mulf %59, %101 : vector<1x64xf32>
    %103 = arith.mulf %89, %102 : vector<1x64xf32>
    %104 = arith.subf %60, %103 : vector<1x64xf32>
    %105 = vector.broadcast %102 : vector<1x64xf32> to vector<8x64xf32>
    %106 = arith.mulf %85, %105 : vector<8x64xf32>
    %107 = vector.broadcast %104 : vector<1x64xf32> to vector<8x64xf32>
    %108 = arith.addf %106, %107 : vector<8x64xf32>
    %109 = vector.shape_cast %57 : vector<2x2x2x64xf32> to vector<8x64xf32>
    %110 = arith.addf %108, %109 : vector<8x64xf32>
    %cst_33 = arith.constant 0.000000e+00 : f32
    %111 = vector.broadcast %cst_33 : f32 to vector<8x64xf32>
    %112 = arith.maximumf %110, %111 : vector<8x64xf32>
    %113 = vector.shape_cast %112 : vector<8x64xf32> to vector<2x2x2x64xf32>
    %114 = arith.truncf %113 : vector<2x2x2x64xf32> to vector<2x2x2x64xbf16>
    %c0_34 = arith.constant 0 : index
    %c0_35 = arith.constant 0 : index
    %c0_36 = arith.constant 0 : index
    %c0_37 = arith.constant 0 : index
    %115 = vector.load %arg7[%c0_34, %c0_35, %c0_36, %c0_37] : memref<2x2x2x64xbf16, #tpu.memory_space<vmem>>, vector<2x2x2x64xbf16>
    tpu.vector_store %arg7[%c0_34, %c0_35, %c0_36, %c0_37], %114 {strides = array<i32>} : memref<2x2x2x64xbf16, #tpu.memory_space<vmem>>, vector<2x2x2x64xbf16>,
    return
  }
}

module attributes {stable_mosaic.version = 11 : i64} {
  func.func @_dec_stage_kernel(%arg0: memref<2x2x2x64xbf16, #tpu.memory_space<vmem>>, %arg1: memref<256x128xbf16, #tpu.memory_space<vmem>>, %arg2: memref<1x32xf32, #tpu.memory_space<vmem>>, %arg3: memref<1x32xf32, #tpu.memory_space<vmem>>, %arg4: memref<2x2x2x128xbf16, #tpu.memory_space<vmem>>) attributes {dimension_semantics = [], scalar_prefetch = 0 : i64, scratch_operands = 0 : i64, tpu.core_type = #tpu.core_type<tc>} {
    %c0 = arith.constant 0 : index
    %c0_0 = arith.constant 0 : index
    %c0_1 = arith.constant 0 : index
    %c0_2 = arith.constant 0 : index
    %0 = vector.load %arg0[%c0, %c0_0, %c0_1, %c0_2] : memref<2x2x2x64xbf16, #tpu.memory_space<vmem>>, vector<2x2x2x64xbf16>
    %cst = arith.constant 0.000000e+00 : bf16
    %1 = vector.broadcast %cst : bf16 to vector<2x1x2x64xbf16>
    %2 = tpu.concatenate %0, %1 in 1 : vector<2x2x2x64xbf16>, vector<2x1x2x64xbf16> -> vector<2x3x2x64xbf16>
    %cst_3 = arith.constant 0.000000e+00 : bf16
    %3 = vector.broadcast %cst_3 : bf16 to vector<2x3x1x64xbf16>
    %4 = tpu.concatenate %2, %3 in 2 : vector<2x3x2x64xbf16>, vector<2x3x1x64xbf16> -> vector<2x3x3x64xbf16>
    %5 = vector.shape_cast %0 : vector<2x2x2x64xbf16> to vector<8x64xbf16>
    %6 = vector.extract_strided_slice %4 {offsets = [0, 0, 1, 0], sizes = [2, 2, 2, 64], strides = [1, 1, 1, 1]} : vector<2x3x3x64xbf16> to vector<2x2x2x64xbf16>
    %7 = vector.shape_cast %6 : vector<2x2x2x64xbf16> to vector<8x64xbf16>
    %8 = vector.extract_strided_slice %4 {offsets = [0, 1, 0, 0], sizes = [2, 2, 2, 64], strides = [1, 1, 1, 1]} : vector<2x3x3x64xbf16> to vector<2x2x2x64xbf16>
    %9 = vector.shape_cast %8 : vector<2x2x2x64xbf16> to vector<8x64xbf16>
    %10 = vector.extract_strided_slice %4 {offsets = [0, 1, 1, 0], sizes = [2, 2, 2, 64], strides = [1, 1, 1, 1]} : vector<2x3x3x64xbf16> to vector<2x2x2x64xbf16>
    %11 = vector.shape_cast %10 : vector<2x2x2x64xbf16> to vector<8x64xbf16>
    %12 = tpu.concatenate %5, %7, %9, %11 in 1 : vector<8x64xbf16>, vector<8x64xbf16>, vector<8x64xbf16>, vector<8x64xbf16> -> vector<8x256xbf16>
    %c0_4 = arith.constant 0 : index
    %c0_5 = arith.constant 0 : index
    %13 = vector.load %arg1[%c0_4, %c0_5] : memref<256x128xbf16, #tpu.memory_space<vmem>>, vector<256x128xbf16>
    %cst_6 = arith.constant dense<0.000000e+00> : vector<8x128xf32>
    %14 = tpu.matmul %12, %13, %cst_6 {dimension_numbers = #tpu.dot_dimension_numbers<[1], [0], [0], [1], [0, 0, 1, 1], [], []>} : vector<8x256xbf16>, vector<256x128xbf16>, vector<8x128xf32> -> vector<8x128xf32>
    %cst_7 = arith.constant dense<0.000000e+00> : vector<128xf32>
    %15 = vector.multi_reduction <add>, %14, %cst_7 [0] : vector<8x128xf32> to vector<128xf32>
    %16 = vector.shape_cast %15 : vector<128xf32> to vector<1x128xf32>
    %cst_8 = arith.constant 8.000000e+00 : f32
    %17 = vector.broadcast %cst_8 : f32 to vector<1x128xf32>
    %18 = arith.divf %16, %17 : vector<1x128xf32>
    %19 = arith.mulf %14, %14 : vector<8x128xf32>
    %cst_9 = arith.constant dense<0.000000e+00> : vector<128xf32>
    %20 = vector.multi_reduction <add>, %19, %cst_9 [0] : vector<8x128xf32> to vector<128xf32>
    %21 = vector.shape_cast %20 : vector<128xf32> to vector<1x128xf32>
    %cst_10 = arith.constant 8.000000e+00 : f32
    %22 = vector.broadcast %cst_10 : f32 to vector<1x128xf32>
    %23 = arith.divf %21, %22 : vector<1x128xf32>
    %24 = vector.extract_strided_slice %18 {offsets = [0, 0], sizes = [1, 32], strides = [1, 1]} : vector<1x128xf32> to vector<1x32xf32>
    %25 = vector.extract_strided_slice %18 {offsets = [0, 32], sizes = [1, 32], strides = [1, 1]} : vector<1x128xf32> to vector<1x32xf32>
    %26 = arith.addf %24, %25 : vector<1x32xf32>
    %27 = vector.extract_strided_slice %18 {offsets = [0, 64], sizes = [1, 32], strides = [1, 1]} : vector<1x128xf32> to vector<1x32xf32>
    %28 = arith.addf %26, %27 : vector<1x32xf32>
    %29 = vector.extract_strided_slice %18 {offsets = [0, 96], sizes = [1, 32], strides = [1, 1]} : vector<1x128xf32> to vector<1x32xf32>
    %30 = arith.addf %28, %29 : vector<1x32xf32>
    %cst_11 = arith.constant 2.500000e-01 : f32
    %31 = vector.broadcast %cst_11 : f32 to vector<1x32xf32>
    %32 = arith.mulf %31, %30 : vector<1x32xf32>
    %33 = vector.extract_strided_slice %23 {offsets = [0, 0], sizes = [1, 32], strides = [1, 1]} : vector<1x128xf32> to vector<1x32xf32>
    %34 = vector.extract_strided_slice %23 {offsets = [0, 32], sizes = [1, 32], strides = [1, 1]} : vector<1x128xf32> to vector<1x32xf32>
    %35 = arith.addf %33, %34 : vector<1x32xf32>
    %36 = vector.extract_strided_slice %23 {offsets = [0, 64], sizes = [1, 32], strides = [1, 1]} : vector<1x128xf32> to vector<1x32xf32>
    %37 = arith.addf %35, %36 : vector<1x32xf32>
    %38 = vector.extract_strided_slice %23 {offsets = [0, 96], sizes = [1, 32], strides = [1, 1]} : vector<1x128xf32> to vector<1x32xf32>
    %39 = arith.addf %37, %38 : vector<1x32xf32>
    %cst_12 = arith.constant 2.500000e-01 : f32
    %40 = vector.broadcast %cst_12 : f32 to vector<1x32xf32>
    %41 = arith.mulf %40, %39 : vector<1x32xf32>
    %42 = arith.mulf %32, %32 : vector<1x32xf32>
    %43 = arith.subf %41, %42 : vector<1x32xf32>
    %cst_13 = arith.constant 0.000000e+00 : f32
    %44 = vector.broadcast %cst_13 : f32 to vector<1x32xf32>
    %45 = arith.maximumf %43, %44 : vector<1x32xf32>
    %c0_14 = arith.constant 0 : index
    %c0_15 = arith.constant 0 : index
    %46 = vector.load %arg2[%c0_14, %c0_15] : memref<1x32xf32, #tpu.memory_space<vmem>>, vector<1x32xf32>
    %cst_16 = arith.constant 9.99999974E-6 : f32
    %47 = vector.broadcast %cst_16 : f32 to vector<1x32xf32>
    %48 = arith.addf %45, %47 : vector<1x32xf32>
    %49 = math.rsqrt %48 : vector<1x32xf32>
    %50 = arith.mulf %46, %49 : vector<1x32xf32>
    %c0_17 = arith.constant 0 : index
    %c0_18 = arith.constant 0 : index
    %51 = vector.load %arg3[%c0_17, %c0_18] : memref<1x32xf32, #tpu.memory_space<vmem>>, vector<1x32xf32>
    %52 = arith.mulf %32, %50 : vector<1x32xf32>
    %53 = arith.subf %51, %52 : vector<1x32xf32>
    %54 = tpu.concatenate %50, %50, %50, %50 in 1 : vector<1x32xf32>, vector<1x32xf32>, vector<1x32xf32>, vector<1x32xf32> -> vector<1x128xf32>
    %55 = tpu.concatenate %53, %53, %53, %53 in 1 : vector<1x32xf32>, vector<1x32xf32>, vector<1x32xf32>, vector<1x32xf32> -> vector<1x128xf32>
    %56 = vector.broadcast %54 : vector<1x128xf32> to vector<8x128xf32>
    %57 = arith.mulf %14, %56 : vector<8x128xf32>
    %58 = vector.broadcast %55 : vector<1x128xf32> to vector<8x128xf32>
    %59 = arith.addf %57, %58 : vector<8x128xf32>
    %cst_19 = arith.constant 0.000000e+00 : f32
    %60 = vector.broadcast %cst_19 : f32 to vector<8x128xf32>
    %61 = arith.maximumf %59, %60 : vector<8x128xf32>
    %62 = vector.shape_cast %61 : vector<8x128xf32> to vector<2x2x2x128xf32>
    %63 = arith.truncf %62 : vector<2x2x2x128xf32> to vector<2x2x2x128xbf16>
    %c0_20 = arith.constant 0 : index
    %c0_21 = arith.constant 0 : index
    %c0_22 = arith.constant 0 : index
    %c0_23 = arith.constant 0 : index
    %64 = vector.load %arg4[%c0_20, %c0_21, %c0_22, %c0_23] : memref<2x2x2x128xbf16, #tpu.memory_space<vmem>>, vector<2x2x2x128xbf16>
    tpu.vector_store %arg4[%c0_20, %c0_21, %c0_22, %c0_23], %63 {strides = array<i32>} : memref<2x2x2x128xbf16, #tpu.memory_space<vmem>>, vector<2x2x2x128xbf16>,
    return
  }
}

module attributes {stable_mosaic.version = 11 : i64} {
  func.func @_dec_stage_kernel(%arg0: memref<2x8x8x16xbf16, #tpu.memory_space<vmem>>, %arg1: memref<64x12xbf16, #tpu.memory_space<vmem>>, %arg2: memref<1x3xf32, #tpu.memory_space<vmem>>, %arg3: memref<1x3xf32, #tpu.memory_space<vmem>>, %arg4: memref<2x8x8x12xf32, #tpu.memory_space<vmem>>) attributes {dimension_semantics = [], scalar_prefetch = 0 : i64, scratch_operands = 0 : i64, tpu.core_type = #tpu.core_type<tc>} {
    %c0 = arith.constant 0 : index
    %c0_0 = arith.constant 0 : index
    %c0_1 = arith.constant 0 : index
    %c0_2 = arith.constant 0 : index
    %0 = vector.load %arg0[%c0, %c0_0, %c0_1, %c0_2] : memref<2x8x8x16xbf16, #tpu.memory_space<vmem>>, vector<2x8x8x16xbf16>
    %cst = arith.constant 0.000000e+00 : bf16
    %1 = vector.broadcast %cst : bf16 to vector<2x1x8x16xbf16>
    %2 = tpu.concatenate %0, %1 in 1 : vector<2x8x8x16xbf16>, vector<2x1x8x16xbf16> -> vector<2x9x8x16xbf16>
    %cst_3 = arith.constant 0.000000e+00 : bf16
    %3 = vector.broadcast %cst_3 : bf16 to vector<2x9x1x16xbf16>
    %4 = tpu.concatenate %2, %3 in 2 : vector<2x9x8x16xbf16>, vector<2x9x1x16xbf16> -> vector<2x9x9x16xbf16>
    %5 = vector.shape_cast %0 : vector<2x8x8x16xbf16> to vector<128x16xbf16>
    %6 = vector.extract_strided_slice %4 {offsets = [0, 0, 1, 0], sizes = [2, 8, 8, 16], strides = [1, 1, 1, 1]} : vector<2x9x9x16xbf16> to vector<2x8x8x16xbf16>
    %7 = vector.shape_cast %6 : vector<2x8x8x16xbf16> to vector<128x16xbf16>
    %8 = vector.extract_strided_slice %4 {offsets = [0, 1, 0, 0], sizes = [2, 8, 8, 16], strides = [1, 1, 1, 1]} : vector<2x9x9x16xbf16> to vector<2x8x8x16xbf16>
    %9 = vector.shape_cast %8 : vector<2x8x8x16xbf16> to vector<128x16xbf16>
    %10 = vector.extract_strided_slice %4 {offsets = [0, 1, 1, 0], sizes = [2, 8, 8, 16], strides = [1, 1, 1, 1]} : vector<2x9x9x16xbf16> to vector<2x8x8x16xbf16>
    %11 = vector.shape_cast %10 : vector<2x8x8x16xbf16> to vector<128x16xbf16>
    %12 = tpu.concatenate %5, %7, %9, %11 in 1 : vector<128x16xbf16>, vector<128x16xbf16>, vector<128x16xbf16>, vector<128x16xbf16> -> vector<128x64xbf16>
    %c0_4 = arith.constant 0 : index
    %c0_5 = arith.constant 0 : index
    %13 = vector.load %arg1[%c0_4, %c0_5] : memref<64x12xbf16, #tpu.memory_space<vmem>>, vector<64x12xbf16>
    %cst_6 = arith.constant dense<0.000000e+00> : vector<128x12xf32>
    %14 = tpu.matmul %12, %13, %cst_6 {dimension_numbers = #tpu.dot_dimension_numbers<[1], [0], [0], [1], [0, 0, 1, 1], [], []>} : vector<128x64xbf16>, vector<64x12xbf16>, vector<128x12xf32> -> vector<128x12xf32>
    %15 = arith.negf %14 : vector<128x12xf32>
    %16 = math.exp %15 : vector<128x12xf32>
    %cst_7 = arith.constant 1.000000e+00 : f32
    %17 = vector.broadcast %cst_7 : f32 to vector<128x12xf32>
    %18 = arith.addf %17, %16 : vector<128x12xf32>
    %19 = arith.divf %17, %18 : vector<128x12xf32>
    %20 = vector.shape_cast %19 : vector<128x12xf32> to vector<2x8x8x12xf32>
    %c0_8 = arith.constant 0 : index
    %c0_9 = arith.constant 0 : index
    %c0_10 = arith.constant 0 : index
    %c0_11 = arith.constant 0 : index
    %21 = vector.load %arg4[%c0_8, %c0_9, %c0_10, %c0_11] : memref<2x8x8x12xf32, #tpu.memory_space<vmem>>, vector<2x8x8x12xf32>
    tpu.vector_store %arg4[%c0_8, %c0_9, %c0_10, %c0_11], %20 {strides = array<i32>} : memref<2x8x8x12xf32, #tpu.memory_space<vmem>>, vector<2x8x8x12xf32>,
    return
  }
}

module attributes {stable_mosaic.version = 11 : i64} {
  func.func @_dec_stage_kernel(%arg0: memref<2x4x4x32xbf16, #tpu.memory_space<vmem>>, %arg1: memref<128x64xbf16, #tpu.memory_space<vmem>>, %arg2: memref<1x16xf32, #tpu.memory_space<vmem>>, %arg3: memref<1x16xf32, #tpu.memory_space<vmem>>, %arg4: memref<2x4x4x64xbf16, #tpu.memory_space<vmem>>) attributes {dimension_semantics = [], scalar_prefetch = 0 : i64, scratch_operands = 0 : i64, tpu.core_type = #tpu.core_type<tc>} {
    %c0 = arith.constant 0 : index
    %c0_0 = arith.constant 0 : index
    %c0_1 = arith.constant 0 : index
    %c0_2 = arith.constant 0 : index
    %0 = vector.load %arg0[%c0, %c0_0, %c0_1, %c0_2] : memref<2x4x4x32xbf16, #tpu.memory_space<vmem>>, vector<2x4x4x32xbf16>
    %cst = arith.constant 0.000000e+00 : bf16
    %1 = vector.broadcast %cst : bf16 to vector<2x1x4x32xbf16>
    %2 = tpu.concatenate %0, %1 in 1 : vector<2x4x4x32xbf16>, vector<2x1x4x32xbf16> -> vector<2x5x4x32xbf16>
    %cst_3 = arith.constant 0.000000e+00 : bf16
    %3 = vector.broadcast %cst_3 : bf16 to vector<2x5x1x32xbf16>
    %4 = tpu.concatenate %2, %3 in 2 : vector<2x5x4x32xbf16>, vector<2x5x1x32xbf16> -> vector<2x5x5x32xbf16>
    %5 = vector.shape_cast %0 : vector<2x4x4x32xbf16> to vector<32x32xbf16>
    %6 = vector.extract_strided_slice %4 {offsets = [0, 0, 1, 0], sizes = [2, 4, 4, 32], strides = [1, 1, 1, 1]} : vector<2x5x5x32xbf16> to vector<2x4x4x32xbf16>
    %7 = vector.shape_cast %6 : vector<2x4x4x32xbf16> to vector<32x32xbf16>
    %8 = vector.extract_strided_slice %4 {offsets = [0, 1, 0, 0], sizes = [2, 4, 4, 32], strides = [1, 1, 1, 1]} : vector<2x5x5x32xbf16> to vector<2x4x4x32xbf16>
    %9 = vector.shape_cast %8 : vector<2x4x4x32xbf16> to vector<32x32xbf16>
    %10 = vector.extract_strided_slice %4 {offsets = [0, 1, 1, 0], sizes = [2, 4, 4, 32], strides = [1, 1, 1, 1]} : vector<2x5x5x32xbf16> to vector<2x4x4x32xbf16>
    %11 = vector.shape_cast %10 : vector<2x4x4x32xbf16> to vector<32x32xbf16>
    %12 = tpu.concatenate %5, %7, %9, %11 in 1 : vector<32x32xbf16>, vector<32x32xbf16>, vector<32x32xbf16>, vector<32x32xbf16> -> vector<32x128xbf16>
    %c0_4 = arith.constant 0 : index
    %c0_5 = arith.constant 0 : index
    %13 = vector.load %arg1[%c0_4, %c0_5] : memref<128x64xbf16, #tpu.memory_space<vmem>>, vector<128x64xbf16>
    %cst_6 = arith.constant dense<0.000000e+00> : vector<32x64xf32>
    %14 = tpu.matmul %12, %13, %cst_6 {dimension_numbers = #tpu.dot_dimension_numbers<[1], [0], [0], [1], [0, 0, 1, 1], [], []>} : vector<32x128xbf16>, vector<128x64xbf16>, vector<32x64xf32> -> vector<32x64xf32>
    %cst_7 = arith.constant dense<0.000000e+00> : vector<64xf32>
    %15 = vector.multi_reduction <add>, %14, %cst_7 [0] : vector<32x64xf32> to vector<64xf32>
    %16 = vector.shape_cast %15 : vector<64xf32> to vector<1x64xf32>
    %cst_8 = arith.constant 3.200000e+01 : f32
    %17 = vector.broadcast %cst_8 : f32 to vector<1x64xf32>
    %18 = arith.divf %16, %17 : vector<1x64xf32>
    %19 = arith.mulf %14, %14 : vector<32x64xf32>
    %cst_9 = arith.constant dense<0.000000e+00> : vector<64xf32>
    %20 = vector.multi_reduction <add>, %19, %cst_9 [0] : vector<32x64xf32> to vector<64xf32>
    %21 = vector.shape_cast %20 : vector<64xf32> to vector<1x64xf32>
    %cst_10 = arith.constant 3.200000e+01 : f32
    %22 = vector.broadcast %cst_10 : f32 to vector<1x64xf32>
    %23 = arith.divf %21, %22 : vector<1x64xf32>
    %24 = vector.extract_strided_slice %18 {offsets = [0, 0], sizes = [1, 16], strides = [1, 1]} : vector<1x64xf32> to vector<1x16xf32>
    %25 = vector.extract_strided_slice %18 {offsets = [0, 16], sizes = [1, 16], strides = [1, 1]} : vector<1x64xf32> to vector<1x16xf32>
    %26 = arith.addf %24, %25 : vector<1x16xf32>
    %27 = vector.extract_strided_slice %18 {offsets = [0, 32], sizes = [1, 16], strides = [1, 1]} : vector<1x64xf32> to vector<1x16xf32>
    %28 = arith.addf %26, %27 : vector<1x16xf32>
    %29 = vector.extract_strided_slice %18 {offsets = [0, 48], sizes = [1, 16], strides = [1, 1]} : vector<1x64xf32> to vector<1x16xf32>
    %30 = arith.addf %28, %29 : vector<1x16xf32>
    %cst_11 = arith.constant 2.500000e-01 : f32
    %31 = vector.broadcast %cst_11 : f32 to vector<1x16xf32>
    %32 = arith.mulf %31, %30 : vector<1x16xf32>
    %33 = vector.extract_strided_slice %23 {offsets = [0, 0], sizes = [1, 16], strides = [1, 1]} : vector<1x64xf32> to vector<1x16xf32>
    %34 = vector.extract_strided_slice %23 {offsets = [0, 16], sizes = [1, 16], strides = [1, 1]} : vector<1x64xf32> to vector<1x16xf32>
    %35 = arith.addf %33, %34 : vector<1x16xf32>
    %36 = vector.extract_strided_slice %23 {offsets = [0, 32], sizes = [1, 16], strides = [1, 1]} : vector<1x64xf32> to vector<1x16xf32>
    %37 = arith.addf %35, %36 : vector<1x16xf32>
    %38 = vector.extract_strided_slice %23 {offsets = [0, 48], sizes = [1, 16], strides = [1, 1]} : vector<1x64xf32> to vector<1x16xf32>
    %39 = arith.addf %37, %38 : vector<1x16xf32>
    %cst_12 = arith.constant 2.500000e-01 : f32
    %40 = vector.broadcast %cst_12 : f32 to vector<1x16xf32>
    %41 = arith.mulf %40, %39 : vector<1x16xf32>
    %42 = arith.mulf %32, %32 : vector<1x16xf32>
    %43 = arith.subf %41, %42 : vector<1x16xf32>
    %cst_13 = arith.constant 0.000000e+00 : f32
    %44 = vector.broadcast %cst_13 : f32 to vector<1x16xf32>
    %45 = arith.maximumf %43, %44 : vector<1x16xf32>
    %c0_14 = arith.constant 0 : index
    %c0_15 = arith.constant 0 : index
    %46 = vector.load %arg2[%c0_14, %c0_15] : memref<1x16xf32, #tpu.memory_space<vmem>>, vector<1x16xf32>
    %cst_16 = arith.constant 9.99999974E-6 : f32
    %47 = vector.broadcast %cst_16 : f32 to vector<1x16xf32>
    %48 = arith.addf %45, %47 : vector<1x16xf32>
    %49 = math.rsqrt %48 : vector<1x16xf32>
    %50 = arith.mulf %46, %49 : vector<1x16xf32>
    %c0_17 = arith.constant 0 : index
    %c0_18 = arith.constant 0 : index
    %51 = vector.load %arg3[%c0_17, %c0_18] : memref<1x16xf32, #tpu.memory_space<vmem>>, vector<1x16xf32>
    %52 = arith.mulf %32, %50 : vector<1x16xf32>
    %53 = arith.subf %51, %52 : vector<1x16xf32>
    %54 = tpu.concatenate %50, %50, %50, %50 in 1 : vector<1x16xf32>, vector<1x16xf32>, vector<1x16xf32>, vector<1x16xf32> -> vector<1x64xf32>
    %55 = tpu.concatenate %53, %53, %53, %53 in 1 : vector<1x16xf32>, vector<1x16xf32>, vector<1x16xf32>, vector<1x16xf32> -> vector<1x64xf32>
    %56 = vector.broadcast %54 : vector<1x64xf32> to vector<32x64xf32>
    %57 = arith.mulf %14, %56 : vector<32x64xf32>
    %58 = vector.broadcast %55 : vector<1x64xf32> to vector<32x64xf32>
    %59 = arith.addf %57, %58 : vector<32x64xf32>
    %cst_19 = arith.constant 0.000000e+00 : f32
    %60 = vector.broadcast %cst_19 : f32 to vector<32x64xf32>
    %61 = arith.maximumf %59, %60 : vector<32x64xf32>
    %62 = vector.shape_cast %61 : vector<32x64xf32> to vector<2x4x4x64xf32>
    %63 = arith.truncf %62 : vector<2x4x4x64xf32> to vector<2x4x4x64xbf16>
    %c0_20 = arith.constant 0 : index
    %c0_21 = arith.constant 0 : index
    %c0_22 = arith.constant 0 : index
    %c0_23 = arith.constant 0 : index
    %64 = vector.load %arg4[%c0_20, %c0_21, %c0_22, %c0_23] : memref<2x4x4x64xbf16, #tpu.memory_space<vmem>>, vector<2x4x4x64xbf16>
    tpu.vector_store %arg4[%c0_20, %c0_21, %c0_22, %c0_23], %63 {strides = array<i32>} : memref<2x4x4x64xbf16, #tpu.memory_space<vmem>>, vector<2x4x4x64xbf16>,
    return
  }
}

</mosaic_0001>

<llo_original>
// kernel: faster_style_transfer.9
$region0: #{faster_style_transfer.9}
  #allocation0 [shape = 'u32[]', space=smem, size = 0x4, offset = 0x4, fixed_abs, tag = 'smem constant byte address 0x4 - core index']
  #allocation1 [shape = 'u32[144,128]{1,0:T(1,128)}', space=vmem, size = 0x12000, scoped, tag = 'internal scratch']
  %s0 = inlined_call_operand.vmem [shape: bf16[2,4,4,32], index: 0, kind: input, shape index: {}]
  %s1 = inlined_call_operand.vmem [shape: bf16[288,64], index: 1, kind: input, shape index: {}]
  %s2 = inlined_call_operand.vmem [shape: f32[1,64], index: 2, kind: input, shape index: {}]
  %s3 = inlined_call_operand.vmem [shape: f32[1,64], index: 3, kind: input, shape index: {}]
  %s4 = inlined_call_operand.vmem [shape: bf16[2,2,2,64], index: 4, kind: output, shape index: {}]
  %s5 = sld [smem:[#allocation0]]
  $region26: #{faster_style_transfer.9} parent=0
    _
  %s7 = ssub.s32 1, %s5
  %s8 = scalar_select 0, %s7, %s5
  // Predicated region
  $region2: #{faster_style_transfer.9} parent=0 // pred_check
    _
  $region3: #{faster_style_transfer.9} parent=0 // pred_check_branch
    %10 = sbr.rel (0) target = $region5
  $region4: #{faster_style_transfer.9} parent=0 // pred_region
    _
  $region5: #{faster_style_transfer.9} parent=0 // pred_fallthru
    _
  // Predicated region
  $region6: #{faster_style_transfer.9} parent=0 // pred_check
    _
  $region7: #{faster_style_transfer.9} parent=0 // pred_check_branch
    %12 = sbr.rel (0) target = $region9
  $region8: #{faster_style_transfer.9} parent=0 // pred_region
    _
  $region9: #{faster_style_transfer.9} parent=0 // pred_fallthru
    _
  // Predicated region
  $region10: #{faster_style_transfer.9} parent=0 // pred_check
    _
  $region11: #{faster_style_transfer.9} parent=0 // pred_check_branch
    %14 = sbr.rel (0) target = $region13
  $region12: #{faster_style_transfer.9} parent=0 // pred_region
    _
  $region13: #{faster_style_transfer.9} parent=0 // pred_fallthru
    _
  // Predicated region
  $region14: #{faster_style_transfer.9} parent=0 // pred_check
    _
  $region15: #{faster_style_transfer.9} parent=0 // pred_check_branch
    %16 = sbr.rel (0) target = $region17
  $region16: #{faster_style_transfer.9} parent=0 // pred_region
    _
  $region17: #{faster_style_transfer.9} parent=0 // pred_fallthru
    _
  %v18 = vld [vmem:[%s0] sm:$0x3]
  %v19 = vld [vmem:[%s0 + $0x2] sm:$0x3]
  %v20 = vld [vmem:[%s0 + $0x4] sm:$0x3]
  %v21 = vld [vmem:[%s0 + $0x6] sm:$0x3]
  %v22 = vld [vmem:[%s0 + $0x8] sm:$0x3]
  %v23 = vld [vmem:[%s0 + $0xa] sm:$0x3]
  %v24 = vld [vmem:[%s0 + $0xc] sm:$0x3]
  %v25 = vld [vmem:[%s0 + $0xe] sm:$0x3]
  %v35 = vunpack.c.l.s4 1983009808
  %v36 = vunpack.c.0.s8 %v35
  %v37 = vlaneseq
  %v38 = vshrl.u32 %v37, 7
  %v39 = vsub.s32 %v36, %v38
  %v40 = vrot.slane %v18, %v39
  %v42 = vunpack.c.l.s4 1983009808
  %v43 = vunpack.c.0.s8 %v42
  %v44 = vlaneseq
  %v45 = vshrl.u32 %v44, 7
  %v46 = vsub.s32 %v43, %v45
  %v47 = vrot.slane %v19, %v46
  %v49 = vunpack.c.l.s4 1983009808
  %v50 = vunpack.c.0.s8 %v49
  %v51 = vlaneseq
  %v52 = vshrl.u32 %v51, 7
  %v53 = vsub.s32 %v50, %v52
  %v54 = vrot.slane %v20, %v53
  %v56 = vunpack.c.l.s4 1983009808
  %v57 = vunpack.c.0.s8 %v56
  %v58 = vlaneseq
  %v59 = vshrl.u32 %v58, 7
  %v60 = vsub.s32 %v57, %v59
  %v61 = vrot.slane %v21, %v60
  %v63 = vunpack.c.l.s4 1983009808
  %v64 = vunpack.c.0.s8 %v63
  %v65 = vlaneseq
  %v66 = vshrl.u32 %v65, 7
  %v67 = vsub.s32 %v64, %v66
  %v68 = vrot.slane %v22, %v67
  %v70 = vunpack.c.l.s4 1983009808
  %v71 = vunpack.c.0.s8 %v70
  %v72 = vlaneseq
  %v73 = vshrl.u32 %v72, 7
  %v74 = vsub.s32 %v71, %v73
  %v75 = vrot.slane %v23, %v74
  %v77 = vunpack.c.l.s4 1983009808
  %v78 = vunpack.c.0.s8 %v77
  %v79 = vlaneseq
  %v80 = vshrl.u32 %v79, 7
  %v81 = vsub.s32 %v78, %v80
  %v82 = vrot.slane %v24, %v81
  %v84 = vunpack.c.l.s4 1983009808
  %v85 = vunpack.c.0.s8 %v84
  %v86 = vlaneseq
  %v87 = vshrl.u32 %v86, 7
  %v88 = vsub.s32 %v85, %v87
  %v89 = vrot.slane %v25, %v88
  %v91 = vshrl.u32 %v40, 16
  %v93 = vrot.slane %v91, 7
  %v94 = vshll.u32 %v40, 16
  %v96 = vor.u32 %v93, %v94
  %v98 = vshrl.u32 %v47, 16
  %v100 = vrot.slane %v98, 7
  %v101 = vshll.u32 %v47, 16
  %v103 = vor.u32 %v100, %v101
  %v105 = vshrl.u32 %v54, 16
  %v107 = vrot.slane %v105, 7
  %v108 = vshll.u32 %v54, 16
  %v110 = vor.u32 %v107, %v108
  %v112 = vshrl.u32 %v61, 16
  %v114 = vrot.slane %v112, 7
  %v115 = vshll.u32 %v61, 16
  %v117 = vor.u32 %v114, %v115
  %v119 = vshrl.u32 %v68, 16
  %v121 = vrot.slane %v119, 7
  %v122 = vshll.u32 %v68, 16
  %v124 = vor.u32 %v121, %v122
  %v126 = vshrl.u32 %v75, 16
  %v128 = vrot.slane %v126, 7
  %v129 = vshll.u32 %v75, 16
  %v131 = vor.u32 %v128, %v129
  %v133 = vshrl.u32 %v82, 16
  %v135 = vrot.slane %v133, 7
  %v136 = vshll.u32 %v82, 16
  %v138 = vor.u32 %v135, %v136
  %v140 = vshrl.u32 %v89, 16
  %v142 = vrot.slane %v140, 7
  %v143 = vshll.u32 %v89, 16
  %v145 = vor.u32 %v142, %v143
  %vm154 = vcmask 1040384
  %vm155 = vsmask.f32 256
  %vm156 = vmand %vm154, %vm155
  %v157 = vsel %vm156, 0, %v96
  %v158 = vsel %vm156, 0, %v103
  %v159 = vsel %vm156, 0, %v110
  %v160 = vsel %vm156, 0, %v117
  %v161 = vsel %vm156, 0, %v124
  %v162 = vsel %vm156, 0, %v131
  %v163 = vsel %vm156, 0, %v138
  %v164 = vsel %vm156, 0, %v145
  %vm165 = vcmask 1042432
  %vm166 = vsmask.f32 2304
  %vm167 = vmand %vm165, %vm166
  %v168 = vsel %vm167, %v157, 0
  %v169 = vsel %vm167, %v158, 0
  %v170 = vsel %vm167, %v159, 0
  %v171 = vsel %vm167, %v160, 0
  %v172 = vsel %vm167, %v161, 0
  %v173 = vsel %vm167, %v162, 0
  %v174 = vsel %vm167, %v163, 0
  %v175 = vsel %vm167, %v164, 0
  %v184 = vunpack.c.l.s4 1983009808
  %v185 = vunpack.c.0.s8 %v184
  %v186 = vlaneseq
  %v187 = vshrl.u32 %v186, 7
  %v188 = vsub.s32 %v185, %v187
  %v189 = vrot.slane 0, %v188
  %v190 = vcombine.high %v189, %v189
  %v192 = vunpack.c.l.s4 1983009808
  %v193 = vunpack.c.0.s8 %v192
  %v194 = vlaneseq
  %v195 = vshrl.u32 %v194, 7
  %v196 = vsub.s32 %v193, %v195
  %v197 = vrot.slane %v168, %v196
  %v198 = vcombine.high %v197, %v197
  %v200 = vunpack.c.l.s4 1983009808
  %v201 = vunpack.c.0.s8 %v200
  %v202 = vlaneseq
  %v203 = vshrl.u32 %v202, 7
  %v204 = vsub.s32 %v201, %v203
  %v205 = vrot.slane %v169, %v204
  %v206 = vcombine.high %v205, %v205
  %v208 = vunpack.c.l.s4 1983009808
  %v209 = vunpack.c.0.s8 %v208
  %v210 = vlaneseq
  %v211 = vshrl.u32 %v210, 7
  %v212 = vsub.s32 %v209, %v211
  %v213 = vrot.slane %v170, %v212
  %v214 = vcombine.high %v213, %v213
  %v216 = vunpack.c.l.s4 1983009808
  %v217 = vunpack.c.0.s8 %v216
  %v218 = vlaneseq
  %v219 = vshrl.u32 %v218, 7
  %v220 = vsub.s32 %v217, %v219
  %v221 = vrot.slane %v172, %v220
  %v222 = vcombine.high %v221, %v221
  %v224 = vunpack.c.l.s4 1983009808
  %v225 = vunpack.c.0.s8 %v224
  %v226 = vlaneseq
  %v227 = vshrl.u32 %v226, 7
  %v228 = vsub.s32 %v225, %v227
  %v229 = vrot.slane %v173, %v228
  %v230 = vcombine.high %v229, %v229
  %v232 = vunpack.c.l.s4 1983009808
  %v233 = vunpack.c.0.s8 %v232
  %v234 = vlaneseq
  %v235 = vshrl.u32 %v234, 7
  %v236 = vsub.s32 %v233, %v235
  %v237 = vrot.slane %v174, %v236
  %v238 = vcombine.high %v237, %v237
  %vm239 = vsmask.f32 1280
  %vm240 = vsmask.f32 3336
  %vm241 = vmor %vm239, %vm240
  %vm242 = vsmask.f32 5392
  %vm243 = vmor %vm241, %vm242
  %vm244 = vsmask.f32 7448
  %vm245 = vmor %vm243, %vm244
  %v247 = vshrl.u32 %v189, 16
  %v249 = vrot.slane %v247, 6
  %v250 = vshll.u32 %v189, 16
  %v252 = vrot.slane %v250, 7
  %v253 = vor.u32 %v249, %v252
  %v254 = vrot.slane %v253, 2
  %v256 = vshll.u32 %v190, 16
  %v258 = vrot.slane %v256, 7
  %v259 = vsel %vm245, %v254, %v258
  %v261 = vshrl.u32 %v197, 16
  %v263 = vrot.slane %v261, 6
  %v264 = vshll.u32 %v197, 16
  %v266 = vrot.slane %v264, 7
  %v267 = vor.u32 %v263, %v266
  %v268 = vrot.slane %v267, 2
  %v270 = vshll.u32 %v198, 16
  %v272 = vrot.slane %v270, 7
  %v273 = vsel %vm245, %v268, %v272
  %v275 = vshrl.u32 %v205, 16
  %v277 = vrot.slane %v275, 6
  %v278 = vshll.u32 %v205, 16
  %v280 = vrot.slane %v278, 7
  %v281 = vor.u32 %v277, %v280
  %v282 = vrot.slane %v281, 2
  %v284 = vshll.u32 %v206, 16
  %v286 = vrot.slane %v284, 7
  %v287 = vsel %vm245, %v282, %v286
  %v289 = vshrl.u32 %v213, 16
  %v291 = vrot.slane %v289, 6
  %v292 = vshll.u32 %v213, 16
  %v294 = vrot.slane %v292, 7
  %v295 = vor.u32 %v291, %v294
  %v296 = vrot.slane %v295, 2
  %v298 = vshll.u32 %v214, 16
  %v300 = vrot.slane %v298, 7
  %v301 = vsel %vm245, %v296, %v300
  %v303 = vshrl.u32 %v221, 16
  %v305 = vrot.slane %v303, 6
  %v306 = vshll.u32 %v221, 16
  %v308 = vrot.slane %v306, 7
  %v309 = vor.u32 %v305, %v308
  %v310 = vrot.slane %v309, 2
  %v312 = vshll.u32 %v222, 16
  %v314 = vrot.slane %v312, 7
  %v315 = vsel %vm245, %v310, %v314
  %v317 = vshrl.u32 %v229, 16
  %v319 = vrot.slane %v317, 6
  %v320 = vshll.u32 %v229, 16
  %v322 = vrot.slane %v320, 7
  %v323 = vor.u32 %v319, %v322
  %v324 = vrot.slane %v323, 2
  %v326 = vshll.u32 %v230, 16
  %v328 = vrot.slane %v326, 7
  %v329 = vsel %vm245, %v324, %v328
  %v331 = vshrl.u32 %v237, 16
  %v333 = vrot.slane %v331, 6
  %v334 = vshll.u32 %v237, 16
  %v336 = vrot.slane %v334, 7
  %v337 = vor.u32 %v333, %v336
  %v338 = vrot.slane %v337, 2
  %v340 = vshll.u32 %v238, 16
  %v342 = vrot.slane %v340, 7
  %v343 = vsel %vm245, %v338, %v342
  %vm344 = vcmask 1042434
  %vm345 = vmor %vm154, %vm344
  %vm346 = vcmask 1044484
  %vm347 = vmor %vm345, %vm346
  %vm348 = vcmask 1046534
  %vm349 = vmor %vm347, %vm348
  %v350 = vrot.slane %v189, 7
  %v351 = vrot.slane %v350, 2
  %v352 = vrot.slane %v190, 7
  %v353 = vsel %vm349, %v351, %v352
  %v354 = vrot.slane %v197, 7
  %v355 = vrot.slane %v354, 2
  %v356 = vrot.slane %v198, 7
  %v357 = vsel %vm349, %v355, %v356
  %v358 = vrot.slane %v205, 7
  %v359 = vrot.slane %v358, 2
  %v360 = vrot.slane %v206, 7
  %v361 = vsel %vm349, %v359, %v360
  %v362 = vrot.slane %v213, 7
  %v363 = vrot.slane %v362, 2
  %v364 = vrot.slane %v214, 7
  %v365 = vsel %vm349, %v363, %v364
  %v366 = vrot.slane %v221, 7
  %v367 = vrot.slane %v366, 2
  %v368 = vrot.slane %v222, 7
  %v369 = vsel %vm349, %v367, %v368
  %v370 = vrot.slane %v229, 7
  %v371 = vrot.slane %v370, 2
  %v372 = vrot.slane %v230, 7
  %v373 = vsel %vm349, %v371, %v372
  %v374 = vrot.slane %v237, 7
  %v375 = vrot.slane %v374, 2
  %v376 = vrot.slane %v238, 7
  %v377 = vsel %vm349, %v375, %v376
  %v381 = vunpack.c.l.s4 1983009808
  %v382 = vunpack.c.0.s8 %v381
  %v383 = vlaneseq
  %v384 = vshrl.u32 %v383, 7
  %v385 = vsub.s32 %v382, %v384
  %v386 = vrot.slane %v171, %v385
  %v387 = vcombine.high %v386, %v386
  %v389 = vunpack.c.l.s4 1983009808
  %v390 = vunpack.c.0.s8 %v389
  %v391 = vlaneseq
  %v392 = vshrl.u32 %v391, 7
  %v393 = vsub.s32 %v390, %v392
  %v394 = vrot.slane %v175, %v393
  %v395 = vcombine.high %v394, %v394
  %v397 = vshrl.u32 %v386, 16
  %v399 = vrot.slane %v397, 6
  %v400 = vshll.u32 %v386, 16
  %v402 = vrot.slane %v400, 7
  %v403 = vor.u32 %v399, %v402
  %v404 = vrot.slane %v403, 2
  %v406 = vshll.u32 %v387, 16
  %v408 = vrot.slane %v406, 7
  %v409 = vsel %vm245, %v404, %v408
  %v411 = vshrl.u32 %v394, 16
  %v413 = vrot.slane %v411, 6
  %v414 = vshll.u32 %v394, 16
  %v416 = vrot.slane %v414, 7
  %v417 = vor.u32 %v413, %v416
  %v418 = vrot.slane %v417, 2
  %v420 = vshll.u32 %v395, 16
  %v422 = vrot.slane %v420, 7
  %v423 = vsel %vm245, %v418, %v422
  %v424 = vrot.slane %v386, 7
  %v425 = vrot.slane %v424, 2
  %v426 = vrot.slane %v387, 7
  %v427 = vsel %vm349, %v425, %v426
  %v428 = vrot.slane %v394, 7
  %v429 = vrot.slane %v428, 2
  %v430 = vrot.slane %v395, 7
  %v431 = vsel %vm349, %v429, %v430
  %v432 = vcombine.low 0, %v168
  %v433 = vcombine.low %v169, %v170
  %v435 = vunpack.c.l.s4 1983009808
  %v436 = vunpack.c.0.s8 %v435
  %v437 = vlaneseq
  %v438 = vshrl.u32 %v437, 7
  %v439 = vsub.s32 %v436, %v438
  %v440 = vrot.slane %v432, %v439
  %v442 = vunpack.c.l.s4 1983009808
  %v443 = vunpack.c.0.s8 %v442
  %v444 = vlaneseq
  %v445 = vshrl.u32 %v444, 7
  %v446 = vsub.s32 %v443, %v445
  %v447 = vrot.slane %v433, %v446
  %v448 = vcombine.low %v440, %v447
  %v449 = vcombine.low 0, %v172
  %v450 = vcombine.low %v173, %v174
  %v452 = vunpack.c.l.s4 1983009808
  %v453 = vunpack.c.0.s8 %v452
  %v454 = vlaneseq
  %v455 = vshrl.u32 %v454, 7
  %v456 = vsub.s32 %v453, %v455
  %v457 = vrot.slane %v449, %v456
  %v459 = vunpack.c.l.s4 1983009808
  %v460 = vunpack.c.0.s8 %v459
  %v461 = vlaneseq
  %v462 = vshrl.u32 %v461, 7
  %v463 = vsub.s32 %v460, %v462
  %v464 = vrot.slane %v450, %v463
  %v465 = vcombine.low %v457, %v464
  %v466 = vcombine.low %v259, %v273
  %v467 = vcombine.low %v287, %v301
  %v469 = vunpack.c.l.s4 1983009808
  %v470 = vunpack.c.0.s8 %v469
  %v471 = vlaneseq
  %v472 = vshrl.u32 %v471, 7
  %v473 = vsub.s32 %v470, %v472
  %v474 = vrot.slane %v466, %v473
  %v476 = vunpack.c.l.s4 1983009808
  %v477 = vunpack.c.0.s8 %v476
  %v478 = vlaneseq
  %v479 = vshrl.u32 %v478, 7
  %v480 = vsub.s32 %v477, %v479
  %v481 = vrot.slane %v467, %v480
  %v482 = vcombine.low %v474, %v481
  %v483 = vcombine.low %v259, %v315
  %v484 = vcombine.low %v329, %v343
  %v486 = vunpack.c.l.s4 1983009808
  %v487 = vunpack.c.0.s8 %v486
  %v488 = vlaneseq
  %v489 = vshrl.u32 %v488, 7
  %v490 = vsub.s32 %v487, %v489
  %v491 = vrot.slane %v483, %v490
  %v493 = vunpack.c.l.s4 1983009808
  %v494 = vunpack.c.0.s8 %v493
  %v495 = vlaneseq
  %v496 = vshrl.u32 %v495, 7
  %v497 = vsub.s32 %v494, %v496
  %v498 = vrot.slane %v484, %v497
  %v499 = vcombine.low %v491, %v498
  %500 = vrot.lane.b32.xlu0 %v482, 32
  %v501 = vpop.permute.xlu0 %500
  %502 = vrot.lane.b32.xlu0 %v499, 32
  %v503 = vpop.permute.xlu0 %502
  %v504 = vcombine.low %v353, %v357
  %v505 = vcombine.low %v361, %v365
  %v507 = vunpack.c.l.s4 1983009808
  %v508 = vunpack.c.0.s8 %v507
  %v509 = vlaneseq
  %v510 = vshrl.u32 %v509, 7
  %v511 = vsub.s32 %v508, %v510
  %v512 = vrot.slane %v504, %v511
  %v514 = vunpack.c.l.s4 1983009808
  %v515 = vunpack.c.0.s8 %v514
  %v516 = vlaneseq
  %v517 = vshrl.u32 %v516, 7
  %v518 = vsub.s32 %v515, %v517
  %v519 = vrot.slane %v505, %v518
  %v520 = vcombine.low %v512, %v519
  %v521 = vcombine.low %v353, %v369
  %v522 = vcombine.low %v373, %v377
  %v524 = vunpack.c.l.s4 1983009808
  %v525 = vunpack.c.0.s8 %v524
  %v526 = vlaneseq
  %v527 = vshrl.u32 %v526, 7
  %v528 = vsub.s32 %v525, %v527
  %v529 = vrot.slane %v521, %v528
  %v531 = vunpack.c.l.s4 1983009808
  %v532 = vunpack.c.0.s8 %v531
  %v533 = vlaneseq
  %v534 = vshrl.u32 %v533, 7
  %v535 = vsub.s32 %v532, %v534
  %v536 = vrot.slane %v522, %v535
  %v537 = vcombine.low %v529, %v536
  %538 = vrot.lane.b32.xlu0 %v520, 64
  %v539 = vpop.permute.xlu0 %538
  %540 = vrot.lane.b32.xlu0 %v537, 64
  %v541 = vpop.permute.xlu0 %540
  %v542 = vcombine.low %v168, %v169
  %v543 = vcombine.low %v170, %v171
  %v545 = vunpack.c.l.s4 1983009808
  %v546 = vunpack.c.0.s8 %v545
  %v547 = vlaneseq
  %v548 = vshrl.u32 %v547, 7
  %v549 = vsub.s32 %v546, %v548
  %v550 = vrot.slane %v542, %v549
  %v552 = vunpack.c.l.s4 1983009808
  %v553 = vunpack.c.0.s8 %v552
  %v554 = vlaneseq
  %v555 = vshrl.u32 %v554, 7
  %v556 = vsub.s32 %v553, %v555
  %v557 = vrot.slane %v543, %v556
  %v558 = vcombine.low %v550, %v557
  %v559 = vcombine.low %v172, %v173
  %v560 = vcombine.low %v174, %v175
  %v562 = vunpack.c.l.s4 1983009808
  %v563 = vunpack.c.0.s8 %v562
  %v564 = vlaneseq
  %v565 = vshrl.u32 %v564, 7
  %v566 = vsub.s32 %v563, %v565
  %v567 = vrot.slane %v559, %v566
  %v569 = vunpack.c.l.s4 1983009808
  %v570 = vunpack.c.0.s8 %v569
  %v571 = vlaneseq
  %v572 = vshrl.u32 %v571, 7
  %v573 = vsub.s32 %v570, %v572
  %v574 = vrot.slane %v560, %v573
  %v575 = vcombine.low %v567, %v574
  %576 = vrot.lane.b32.xlu0 %v558, 96
  %v577 = vpop.permute.xlu0 %576
  %578 = vrot.lane.b32.xlu0 %v575, 96
  %v579 = vpop.permute.xlu0 %578
  %v580 = vcombine.low %v273, %v287
  %v581 = vcombine.low %v301, %v409
  %v583 = vunpack.c.l.s4 1983009808
  %v584 = vunpack.c.0.s8 %v583
  %v585 = vlaneseq
  %v586 = vshrl.u32 %v585, 7
  %v587 = vsub.s32 %v584, %v586
  %v588 = vrot.slane %v580, %v587
  %v590 = vunpack.c.l.s4 1983009808
  %v591 = vunpack.c.0.s8 %v590
  %v592 = vlaneseq
  %v593 = vshrl.u32 %v592, 7
  %v594 = vsub.s32 %v591, %v593
  %v595 = vrot.slane %v581, %v594
  %v596 = vcombine.low %v588, %v595
  %v597 = vcombine.low %v315, %v329
  %v598 = vcombine.low %v343, %v423
  %v600 = vunpack.c.l.s4 1983009808
  %v601 = vunpack.c.0.s8 %v600
  %v602 = vlaneseq
  %v603 = vshrl.u32 %v602, 7
  %v604 = vsub.s32 %v601, %v603
  %v605 = vrot.slane %v597, %v604
  %v607 = vunpack.c.l.s4 1983009808
  %v608 = vunpack.c.0.s8 %v607
  %v609 = vlaneseq
  %v610 = vshrl.u32 %v609, 7
  %v611 = vsub.s32 %v608, %v610
  %v612 = vrot.slane %v598, %v611
  %v613 = vcombine.low %v605, %v612
  %v614 = vcombine.low %v357, %v361
  %v615 = vcombine.low %v365, %v427
  %v617 = vunpack.c.l.s4 1983009808
  %v618 = vunpack.c.0.s8 %v617
  %v619 = vlaneseq
  %v620 = vshrl.u32 %v619, 7
  %v621 = vsub.s32 %v618, %v620
  %v622 = vrot.slane %v614, %v621
  %v624 = vunpack.c.l.s4 1983009808
  %v625 = vunpack.c.0.s8 %v624
  %v626 = vlaneseq
  %v627 = vshrl.u32 %v626, 7
  %v628 = vsub.s32 %v625, %v627
  %v629 = vrot.slane %v615, %v628
  %v630 = vcombine.low %v622, %v629
  %v631 = vcombine.low %v369, %v373
  %v632 = vcombine.low %v377, %v431
  %v634 = vunpack.c.l.s4 1983009808
  %v635 = vunpack.c.0.s8 %v634
  %v636 = vlaneseq
  %v637 = vshrl.u32 %v636, 7
  %v638 = vsub.s32 %v635, %v637
  %v639 = vrot.slane %v631, %v638
  %v641 = vunpack.c.l.s4 1983009808
  %v642 = vunpack.c.0.s8 %v641
  %v643 = vlaneseq
  %v644 = vshrl.u32 %v643, 7
  %v645 = vsub.s32 %v642, %v644
  %v646 = vrot.slane %v632, %v645
  %v647 = vcombine.low %v639, %v646
  %648 = vrot.lane.b32.xlu0 %v630, 32
  %v649 = vpop.permute.xlu0 %648
  %650 = vrot.lane.b32.xlu0 %v647, 32
  %v651 = vpop.permute.xlu0 %650
  %v652 = vcombine.low %v171, 0
  %v654 = vunpack.c.l.s4 1983009808
  %v655 = vunpack.c.0.s8 %v654
  %v656 = vlaneseq
  %v657 = vshrl.u32 %v656, 7
  %v658 = vsub.s32 %v655, %v657
  %v659 = vrot.slane %v652, %v658
  %v660 = vcombine.low %v447, %v659
  %v661 = vcombine.low %v175, 0
  %v663 = vunpack.c.l.s4 1983009808
  %v664 = vunpack.c.0.s8 %v663
  %v665 = vlaneseq
  %v666 = vshrl.u32 %v665, 7
  %v667 = vsub.s32 %v664, %v666
  %v668 = vrot.slane %v661, %v667
  %v669 = vcombine.low %v464, %v668
  %670 = vrot.lane.b32.xlu0 %v660, 64
  %v671 = vpop.permute.xlu0 %670
  %672 = vrot.lane.b32.xlu0 %v669, 64
  %v673 = vpop.permute.xlu0 %672
  %v674 = vcombine.low %v409, %v259
  %v676 = vunpack.c.l.s4 1983009808
  %v677 = vunpack.c.0.s8 %v676
  %v678 = vlaneseq
  %v679 = vshrl.u32 %v678, 7
  %v680 = vsub.s32 %v677, %v679
  %v681 = vrot.slane %v674, %v680
  %v682 = vcombine.low %v481, %v681
  %v683 = vcombine.low %v423, %v259
  %v685 = vunpack.c.l.s4 1983009808
  %v686 = vunpack.c.0.s8 %v685
  %v687 = vlaneseq
  %v688 = vshrl.u32 %v687, 7
  %v689 = vsub.s32 %v686, %v688
  %v690 = vrot.slane %v683, %v689
  %v691 = vcombine.low %v498, %v690
  %692 = vrot.lane.b32.xlu0 %v682, 96
  %v693 = vpop.permute.xlu0 %692
  %694 = vrot.lane.b32.xlu0 %v691, 96
  %v695 = vpop.permute.xlu0 %694
  %v696 = vcombine.low %v427, %v353
  %v698 = vunpack.c.l.s4 1983009808
  %v699 = vunpack.c.0.s8 %v698
  %v700 = vlaneseq
  %v701 = vshrl.u32 %v700, 7
  %v702 = vsub.s32 %v699, %v701
  %v703 = vrot.slane %v696, %v702
  %v704 = vcombine.low %v519, %v703
  %v705 = vcombine.low %v431, %v353
  %v707 = vunpack.c.l.s4 1983009808
  %v708 = vunpack.c.0.s8 %v707
  %v709 = vlaneseq
  %v710 = vshrl.u32 %v709, 7
  %v711 = vsub.s32 %v708, %v710
  %v712 = vrot.slane %v705, %v711
  %v713 = vcombine.low %v536, %v712
  %vm714 = vcmask 261120
  %v717 = vsel %vm714, %v448, %v501
  %v720 = vsel %vm714, %v465, %v503
  %vm721 = vcmask 523264
  %v723 = vsel %vm721, %v717, %v539
  %v725 = vsel %vm721, %v720, %v541
  %vm726 = vcmask 785408
  %v728 = vsel %vm726, %v723, %v577
  %v731 = vsel %vm726, %v725, %v579
  %v735 = vsel %vm714, %v596, %v649
  %v738 = vsel %vm714, %v613, %v651
  %v740 = vsel %vm721, %v735, %v671
  %v742 = vsel %vm721, %v738, %v673
  %v744 = vsel %vm726, %v740, %v693
  %v747 = vsel %vm726, %v742, %v695
  %v749 = vld [vmem:[%s1] sm:$0xf]
  %v750 = vld [vmem:[%s1 + $0x4] sm:$0xf]
  %v751 = vld [vmem:[%s1 + $0x8] sm:$0xf]
  %v752 = vld [vmem:[%s1 + $0xc] sm:$0xf]
  %v753 = vld [vmem:[%s1 + $0x10] sm:$0xf]
  %v754 = vld [vmem:[%s1 + $0x14] sm:$0xf]
  %v755 = vld [vmem:[%s1 + $0x18] sm:$0xf]
  %v756 = vld [vmem:[%s1 + $0x1c] sm:$0xf]
  %v757 = vld [vmem:[%s1 + $0x20] sm:$0xf]
  %v758 = vld [vmem:[%s1 + $0x24] sm:$0xf]
  %v759 = vld [vmem:[%s1 + $0x28] sm:$0xf]
  %v760 = vld [vmem:[%s1 + $0x2c] sm:$0xf]
  %v761 = vld [vmem:[%s1 + $0x30] sm:$0xf]
  %v762 = vld [vmem:[%s1 + $0x34] sm:$0xf]
  %v763 = vld [vmem:[%s1 + $0x38] sm:$0xf]
  %v764 = vld [vmem:[%s1 + $0x3c] sm:$0xf]
  %v765 = vld [vmem:[%s1 + $0x40] sm:$0xf]
  %v766 = vld [vmem:[%s1 + $0x44] sm:$0xf]
  %v767 = vld [vmem:[%s1 + $0x48] sm:$0xf]
  %v768 = vld [vmem:[%s1 + $0x4c] sm:$0xf]
  %v769 = vld [vmem:[%s1 + $0x50] sm:$0xf]
  %v770 = vld [vmem:[%s1 + $0x54] sm:$0xf]
  %v771 = vld [vmem:[%s1 + $0x58] sm:$0xf]
  %v772 = vld [vmem:[%s1 + $0x5c] sm:$0xf]
  %v773 = vld [vmem:[%s1 + $0x60] sm:$0xf]
  %v774 = vld [vmem:[%s1 + $0x64] sm:$0xf]
  %v775 = vld [vmem:[%s1 + $0x68] sm:$0xf]
  %v776 = vld [vmem:[%s1 + $0x6c] sm:$0xf]
  %v777 = vld [vmem:[%s1 + $0x70] sm:$0xf]
  %v778 = vld [vmem:[%s1 + $0x74] sm:$0xf]
  %v779 = vld [vmem:[%s1 + $0x78] sm:$0xf]
  %v780 = vld [vmem:[%s1 + $0x7c] sm:$0xf]
  %v781 = vld [vmem:[%s1 + $0x80] sm:$0xf]
  %v782 = vld [vmem:[%s1 + $0x84] sm:$0xf]
  %v783 = vld [vmem:[%s1 + $0x88] sm:$0xf]
  %v784 = vld [vmem:[%s1 + $0x8c] sm:$0xf]
  %v821 = vunpack.c.l.b16 %v749
  %v822 = vunpack.c.l.b16 %v750
  %v823 = vunpack.c.l.b16 %v751
  %v824 = vunpack.c.l.b16 %v752
  %v825 = vunpack.c.l.b16 %v753
  %v826 = vunpack.c.l.b16 %v754
  %v827 = vunpack.c.l.b16 %v755
  %v828 = vunpack.c.l.b16 %v756
  %v829 = vunpack.c.l.b16 %v757
  %v830 = vunpack.c.l.b16 %v758
  %v831 = vunpack.c.l.b16 %v759
  %v832 = vunpack.c.l.b16 %v760
  %v833 = vunpack.c.l.b16 %v761
  %v834 = vunpack.c.l.b16 %v762
  %v835 = vunpack.c.l.b16 %v763
  %v836 = vunpack.c.l.b16 %v764
  %v837 = vunpack.c.l.b16 %v765
  %v838 = vunpack.c.l.b16 %v766
  %v839 = vunpack.c.l.b16 %v767
  %v840 = vunpack.c.l.b16 %v768
  %v841 = vunpack.c.l.b16 %v769
  %v842 = vunpack.c.l.b16 %v770
  %v843 = vunpack.c.l.b16 %v771
  %v844 = vunpack.c.l.b16 %v772
  %v845 = vunpack.c.l.b16 %v773
  %v846 = vunpack.c.l.b16 %v774
  %v847 = vunpack.c.l.b16 %v775
  %v848 = vunpack.c.l.b16 %v776
  %v849 = vunpack.c.l.b16 %v777
  %v850 = vunpack.c.l.b16 %v778
  %v851 = vunpack.c.l.b16 %v779
  %v852 = vunpack.c.l.b16 %v780
  %v853 = vunpack.c.l.b16 %v781
  %v854 = vunpack.c.l.b16 %v782
  %v855 = vunpack.c.l.b16 %v783
  %v856 = vunpack.c.l.b16 %v784
  %v857 = vpack.c.b16 %v822, %v821
  %v858 = vpack.c.b16 %v824, %v823
  %v859 = vpack.c.b16 %v826, %v825
  %v860 = vpack.c.b16 %v828, %v827
  %v861 = vpack.c.b16 %v830, %v829
  %v862 = vpack.c.b16 %v832, %v831
  %v863 = vpack.c.b16 %v834, %v833
  %v864 = vpack.c.b16 %v836, %v835
  %v865 = vpack.c.b16 %v838, %v837
  %v866 = vpack.c.b16 %v840, %v839
  %v867 = vpack.c.b16 %v842, %v841
  %v868 = vpack.c.b16 %v844, %v843
  %v869 = vpack.c.b16 %v846, %v845
  %v870 = vpack.c.b16 %v848, %v847
  %v871 = vpack.c.b16 %v850, %v849
  %v872 = vpack.c.b16 %v852, %v851
  %v873 = vpack.c.b16 %v854, %v853
  %v874 = vpack.c.b16 %v856, %v855
  %v894 = vsel %vm714, %v704, 0
  %v897 = vsel %vm714, %v713, 0
  %899 = vmatprep.subr.bf16.mxu0 0
  %900 = vmatpush1.bf16.msra.mxu0 %v864
  %901 = vmatprep.subr.bf16.mxu0 0
  %902 = vmatpush1.bf16.msra.mxu0 %v863
  %903 = vmatprep.subr.bf16.mxu0 0
  %904 = vmatpush1.bf16.msra.mxu0 %v862
  %905 = vmatprep.subr.bf16.mxu0 0
  %906 = vmatpush1.bf16.msra.mxu0 %v861
  %907 = vmatprep.subr.bf16.mxu0 0
  %908 = vmatpush1.bf16.msra.mxu0 %v860
  %909 = vmatprep.subr.bf16.mxu0 0
  %910 = vmatpush1.bf16.msra.mxu0 %v859
  %911 = vmatprep.subr.bf16.mxu0 0
  %912 = vmatpush1.bf16.msra.mxu0 %v858
  %913 = vmatprep.subr.bf16.mxu0 0
  %914 = vmatpush1.bf16.msra.mxu0 %v857
  %915 = vmatprep.subr.bf16.mxu0 0
  %916 = vmatpush2.bf16.msra.mxu0 %v872
  %917 = vmatprep.subr.bf16.mxu0 0
  %918 = vmatpush2.bf16.msra.mxu0 %v871
  %919 = vmatprep.subr.bf16.mxu0 0
  %920 = vmatpush2.bf16.msra.mxu0 %v870
  %921 = vmatprep.subr.bf16.mxu0 0
  %922 = vmatpush2.bf16.msra.mxu0 %v869
  %923 = vmatprep.subr.bf16.mxu0 0
  %924 = vmatpush2.bf16.msra.mxu0 %v868
  %925 = vmatprep.subr.bf16.mxu0 0
  %926 = vmatpush2.bf16.msra.mxu0 %v867
  %927 = vmatprep.subr.bf16.mxu0 0
  %928 = vmatpush2.bf16.msra.mxu0 %v866
  %929 = vmatprep.subr.bf16.mxu0 0
  %930 = vmatpush2.bf16.msra.mxu0 %v865
  %931 = vmatprep.mubr.bf16.mxu0 %v744
  %932 = vmatmul.mubr.bf16.gmra.mxu0 %v728
  %v933 = vpop.f32.mrf.mxu0
  %v934 = vadd.f32 0.0, %v933
  %v935 = vpop.f32.mrf.mxu0
  %v936 = vpop.f32.mrf.mxu0
  %v937 = vadd.f32 0.0, %v936
  %v938 = vpop.f32.mrf.mxu0
  %939 = vmatprep.mubr.bf16.mxu0 %v747
  %940 = vmatmul.mubr.bf16.gmra.mxu0 %v731
  %v941 = vpop.f32.mrf.mxu0
  %v942 = vadd.f32 0.0, %v941
  %v943 = vpop.f32.mrf.mxu0
  %v944 = vpop.f32.mrf.mxu0
  %v945 = vadd.f32 0.0, %v944
  %v946 = vpop.f32.mrf.mxu0
  %947 = vdwg.mxu0
  %948 = vmatprep.subr.bf16.mxu0 0
  %949 = vmatpush1.bf16.msra.mxu0 0
  %950 = vmatprep.subr.bf16.mxu0 0
  %951 = vmatpush1.bf16.msra.mxu0 0
  %952 = vmatprep.subr.bf16.mxu0 0
  %953 = vmatpush1.bf16.msra.mxu0 0
  %954 = vmatprep.subr.bf16.mxu0 0
  %955 = vmatpush1.bf16.msra.mxu0 0
  %956 = vmatprep.subr.bf16.mxu0 0
  %957 = vmatpush1.bf16.msra.mxu0 0
  %958 = vmatprep.subr.bf16.mxu0 0
  %959 = vmatpush1.bf16.msra.mxu0 0
  %960 = vmatprep.subr.bf16.mxu0 0
  %961 = vmatpush1.bf16.msra.mxu0 %v874
  %962 = vmatprep.subr.bf16.mxu0 0
  %963 = vmatpush1.bf16.msra.mxu0 %v873
  %964 = vmatprep.subr.bf16.mxu0 0
  %965 = vmatpush2.bf16.msra.mxu0 0
  %966 = vmatprep.subr.bf16.mxu0 0
  %967 = vmatpush2.bf16.msra.mxu0 0
  %968 = vmatprep.subr.bf16.mxu0 0
  %969 = vmatpush2.bf16.msra.mxu0 0
  %970 = vmatprep.subr.bf16.mxu0 0
  %971 = vmatpush2.bf16.msra.mxu0 0
  %972 = vmatprep.subr.bf16.mxu0 0
  %973 = vmatpush2.bf16.msra.mxu0 0
  %974 = vmatprep.subr.bf16.mxu0 0
  %975 = vmatpush2.bf16.msra.mxu0 0
  %976 = vmatprep.subr.bf16.mxu0 0
  %977 = vmatpush2.bf16.msra.mxu0 0
  %978 = vmatprep.subr.bf16.mxu0 0
  %979 = vmatpush2.bf16.msra.mxu0 0
  %980 = vmatprep.mubr.bf16.mxu0 0
  %981 = vmatmul.mubr.bf16.gmra.mxu0 %v894
  %v982 = vpop.f32.mrf.mxu0
  %v983 = vadd.f32 %v934, %v982
  %v984 = vpop.f32.mrf.mxu0
  %v985 = vpop.f32.mrf.mxu0
  %v986 = vadd.f32 %v937, %v985
  %v987 = vpop.f32.mrf.mxu0
  %988 = vmatprep.mubr.bf16.mxu0 0
  %989 = vmatmul.mubr.bf16.gmra.mxu0 %v897
  %v990 = vpop.f32.mrf.mxu0
  %v991 = vadd.f32 %v942, %v990
  %v992 = vpop.f32.mrf.mxu0
  %v993 = vpop.f32.mrf.mxu0
  %v994 = vadd.f32 %v945, %v993
  %v995 = vpop.f32.mrf.mxu0
  %996 = vdwg.mxu0
  %v997 = vld [vmem:[%s2] sm:$0x1]
  %v998 = vld [vmem:[%s3] sm:$0x1]
  %v999 = vsel %vm721, %v983, 0.0
  %v1000 = vsel %vm721, %v986, 0.0
  %v1001 = vadd.f32 %v999, %v1000
  %v1002 = vsel %vm721, %v991, 0.0
  %v1003 = vadd.f32 %v1001, %v1002
  %v1004 = vsel %vm721, %v994, 0.0
  %v1005 = vadd.f32 %v1003, %v1004
  %v1006 = vrot.slane %v1005, 4
  %v1007 = vadd.f32 %v1005, %v1006
  %v1008 = vrot.slane %v1007, 2
  %v1009 = vadd.f32 %v1007, %v1008
  %v1010 = vrot.slane %v1009, 1
  %v1011 = vadd.f32 %v1009, %v1010
  %v1012 = vrcp.pop 32.0
  %v1013 = vmul.f32 %v1011, %v1012
  %v1014 = vmul.f32 %v983, %v983
  %v1015 = vmul.f32 %v986, %v986
  %v1016 = vmul.f32 %v991, %v991
  %v1017 = vmul.f32 %v994, %v994
  %v1018 = vsel %vm721, %v1014, 0.0
  %v1019 = vsel %vm721, %v1015, 0.0
  %v1020 = vadd.f32 %v1018, %v1019
  %v1021 = vsel %vm721, %v1016, 0.0
  %v1022 = vadd.f32 %v1020, %v1021
  %v1023 = vsel %vm721, %v1017, 0.0
  %v1024 = vadd.f32 %v1022, %v1023
  %v1025 = vrot.slane %v1024, 4
  %v1026 = vadd.f32 %v1024, %v1025
  %v1027 = vrot.slane %v1026, 2
  %v1028 = vadd.f32 %v1026, %v1027
  %v1029 = vrot.slane %v1028, 1
  %v1030 = vadd.f32 %v1028, %v1029
  %v1031 = vmul.f32 %v1030, %v1012
  %v1032 = vmul.f32 %v1013, %v1013
  %v1033 = vsub.f32 %v1031, %v1032
  %v1034 = vmax.f32 %v1033, 0.0
  %v1035 = vadd.f32 %v1034, 1e-05
  %v1036 = vrsqrt.pop %v1035
  %v1037 = vmul.f32 %v997, %v1036
  %v1038 = vmul.f32 %v1013, %v1037
  %v1039 = vsub.f32 %v998, %v1038
  %v1041 = vlaneseq
  %v1042 = vshrl.u32 %v1041, 7
  %v1043 = vsub.s32 0, %v1042
  %v1044 = vrot.slane %v1037, %v1043
  %v1046 = vmul.f32 %v983, %v1044
  %v1047 = vmul.f32 %v986, %v1044
  %v1048 = vmul.f32 %v991, %v1044
  %v1049 = vmul.f32 %v994, %v1044
  %v1051 = vlaneseq
  %v1052 = vshrl.u32 %v1051, 7
  %v1053 = vsub.s32 0, %v1052
  %v1054 = vrot.slane %v1039, %v1053
  %v1056 = vadd.f32 %v1046, %v1054
  %v1057 = vadd.f32 %v1047, %v1054
  %v1058 = vadd.f32 %v1048, %v1054
  %v1059 = vadd.f32 %v1049, %v1054
  %v1060 = vmax.f32 %v1056, 0.0
  %v1061 = vmax.f32 %v1057, 0.0
  %v1062 = vmax.f32 %v1058, 0.0
  %v1063 = vmax.f32 %v1059, 0.0
  %v1068 = vcombine.high %v1060, %v1060
  %v1070 = vunpack.c.l.s4 1983009808
  %v1071 = vunpack.c.0.s8 %v1070
  %v1072 = vlaneseq
  %v1073 = vshrl.u32 %v1072, 7
  %v1074 = vsub.s32 %v1071, %v1073
  %v1075 = vrot.slane %v1060, %v1074
  %v1077 = vunpack.c.l.s4 1983009808
  %v1078 = vunpack.c.0.s8 %v1077
  %v1079 = vlaneseq
  %v1080 = vshrl.u32 %v1079, 7
  %v1081 = vsub.s32 %v1078, %v1080
  %v1082 = vrot.slane %v1068, %v1081
  %v1083 = vcombine.high %v1075, %v1075
  %v1084 = vcombine.high %v1082, %v1082
  %v1085 = vcombine.high %v1061, %v1061
  %v1087 = vunpack.c.l.s4 1983009808
  %v1088 = vunpack.c.0.s8 %v1087
  %v1089 = vlaneseq
  %v1090 = vshrl.u32 %v1089, 7
  %v1091 = vsub.s32 %v1088, %v1090
  %v1092 = vrot.slane %v1061, %v1091
  %v1094 = vunpack.c.l.s4 1983009808
  %v1095 = vunpack.c.0.s8 %v1094
  %v1096 = vlaneseq
  %v1097 = vshrl.u32 %v1096, 7
  %v1098 = vsub.s32 %v1095, %v1097
  %v1099 = vrot.slane %v1085, %v1098
  %v1100 = vcombine.high %v1092, %v1092
  %v1101 = vcombine.high %v1099, %v1099
  %v1102 = vcombine.high %v1062, %v1062
  %v1104 = vunpack.c.l.s4 1983009808
  %v1105 = vunpack.c.0.s8 %v1104
  %v1106 = vlaneseq
  %v1107 = vshrl.u32 %v1106, 7
  %v1108 = vsub.s32 %v1105, %v1107
  %v1109 = vrot.slane %v1062, %v1108
  %v1111 = vunpack.c.l.s4 1983009808
  %v1112 = vunpack.c.0.s8 %v1111
  %v1113 = vlaneseq
  %v1114 = vshrl.u32 %v1113, 7
  %v1115 = vsub.s32 %v1112, %v1114
  %v1116 = vrot.slane %v1102, %v1115
  %v1117 = vcombine.high %v1109, %v1109
  %v1118 = vcombine.high %v1116, %v1116
  %v1119 = vcombine.high %v1063, %v1063
  %v1121 = vunpack.c.l.s4 1983009808
  %v1122 = vunpack.c.0.s8 %v1121
  %v1123 = vlaneseq
  %v1124 = vshrl.u32 %v1123, 7
  %v1125 = vsub.s32 %v1122, %v1124
  %v1126 = vrot.slane %v1063, %v1125
  %v1128 = vunpack.c.l.s4 1983009808
  %v1129 = vunpack.c.0.s8 %v1128
  %v1130 = vlaneseq
  %v1131 = vshrl.u32 %v1130, 7
  %v1132 = vsub.s32 %v1129, %v1131
  %v1133 = vrot.slane %v1119, %v1132
  %v1134 = vcombine.high %v1126, %v1126
  %v1135 = vcombine.high %v1133, %v1133
  %v1152 = vrot.slane %v1075, 7
  %v1153 = vrot.slane %v1152, 2
  %v1154 = vrot.slane %v1083, 7
  %v1155 = vrot.slane %v1154, 2
  %v1156 = vrot.slane %v1082, 7
  %v1157 = vrot.slane %v1156, 2
  %v1158 = vrot.slane %v1084, 7
  %v1159 = vrot.slane %v1158, 2
  %v1160 = vrot.slane %v1092, 7
  %v1161 = vrot.slane %v1160, 2
  %v1162 = vrot.slane %v1100, 7
  %v1163 = vrot.slane %v1162, 2
  %v1164 = vrot.slane %v1099, 7
  %v1165 = vrot.slane %v1164, 2
  %v1166 = vrot.slane %v1101, 7
  %v1167 = vrot.slane %v1166, 2
  %v1168 = vrot.slane %v1109, 7
  %v1169 = vrot.slane %v1168, 2
  %v1170 = vrot.slane %v1117, 7
  %v1171 = vrot.slane %v1170, 2
  %v1172 = vrot.slane %v1116, 7
  %v1173 = vrot.slane %v1172, 2
  %v1174 = vrot.slane %v1118, 7
  %v1175 = vrot.slane %v1174, 2
  %v1176 = vrot.slane %v1126, 7
  %v1177 = vrot.slane %v1176, 2
  %v1178 = vrot.slane %v1134, 7
  %v1179 = vrot.slane %v1178, 2
  %v1180 = vrot.slane %v1133, 7
  %v1181 = vrot.slane %v1180, 2
  %v1182 = vrot.slane %v1135, 7
  %v1183 = vrot.slane %v1182, 2
  %v1200 = vmax.f32 %v1075, %v1153
  %v1201 = vmax.f32 %v1083, %v1155
  %v1202 = vmax.f32 %v1082, %v1157
  %v1203 = vmax.f32 %v1084, %v1159
  %v1204 = vmax.f32 %v1092, %v1161
  %v1205 = vmax.f32 %v1100, %v1163
  %v1206 = vmax.f32 %v1099, %v1165
  %v1207 = vmax.f32 %v1101, %v1167
  %v1208 = vmax.f32 %v1109, %v1169
  %v1209 = vmax.f32 %v1117, %v1171
  %v1210 = vmax.f32 %v1116, %v1173
  %v1211 = vmax.f32 %v1118, %v1175
  %v1212 = vmax.f32 %v1126, %v1177
  %v1213 = vmax.f32 %v1134, %v1179
  %v1214 = vmax.f32 %v1133, %v1181
  %v1215 = vmax.f32 %v1135, %v1183
  %v1216 = vmax.f32 %v1200, %v1202
  %v1217 = vmax.f32 %v1201, %v1203
  %v1218 = vmax.f32 %v1204, %v1206
  %v1219 = vmax.f32 %v1205, %v1207
  %v1220 = vmax.f32 %v1208, %v1210
  %v1221 = vmax.f32 %v1209, %v1211
  %v1222 = vmax.f32 %v1212, %v1214
  %v1223 = vmax.f32 %v1213, %v1215
  %v1224 = vpack.c.bf16 %v1216, %v1216
  %v1225 = vpack.c.bf16 %v1217, %v1217
  %v1226 = vpack.c.bf16 %v1218, %v1218
  %v1227 = vpack.c.bf16 %v1219, %v1219
  %v1228 = vpack.c.bf16 %v1220, %v1220
  %v1229 = vpack.c.bf16 %v1221, %v1221
  %v1230 = vpack.c.bf16 %v1222, %v1222
  %v1231 = vpack.c.bf16 %v1223, %v1223
  %v1241 = vunpack.c.l.s4 1966171168
  %v1242 = vunpack.c.0.s8 %v1241
  %v1243 = vlaneseq
  %v1244 = vshrl.u32 %v1243, 7
  %v1245 = vsub.s32 %v1242, %v1244
  %v1246 = vrot.slane %v1224, %v1245
  %v1248 = vunpack.c.l.s4 1966171168
  %v1249 = vunpack.c.0.s8 %v1248
  %v1250 = vlaneseq
  %v1251 = vshrl.u32 %v1250, 7
  %v1252 = vsub.s32 %v1249, %v1251
  %v1253 = vrot.slane %v1246, %v1252
  %v1255 = vunpack.c.l.s4 1966171168
  %v1256 = vunpack.c.0.s8 %v1255
  %v1257 = vlaneseq
  %v1258 = vshrl.u32 %v1257, 7
  %v1259 = vsub.s32 %v1256, %v1258
  %v1260 = vrot.slane %v1225, %v1259
  %v1262 = vunpack.c.l.s4 1966171168
  %v1263 = vunpack.c.0.s8 %v1262
  %v1264 = vlaneseq
  %v1265 = vshrl.u32 %v1264, 7
  %v1266 = vsub.s32 %v1263, %v1265
  %v1267 = vrot.slane %v1260, %v1266
  %v1269 = vunpack.c.l.s4 1966171168
  %v1270 = vunpack.c.0.s8 %v1269
  %v1271 = vlaneseq
  %v1272 = vshrl.u32 %v1271, 7
  %v1273 = vsub.s32 %v1270, %v1272
  %v1274 = vrot.slane %v1226, %v1273
  %v1276 = vunpack.c.l.s4 1966171168
  %v1277 = vunpack.c.0.s8 %v1276
  %v1278 = vlaneseq
  %v1279 = vshrl.u32 %v1278, 7
  %v1280 = vsub.s32 %v1277, %v1279
  %v1281 = vrot.slane %v1274, %v1280
  %v1283 = vunpack.c.l.s4 1966171168
  %v1284 = vunpack.c.0.s8 %v1283
  %v1285 = vlaneseq
  %v1286 = vshrl.u32 %v1285, 7
  %v1287 = vsub.s32 %v1284, %v1286
  %v1288 = vrot.slane %v1227, %v1287
  %v1290 = vunpack.c.l.s4 1966171168
  %v1291 = vunpack.c.0.s8 %v1290
  %v1292 = vlaneseq
  %v1293 = vshrl.u32 %v1292, 7
  %v1294 = vsub.s32 %v1291, %v1293
  %v1295 = vrot.slane %v1288, %v1294
  %v1297 = vunpack.c.l.s4 1966171168
  %v1298 = vunpack.c.0.s8 %v1297
  %v1299 = vlaneseq
  %v1300 = vshrl.u32 %v1299, 7
  %v1301 = vsub.s32 %v1298, %v1300
  %v1302 = vrot.slane %v1228, %v1301
  %v1304 = vunpack.c.l.s4 1966171168
  %v1305 = vunpack.c.0.s8 %v1304
  %v1306 = vlaneseq
  %v1307 = vshrl.u32 %v1306, 7
  %v1308 = vsub.s32 %v1305, %v1307
  %v1309 = vrot.slane %v1302, %v1308
  %v1311 = vunpack.c.l.s4 1966171168
  %v1312 = vunpack.c.0.s8 %v1311
  %v1313 = vlaneseq
  %v1314 = vshrl.u32 %v1313, 7
  %v1315 = vsub.s32 %v1312, %v1314
  %v1316 = vrot.slane %v1229, %v1315
  %v1318 = vunpack.c.l.s4 1966171168
  %v1319 = vunpack.c.0.s8 %v1318
  %v1320 = vlaneseq
  %v1321 = vshrl.u32 %v1320, 7
  %v1322 = vsub.s32 %v1319, %v1321
  %v1323 = vrot.slane %v1316, %v1322
  %v1325 = vunpack.c.l.s4 1966171168
  %v1326 = vunpack.c.0.s8 %v1325
  %v1327 = vlaneseq
  %v1328 = vshrl.u32 %v1327, 7
  %v1329 = vsub.s32 %v1326, %v1328
  %v1330 = vrot.slane %v1230, %v1329
  %v1332 = vunpack.c.l.s4 1966171168
  %v1333 = vunpack.c.0.s8 %v1332
  %v1334 = vlaneseq
  %v1335 = vshrl.u32 %v1334, 7
  %v1336 = vsub.s32 %v1333, %v1335
  %v1337 = vrot.slane %v1330, %v1336
  %v1339 = vunpack.c.l.s4 1966171168
  %v1340 = vunpack.c.0.s8 %v1339
  %v1341 = vlaneseq
  %v1342 = vshrl.u32 %v1341, 7
  %v1343 = vsub.s32 %v1340, %v1342
  %v1344 = vrot.slane %v1231, %v1343
  %v1346 = vunpack.c.l.s4 1966171168
  %v1347 = vunpack.c.0.s8 %v1346
  %v1348 = vlaneseq
  %v1349 = vshrl.u32 %v1348, 7
  %v1350 = vsub.s32 %v1347, %v1349
  %v1351 = vrot.slane %v1344, %v1350
  %v1353 = vunpack.c.l.s4 1935823168
  %v1354 = vunpack.c.0.s8 %v1353
  %v1355 = vlaneseq
  %v1356 = vshrl.u32 %v1355, 7
  %v1357 = vsub.s32 %v1354, %v1356
  %v1358 = vrot.slane %v1253, %v1357
  %v1360 = vunpack.c.l.s4 1935823168
  %v1361 = vunpack.c.0.s8 %v1360
  %v1362 = vlaneseq
  %v1363 = vshrl.u32 %v1362, 7
  %v1364 = vsub.s32 %v1361, %v1363
  %v1365 = vrot.slane %v1358, %v1364
  %v1367 = vunpack.c.l.s4 1935823168
  %v1368 = vunpack.c.0.s8 %v1367
  %v1369 = vlaneseq
  %v1370 = vshrl.u32 %v1369, 7
  %v1371 = vsub.s32 %v1368, %v1370
  %v1372 = vrot.slane %v1267, %v1371
  %v1374 = vunpack.c.l.s4 1935823168
  %v1375 = vunpack.c.0.s8 %v1374
  %v1376 = vlaneseq
  %v1377 = vshrl.u32 %v1376, 7
  %v1378 = vsub.s32 %v1375, %v1377
  %v1379 = vrot.slane %v1372, %v1378
  %v1381 = vunpack.c.l.s4 1935823168
  %v1382 = vunpack.c.0.s8 %v1381
  %v1383 = vlaneseq
  %v1384 = vshrl.u32 %v1383, 7
  %v1385 = vsub.s32 %v1382, %v1384
  %v1386 = vrot.slane %v1281, %v1385
  %v1388 = vunpack.c.l.s4 1935823168
  %v1389 = vunpack.c.0.s8 %v1388
  %v1390 = vlaneseq
  %v1391 = vshrl.u32 %v1390, 7
  %v1392 = vsub.s32 %v1389, %v1391
  %v1393 = vrot.slane %v1386, %v1392
  %v1395 = vunpack.c.l.s4 1935823168
  %v1396 = vunpack.c.0.s8 %v1395
  %v1397 = vlaneseq
  %v1398 = vshrl.u32 %v1397, 7
  %v1399 = vsub.s32 %v1396, %v1398
  %v1400 = vrot.slane %v1295, %v1399
  %v1402 = vunpack.c.l.s4 1935823168
  %v1403 = vunpack.c.0.s8 %v1402
  %v1404 = vlaneseq
  %v1405 = vshrl.u32 %v1404, 7
  %v1406 = vsub.s32 %v1403, %v1405
  %v1407 = vrot.slane %v1400, %v1406
  %v1409 = vunpack.c.l.s4 1935823168
  %v1410 = vunpack.c.0.s8 %v1409
  %v1411 = vlaneseq
  %v1412 = vshrl.u32 %v1411, 7
  %v1413 = vsub.s32 %v1410, %v1412
  %v1414 = vrot.slane %v1309, %v1413
  %v1416 = vunpack.c.l.s4 1935823168
  %v1417 = vunpack.c.0.s8 %v1416
  %v1418 = vlaneseq
  %v1419 = vshrl.u32 %v1418, 7
  %v1420 = vsub.s32 %v1417, %v1419
  %v1421 = vrot.slane %v1414, %v1420
  %v1423 = vunpack.c.l.s4 1935823168
  %v1424 = vunpack.c.0.s8 %v1423
  %v1425 = vlaneseq
  %v1426 = vshrl.u32 %v1425, 7
  %v1427 = vsub.s32 %v1424, %v1426
  %v1428 = vrot.slane %v1323, %v1427
  %v1430 = vunpack.c.l.s4 1935823168
  %v1431 = vunpack.c.0.s8 %v1430
  %v1432 = vlaneseq
  %v1433 = vshrl.u32 %v1432, 7
  %v1434 = vsub.s32 %v1431, %v1433
  %v1435 = vrot.slane %v1428, %v1434
  %v1437 = vunpack.c.l.s4 1935823168
  %v1438 = vunpack.c.0.s8 %v1437
  %v1439 = vlaneseq
  %v1440 = vshrl.u32 %v1439, 7
  %v1441 = vsub.s32 %v1438, %v1440
  %v1442 = vrot.slane %v1337, %v1441
  %v1444 = vunpack.c.l.s4 1935823168
  %v1445 = vunpack.c.0.s8 %v1444
  %v1446 = vlaneseq
  %v1447 = vshrl.u32 %v1446, 7
  %v1448 = vsub.s32 %v1445, %v1447
  %v1449 = vrot.slane %v1442, %v1448
  %v1451 = vunpack.c.l.s4 1935823168
  %v1452 = vunpack.c.0.s8 %v1451
  %v1453 = vlaneseq
  %v1454 = vshrl.u32 %v1453, 7
  %v1455 = vsub.s32 %v1452, %v1454
  %v1456 = vrot.slane %v1351, %v1455
  %v1458 = vunpack.c.l.s4 1935823168
  %v1459 = vunpack.c.0.s8 %v1458
  %v1460 = vlaneseq
  %v1461 = vshrl.u32 %v1460, 7
  %v1462 = vsub.s32 %v1459, %v1461
  %v1463 = vrot.slane %v1456, %v1462
  %v1464 = vunpack.c.l.b16 %v1365
  %v1465 = vunpack.c.l.b16 %v1379
  %v1466 = vunpack.c.l.b16 %v1393
  %v1467 = vunpack.c.l.b16 %v1407
  %v1468 = vunpack.c.l.b16 %v1421
  %v1469 = vunpack.c.l.b16 %v1435
  %v1470 = vunpack.c.l.b16 %v1449
  %v1471 = vunpack.c.l.b16 %v1463
  %v1472 = vrot.slane %v1465, 7
  %vm1473 = vcmask 1041409
  %v1474 = vsel %vm1473, %v1472, %v1464
  %v1475 = vrot.slane %v1467, 7
  %v1476 = vsel %vm1473, %v1475, %v1466
  %v1477 = vrot.slane %v1469, 7
  %v1478 = vsel %vm1473, %v1477, %v1468
  %v1479 = vrot.slane %v1471, 7
  %v1480 = vsel %vm1473, %v1479, %v1470
  %v1481 = vpack.c.b16 %v1474, %v1474
  %v1482 = vpack.c.b16 %v1476, %v1476
  %v1483 = vpack.c.b16 %v1478, %v1478
  %v1484 = vpack.c.b16 %v1480, %v1480
  %v1486 = vunpack.c.l.s4 1966171168
  %v1487 = vunpack.c.0.s8 %v1486
  %v1488 = vlaneseq
  %v1489 = vshrl.u32 %v1488, 7
  %v1490 = vsub.s32 %v1487, %v1489
  %v1491 = vrot.slane %v1481, %v1490
  %v1493 = vunpack.c.l.s4 1966171168
  %v1494 = vunpack.c.0.s8 %v1493
  %v1495 = vlaneseq
  %v1496 = vshrl.u32 %v1495, 7
  %v1497 = vsub.s32 %v1494, %v1496
  %v1498 = vrot.slane %v1491, %v1497
  %v1500 = vunpack.c.l.s4 1966171168
  %v1501 = vunpack.c.0.s8 %v1500
  %v1502 = vlaneseq
  %v1503 = vshrl.u32 %v1502, 7
  %v1504 = vsub.s32 %v1501, %v1503
  %v1505 = vrot.slane %v1482, %v1504
  %v1507 = vunpack.c.l.s4 1966171168
  %v1508 = vunpack.c.0.s8 %v1507
  %v1509 = vlaneseq
  %v1510 = vshrl.u32 %v1509, 7
  %v1511 = vsub.s32 %v1508, %v1510
  %v1512 = vrot.slane %v1505, %v1511
  %v1514 = vunpack.c.l.s4 1966171168
  %v1515 = vunpack.c.0.s8 %v1514
  %v1516 = vlaneseq
  %v1517 = vshrl.u32 %v1516, 7
  %v1518 = vsub.s32 %v1515, %v1517
  %v1519 = vrot.slane %v1483, %v1518
  %v1521 = vunpack.c.l.s4 1966171168
  %v1522 = vunpack.c.0.s8 %v1521
  %v1523 = vlaneseq
  %v1524 = vshrl.u32 %v1523, 7
  %v1525 = vsub.s32 %v1522, %v1524
  %v1526 = vrot.slane %v1519, %v1525
  %v1528 = vunpack.c.l.s4 1966171168
  %v1529 = vunpack.c.0.s8 %v1528
  %v1530 = vlaneseq
  %v1531 = vshrl.u32 %v1530, 7
  %v1532 = vsub.s32 %v1529, %v1531
  %v1533 = vrot.slane %v1484, %v1532
  %v1535 = vunpack.c.l.s4 1966171168
  %v1536 = vunpack.c.0.s8 %v1535
  %v1537 = vlaneseq
  %v1538 = vshrl.u32 %v1537, 7
  %v1539 = vsub.s32 %v1536, %v1538
  %v1540 = vrot.slane %v1533, %v1539
  %vm1545 = vcmask 516096
  %1546 = vst.msk [vmem:[%s4] sm:$0x1] %vm1545, %v1498
  %1547 = vst.msk [vmem:[%s4 + $0x1] sm:$0x1] %vm1545, %v1512
  %1548 = vst.msk [vmem:[%s4 + $0x2] sm:$0x1] %vm1545, %v1526
  %1549 = vst.msk [vmem:[%s4 + $0x3] sm:$0x1] %vm1545, %v1540
  // Predicated region
  $region18: #{faster_style_transfer.9} parent=0 // pred_check
    _
  $region19: #{faster_style_transfer.9} parent=0 // pred_check_branch
    %1551 = sbr.rel (0) target = $region21
  $region20: #{faster_style_transfer.9} parent=0 // pred_region
    _
  $region21: #{faster_style_transfer.9} parent=0 // pred_fallthru
    _
  // Predicated region
  $region22: #{faster_style_transfer.9} parent=0 // pred_check
    _
  $region23: #{faster_style_transfer.9} parent=0 // pred_check_branch
    %1553 = sbr.rel (0) target = $region25
  $region24: #{faster_style_transfer.9} parent=0 // pred_region
    _
  $region25: #{faster_style_transfer.9} parent=0 // pred_fallthru
    _

// kernel: faster_style_transfer.8
$region0: #{faster_style_transfer.8}
  #allocation0 [shape = 'u32[]', space=smem, size = 0x4, offset = 0x4, fixed_abs, tag = 'smem constant byte address 0x4 - core index']
  #allocation1 [shape = 'u32[144,128]{1,0:T(1,128)}', space=vmem, size = 0x12000, scoped, tag = 'internal scratch']
  %s0 = inlined_call_operand.vmem [shape: bf16[2,8,8,16], index: 0, kind: input, shape index: {}]
  %s1 = inlined_call_operand.vmem [shape: bf16[144,32], index: 1, kind: input, shape index: {}]
  %s2 = inlined_call_operand.vmem [shape: f32[1,32], index: 2, kind: input, shape index: {}]
  %s3 = inlined_call_operand.vmem [shape: f32[1,32], index: 3, kind: input, shape index: {}]
  %s4 = inlined_call_operand.vmem [shape: bf16[2,4,4,32], index: 4, kind: output, shape index: {}]
  %s5 = sld [smem:[#allocation0]]
  $region26: #{faster_style_transfer.8} parent=0
    _
  %s7 = ssub.s32 1, %s5
  %s8 = scalar_select 0, %s7, %s5
  // Predicated region
  $region2: #{faster_style_transfer.8} parent=0 // pred_check
    _
  $region3: #{faster_style_transfer.8} parent=0 // pred_check_branch
    %10 = sbr.rel (0) target = $region5
  $region4: #{faster_style_transfer.8} parent=0 // pred_region
    _
  $region5: #{faster_style_transfer.8} parent=0 // pred_fallthru
    _
  // Predicated region
  $region6: #{faster_style_transfer.8} parent=0 // pred_check
    _
  $region7: #{faster_style_transfer.8} parent=0 // pred_check_branch
    %12 = sbr.rel (0) target = $region9
  $region8: #{faster_style_transfer.8} parent=0 // pred_region
    _
  $region9: #{faster_style_transfer.8} parent=0 // pred_fallthru
    _
  // Predicated region
  $region10: #{faster_style_transfer.8} parent=0 // pred_check
    _
  $region11: #{faster_style_transfer.8} parent=0 // pred_check_branch
    %14 = sbr.rel (0) target = $region13
  $region12: #{faster_style_transfer.8} parent=0 // pred_region
    _
  $region13: #{faster_style_transfer.8} parent=0 // pred_fallthru
    _
  // Predicated region
  $region14: #{faster_style_transfer.8} parent=0 // pred_check
    _
  $region15: #{faster_style_transfer.8} parent=0 // pred_check_branch
    %16 = sbr.rel (0) target = $region17
  $region16: #{faster_style_transfer.8} parent=0 // pred_region
    _
  $region17: #{faster_style_transfer.8} parent=0 // pred_fallthru
    _
  %v18 = vld [vmem:[%s0] sm:$0xf]
  %v19 = vld [vmem:[%s0 + $0x4] sm:$0xf]
  %v20 = vld [vmem:[%s0 + $0x8] sm:$0xf]
  %v21 = vld [vmem:[%s0 + $0xc] sm:$0xf]
  %v22 = vld [vmem:[%s0 + $0x10] sm:$0xf]
  %v23 = vld [vmem:[%s0 + $0x14] sm:$0xf]
  %v24 = vld [vmem:[%s0 + $0x18] sm:$0xf]
  %v25 = vld [vmem:[%s0 + $0x1c] sm:$0xf]
  %v26 = vld [vmem:[%s0 + $0x20] sm:$0xf]
  %v27 = vld [vmem:[%s0 + $0x24] sm:$0xf]
  %v28 = vld [vmem:[%s0 + $0x28] sm:$0xf]
  %v29 = vld [vmem:[%s0 + $0x2c] sm:$0xf]
  %v30 = vld [vmem:[%s0 + $0x30] sm:$0xf]
  %v31 = vld [vmem:[%s0 + $0x34] sm:$0xf]
  %v32 = vld [vmem:[%s0 + $0x38] sm:$0xf]
  %v33 = vld [vmem:[%s0 + $0x3c] sm:$0xf]
  %v50 = vunpack.c.l.b16 %v18
  %v51 = vunpack.c.l.b16 %v19
  %v52 = vunpack.c.l.b16 %v20
  %v53 = vunpack.c.l.b16 %v21
  %v54 = vunpack.c.l.b16 %v22
  %v55 = vunpack.c.l.b16 %v23
  %v56 = vunpack.c.l.b16 %v24
  %v57 = vunpack.c.l.b16 %v25
  %v58 = vunpack.c.l.b16 %v26
  %v59 = vunpack.c.l.b16 %v27
  %v60 = vunpack.c.l.b16 %v28
  %v61 = vunpack.c.l.b16 %v29
  %v62 = vunpack.c.l.b16 %v30
  %v63 = vunpack.c.l.b16 %v31
  %v64 = vunpack.c.l.b16 %v32
  %v65 = vunpack.c.l.b16 %v33
  %v66 = vpack.c.b16 %v50, %v50
  %v67 = vpack.c.b16 %v51, %v51
  %v68 = vpack.c.b16 %v52, %v52
  %v69 = vpack.c.b16 %v53, %v53
  %v70 = vpack.c.b16 %v54, %v54
  %v71 = vpack.c.b16 %v55, %v55
  %v72 = vpack.c.b16 %v56, %v56
  %v73 = vpack.c.b16 %v57, %v57
  %v74 = vpack.c.b16 %v58, %v58
  %v75 = vpack.c.b16 %v59, %v59
  %v76 = vpack.c.b16 %v60, %v60
  %v77 = vpack.c.b16 %v61, %v61
  %v78 = vpack.c.b16 %v62, %v62
  %v79 = vpack.c.b16 %v63, %v63
  %v80 = vpack.c.b16 %v64, %v64
  %v81 = vpack.c.b16 %v65, %v65
  %v83 = vshrl.u32 %v66, 16
  %v85 = vrot.slane %v83, 7
  %v86 = vshll.u32 %v66, 16
  %v88 = vor.u32 %v85, %v86
  %v90 = vshrl.u32 %v67, 16
  %v92 = vrot.slane %v90, 7
  %v93 = vshll.u32 %v67, 16
  %v95 = vor.u32 %v92, %v93
  %v97 = vshrl.u32 %v68, 16
  %v99 = vrot.slane %v97, 7
  %v100 = vshll.u32 %v68, 16
  %v102 = vor.u32 %v99, %v100
  %v104 = vshrl.u32 %v69, 16
  %v106 = vrot.slane %v104, 7
  %v107 = vshll.u32 %v69, 16
  %v109 = vor.u32 %v106, %v107
  %v111 = vshrl.u32 %v70, 16
  %v113 = vrot.slane %v111, 7
  %v114 = vshll.u32 %v70, 16
  %v116 = vor.u32 %v113, %v114
  %v118 = vshrl.u32 %v71, 16
  %v120 = vrot.slane %v118, 7
  %v121 = vshll.u32 %v71, 16
  %v123 = vor.u32 %v120, %v121
  %v125 = vshrl.u32 %v72, 16
  %v127 = vrot.slane %v125, 7
  %v128 = vshll.u32 %v72, 16
  %v130 = vor.u32 %v127, %v128
  %v132 = vshrl.u32 %v73, 16
  %v134 = vrot.slane %v132, 7
  %v135 = vshll.u32 %v73, 16
  %v137 = vor.u32 %v134, %v135
  %v139 = vshrl.u32 %v74, 16
  %v141 = vrot.slane %v139, 7
  %v142 = vshll.u32 %v74, 16
  %v144 = vor.u32 %v141, %v142
  %v146 = vshrl.u32 %v75, 16
  %v148 = vrot.slane %v146, 7
  %v149 = vshll.u32 %v75, 16
  %v151 = vor.u32 %v148, %v149
  %v153 = vshrl.u32 %v76, 16
  %v155 = vrot.slane %v153, 7
  %v156 = vshll.u32 %v76, 16
  %v158 = vor.u32 %v155, %v156
  %v160 = vshrl.u32 %v77, 16
  %v162 = vrot.slane %v160, 7
  %v163 = vshll.u32 %v77, 16
  %v165 = vor.u32 %v162, %v163
  %v167 = vshrl.u32 %v78, 16
  %v169 = vrot.slane %v167, 7
  %v170 = vshll.u32 %v78, 16
  %v172 = vor.u32 %v169, %v170
  %v174 = vshrl.u32 %v79, 16
  %v176 = vrot.slane %v174, 7
  %v177 = vshll.u32 %v79, 16
  %v179 = vor.u32 %v176, %v177
  %v181 = vshrl.u32 %v80, 16
  %v183 = vrot.slane %v181, 7
  %v184 = vshll.u32 %v80, 16
  %v186 = vor.u32 %v183, %v184
  %v188 = vshrl.u32 %v81, 16
  %v190 = vrot.slane %v188, 7
  %v191 = vshll.u32 %v81, 16
  %v193 = vor.u32 %v190, %v191
  %vm210 = vcmask 1040384
  %vm211 = vsmask.f32 256
  %vm212 = vmand %vm210, %vm211
  %v213 = vsel %vm212, 0, %v88
  %v214 = vsel %vm212, 0, %v95
  %v215 = vsel %vm212, 0, %v102
  %v216 = vsel %vm212, 0, %v109
  %v217 = vsel %vm212, 0, %v116
  %v218 = vsel %vm212, 0, %v123
  %v219 = vsel %vm212, 0, %v130
  %v220 = vsel %vm212, 0, %v137
  %v221 = vsel %vm212, 0, %v144
  %v222 = vsel %vm212, 0, %v151
  %v223 = vsel %vm212, 0, %v158
  %v224 = vsel %vm212, 0, %v165
  %v225 = vsel %vm212, 0, %v172
  %v226 = vsel %vm212, 0, %v179
  %v227 = vsel %vm212, 0, %v186
  %v228 = vsel %vm212, 0, %v193
  %vm229 = vcmask 1044480
  %vm230 = vsmask.f32 4352
  %vm231 = vmand %vm229, %vm230
  %v232 = vsel %vm231, %v213, 0
  %v233 = vsel %vm231, %v214, 0
  %v234 = vsel %vm231, %v215, 0
  %v235 = vsel %vm231, %v216, 0
  %v236 = vsel %vm231, %v217, 0
  %v237 = vsel %vm231, %v218, 0
  %v238 = vsel %vm231, %v219, 0
  %v239 = vsel %vm231, %v220, 0
  %v240 = vsel %vm231, %v221, 0
  %v241 = vsel %vm231, %v222, 0
  %v242 = vsel %vm231, %v223, 0
  %v243 = vsel %vm231, %v224, 0
  %v244 = vsel %vm231, %v225, 0
  %v245 = vsel %vm231, %v226, 0
  %v246 = vsel %vm231, %v227, 0
  %v247 = vsel %vm231, %v228, 0
  %v263 = vunpack.c.l.b16 0
  %v264 = vunpack.c.h.b16 0
  %v265 = vunpack.c.l.b16 %v232
  %v266 = vunpack.c.h.b16 %v232
  %v267 = vunpack.c.l.b16 %v233
  %v268 = vunpack.c.h.b16 %v233
  %v269 = vunpack.c.l.b16 %v234
  %v270 = vunpack.c.h.b16 %v234
  %v271 = vunpack.c.l.b16 %v235
  %v272 = vunpack.c.h.b16 %v235
  %v273 = vunpack.c.l.b16 %v236
  %v274 = vunpack.c.h.b16 %v236
  %v275 = vunpack.c.l.b16 %v237
  %v276 = vunpack.c.h.b16 %v237
  %v277 = vunpack.c.l.b16 %v238
  %v278 = vunpack.c.h.b16 %v238
  %v279 = vunpack.c.l.b16 %v240
  %v280 = vunpack.c.h.b16 %v240
  %v281 = vunpack.c.l.b16 %v241
  %v282 = vunpack.c.h.b16 %v241
  %v283 = vunpack.c.l.b16 %v242
  %v284 = vunpack.c.h.b16 %v242
  %v285 = vunpack.c.l.b16 %v243
  %v286 = vunpack.c.h.b16 %v243
  %v287 = vunpack.c.l.b16 %v244
  %v288 = vunpack.c.h.b16 %v244
  %v289 = vunpack.c.l.b16 %v245
  %v290 = vunpack.c.h.b16 %v245
  %v291 = vunpack.c.l.b16 %v246
  %v292 = vunpack.c.h.b16 %v246
  %v293 = vpack.c.b16 %v263, %v263
  %v294 = vpack.c.b16 %v264, %v264
  %v295 = vpack.c.b16 %v265, %v265
  %v296 = vpack.c.b16 %v266, %v266
  %v297 = vpack.c.b16 %v267, %v267
  %v298 = vpack.c.b16 %v268, %v268
  %v299 = vpack.c.b16 %v269, %v269
  %v300 = vpack.c.b16 %v270, %v270
  %v301 = vpack.c.b16 %v271, %v271
  %v302 = vpack.c.b16 %v272, %v272
  %v303 = vpack.c.b16 %v273, %v273
  %v304 = vpack.c.b16 %v274, %v274
  %v305 = vpack.c.b16 %v275, %v275
  %v306 = vpack.c.b16 %v276, %v276
  %v307 = vpack.c.b16 %v277, %v277
  %v308 = vpack.c.b16 %v278, %v278
  %v309 = vpack.c.b16 %v279, %v279
  %v310 = vpack.c.b16 %v280, %v280
  %v311 = vpack.c.b16 %v281, %v281
  %v312 = vpack.c.b16 %v282, %v282
  %v313 = vpack.c.b16 %v283, %v283
  %v314 = vpack.c.b16 %v284, %v284
  %v315 = vpack.c.b16 %v285, %v285
  %v316 = vpack.c.b16 %v286, %v286
  %v317 = vpack.c.b16 %v287, %v287
  %v318 = vpack.c.b16 %v288, %v288
  %v319 = vpack.c.b16 %v289, %v289
  %v320 = vpack.c.b16 %v290, %v290
  %v321 = vpack.c.b16 %v291, %v291
  %v322 = vpack.c.b16 %v292, %v292
  %vm323 = vsmask.f32 3328
  %vm324 = vsmask.f32 7440
  %vm325 = vmor %vm323, %vm324
  %v327 = vshrl.u32 %v293, 16
  %v329 = vrot.slane %v327, 4
  %v330 = vshll.u32 %v293, 16
  %v332 = vrot.slane %v330, 5
  %v333 = vor.u32 %v329, %v332
  %v334 = vrot.slane %v333, 4
  %v336 = vshll.u32 %v294, 16
  %v338 = vrot.slane %v336, 5
  %v339 = vsel %vm325, %v334, %v338
  %v341 = vshrl.u32 %v295, 16
  %v343 = vrot.slane %v341, 4
  %v344 = vshll.u32 %v295, 16
  %v346 = vrot.slane %v344, 5
  %v347 = vor.u32 %v343, %v346
  %v348 = vrot.slane %v347, 4
  %v350 = vshll.u32 %v296, 16
  %v352 = vrot.slane %v350, 5
  %v353 = vsel %vm325, %v348, %v352
  %v355 = vshrl.u32 %v297, 16
  %v357 = vrot.slane %v355, 4
  %v358 = vshll.u32 %v297, 16
  %v360 = vrot.slane %v358, 5
  %v361 = vor.u32 %v357, %v360
  %v362 = vrot.slane %v361, 4
  %v364 = vshll.u32 %v298, 16
  %v366 = vrot.slane %v364, 5
  %v367 = vsel %vm325, %v362, %v366
  %v369 = vshrl.u32 %v299, 16
  %v371 = vrot.slane %v369, 4
  %v372 = vshll.u32 %v299, 16
  %v374 = vrot.slane %v372, 5
  %v375 = vor.u32 %v371, %v374
  %v376 = vrot.slane %v375, 4
  %v378 = vshll.u32 %v300, 16
  %v380 = vrot.slane %v378, 5
  %v381 = vsel %vm325, %v376, %v380
  %v383 = vshrl.u32 %v301, 16
  %v385 = vrot.slane %v383, 4
  %v386 = vshll.u32 %v301, 16
  %v388 = vrot.slane %v386, 5
  %v389 = vor.u32 %v385, %v388
  %v390 = vrot.slane %v389, 4
  %v392 = vshll.u32 %v302, 16
  %v394 = vrot.slane %v392, 5
  %v395 = vsel %vm325, %v390, %v394
  %v397 = vshrl.u32 %v303, 16
  %v399 = vrot.slane %v397, 4
  %v400 = vshll.u32 %v303, 16
  %v402 = vrot.slane %v400, 5
  %v403 = vor.u32 %v399, %v402
  %v404 = vrot.slane %v403, 4
  %v406 = vshll.u32 %v304, 16
  %v408 = vrot.slane %v406, 5
  %v409 = vsel %vm325, %v404, %v408
  %v411 = vshrl.u32 %v305, 16
  %v413 = vrot.slane %v411, 4
  %v414 = vshll.u32 %v305, 16
  %v416 = vrot.slane %v414, 5
  %v417 = vor.u32 %v413, %v416
  %v418 = vrot.slane %v417, 4
  %v420 = vshll.u32 %v306, 16
  %v422 = vrot.slane %v420, 5
  %v423 = vsel %vm325, %v418, %v422
  %v425 = vshrl.u32 %v307, 16
  %v427 = vrot.slane %v425, 4
  %v428 = vshll.u32 %v307, 16
  %v430 = vrot.slane %v428, 5
  %v431 = vor.u32 %v427, %v430
  %v432 = vrot.slane %v431, 4
  %v434 = vshll.u32 %v308, 16
  %v436 = vrot.slane %v434, 5
  %v437 = vsel %vm325, %v432, %v436
  %v439 = vshrl.u32 %v309, 16
  %v441 = vrot.slane %v439, 4
  %v442 = vshll.u32 %v309, 16
  %v444 = vrot.slane %v442, 5
  %v445 = vor.u32 %v441, %v444
  %v446 = vrot.slane %v445, 4
  %v448 = vshll.u32 %v310, 16
  %v450 = vrot.slane %v448, 5
  %v451 = vsel %vm325, %v446, %v450
  %v453 = vshrl.u32 %v311, 16
  %v455 = vrot.slane %v453, 4
  %v456 = vshll.u32 %v311, 16
  %v458 = vrot.slane %v456, 5
  %v459 = vor.u32 %v455, %v458
  %v460 = vrot.slane %v459, 4
  %v462 = vshll.u32 %v312, 16
  %v464 = vrot.slane %v462, 5
  %v465 = vsel %vm325, %v460, %v464
  %v467 = vshrl.u32 %v313, 16
  %v469 = vrot.slane %v467, 4
  %v470 = vshll.u32 %v313, 16
  %v472 = vrot.slane %v470, 5
  %v473 = vor.u32 %v469, %v472
  %v474 = vrot.slane %v473, 4
  %v476 = vshll.u32 %v314, 16
  %v478 = vrot.slane %v476, 5
  %v479 = vsel %vm325, %v474, %v478
  %v481 = vshrl.u32 %v315, 16
  %v483 = vrot.slane %v481, 4
  %v484 = vshll.u32 %v315, 16
  %v486 = vrot.slane %v484, 5
  %v487 = vor.u32 %v483, %v486
  %v488 = vrot.slane %v487, 4
  %v490 = vshll.u32 %v316, 16
  %v492 = vrot.slane %v490, 5
  %v493 = vsel %vm325, %v488, %v492
  %v495 = vshrl.u32 %v317, 16
  %v497 = vrot.slane %v495, 4
  %v498 = vshll.u32 %v317, 16
  %v500 = vrot.slane %v498, 5
  %v501 = vor.u32 %v497, %v500
  %v502 = vrot.slane %v501, 4
  %v504 = vshll.u32 %v318, 16
  %v506 = vrot.slane %v504, 5
  %v507 = vsel %vm325, %v502, %v506
  %v509 = vshrl.u32 %v319, 16
  %v511 = vrot.slane %v509, 4
  %v512 = vshll.u32 %v319, 16
  %v514 = vrot.slane %v512, 5
  %v515 = vor.u32 %v511, %v514
  %v516 = vrot.slane %v515, 4
  %v518 = vshll.u32 %v320, 16
  %v520 = vrot.slane %v518, 5
  %v521 = vsel %vm325, %v516, %v520
  %v523 = vshrl.u32 %v321, 16
  %v525 = vrot.slane %v523, 4
  %v526 = vshll.u32 %v321, 16
  %v528 = vrot.slane %v526, 5
  %v529 = vor.u32 %v525, %v528
  %v530 = vrot.slane %v529, 4
  %v532 = vshll.u32 %v322, 16
  %v534 = vrot.slane %v532, 5
  %v535 = vsel %vm325, %v530, %v534
  %vm536 = vcmask 1042432
  %vm537 = vcmask 1046532
  %vm538 = vmor %vm536, %vm537
  %v539 = vrot.slane %v293, 5
  %v540 = vrot.slane %v539, 4
  %v541 = vrot.slane %v294, 5
  %v542 = vsel %vm538, %v540, %v541
  %v543 = vrot.slane %v295, 5
  %v544 = vrot.slane %v543, 4
  %v545 = vrot.slane %v296, 5
  %v546 = vsel %vm538, %v544, %v545
  %v547 = vrot.slane %v297, 5
  %v548 = vrot.slane %v547, 4
  %v549 = vrot.slane %v298, 5
  %v550 = vsel %vm538, %v548, %v549
  %v551 = vrot.slane %v299, 5
  %v552 = vrot.slane %v551, 4
  %v553 = vrot.slane %v300, 5
  %v554 = vsel %vm538, %v552, %v553
  %v555 = vrot.slane %v301, 5
  %v556 = vrot.slane %v555, 4
  %v557 = vrot.slane %v302, 5
  %v558 = vsel %vm538, %v556, %v557
  %v559 = vrot.slane %v303, 5
  %v560 = vrot.slane %v559, 4
  %v561 = vrot.slane %v304, 5
  %v562 = vsel %vm538, %v560, %v561
  %v563 = vrot.slane %v305, 5
  %v564 = vrot.slane %v563, 4
  %v565 = vrot.slane %v306, 5
  %v566 = vsel %vm538, %v564, %v565
  %v567 = vrot.slane %v307, 5
  %v568 = vrot.slane %v567, 4
  %v569 = vrot.slane %v308, 5
  %v570 = vsel %vm538, %v568, %v569
  %v571 = vrot.slane %v309, 5
  %v572 = vrot.slane %v571, 4
  %v573 = vrot.slane %v310, 5
  %v574 = vsel %vm538, %v572, %v573
  %v575 = vrot.slane %v311, 5
  %v576 = vrot.slane %v575, 4
  %v577 = vrot.slane %v312, 5
  %v578 = vsel %vm538, %v576, %v577
  %v579 = vrot.slane %v313, 5
  %v580 = vrot.slane %v579, 4
  %v581 = vrot.slane %v314, 5
  %v582 = vsel %vm538, %v580, %v581
  %v583 = vrot.slane %v315, 5
  %v584 = vrot.slane %v583, 4
  %v585 = vrot.slane %v316, 5
  %v586 = vsel %vm538, %v584, %v585
  %v587 = vrot.slane %v317, 5
  %v588 = vrot.slane %v587, 4
  %v589 = vrot.slane %v318, 5
  %v590 = vsel %vm538, %v588, %v589
  %v591 = vrot.slane %v319, 5
  %v592 = vrot.slane %v591, 4
  %v593 = vrot.slane %v320, 5
  %v594 = vsel %vm538, %v592, %v593
  %v595 = vrot.slane %v321, 5
  %v596 = vrot.slane %v595, 4
  %v597 = vrot.slane %v322, 5
  %v598 = vsel %vm538, %v596, %v597
  %v601 = vunpack.c.l.b16 %v239
  %v602 = vunpack.c.h.b16 %v239
  %v603 = vunpack.c.l.b16 %v247
  %v604 = vunpack.c.h.b16 %v247
  %v605 = vpack.c.b16 %v601, %v601
  %v606 = vpack.c.b16 %v602, %v602
  %v607 = vpack.c.b16 %v603, %v603
  %v608 = vpack.c.b16 %v604, %v604
  %v610 = vshrl.u32 %v605, 16
  %v612 = vrot.slane %v610, 4
  %v613 = vshll.u32 %v605, 16
  %v615 = vrot.slane %v613, 5
  %v616 = vor.u32 %v612, %v615
  %v617 = vrot.slane %v616, 4
  %v619 = vshll.u32 %v606, 16
  %v621 = vrot.slane %v619, 5
  %v622 = vsel %vm325, %v617, %v621
  %v624 = vshrl.u32 %v607, 16
  %v626 = vrot.slane %v624, 4
  %v627 = vshll.u32 %v607, 16
  %v629 = vrot.slane %v627, 5
  %v630 = vor.u32 %v626, %v629
  %v631 = vrot.slane %v630, 4
  %v633 = vshll.u32 %v608, 16
  %v635 = vrot.slane %v633, 5
  %v636 = vsel %vm325, %v631, %v635
  %v637 = vrot.slane %v605, 5
  %v638 = vrot.slane %v637, 4
  %v639 = vrot.slane %v606, 5
  %v640 = vsel %vm538, %v638, %v639
  %v641 = vrot.slane %v607, 5
  %v642 = vrot.slane %v641, 4
  %v643 = vrot.slane %v608, 5
  %v644 = vsel %vm538, %v642, %v643
  %v645 = vpack.c.b16 %v265, %v263
  %v646 = vpack.c.b16 %v269, %v267
  %v647 = vpack.c.b16 %v273, %v271
  %v648 = vpack.c.b16 %v277, %v275
  %v649 = vpack.c.b16 %v279, %v263
  %v650 = vpack.c.b16 %v283, %v281
  %v651 = vpack.c.b16 %v287, %v285
  %v652 = vpack.c.b16 %v291, %v289
  %v653 = vunpack.c.l.b16 %v339
  %v654 = vunpack.c.l.b16 %v353
  %v655 = vunpack.c.l.b16 %v367
  %v656 = vunpack.c.l.b16 %v381
  %v657 = vunpack.c.l.b16 %v395
  %v658 = vunpack.c.l.b16 %v409
  %v659 = vunpack.c.l.b16 %v423
  %v660 = vunpack.c.l.b16 %v437
  %v661 = vunpack.c.l.b16 %v451
  %v662 = vunpack.c.l.b16 %v465
  %v663 = vunpack.c.l.b16 %v479
  %v664 = vunpack.c.l.b16 %v493
  %v665 = vunpack.c.l.b16 %v507
  %v666 = vunpack.c.l.b16 %v521
  %v667 = vunpack.c.l.b16 %v535
  %v668 = vpack.c.b16 %v654, %v653
  %v669 = vpack.c.b16 %v656, %v655
  %v670 = vpack.c.b16 %v658, %v657
  %v671 = vpack.c.b16 %v660, %v659
  %v672 = vpack.c.b16 %v661, %v653
  %v673 = vpack.c.b16 %v663, %v662
  %v674 = vpack.c.b16 %v665, %v664
  %v675 = vpack.c.b16 %v667, %v666
  %676 = vrot.lane.b32.xlu0 %v668, 16
  %v677 = vpop.permute.xlu0 %676
  %678 = vrot.lane.b32.xlu0 %v669, 16
  %v679 = vpop.permute.xlu0 %678
  %680 = vrot.lane.b32.xlu0 %v670, 16
  %v681 = vpop.permute.xlu0 %680
  %682 = vrot.lane.b32.xlu0 %v671, 16
  %v683 = vpop.permute.xlu0 %682
  %684 = vrot.lane.b32.xlu0 %v672, 16
  %v685 = vpop.permute.xlu0 %684
  %686 = vrot.lane.b32.xlu0 %v673, 16
  %v687 = vpop.permute.xlu0 %686
  %688 = vrot.lane.b32.xlu0 %v674, 16
  %v689 = vpop.permute.xlu0 %688
  %690 = vrot.lane.b32.xlu0 %v675, 16
  %v691 = vpop.permute.xlu0 %690
  %v692 = vunpack.c.l.b16 %v542
  %v693 = vunpack.c.l.b16 %v546
  %v694 = vunpack.c.l.b16 %v550
  %v695 = vunpack.c.l.b16 %v554
  %v696 = vunpack.c.l.b16 %v558
  %v697 = vunpack.c.l.b16 %v562
  %v698 = vunpack.c.l.b16 %v566
  %v699 = vunpack.c.l.b16 %v570
  %v700 = vunpack.c.l.b16 %v574
  %v701 = vunpack.c.l.b16 %v578
  %v702 = vunpack.c.l.b16 %v582
  %v703 = vunpack.c.l.b16 %v586
  %v704 = vunpack.c.l.b16 %v590
  %v705 = vunpack.c.l.b16 %v594
  %v706 = vunpack.c.l.b16 %v598
  %v707 = vpack.c.b16 %v693, %v692
  %v708 = vpack.c.b16 %v695, %v694
  %v709 = vpack.c.b16 %v697, %v696
  %v710 = vpack.c.b16 %v699, %v698
  %v711 = vpack.c.b16 %v700, %v692
  %v712 = vpack.c.b16 %v702, %v701
  %v713 = vpack.c.b16 %v704, %v703
  %v714 = vpack.c.b16 %v706, %v705
  %715 = vrot.lane.b32.xlu0 %v707, 32
  %v716 = vpop.permute.xlu0 %715
  %717 = vrot.lane.b32.xlu0 %v708, 32
  %v718 = vpop.permute.xlu0 %717
  %719 = vrot.lane.b32.xlu0 %v709, 32
  %v720 = vpop.permute.xlu0 %719
  %721 = vrot.lane.b32.xlu0 %v710, 32
  %v722 = vpop.permute.xlu0 %721
  %723 = vrot.lane.b32.xlu0 %v711, 32
  %v724 = vpop.permute.xlu0 %723
  %725 = vrot.lane.b32.xlu0 %v712, 32
  %v726 = vpop.permute.xlu0 %725
  %727 = vrot.lane.b32.xlu0 %v713, 32
  %v728 = vpop.permute.xlu0 %727
  %729 = vrot.lane.b32.xlu0 %v714, 32
  %v730 = vpop.permute.xlu0 %729
  %v731 = vpack.c.b16 %v267, %v265
  %v732 = vpack.c.b16 %v271, %v269
  %v733 = vpack.c.b16 %v275, %v273
  %v734 = vpack.c.b16 %v601, %v277
  %v735 = vpack.c.b16 %v281, %v279
  %v736 = vpack.c.b16 %v285, %v283
  %v737 = vpack.c.b16 %v289, %v287
  %v738 = vpack.c.b16 %v603, %v291
  %739 = vrot.lane.b32.xlu0 %v731, 48
  %v740 = vpop.permute.xlu0 %739
  %741 = vrot.lane.b32.xlu0 %v732, 48
  %v742 = vpop.permute.xlu0 %741
  %743 = vrot.lane.b32.xlu0 %v733, 48
  %v744 = vpop.permute.xlu0 %743
  %745 = vrot.lane.b32.xlu0 %v734, 48
  %v746 = vpop.permute.xlu0 %745
  %747 = vrot.lane.b32.xlu0 %v735, 48
  %v748 = vpop.permute.xlu0 %747
  %749 = vrot.lane.b32.xlu0 %v736, 48
  %v750 = vpop.permute.xlu0 %749
  %751 = vrot.lane.b32.xlu0 %v737, 48
  %v752 = vpop.permute.xlu0 %751
  %753 = vrot.lane.b32.xlu0 %v738, 48
  %v754 = vpop.permute.xlu0 %753
  %v755 = vunpack.c.l.b16 %v622
  %v756 = vunpack.c.l.b16 %v636
  %v757 = vpack.c.b16 %v655, %v654
  %v758 = vpack.c.b16 %v657, %v656
  %v759 = vpack.c.b16 %v659, %v658
  %v760 = vpack.c.b16 %v755, %v660
  %v761 = vpack.c.b16 %v662, %v661
  %v762 = vpack.c.b16 %v664, %v663
  %v763 = vpack.c.b16 %v666, %v665
  %v764 = vpack.c.b16 %v756, %v667
  %765 = vrot.lane.b32.xlu0 %v757, 64
  %v766 = vpop.permute.xlu0 %765
  %767 = vrot.lane.b32.xlu0 %v758, 64
  %v768 = vpop.permute.xlu0 %767
  %769 = vrot.lane.b32.xlu0 %v759, 64
  %v770 = vpop.permute.xlu0 %769
  %771 = vrot.lane.b32.xlu0 %v760, 64
  %v772 = vpop.permute.xlu0 %771
  %773 = vrot.lane.b32.xlu0 %v761, 64
  %v774 = vpop.permute.xlu0 %773
  %775 = vrot.lane.b32.xlu0 %v762, 64
  %v776 = vpop.permute.xlu0 %775
  %777 = vrot.lane.b32.xlu0 %v763, 64
  %v778 = vpop.permute.xlu0 %777
  %779 = vrot.lane.b32.xlu0 %v764, 64
  %v780 = vpop.permute.xlu0 %779
  %v781 = vunpack.c.l.b16 %v640
  %v782 = vunpack.c.l.b16 %v644
  %v783 = vpack.c.b16 %v694, %v693
  %v784 = vpack.c.b16 %v696, %v695
  %v785 = vpack.c.b16 %v698, %v697
  %v786 = vpack.c.b16 %v781, %v699
  %v787 = vpack.c.b16 %v701, %v700
  %v788 = vpack.c.b16 %v703, %v702
  %v789 = vpack.c.b16 %v705, %v704
  %v790 = vpack.c.b16 %v782, %v706
  %791 = vrot.lane.b32.xlu0 %v783, 80
  %v792 = vpop.permute.xlu0 %791
  %793 = vrot.lane.b32.xlu0 %v784, 80
  %v794 = vpop.permute.xlu0 %793
  %795 = vrot.lane.b32.xlu0 %v785, 80
  %v796 = vpop.permute.xlu0 %795
  %797 = vrot.lane.b32.xlu0 %v786, 80
  %v798 = vpop.permute.xlu0 %797
  %799 = vrot.lane.b32.xlu0 %v787, 80
  %v800 = vpop.permute.xlu0 %799
  %801 = vrot.lane.b32.xlu0 %v788, 80
  %v802 = vpop.permute.xlu0 %801
  %803 = vrot.lane.b32.xlu0 %v789, 80
  %v804 = vpop.permute.xlu0 %803
  %805 = vrot.lane.b32.xlu0 %v790, 80
  %v806 = vpop.permute.xlu0 %805
  %v807 = vpack.c.b16 %v263, %v601
  %v808 = vpack.c.b16 %v263, %v603
  %809 = vrot.lane.b32.xlu0 %v646, 96
  %v810 = vpop.permute.xlu0 %809
  %811 = vrot.lane.b32.xlu0 %v647, 96
  %v812 = vpop.permute.xlu0 %811
  %813 = vrot.lane.b32.xlu0 %v648, 96
  %v814 = vpop.permute.xlu0 %813
  %815 = vrot.lane.b32.xlu0 %v807, 96
  %v816 = vpop.permute.xlu0 %815
  %817 = vrot.lane.b32.xlu0 %v650, 96
  %v818 = vpop.permute.xlu0 %817
  %819 = vrot.lane.b32.xlu0 %v651, 96
  %v820 = vpop.permute.xlu0 %819
  %821 = vrot.lane.b32.xlu0 %v652, 96
  %v822 = vpop.permute.xlu0 %821
  %823 = vrot.lane.b32.xlu0 %v808, 96
  %v824 = vpop.permute.xlu0 %823
  %v825 = vpack.c.b16 %v653, %v755
  %v826 = vpack.c.b16 %v653, %v756
  %827 = vrot.lane.b32.xlu0 %v669, 112
  %v828 = vpop.permute.xlu0 %827
  %829 = vrot.lane.b32.xlu0 %v670, 112
  %v830 = vpop.permute.xlu0 %829
  %831 = vrot.lane.b32.xlu0 %v671, 112
  %v832 = vpop.permute.xlu0 %831
  %833 = vrot.lane.b32.xlu0 %v825, 112
  %v834 = vpop.permute.xlu0 %833
  %835 = vrot.lane.b32.xlu0 %v673, 112
  %v836 = vpop.permute.xlu0 %835
  %837 = vrot.lane.b32.xlu0 %v674, 112
  %v838 = vpop.permute.xlu0 %837
  %839 = vrot.lane.b32.xlu0 %v675, 112
  %v840 = vpop.permute.xlu0 %839
  %841 = vrot.lane.b32.xlu0 %v826, 112
  %v842 = vpop.permute.xlu0 %841
  %v843 = vpack.c.b16 %v692, %v781
  %v844 = vpack.c.b16 %v692, %v782
  %vm845 = vcmask 130048
  %v848 = vsel %vm845, %v645, %v677
  %v851 = vsel %vm845, %v646, %v679
  %v854 = vsel %vm845, %v647, %v681
  %v857 = vsel %vm845, %v648, %v683
  %v860 = vsel %vm845, %v649, %v685
  %v863 = vsel %vm845, %v650, %v687
  %v866 = vsel %vm845, %v651, %v689
  %v869 = vsel %vm845, %v652, %v691
  %vm870 = vcmask 261120
  %v872 = vsel %vm870, %v848, %v716
  %v874 = vsel %vm870, %v851, %v718
  %v876 = vsel %vm870, %v854, %v720
  %v878 = vsel %vm870, %v857, %v722
  %v880 = vsel %vm870, %v860, %v724
  %v882 = vsel %vm870, %v863, %v726
  %v884 = vsel %vm870, %v866, %v728
  %v886 = vsel %vm870, %v869, %v730
  %vm887 = vcmask 392192
  %v889 = vsel %vm887, %v872, %v740
  %v891 = vsel %vm887, %v874, %v742
  %v893 = vsel %vm887, %v876, %v744
  %v895 = vsel %vm887, %v878, %v746
  %v897 = vsel %vm887, %v880, %v748
  %v899 = vsel %vm887, %v882, %v750
  %v901 = vsel %vm887, %v884, %v752
  %v903 = vsel %vm887, %v886, %v754
  %vm904 = vcmask 523264
  %v906 = vsel %vm904, %v889, %v766
  %v908 = vsel %vm904, %v891, %v768
  %v910 = vsel %vm904, %v893, %v770
  %v912 = vsel %vm904, %v895, %v772
  %v914 = vsel %vm904, %v897, %v774
  %v916 = vsel %vm904, %v899, %v776
  %v918 = vsel %vm904, %v901, %v778
  %v920 = vsel %vm904, %v903, %v780
  %vm921 = vcmask 654336
  %v923 = vsel %vm921, %v906, %v792
  %v925 = vsel %vm921, %v908, %v794
  %v927 = vsel %vm921, %v910, %v796
  %v929 = vsel %vm921, %v912, %v798
  %v931 = vsel %vm921, %v914, %v800
  %v933 = vsel %vm921, %v916, %v802
  %v935 = vsel %vm921, %v918, %v804
  %v937 = vsel %vm921, %v920, %v806
  %vm938 = vcmask 785408
  %v940 = vsel %vm938, %v923, %v810
  %v942 = vsel %vm938, %v925, %v812
  %v944 = vsel %vm938, %v927, %v814
  %v946 = vsel %vm938, %v929, %v816
  %v948 = vsel %vm938, %v931, %v818
  %v950 = vsel %vm938, %v933, %v820
  %v952 = vsel %vm938, %v935, %v822
  %v954 = vsel %vm938, %v937, %v824
  %vm955 = vcmask 916480
  %v957 = vsel %vm955, %v940, %v828
  %v960 = vsel %vm955, %v942, %v830
  %v963 = vsel %vm955, %v944, %v832
  %v966 = vsel %vm955, %v946, %v834
  %v969 = vsel %vm955, %v948, %v836
  %v972 = vsel %vm955, %v950, %v838
  %v975 = vsel %vm955, %v952, %v840
  %v978 = vsel %vm955, %v954, %v842
  %v980 = vld [vmem:[%s1] sm:$0xf]
  %v981 = vld [vmem:[%s1 + $0x4] sm:$0xf]
  %v982 = vld [vmem:[%s1 + $0x8] sm:$0xf]
  %v983 = vld [vmem:[%s1 + $0xc] sm:$0xf]
  %v984 = vld [vmem:[%s1 + $0x10] sm:$0xf]
  %v985 = vld [vmem:[%s1 + $0x14] sm:$0xf]
  %v986 = vld [vmem:[%s1 + $0x18] sm:$0xf]
  %v987 = vld [vmem:[%s1 + $0x1c] sm:$0xf]
  %v988 = vld [vmem:[%s1 + $0x20] sm:$0xf]
  %v989 = vld [vmem:[%s1 + $0x24] sm:$0xf]
  %v990 = vld [vmem:[%s1 + $0x28] sm:$0xf]
  %v991 = vld [vmem:[%s1 + $0x2c] sm:$0xf]
  %v992 = vld [vmem:[%s1 + $0x30] sm:$0xf]
  %v993 = vld [vmem:[%s1 + $0x34] sm:$0xf]
  %v994 = vld [vmem:[%s1 + $0x38] sm:$0xf]
  %v995 = vld [vmem:[%s1 + $0x3c] sm:$0xf]
  %v996 = vld [vmem:[%s1 + $0x40] sm:$0xf]
  %v997 = vld [vmem:[%s1 + $0x44] sm:$0xf]
  %v1016 = vunpack.c.l.b16 %v980
  %v1017 = vunpack.c.l.b16 %v981
  %v1018 = vunpack.c.l.b16 %v982
  %v1019 = vunpack.c.l.b16 %v983
  %v1020 = vunpack.c.l.b16 %v984
  %v1021 = vunpack.c.l.b16 %v985
  %v1022 = vunpack.c.l.b16 %v986
  %v1023 = vunpack.c.l.b16 %v987
  %v1024 = vunpack.c.l.b16 %v988
  %v1025 = vunpack.c.l.b16 %v989
  %v1026 = vunpack.c.l.b16 %v990
  %v1027 = vunpack.c.l.b16 %v991
  %v1028 = vunpack.c.l.b16 %v992
  %v1029 = vunpack.c.l.b16 %v993
  %v1030 = vunpack.c.l.b16 %v994
  %v1031 = vunpack.c.l.b16 %v995
  %v1032 = vunpack.c.l.b16 %v996
  %v1033 = vunpack.c.l.b16 %v997
  %v1034 = vpack.c.b16 %v1017, %v1016
  %v1035 = vpack.c.b16 %v1019, %v1018
  %v1036 = vpack.c.b16 %v1021, %v1020
  %v1037 = vpack.c.b16 %v1023, %v1022
  %v1038 = vpack.c.b16 %v1025, %v1024
  %v1039 = vpack.c.b16 %v1027, %v1026
  %v1040 = vpack.c.b16 %v1029, %v1028
  %v1041 = vpack.c.b16 %v1031, %v1030
  %v1042 = vpack.c.b16 %v1033, %v1032
  %v1053 = vsel %vm845, %v708, 0
  %v1056 = vsel %vm845, %v709, 0
  %v1059 = vsel %vm845, %v710, 0
  %v1062 = vsel %vm845, %v843, 0
  %v1065 = vsel %vm845, %v712, 0
  %v1068 = vsel %vm845, %v713, 0
  %v1071 = vsel %vm845, %v714, 0
  %v1074 = vsel %vm845, %v844, 0
  %1076 = vmatprep.subr.bf16.mxu0 0
  %1077 = vmatpush1.bf16.msra.mxu0 %v1041
  %1078 = vmatprep.subr.bf16.mxu0 0
  %1079 = vmatpush1.bf16.msra.mxu0 %v1040
  %1080 = vmatprep.subr.bf16.mxu0 0
  %1081 = vmatpush1.bf16.msra.mxu0 %v1039
  %1082 = vmatprep.subr.bf16.mxu0 0
  %1083 = vmatpush1.bf16.msra.mxu0 %v1038
  %1084 = vmatprep.subr.bf16.mxu0 0
  %1085 = vmatpush1.bf16.msra.mxu0 %v1037
  %1086 = vmatprep.subr.bf16.mxu0 0
  %1087 = vmatpush1.bf16.msra.mxu0 %v1036
  %1088 = vmatprep.subr.bf16.mxu0 0
  %1089 = vmatpush1.bf16.msra.mxu0 %v1035
  %1090 = vmatprep.subr.bf16.mxu0 0
  %1091 = vmatpush1.bf16.msra.mxu0 %v1034
  %1092 = vmatprep.subr.bf16.mxu0 0
  %1093 = vmatpush2.bf16.msra.mxu0 0
  %1094 = vmatprep.subr.bf16.mxu0 0
  %1095 = vmatpush2.bf16.msra.mxu0 0
  %1096 = vmatprep.subr.bf16.mxu0 0
  %1097 = vmatpush2.bf16.msra.mxu0 0
  %1098 = vmatprep.subr.bf16.mxu0 0
  %1099 = vmatpush2.bf16.msra.mxu0 0
  %1100 = vmatprep.subr.bf16.mxu0 0
  %1101 = vmatpush2.bf16.msra.mxu0 0
  %1102 = vmatprep.subr.bf16.mxu0 0
  %1103 = vmatpush2.bf16.msra.mxu0 0
  %1104 = vmatprep.subr.bf16.mxu0 0
  %1105 = vmatpush2.bf16.msra.mxu0 0
  %1106 = vmatprep.subr.bf16.mxu0 0
  %1107 = vmatpush2.bf16.msra.mxu0 %v1042
  %1108 = vmatprep.mubr.bf16.mxu0 %v1053
  %1109 = vmatmul.mubr.bf16.gmra.mxu0 %v957
  %v1110 = vpop.f32.mrf.mxu0
  %v1111 = vadd.f32 0.0, %v1110
  %v1112 = vpop.f32.mrf.mxu0
  %v1113 = vpop.f32.mrf.mxu0
  %v1114 = vadd.f32 0.0, %v1113
  %v1115 = vpop.f32.mrf.mxu0
  %1116 = vmatprep.mubr.bf16.mxu0 %v1056
  %1117 = vmatmul.mubr.bf16.gmra.mxu0 %v960
  %v1118 = vpop.f32.mrf.mxu0
  %v1119 = vadd.f32 0.0, %v1118
  %v1120 = vpop.f32.mrf.mxu0
  %v1121 = vpop.f32.mrf.mxu0
  %v1122 = vadd.f32 0.0, %v1121
  %v1123 = vpop.f32.mrf.mxu0
  %1124 = vmatprep.mubr.bf16.mxu0 %v1059
  %1125 = vmatmul.mubr.bf16.gmra.mxu0 %v963
  %v1126 = vpop.f32.mrf.mxu0
  %v1127 = vadd.f32 0.0, %v1126
  %v1128 = vpop.f32.mrf.mxu0
  %v1129 = vpop.f32.mrf.mxu0
  %v1130 = vadd.f32 0.0, %v1129
  %v1131 = vpop.f32.mrf.mxu0
  %1132 = vmatprep.mubr.bf16.mxu0 %v1062
  %1133 = vmatmul.mubr.bf16.gmra.mxu0 %v966
  %v1134 = vpop.f32.mrf.mxu0
  %v1135 = vadd.f32 0.0, %v1134
  %v1136 = vpop.f32.mrf.mxu0
  %v1137 = vpop.f32.mrf.mxu0
  %v1138 = vadd.f32 0.0, %v1137
  %v1139 = vpop.f32.mrf.mxu0
  %1140 = vmatprep.mubr.bf16.mxu0 %v1065
  %1141 = vmatmul.mubr.bf16.gmra.mxu0 %v969
  %v1142 = vpop.f32.mrf.mxu0
  %v1143 = vadd.f32 0.0, %v1142
  %v1144 = vpop.f32.mrf.mxu0
  %v1145 = vpop.f32.mrf.mxu0
  %v1146 = vadd.f32 0.0, %v1145
  %v1147 = vpop.f32.mrf.mxu0
  %1148 = vmatprep.mubr.bf16.mxu0 %v1068
  %1149 = vmatmul.mubr.bf16.gmra.mxu0 %v972
  %v1150 = vpop.f32.mrf.mxu0
  %v1151 = vadd.f32 0.0, %v1150
  %v1152 = vpop.f32.mrf.mxu0
  %v1153 = vpop.f32.mrf.mxu0
  %v1154 = vadd.f32 0.0, %v1153
  %v1155 = vpop.f32.mrf.mxu0
  %1156 = vmatprep.mubr.bf16.mxu0 %v1071
  %1157 = vmatmul.mubr.bf16.gmra.mxu0 %v975
  %v1158 = vpop.f32.mrf.mxu0
  %v1159 = vadd.f32 0.0, %v1158
  %v1160 = vpop.f32.mrf.mxu0
  %v1161 = vpop.f32.mrf.mxu0
  %v1162 = vadd.f32 0.0, %v1161
  %v1163 = vpop.f32.mrf.mxu0
  %1164 = vmatprep.mubr.bf16.mxu0 %v1074
  %1165 = vmatmul.mubr.bf16.gmra.mxu0 %v978
  %v1166 = vpop.f32.mrf.mxu0
  %v1167 = vadd.f32 0.0, %v1166
  %v1168 = vpop.f32.mrf.mxu0
  %v1169 = vpop.f32.mrf.mxu0
  %v1170 = vadd.f32 0.0, %v1169
  %v1171 = vpop.f32.mrf.mxu0
  %1172 = vdwg.mxu0
  %v1173 = vld [vmem:[%s2] sm:$0x1]
  %v1174 = vld [vmem:[%s3] sm:$0x1]
  %v1175 = vsel %vm870, %v1111, 0.0
  %v1176 = vsel %vm870, %v1114, 0.0
  %v1177 = vadd.f32 %v1175, %v1176
  %v1178 = vsel %vm870, %v1119, 0.0
  %v1179 = vadd.f32 %v1177, %v1178
  %v1180 = vsel %vm870, %v1122, 0.0
  %v1181 = vadd.f32 %v1179, %v1180
  %v1182 = vsel %vm870, %v1127, 0.0
  %v1183 = vadd.f32 %v1181, %v1182
  %v1184 = vsel %vm870, %v1130, 0.0
  %v1185 = vadd.f32 %v1183, %v1184
  %v1186 = vsel %vm870, %v1135, 0.0
  %v1187 = vadd.f32 %v1185, %v1186
  %v1188 = vsel %vm870, %v1138, 0.0
  %v1189 = vadd.f32 %v1187, %v1188
  %v1190 = vsel %vm870, %v1143, 0.0
  %v1191 = vadd.f32 %v1189, %v1190
  %v1192 = vsel %vm870, %v1146, 0.0
  %v1193 = vadd.f32 %v1191, %v1192
  %v1194 = vsel %vm870, %v1151, 0.0
  %v1195 = vadd.f32 %v1193, %v1194
  %v1196 = vsel %vm870, %v1154, 0.0
  %v1197 = vadd.f32 %v1195, %v1196
  %v1198 = vsel %vm870, %v1159, 0.0
  %v1199 = vadd.f32 %v1197, %v1198
  %v1200 = vsel %vm870, %v1162, 0.0
  %v1201 = vadd.f32 %v1199, %v1200
  %v1202 = vsel %vm870, %v1167, 0.0
  %v1203 = vadd.f32 %v1201, %v1202
  %v1204 = vsel %vm870, %v1170, 0.0
  %v1205 = vadd.f32 %v1203, %v1204
  %v1206 = vrot.slane %v1205, 4
  %v1207 = vadd.f32 %v1205, %v1206
  %v1208 = vrot.slane %v1207, 2
  %v1209 = vadd.f32 %v1207, %v1208
  %v1210 = vrot.slane %v1209, 1
  %v1211 = vadd.f32 %v1209, %v1210
  %v1212 = vrcp.pop 128.0
  %v1213 = vmul.f32 %v1211, %v1212
  %v1214 = vmul.f32 %v1111, %v1111
  %v1215 = vmul.f32 %v1114, %v1114
  %v1216 = vmul.f32 %v1119, %v1119
  %v1217 = vmul.f32 %v1122, %v1122
  %v1218 = vmul.f32 %v1127, %v1127
  %v1219 = vmul.f32 %v1130, %v1130
  %v1220 = vmul.f32 %v1135, %v1135
  %v1221 = vmul.f32 %v1138, %v1138
  %v1222 = vmul.f32 %v1143, %v1143
  %v1223 = vmul.f32 %v1146, %v1146
  %v1224 = vmul.f32 %v1151, %v1151
  %v1225 = vmul.f32 %v1154, %v1154
  %v1226 = vmul.f32 %v1159, %v1159
  %v1227 = vmul.f32 %v1162, %v1162
  %v1228 = vmul.f32 %v1167, %v1167
  %v1229 = vmul.f32 %v1170, %v1170
  %v1230 = vsel %vm870, %v1214, 0.0
  %v1231 = vsel %vm870, %v1215, 0.0
  %v1232 = vadd.f32 %v1230, %v1231
  %v1233 = vsel %vm870, %v1216, 0.0
  %v1234 = vadd.f32 %v1232, %v1233
  %v1235 = vsel %vm870, %v1217, 0.0
  %v1236 = vadd.f32 %v1234, %v1235
  %v1237 = vsel %vm870, %v1218, 0.0
  %v1238 = vadd.f32 %v1236, %v1237
  %v1239 = vsel %vm870, %v1219, 0.0
  %v1240 = vadd.f32 %v1238, %v1239
  %v1241 = vsel %vm870, %v1220, 0.0
  %v1242 = vadd.f32 %v1240, %v1241
  %v1243 = vsel %vm870, %v1221, 0.0
  %v1244 = vadd.f32 %v1242, %v1243
  %v1245 = vsel %vm870, %v1222, 0.0
  %v1246 = vadd.f32 %v1244, %v1245
  %v1247 = vsel %vm870, %v1223, 0.0
  %v1248 = vadd.f32 %v1246, %v1247
  %v1249 = vsel %vm870, %v1224, 0.0
  %v1250 = vadd.f32 %v1248, %v1249
  %v1251 = vsel %vm870, %v1225, 0.0
  %v1252 = vadd.f32 %v1250, %v1251
  %v1253 = vsel %vm870, %v1226, 0.0
  %v1254 = vadd.f32 %v1252, %v1253
  %v1255 = vsel %vm870, %v1227, 0.0
  %v1256 = vadd.f32 %v1254, %v1255
  %v1257 = vsel %vm870, %v1228, 0.0
  %v1258 = vadd.f32 %v1256, %v1257
  %v1259 = vsel %vm870, %v1229, 0.0
  %v1260 = vadd.f32 %v1258, %v1259
  %v1261 = vrot.slane %v1260, 4
  %v1262 = vadd.f32 %v1260, %v1261
  %v1263 = vrot.slane %v1262, 2
  %v1264 = vadd.f32 %v1262, %v1263
  %v1265 = vrot.slane %v1264, 1
  %v1266 = vadd.f32 %v1264, %v1265
  %v1267 = vmul.f32 %v1266, %v1212
  %v1268 = vmul.f32 %v1213, %v1213
  %v1269 = vsub.f32 %v1267, %v1268
  %v1270 = vmax.f32 %v1269, 0.0
  %v1271 = vadd.f32 %v1270, 1e-05
  %v1272 = vrsqrt.pop %v1271
  %v1273 = vmul.f32 %v1173, %v1272
  %v1274 = vmul.f32 %v1213, %v1273
  %v1275 = vsub.f32 %v1174, %v1274
  %v1277 = vlaneseq
  %v1278 = vshrl.u32 %v1277, 7
  %v1279 = vsub.s32 0, %v1278
  %v1280 = vrot.slane %v1273, %v1279
  %v1282 = vmul.f32 %v1111, %v1280
  %v1283 = vmul.f32 %v1114, %v1280
  %v1284 = vmul.f32 %v1119, %v1280
  %v1285 = vmul.f32 %v1122, %v1280
  %v1286 = vmul.f32 %v1127, %v1280
  %v1287 = vmul.f32 %v1130, %v1280
  %v1288 = vmul.f32 %v1135, %v1280
  %v1289 = vmul.f32 %v1138, %v1280
  %v1290 = vmul.f32 %v1143, %v1280
  %v1291 = vmul.f32 %v1146, %v1280
  %v1292 = vmul.f32 %v1151, %v1280
  %v1293 = vmul.f32 %v1154, %v1280
  %v1294 = vmul.f32 %v1159, %v1280
  %v1295 = vmul.f32 %v1162, %v1280
  %v1296 = vmul.f32 %v1167, %v1280
  %v1297 = vmul.f32 %v1170, %v1280
  %v1299 = vlaneseq
  %v1300 = vshrl.u32 %v1299, 7
  %v1301 = vsub.s32 0, %v1300
  %v1302 = vrot.slane %v1275, %v1301
  %v1304 = vadd.f32 %v1282, %v1302
  %v1305 = vadd.f32 %v1283, %v1302
  %v1306 = vadd.f32 %v1284, %v1302
  %v1307 = vadd.f32 %v1285, %v1302
  %v1308 = vadd.f32 %v1286, %v1302
  %v1309 = vadd.f32 %v1287, %v1302
  %v1310 = vadd.f32 %v1288, %v1302
  %v1311 = vadd.f32 %v1289, %v1302
  %v1312 = vadd.f32 %v1290, %v1302
  %v1313 = vadd.f32 %v1291, %v1302
  %v1314 = vadd.f32 %v1292, %v1302
  %v1315 = vadd.f32 %v1293, %v1302
  %v1316 = vadd.f32 %v1294, %v1302
  %v1317 = vadd.f32 %v1295, %v1302
  %v1318 = vadd.f32 %v1296, %v1302
  %v1319 = vadd.f32 %v1297, %v1302
  %v1320 = vmax.f32 %v1304, 0.0
  %v1321 = vmax.f32 %v1305, 0.0
  %v1322 = vmax.f32 %v1306, 0.0
  %v1323 = vmax.f32 %v1307, 0.0
  %v1324 = vmax.f32 %v1308, 0.0
  %v1325 = vmax.f32 %v1309, 0.0
  %v1326 = vmax.f32 %v1310, 0.0
  %v1327 = vmax.f32 %v1311, 0.0
  %v1328 = vmax.f32 %v1312, 0.0
  %v1329 = vmax.f32 %v1313, 0.0
  %v1330 = vmax.f32 %v1314, 0.0
  %v1331 = vmax.f32 %v1315, 0.0
  %v1332 = vmax.f32 %v1316, 0.0
  %v1333 = vmax.f32 %v1317, 0.0
  %v1334 = vmax.f32 %v1318, 0.0
  %v1335 = vmax.f32 %v1319, 0.0
  %v1352 = vcombine.high %v1320, %v1320
  %v1354 = vunpack.c.l.s4 1983009808
  %v1355 = vunpack.c.0.s8 %v1354
  %v1356 = vlaneseq
  %v1357 = vshrl.u32 %v1356, 7
  %v1358 = vsub.s32 %v1355, %v1357
  %v1359 = vrot.slane %v1320, %v1358
  %v1361 = vunpack.c.l.s4 1983009808
  %v1362 = vunpack.c.0.s8 %v1361
  %v1363 = vlaneseq
  %v1364 = vshrl.u32 %v1363, 7
  %v1365 = vsub.s32 %v1362, %v1364
  %v1366 = vrot.slane %v1352, %v1365
  %v1367 = vcombine.high %v1359, %v1359
  %v1368 = vcombine.high %v1366, %v1366
  %v1369 = vcombine.high %v1321, %v1321
  %v1371 = vunpack.c.l.s4 1983009808
  %v1372 = vunpack.c.0.s8 %v1371
  %v1373 = vlaneseq
  %v1374 = vshrl.u32 %v1373, 7
  %v1375 = vsub.s32 %v1372, %v1374
  %v1376 = vrot.slane %v1321, %v1375
  %v1378 = vunpack.c.l.s4 1983009808
  %v1379 = vunpack.c.0.s8 %v1378
  %v1380 = vlaneseq
  %v1381 = vshrl.u32 %v1380, 7
  %v1382 = vsub.s32 %v1379, %v1381
  %v1383 = vrot.slane %v1369, %v1382
  %v1384 = vcombine.high %v1376, %v1376
  %v1385 = vcombine.high %v1383, %v1383
  %v1386 = vcombine.high %v1322, %v1322
  %v1388 = vunpack.c.l.s4 1983009808
  %v1389 = vunpack.c.0.s8 %v1388
  %v1390 = vlaneseq
  %v1391 = vshrl.u32 %v1390, 7
  %v1392 = vsub.s32 %v1389, %v1391
  %v1393 = vrot.slane %v1322, %v1392
  %v1395 = vunpack.c.l.s4 1983009808
  %v1396 = vunpack.c.0.s8 %v1395
  %v1397 = vlaneseq
  %v1398 = vshrl.u32 %v1397, 7
  %v1399 = vsub.s32 %v1396, %v1398
  %v1400 = vrot.slane %v1386, %v1399
  %v1401 = vcombine.high %v1393, %v1393
  %v1402 = vcombine.high %v1400, %v1400
  %v1403 = vcombine.high %v1323, %v1323
  %v1405 = vunpack.c.l.s4 1983009808
  %v1406 = vunpack.c.0.s8 %v1405
  %v1407 = vlaneseq
  %v1408 = vshrl.u32 %v1407, 7
  %v1409 = vsub.s32 %v1406, %v1408
  %v1410 = vrot.slane %v1323, %v1409
  %v1412 = vunpack.c.l.s4 1983009808
  %v1413 = vunpack.c.0.s8 %v1412
  %v1414 = vlaneseq
  %v1415 = vshrl.u32 %v1414, 7
  %v1416 = vsub.s32 %v1413, %v1415
  %v1417 = vrot.slane %v1403, %v1416
  %v1418 = vcombine.high %v1410, %v1410
  %v1419 = vcombine.high %v1417, %v1417
  %v1420 = vcombine.high %v1324, %v1324
  %v1422 = vunpack.c.l.s4 1983009808
  %v1423 = vunpack.c.0.s8 %v1422
  %v1424 = vlaneseq
  %v1425 = vshrl.u32 %v1424, 7
  %v1426 = vsub.s32 %v1423, %v1425
  %v1427 = vrot.slane %v1324, %v1426
  %v1429 = vunpack.c.l.s4 1983009808
  %v1430 = vunpack.c.0.s8 %v1429
  %v1431 = vlaneseq
  %v1432 = vshrl.u32 %v1431, 7
  %v1433 = vsub.s32 %v1430, %v1432
  %v1434 = vrot.slane %v1420, %v1433
  %v1435 = vcombine.high %v1427, %v1427
  %v1436 = vcombine.high %v1434, %v1434
  %v1437 = vcombine.high %v1325, %v1325
  %v1439 = vunpack.c.l.s4 1983009808
  %v1440 = vunpack.c.0.s8 %v1439
  %v1441 = vlaneseq
  %v1442 = vshrl.u32 %v1441, 7
  %v1443 = vsub.s32 %v1440, %v1442
  %v1444 = vrot.slane %v1325, %v1443
  %v1446 = vunpack.c.l.s4 1983009808
  %v1447 = vunpack.c.0.s8 %v1446
  %v1448 = vlaneseq
  %v1449 = vshrl.u32 %v1448, 7
  %v1450 = vsub.s32 %v1447, %v1449
  %v1451 = vrot.slane %v1437, %v1450
  %v1452 = vcombine.high %v1444, %v1444
  %v1453 = vcombine.high %v1451, %v1451
  %v1454 = vcombine.high %v1326, %v1326
  %v1456 = vunpack.c.l.s4 1983009808
  %v1457 = vunpack.c.0.s8 %v1456
  %v1458 = vlaneseq
  %v1459 = vshrl.u32 %v1458, 7
  %v1460 = vsub.s32 %v1457, %v1459
  %v1461 = vrot.slane %v1326, %v1460
  %v1463 = vunpack.c.l.s4 1983009808
  %v1464 = vunpack.c.0.s8 %v1463
  %v1465 = vlaneseq
  %v1466 = vshrl.u32 %v1465, 7
  %v1467 = vsub.s32 %v1464, %v1466
  %v1468 = vrot.slane %v1454, %v1467
  %v1469 = vcombine.high %v1461, %v1461
  %v1470 = vcombine.high %v1468, %v1468
  %v1471 = vcombine.high %v1327, %v1327
  %v1473 = vunpack.c.l.s4 1983009808
  %v1474 = vunpack.c.0.s8 %v1473
  %v1475 = vlaneseq
  %v1476 = vshrl.u32 %v1475, 7
  %v1477 = vsub.s32 %v1474, %v1476
  %v1478 = vrot.slane %v1327, %v1477
  %v1480 = vunpack.c.l.s4 1983009808
  %v1481 = vunpack.c.0.s8 %v1480
  %v1482 = vlaneseq
  %v1483 = vshrl.u32 %v1482, 7
  %v1484 = vsub.s32 %v1481, %v1483
  %v1485 = vrot.slane %v1471, %v1484
  %v1486 = vcombine.high %v1478, %v1478
  %v1487 = vcombine.high %v1485, %v1485
  %v1488 = vcombine.high %v1328, %v1328
  %v1490 = vunpack.c.l.s4 1983009808
  %v1491 = vunpack.c.0.s8 %v1490
  %v1492 = vlaneseq
  %v1493 = vshrl.u32 %v1492, 7
  %v1494 = vsub.s32 %v1491, %v1493
  %v1495 = vrot.slane %v1328, %v1494
  %v1497 = vunpack.c.l.s4 1983009808
  %v1498 = vunpack.c.0.s8 %v1497
  %v1499 = vlaneseq
  %v1500 = vshrl.u32 %v1499, 7
  %v1501 = vsub.s32 %v1498, %v1500
  %v1502 = vrot.slane %v1488, %v1501
  %v1503 = vcombine.high %v1495, %v1495
  %v1504 = vcombine.high %v1502, %v1502
  %v1505 = vcombine.high %v1329, %v1329
  %v1507 = vunpack.c.l.s4 1983009808
  %v1508 = vunpack.c.0.s8 %v1507
  %v1509 = vlaneseq
  %v1510 = vshrl.u32 %v1509, 7
  %v1511 = vsub.s32 %v1508, %v1510
  %v1512 = vrot.slane %v1329, %v1511
  %v1514 = vunpack.c.l.s4 1983009808
  %v1515 = vunpack.c.0.s8 %v1514
  %v1516 = vlaneseq
  %v1517 = vshrl.u32 %v1516, 7
  %v1518 = vsub.s32 %v1515, %v1517
  %v1519 = vrot.slane %v1505, %v1518
  %v1520 = vcombine.high %v1512, %v1512
  %v1521 = vcombine.high %v1519, %v1519
  %v1522 = vcombine.high %v1330, %v1330
  %v1524 = vunpack.c.l.s4 1983009808
  %v1525 = vunpack.c.0.s8 %v1524
  %v1526 = vlaneseq
  %v1527 = vshrl.u32 %v1526, 7
  %v1528 = vsub.s32 %v1525, %v1527
  %v1529 = vrot.slane %v1330, %v1528
  %v1531 = vunpack.c.l.s4 1983009808
  %v1532 = vunpack.c.0.s8 %v1531
  %v1533 = vlaneseq
  %v1534 = vshrl.u32 %v1533, 7
  %v1535 = vsub.s32 %v1532, %v1534
  %v1536 = vrot.slane %v1522, %v1535
  %v1537 = vcombine.high %v1529, %v1529
  %v1538 = vcombine.high %v1536, %v1536
  %v1539 = vcombine.high %v1331, %v1331
  %v1541 = vunpack.c.l.s4 1983009808
  %v1542 = vunpack.c.0.s8 %v1541
  %v1543 = vlaneseq
  %v1544 = vshrl.u32 %v1543, 7
  %v1545 = vsub.s32 %v1542, %v1544
  %v1546 = vrot.slane %v1331, %v1545
  %v1548 = vunpack.c.l.s4 1983009808
  %v1549 = vunpack.c.0.s8 %v1548
  %v1550 = vlaneseq
  %v1551 = vshrl.u32 %v1550, 7
  %v1552 = vsub.s32 %v1549, %v1551
  %v1553 = vrot.slane %v1539, %v1552
  %v1554 = vcombine.high %v1546, %v1546
  %v1555 = vcombine.high %v1553, %v1553
  %v1556 = vcombine.high %v1332, %v1332
  %v1558 = vunpack.c.l.s4 1983009808
  %v1559 = vunpack.c.0.s8 %v1558
  %v1560 = vlaneseq
  %v1561 = vshrl.u32 %v1560, 7
  %v1562 = vsub.s32 %v1559, %v1561
  %v1563 = vrot.slane %v1332, %v1562
  %v1565 = vunpack.c.l.s4 1983009808
  %v1566 = vunpack.c.0.s8 %v1565
  %v1567 = vlaneseq
  %v1568 = vshrl.u32 %v1567, 7
  %v1569 = vsub.s32 %v1566, %v1568
  %v1570 = vrot.slane %v1556, %v1569
  %v1571 = vcombine.high %v1563, %v1563
  %v1572 = vcombine.high %v1570, %v1570
  %v1573 = vcombine.high %v1333, %v1333
  %v1575 = vunpack.c.l.s4 1983009808
  %v1576 = vunpack.c.0.s8 %v1575
  %v1577 = vlaneseq
  %v1578 = vshrl.u32 %v1577, 7
  %v1579 = vsub.s32 %v1576, %v1578
  %v1580 = vrot.slane %v1333, %v1579
  %v1582 = vunpack.c.l.s4 1983009808
  %v1583 = vunpack.c.0.s8 %v1582
  %v1584 = vlaneseq
  %v1585 = vshrl.u32 %v1584, 7
  %v1586 = vsub.s32 %v1583, %v1585
  %v1587 = vrot.slane %v1573, %v1586
  %v1588 = vcombine.high %v1580, %v1580
  %v1589 = vcombine.high %v1587, %v1587
  %v1590 = vcombine.high %v1334, %v1334
  %v1592 = vunpack.c.l.s4 1983009808
  %v1593 = vunpack.c.0.s8 %v1592
  %v1594 = vlaneseq
  %v1595 = vshrl.u32 %v1594, 7
  %v1596 = vsub.s32 %v1593, %v1595
  %v1597 = vrot.slane %v1334, %v1596
  %v1599 = vunpack.c.l.s4 1983009808
  %v1600 = vunpack.c.0.s8 %v1599
  %v1601 = vlaneseq
  %v1602 = vshrl.u32 %v1601, 7
  %v1603 = vsub.s32 %v1600, %v1602
  %v1604 = vrot.slane %v1590, %v1603
  %v1605 = vcombine.high %v1597, %v1597
  %v1606 = vcombine.high %v1604, %v1604
  %v1607 = vcombine.high %v1335, %v1335
  %v1609 = vunpack.c.l.s4 1983009808
  %v1610 = vunpack.c.0.s8 %v1609
  %v1611 = vlaneseq
  %v1612 = vshrl.u32 %v1611, 7
  %v1613 = vsub.s32 %v1610, %v1612
  %v1614 = vrot.slane %v1335, %v1613
  %v1616 = vunpack.c.l.s4 1983009808
  %v1617 = vunpack.c.0.s8 %v1616
  %v1618 = vlaneseq
  %v1619 = vshrl.u32 %v1618, 7
  %v1620 = vsub.s32 %v1617, %v1619
  %v1621 = vrot.slane %v1607, %v1620
  %v1622 = vcombine.high %v1614, %v1614
  %v1623 = vcombine.high %v1621, %v1621
  %v1688 = vrot.slane %v1359, 7
  %v1689 = vrot.slane %v1688, 2
  %v1690 = vrot.slane %v1367, 7
  %v1691 = vrot.slane %v1690, 2
  %v1692 = vrot.slane %v1366, 7
  %v1693 = vrot.slane %v1692, 2
  %v1694 = vrot.slane %v1368, 7
  %v1695 = vrot.slane %v1694, 2
  %v1696 = vrot.slane %v1376, 7
  %v1697 = vrot.slane %v1696, 2
  %v1698 = vrot.slane %v1384, 7
  %v1699 = vrot.slane %v1698, 2
  %v1700 = vrot.slane %v1383, 7
  %v1701 = vrot.slane %v1700, 2
  %v1702 = vrot.slane %v1385, 7
  %v1703 = vrot.slane %v1702, 2
  %v1704 = vrot.slane %v1393, 7
  %v1705 = vrot.slane %v1704, 2
  %v1706 = vrot.slane %v1401, 7
  %v1707 = vrot.slane %v1706, 2
  %v1708 = vrot.slane %v1400, 7
  %v1709 = vrot.slane %v1708, 2
  %v1710 = vrot.slane %v1402, 7
  %v1711 = vrot.slane %v1710, 2
  %v1712 = vrot.slane %v1410, 7
  %v1713 = vrot.slane %v1712, 2
  %v1714 = vrot.slane %v1418, 7
  %v1715 = vrot.slane %v1714, 2
  %v1716 = vrot.slane %v1417, 7
  %v1717 = vrot.slane %v1716, 2
  %v1718 = vrot.slane %v1419, 7
  %v1719 = vrot.slane %v1718, 2
  %v1720 = vrot.slane %v1427, 7
  %v1721 = vrot.slane %v1720, 2
  %v1722 = vrot.slane %v1435, 7
  %v1723 = vrot.slane %v1722, 2
  %v1724 = vrot.slane %v1434, 7
  %v1725 = vrot.slane %v1724, 2
  %v1726 = vrot.slane %v1436, 7
  %v1727 = vrot.slane %v1726, 2
  %v1728 = vrot.slane %v1444, 7
  %v1729 = vrot.slane %v1728, 2
  %v1730 = vrot.slane %v1452, 7
  %v1731 = vrot.slane %v1730, 2
  %v1732 = vrot.slane %v1451, 7
  %v1733 = vrot.slane %v1732, 2
  %v1734 = vrot.slane %v1453, 7
  %v1735 = vrot.slane %v1734, 2
  %v1736 = vrot.slane %v1461, 7
  %v1737 = vrot.slane %v1736, 2
  %v1738 = vrot.slane %v1469, 7
  %v1739 = vrot.slane %v1738, 2
  %v1740 = vrot.slane %v1468, 7
  %v1741 = vrot.slane %v1740, 2
  %v1742 = vrot.slane %v1470, 7
  %v1743 = vrot.slane %v1742, 2
  %v1744 = vrot.slane %v1478, 7
  %v1745 = vrot.slane %v1744, 2
  %v1746 = vrot.slane %v1486, 7
  %v1747 = vrot.slane %v1746, 2
  %v1748 = vrot.slane %v1485, 7
  %v1749 = vrot.slane %v1748, 2
  %v1750 = vrot.slane %v1487, 7
  %v1751 = vrot.slane %v1750, 2
  %v1752 = vrot.slane %v1495, 7
  %v1753 = vrot.slane %v1752, 2
  %v1754 = vrot.slane %v1503, 7
  %v1755 = vrot.slane %v1754, 2
  %v1756 = vrot.slane %v1502, 7
  %v1757 = vrot.slane %v1756, 2
  %v1758 = vrot.slane %v1504, 7
  %v1759 = vrot.slane %v1758, 2
  %v1760 = vrot.slane %v1512, 7
  %v1761 = vrot.slane %v1760, 2
  %v1762 = vrot.slane %v1520, 7
  %v1763 = vrot.slane %v1762, 2
  %v1764 = vrot.slane %v1519, 7
  %v1765 = vrot.slane %v1764, 2
  %v1766 = vrot.slane %v1521, 7
  %v1767 = vrot.slane %v1766, 2
  %v1768 = vrot.slane %v1529, 7
  %v1769 = vrot.slane %v1768, 2
  %v1770 = vrot.slane %v1537, 7
  %v1771 = vrot.slane %v1770, 2
  %v1772 = vrot.slane %v1536, 7
  %v1773 = vrot.slane %v1772, 2
  %v1774 = vrot.slane %v1538, 7
  %v1775 = vrot.slane %v1774, 2
  %v1776 = vrot.slane %v1546, 7
  %v1777 = vrot.slane %v1776, 2
  %v1778 = vrot.slane %v1554, 7
  %v1779 = vrot.slane %v1778, 2
  %v1780 = vrot.slane %v1553, 7
  %v1781 = vrot.slane %v1780, 2
  %v1782 = vrot.slane %v1555, 7
  %v1783 = vrot.slane %v1782, 2
  %v1784 = vrot.slane %v1563, 7
  %v1785 = vrot.slane %v1784, 2
  %v1786 = vrot.slane %v1571, 7
  %v1787 = vrot.slane %v1786, 2
  %v1788 = vrot.slane %v1570, 7
  %v1789 = vrot.slane %v1788, 2
  %v1790 = vrot.slane %v1572, 7
  %v1791 = vrot.slane %v1790, 2
  %v1792 = vrot.slane %v1580, 7
  %v1793 = vrot.slane %v1792, 2
  %v1794 = vrot.slane %v1588, 7
  %v1795 = vrot.slane %v1794, 2
  %v1796 = vrot.slane %v1587, 7
  %v1797 = vrot.slane %v1796, 2
  %v1798 = vrot.slane %v1589, 7
  %v1799 = vrot.slane %v1798, 2
  %v1800 = vrot.slane %v1597, 7
  %v1801 = vrot.slane %v1800, 2
  %v1802 = vrot.slane %v1605, 7
  %v1803 = vrot.slane %v1802, 2
  %v1804 = vrot.slane %v1604, 7
  %v1805 = vrot.slane %v1804, 2
  %v1806 = vrot.slane %v1606, 7
  %v1807 = vrot.slane %v1806, 2
  %v1808 = vrot.slane %v1614, 7
  %v1809 = vrot.slane %v1808, 2
  %v1810 = vrot.slane %v1622, 7
  %v1811 = vrot.slane %v1810, 2
  %v1812 = vrot.slane %v1621, 7
  %v1813 = vrot.slane %v1812, 2
  %v1814 = vrot.slane %v1623, 7
  %v1815 = vrot.slane %v1814, 2
  %v1880 = vmax.f32 %v1359, %v1689
  %v1881 = vmax.f32 %v1367, %v1691
  %v1882 = vmax.f32 %v1366, %v1693
  %v1883 = vmax.f32 %v1368, %v1695
  %v1884 = vmax.f32 %v1376, %v1697
  %v1885 = vmax.f32 %v1384, %v1699
  %v1886 = vmax.f32 %v1383, %v1701
  %v1887 = vmax.f32 %v1385, %v1703
  %v1888 = vmax.f32 %v1393, %v1705
  %v1889 = vmax.f32 %v1401, %v1707
  %v1890 = vmax.f32 %v1400, %v1709
  %v1891 = vmax.f32 %v1402, %v1711
  %v1892 = vmax.f32 %v1410, %v1713
  %v1893 = vmax.f32 %v1418, %v1715
  %v1894 = vmax.f32 %v1417, %v1717
  %v1895 = vmax.f32 %v1419, %v1719
  %v1896 = vmax.f32 %v1427, %v1721
  %v1897 = vmax.f32 %v1435, %v1723
  %v1898 = vmax.f32 %v1434, %v1725
  %v1899 = vmax.f32 %v1436, %v1727
  %v1900 = vmax.f32 %v1444, %v1729
  %v1901 = vmax.f32 %v1452, %v1731
  %v1902 = vmax.f32 %v1451, %v1733
  %v1903 = vmax.f32 %v1453, %v1735
  %v1904 = vmax.f32 %v1461, %v1737
  %v1905 = vmax.f32 %v1469, %v1739
  %v1906 = vmax.f32 %v1468, %v1741
  %v1907 = vmax.f32 %v1470, %v1743
  %v1908 = vmax.f32 %v1478, %v1745
  %v1909 = vmax.f32 %v1486, %v1747
  %v1910 = vmax.f32 %v1485, %v1749
  %v1911 = vmax.f32 %v1487, %v1751
  %v1912 = vmax.f32 %v1495, %v1753
  %v1913 = vmax.f32 %v1503, %v1755
  %v1914 = vmax.f32 %v1502, %v1757
  %v1915 = vmax.f32 %v1504, %v1759
  %v1916 = vmax.f32 %v1512, %v1761
  %v1917 = vmax.f32 %v1520, %v1763
  %v1918 = vmax.f32 %v1519, %v1765
  %v1919 = vmax.f32 %v1521, %v1767
  %v1920 = vmax.f32 %v1529, %v1769
  %v1921 = vmax.f32 %v1537, %v1771
  %v1922 = vmax.f32 %v1536, %v1773
  %v1923 = vmax.f32 %v1538, %v1775
  %v1924 = vmax.f32 %v1546, %v1777
  %v1925 = vmax.f32 %v1554, %v1779
  %v1926 = vmax.f32 %v1553, %v1781
  %v1927 = vmax.f32 %v1555, %v1783
  %v1928 = vmax.f32 %v1563, %v1785
  %v1929 = vmax.f32 %v1571, %v1787
  %v1930 = vmax.f32 %v1570, %v1789
  %v1931 = vmax.f32 %v1572, %v1791
  %v1932 = vmax.f32 %v1580, %v1793
  %v1933 = vmax.f32 %v1588, %v1795
  %v1934 = vmax.f32 %v1587, %v1797
  %v1935 = vmax.f32 %v1589, %v1799
  %v1936 = vmax.f32 %v1597, %v1801
  %v1937 = vmax.f32 %v1605, %v1803
  %v1938 = vmax.f32 %v1604, %v1805
  %v1939 = vmax.f32 %v1606, %v1807
  %v1940 = vmax.f32 %v1614, %v1809
  %v1941 = vmax.f32 %v1622, %v1811
  %v1942 = vmax.f32 %v1621, %v1813
  %v1943 = vmax.f32 %v1623, %v1815
  %v1944 = vmax.f32 %v1880, %v1884
  %v1945 = vmax.f32 %v1881, %v1885
  %v1946 = vmax.f32 %v1882, %v1886
  %v1947 = vmax.f32 %v1883, %v1887
  %v1948 = vmax.f32 %v1888, %v1892
  %v1949 = vmax.f32 %v1889, %v1893
  %v1950 = vmax.f32 %v1890, %v1894
  %v1951 = vmax.f32 %v1891, %v1895
  %v1952 = vmax.f32 %v1896, %v1900
  %v1953 = vmax.f32 %v1897, %v1901
  %v1954 = vmax.f32 %v1898, %v1902
  %v1955 = vmax.f32 %v1899, %v1903
  %v1956 = vmax.f32 %v1904, %v1908
  %v1957 = vmax.f32 %v1905, %v1909
  %v1958 = vmax.f32 %v1906, %v1910
  %v1959 = vmax.f32 %v1907, %v1911
  %v1960 = vmax.f32 %v1912, %v1916
  %v1961 = vmax.f32 %v1913, %v1917
  %v1962 = vmax.f32 %v1914, %v1918
  %v1963 = vmax.f32 %v1915, %v1919
  %v1964 = vmax.f32 %v1920, %v1924
  %v1965 = vmax.f32 %v1921, %v1925
  %v1966 = vmax.f32 %v1922, %v1926
  %v1967 = vmax.f32 %v1923, %v1927
  %v1968 = vmax.f32 %v1928, %v1932
  %v1969 = vmax.f32 %v1929, %v1933
  %v1970 = vmax.f32 %v1930, %v1934
  %v1971 = vmax.f32 %v1931, %v1935
  %v1972 = vmax.f32 %v1936, %v1940
  %v1973 = vmax.f32 %v1937, %v1941
  %v1974 = vmax.f32 %v1938, %v1942
  %v1975 = vmax.f32 %v1939, %v1943
  %v1976 = vpack.c.bf16 %v1944, %v1944
  %v1977 = vpack.c.bf16 %v1945, %v1945
  %v1978 = vpack.c.bf16 %v1946, %v1946
  %v1979 = vpack.c.bf16 %v1947, %v1947
  %v1980 = vpack.c.bf16 %v1948, %v1948
  %v1981 = vpack.c.bf16 %v1949, %v1949
  %v1982 = vpack.c.bf16 %v1950, %v1950
  %v1983 = vpack.c.bf16 %v1951, %v1951
  %v1984 = vpack.c.bf16 %v1952, %v1952
  %v1985 = vpack.c.bf16 %v1953, %v1953
  %v1986 = vpack.c.bf16 %v1954, %v1954
  %v1987 = vpack.c.bf16 %v1955, %v1955
  %v1988 = vpack.c.bf16 %v1956, %v1956
  %v1989 = vpack.c.bf16 %v1957, %v1957
  %v1990 = vpack.c.bf16 %v1958, %v1958
  %v1991 = vpack.c.bf16 %v1959, %v1959
  %v1992 = vpack.c.bf16 %v1960, %v1960
  %v1993 = vpack.c.bf16 %v1961, %v1961
  %v1994 = vpack.c.bf16 %v1962, %v1962
  %v1995 = vpack.c.bf16 %v1963, %v1963
  %v1996 = vpack.c.bf16 %v1964, %v1964
  %v1997 = vpack.c.bf16 %v1965, %v1965
  %v1998 = vpack.c.bf16 %v1966, %v1966
  %v1999 = vpack.c.bf16 %v1967, %v1967
  %v2000 = vpack.c.bf16 %v1968, %v1968
  %v2001 = vpack.c.bf16 %v1969, %v1969
  %v2002 = vpack.c.bf16 %v1970, %v1970
  %v2003 = vpack.c.bf16 %v1971, %v1971
  %v2004 = vpack.c.bf16 %v1972, %v1972
  %v2005 = vpack.c.bf16 %v1973, %v1973
  %v2006 = vpack.c.bf16 %v1974, %v1974
  %v2007 = vpack.c.bf16 %v1975, %v1975
  %v2041 = vunpack.c.l.s4 1983009808
  %v2042 = vunpack.c.0.s8 %v2041
  %v2043 = vlaneseq
  %v2044 = vshrl.u32 %v2043, 7
  %v2045 = vsub.s32 %v2042, %v2044
  %v2046 = vrot.slane %v1976, %v2045
  %v2048 = vunpack.c.l.s4 1983009808
  %v2049 = vunpack.c.0.s8 %v2048
  %v2050 = vlaneseq
  %v2051 = vshrl.u32 %v2050, 7
  %v2052 = vsub.s32 %v2049, %v2051
  %v2053 = vrot.slane %v1977, %v2052
  %v2055 = vunpack.c.l.s4 1983009808
  %v2056 = vunpack.c.0.s8 %v2055
  %v2057 = vlaneseq
  %v2058 = vshrl.u32 %v2057, 7
  %v2059 = vsub.s32 %v2056, %v2058
  %v2060 = vrot.slane %v1978, %v2059
  %v2062 = vunpack.c.l.s4 1983009808
  %v2063 = vunpack.c.0.s8 %v2062
  %v2064 = vlaneseq
  %v2065 = vshrl.u32 %v2064, 7
  %v2066 = vsub.s32 %v2063, %v2065
  %v2067 = vrot.slane %v1979, %v2066
  %v2069 = vunpack.c.l.s4 1983009808
  %v2070 = vunpack.c.0.s8 %v2069
  %v2071 = vlaneseq
  %v2072 = vshrl.u32 %v2071, 7
  %v2073 = vsub.s32 %v2070, %v2072
  %v2074 = vrot.slane %v1980, %v2073
  %v2076 = vunpack.c.l.s4 1983009808
  %v2077 = vunpack.c.0.s8 %v2076
  %v2078 = vlaneseq
  %v2079 = vshrl.u32 %v2078, 7
  %v2080 = vsub.s32 %v2077, %v2079
  %v2081 = vrot.slane %v1981, %v2080
  %v2083 = vunpack.c.l.s4 1983009808
  %v2084 = vunpack.c.0.s8 %v2083
  %v2085 = vlaneseq
  %v2086 = vshrl.u32 %v2085, 7
  %v2087 = vsub.s32 %v2084, %v2086
  %v2088 = vrot.slane %v1982, %v2087
  %v2090 = vunpack.c.l.s4 1983009808
  %v2091 = vunpack.c.0.s8 %v2090
  %v2092 = vlaneseq
  %v2093 = vshrl.u32 %v2092, 7
  %v2094 = vsub.s32 %v2091, %v2093
  %v2095 = vrot.slane %v1983, %v2094
  %v2097 = vunpack.c.l.s4 1983009808
  %v2098 = vunpack.c.0.s8 %v2097
  %v2099 = vlaneseq
  %v2100 = vshrl.u32 %v2099, 7
  %v2101 = vsub.s32 %v2098, %v2100
  %v2102 = vrot.slane %v1984, %v2101
  %v2104 = vunpack.c.l.s4 1983009808
  %v2105 = vunpack.c.0.s8 %v2104
  %v2106 = vlaneseq
  %v2107 = vshrl.u32 %v2106, 7
  %v2108 = vsub.s32 %v2105, %v2107
  %v2109 = vrot.slane %v1985, %v2108
  %v2111 = vunpack.c.l.s4 1983009808
  %v2112 = vunpack.c.0.s8 %v2111
  %v2113 = vlaneseq
  %v2114 = vshrl.u32 %v2113, 7
  %v2115 = vsub.s32 %v2112, %v2114
  %v2116 = vrot.slane %v1986, %v2115
  %v2118 = vunpack.c.l.s4 1983009808
  %v2119 = vunpack.c.0.s8 %v2118
  %v2120 = vlaneseq
  %v2121 = vshrl.u32 %v2120, 7
  %v2122 = vsub.s32 %v2119, %v2121
  %v2123 = vrot.slane %v1987, %v2122
  %v2125 = vunpack.c.l.s4 1983009808
  %v2126 = vunpack.c.0.s8 %v2125
  %v2127 = vlaneseq
  %v2128 = vshrl.u32 %v2127, 7
  %v2129 = vsub.s32 %v2126, %v2128
  %v2130 = vrot.slane %v1988, %v2129
  %v2132 = vunpack.c.l.s4 1983009808
  %v2133 = vunpack.c.0.s8 %v2132
  %v2134 = vlaneseq
  %v2135 = vshrl.u32 %v2134, 7
  %v2136 = vsub.s32 %v2133, %v2135
  %v2137 = vrot.slane %v1989, %v2136
  %v2139 = vunpack.c.l.s4 1983009808
  %v2140 = vunpack.c.0.s8 %v2139
  %v2141 = vlaneseq
  %v2142 = vshrl.u32 %v2141, 7
  %v2143 = vsub.s32 %v2140, %v2142
  %v2144 = vrot.slane %v1990, %v2143
  %v2146 = vunpack.c.l.s4 1983009808
  %v2147 = vunpack.c.0.s8 %v2146
  %v2148 = vlaneseq
  %v2149 = vshrl.u32 %v2148, 7
  %v2150 = vsub.s32 %v2147, %v2149
  %v2151 = vrot.slane %v1991, %v2150
  %v2153 = vunpack.c.l.s4 1983009808
  %v2154 = vunpack.c.0.s8 %v2153
  %v2155 = vlaneseq
  %v2156 = vshrl.u32 %v2155, 7
  %v2157 = vsub.s32 %v2154, %v2156
  %v2158 = vrot.slane %v1992, %v2157
  %v2160 = vunpack.c.l.s4 1983009808
  %v2161 = vunpack.c.0.s8 %v2160
  %v2162 = vlaneseq
  %v2163 = vshrl.u32 %v2162, 7
  %v2164 = vsub.s32 %v2161, %v2163
  %v2165 = vrot.slane %v1993, %v2164
  %v2167 = vunpack.c.l.s4 1983009808
  %v2168 = vunpack.c.0.s8 %v2167
  %v2169 = vlaneseq
  %v2170 = vshrl.u32 %v2169, 7
  %v2171 = vsub.s32 %v2168, %v2170
  %v2172 = vrot.slane %v1994, %v2171
  %v2174 = vunpack.c.l.s4 1983009808
  %v2175 = vunpack.c.0.s8 %v2174
  %v2176 = vlaneseq
  %v2177 = vshrl.u32 %v2176, 7
  %v2178 = vsub.s32 %v2175, %v2177
  %v2179 = vrot.slane %v1995, %v2178
  %v2181 = vunpack.c.l.s4 1983009808
  %v2182 = vunpack.c.0.s8 %v2181
  %v2183 = vlaneseq
  %v2184 = vshrl.u32 %v2183, 7
  %v2185 = vsub.s32 %v2182, %v2184
  %v2186 = vrot.slane %v1996, %v2185
  %v2188 = vunpack.c.l.s4 1983009808
  %v2189 = vunpack.c.0.s8 %v2188
  %v2190 = vlaneseq
  %v2191 = vshrl.u32 %v2190, 7
  %v2192 = vsub.s32 %v2189, %v2191
  %v2193 = vrot.slane %v1997, %v2192
  %v2195 = vunpack.c.l.s4 1983009808
  %v2196 = vunpack.c.0.s8 %v2195
  %v2197 = vlaneseq
  %v2198 = vshrl.u32 %v2197, 7
  %v2199 = vsub.s32 %v2196, %v2198
  %v2200 = vrot.slane %v1998, %v2199
  %v2202 = vunpack.c.l.s4 1983009808
  %v2203 = vunpack.c.0.s8 %v2202
  %v2204 = vlaneseq
  %v2205 = vshrl.u32 %v2204, 7
  %v2206 = vsub.s32 %v2203, %v2205
  %v2207 = vrot.slane %v1999, %v2206
  %v2209 = vunpack.c.l.s4 1983009808
  %v2210 = vunpack.c.0.s8 %v2209
  %v2211 = vlaneseq
  %v2212 = vshrl.u32 %v2211, 7
  %v2213 = vsub.s32 %v2210, %v2212
  %v2214 = vrot.slane %v2000, %v2213
  %v2216 = vunpack.c.l.s4 1983009808
  %v2217 = vunpack.c.0.s8 %v2216
  %v2218 = vlaneseq
  %v2219 = vshrl.u32 %v2218, 7
  %v2220 = vsub.s32 %v2217, %v2219
  %v2221 = vrot.slane %v2001, %v2220
  %v2223 = vunpack.c.l.s4 1983009808
  %v2224 = vunpack.c.0.s8 %v2223
  %v2225 = vlaneseq
  %v2226 = vshrl.u32 %v2225, 7
  %v2227 = vsub.s32 %v2224, %v2226
  %v2228 = vrot.slane %v2002, %v2227
  %v2230 = vunpack.c.l.s4 1983009808
  %v2231 = vunpack.c.0.s8 %v2230
  %v2232 = vlaneseq
  %v2233 = vshrl.u32 %v2232, 7
  %v2234 = vsub.s32 %v2231, %v2233
  %v2235 = vrot.slane %v2003, %v2234
  %v2237 = vunpack.c.l.s4 1983009808
  %v2238 = vunpack.c.0.s8 %v2237
  %v2239 = vlaneseq
  %v2240 = vshrl.u32 %v2239, 7
  %v2241 = vsub.s32 %v2238, %v2240
  %v2242 = vrot.slane %v2004, %v2241
  %v2244 = vunpack.c.l.s4 1983009808
  %v2245 = vunpack.c.0.s8 %v2244
  %v2246 = vlaneseq
  %v2247 = vshrl.u32 %v2246, 7
  %v2248 = vsub.s32 %v2245, %v2247
  %v2249 = vrot.slane %v2005, %v2248
  %v2251 = vunpack.c.l.s4 1983009808
  %v2252 = vunpack.c.0.s8 %v2251
  %v2253 = vlaneseq
  %v2254 = vshrl.u32 %v2253, 7
  %v2255 = vsub.s32 %v2252, %v2254
  %v2256 = vrot.slane %v2006, %v2255
  %v2258 = vunpack.c.l.s4 1983009808
  %v2259 = vunpack.c.0.s8 %v2258
  %v2260 = vlaneseq
  %v2261 = vshrl.u32 %v2260, 7
  %v2262 = vsub.s32 %v2259, %v2261
  %v2263 = vrot.slane %v2007, %v2262
  %v2265 = vunpack.c.l.s4 1983009808
  %v2266 = vunpack.c.0.s8 %v2265
  %v2267 = vlaneseq
  %v2268 = vshrl.u32 %v2267, 7
  %v2269 = vsub.s32 %v2266, %v2268
  %v2270 = vrot.slane %v2046, %v2269
  %v2272 = vunpack.c.l.s4 1983009808
  %v2273 = vunpack.c.0.s8 %v2272
  %v2274 = vlaneseq
  %v2275 = vshrl.u32 %v2274, 7
  %v2276 = vsub.s32 %v2273, %v2275
  %v2277 = vrot.slane %v2053, %v2276
  %v2279 = vunpack.c.l.s4 1983009808
  %v2280 = vunpack.c.0.s8 %v2279
  %v2281 = vlaneseq
  %v2282 = vshrl.u32 %v2281, 7
  %v2283 = vsub.s32 %v2280, %v2282
  %v2284 = vrot.slane %v2060, %v2283
  %v2286 = vunpack.c.l.s4 1983009808
  %v2287 = vunpack.c.0.s8 %v2286
  %v2288 = vlaneseq
  %v2289 = vshrl.u32 %v2288, 7
  %v2290 = vsub.s32 %v2287, %v2289
  %v2291 = vrot.slane %v2067, %v2290
  %v2293 = vunpack.c.l.s4 1983009808
  %v2294 = vunpack.c.0.s8 %v2293
  %v2295 = vlaneseq
  %v2296 = vshrl.u32 %v2295, 7
  %v2297 = vsub.s32 %v2294, %v2296
  %v2298 = vrot.slane %v2074, %v2297
  %v2300 = vunpack.c.l.s4 1983009808
  %v2301 = vunpack.c.0.s8 %v2300
  %v2302 = vlaneseq
  %v2303 = vshrl.u32 %v2302, 7
  %v2304 = vsub.s32 %v2301, %v2303
  %v2305 = vrot.slane %v2081, %v2304
  %v2307 = vunpack.c.l.s4 1983009808
  %v2308 = vunpack.c.0.s8 %v2307
  %v2309 = vlaneseq
  %v2310 = vshrl.u32 %v2309, 7
  %v2311 = vsub.s32 %v2308, %v2310
  %v2312 = vrot.slane %v2088, %v2311
  %v2314 = vunpack.c.l.s4 1983009808
  %v2315 = vunpack.c.0.s8 %v2314
  %v2316 = vlaneseq
  %v2317 = vshrl.u32 %v2316, 7
  %v2318 = vsub.s32 %v2315, %v2317
  %v2319 = vrot.slane %v2095, %v2318
  %v2321 = vunpack.c.l.s4 1983009808
  %v2322 = vunpack.c.0.s8 %v2321
  %v2323 = vlaneseq
  %v2324 = vshrl.u32 %v2323, 7
  %v2325 = vsub.s32 %v2322, %v2324
  %v2326 = vrot.slane %v2102, %v2325
  %v2328 = vunpack.c.l.s4 1983009808
  %v2329 = vunpack.c.0.s8 %v2328
  %v2330 = vlaneseq
  %v2331 = vshrl.u32 %v2330, 7
  %v2332 = vsub.s32 %v2329, %v2331
  %v2333 = vrot.slane %v2109, %v2332
  %v2335 = vunpack.c.l.s4 1983009808
  %v2336 = vunpack.c.0.s8 %v2335
  %v2337 = vlaneseq
  %v2338 = vshrl.u32 %v2337, 7
  %v2339 = vsub.s32 %v2336, %v2338
  %v2340 = vrot.slane %v2116, %v2339
  %v2342 = vunpack.c.l.s4 1983009808
  %v2343 = vunpack.c.0.s8 %v2342
  %v2344 = vlaneseq
  %v2345 = vshrl.u32 %v2344, 7
  %v2346 = vsub.s32 %v2343, %v2345
  %v2347 = vrot.slane %v2123, %v2346
  %v2349 = vunpack.c.l.s4 1983009808
  %v2350 = vunpack.c.0.s8 %v2349
  %v2351 = vlaneseq
  %v2352 = vshrl.u32 %v2351, 7
  %v2353 = vsub.s32 %v2350, %v2352
  %v2354 = vrot.slane %v2130, %v2353
  %v2356 = vunpack.c.l.s4 1983009808
  %v2357 = vunpack.c.0.s8 %v2356
  %v2358 = vlaneseq
  %v2359 = vshrl.u32 %v2358, 7
  %v2360 = vsub.s32 %v2357, %v2359
  %v2361 = vrot.slane %v2137, %v2360
  %v2363 = vunpack.c.l.s4 1983009808
  %v2364 = vunpack.c.0.s8 %v2363
  %v2365 = vlaneseq
  %v2366 = vshrl.u32 %v2365, 7
  %v2367 = vsub.s32 %v2364, %v2366
  %v2368 = vrot.slane %v2144, %v2367
  %v2370 = vunpack.c.l.s4 1983009808
  %v2371 = vunpack.c.0.s8 %v2370
  %v2372 = vlaneseq
  %v2373 = vshrl.u32 %v2372, 7
  %v2374 = vsub.s32 %v2371, %v2373
  %v2375 = vrot.slane %v2151, %v2374
  %v2377 = vunpack.c.l.s4 1983009808
  %v2378 = vunpack.c.0.s8 %v2377
  %v2379 = vlaneseq
  %v2380 = vshrl.u32 %v2379, 7
  %v2381 = vsub.s32 %v2378, %v2380
  %v2382 = vrot.slane %v2158, %v2381
  %v2384 = vunpack.c.l.s4 1983009808
  %v2385 = vunpack.c.0.s8 %v2384
  %v2386 = vlaneseq
  %v2387 = vshrl.u32 %v2386, 7
  %v2388 = vsub.s32 %v2385, %v2387
  %v2389 = vrot.slane %v2165, %v2388
  %v2391 = vunpack.c.l.s4 1983009808
  %v2392 = vunpack.c.0.s8 %v2391
  %v2393 = vlaneseq
  %v2394 = vshrl.u32 %v2393, 7
  %v2395 = vsub.s32 %v2392, %v2394
  %v2396 = vrot.slane %v2172, %v2395
  %v2398 = vunpack.c.l.s4 1983009808
  %v2399 = vunpack.c.0.s8 %v2398
  %v2400 = vlaneseq
  %v2401 = vshrl.u32 %v2400, 7
  %v2402 = vsub.s32 %v2399, %v2401
  %v2403 = vrot.slane %v2179, %v2402
  %v2405 = vunpack.c.l.s4 1983009808
  %v2406 = vunpack.c.0.s8 %v2405
  %v2407 = vlaneseq
  %v2408 = vshrl.u32 %v2407, 7
  %v2409 = vsub.s32 %v2406, %v2408
  %v2410 = vrot.slane %v2186, %v2409
  %v2412 = vunpack.c.l.s4 1983009808
  %v2413 = vunpack.c.0.s8 %v2412
  %v2414 = vlaneseq
  %v2415 = vshrl.u32 %v2414, 7
  %v2416 = vsub.s32 %v2413, %v2415
  %v2417 = vrot.slane %v2193, %v2416
  %v2419 = vunpack.c.l.s4 1983009808
  %v2420 = vunpack.c.0.s8 %v2419
  %v2421 = vlaneseq
  %v2422 = vshrl.u32 %v2421, 7
  %v2423 = vsub.s32 %v2420, %v2422
  %v2424 = vrot.slane %v2200, %v2423
  %v2426 = vunpack.c.l.s4 1983009808
  %v2427 = vunpack.c.0.s8 %v2426
  %v2428 = vlaneseq
  %v2429 = vshrl.u32 %v2428, 7
  %v2430 = vsub.s32 %v2427, %v2429
  %v2431 = vrot.slane %v2207, %v2430
  %v2433 = vunpack.c.l.s4 1983009808
  %v2434 = vunpack.c.0.s8 %v2433
  %v2435 = vlaneseq
  %v2436 = vshrl.u32 %v2435, 7
  %v2437 = vsub.s32 %v2434, %v2436
  %v2438 = vrot.slane %v2214, %v2437
  %v2440 = vunpack.c.l.s4 1983009808
  %v2441 = vunpack.c.0.s8 %v2440
  %v2442 = vlaneseq
  %v2443 = vshrl.u32 %v2442, 7
  %v2444 = vsub.s32 %v2441, %v2443
  %v2445 = vrot.slane %v2221, %v2444
  %v2447 = vunpack.c.l.s4 1983009808
  %v2448 = vunpack.c.0.s8 %v2447
  %v2449 = vlaneseq
  %v2450 = vshrl.u32 %v2449, 7
  %v2451 = vsub.s32 %v2448, %v2450
  %v2452 = vrot.slane %v2228, %v2451
  %v2454 = vunpack.c.l.s4 1983009808
  %v2455 = vunpack.c.0.s8 %v2454
  %v2456 = vlaneseq
  %v2457 = vshrl.u32 %v2456, 7
  %v2458 = vsub.s32 %v2455, %v2457
  %v2459 = vrot.slane %v2235, %v2458
  %v2461 = vunpack.c.l.s4 1983009808
  %v2462 = vunpack.c.0.s8 %v2461
  %v2463 = vlaneseq
  %v2464 = vshrl.u32 %v2463, 7
  %v2465 = vsub.s32 %v2462, %v2464
  %v2466 = vrot.slane %v2242, %v2465
  %v2468 = vunpack.c.l.s4 1983009808
  %v2469 = vunpack.c.0.s8 %v2468
  %v2470 = vlaneseq
  %v2471 = vshrl.u32 %v2470, 7
  %v2472 = vsub.s32 %v2469, %v2471
  %v2473 = vrot.slane %v2249, %v2472
  %v2475 = vunpack.c.l.s4 1983009808
  %v2476 = vunpack.c.0.s8 %v2475
  %v2477 = vlaneseq
  %v2478 = vshrl.u32 %v2477, 7
  %v2479 = vsub.s32 %v2476, %v2478
  %v2480 = vrot.slane %v2256, %v2479
  %v2482 = vunpack.c.l.s4 1983009808
  %v2483 = vunpack.c.0.s8 %v2482
  %v2484 = vlaneseq
  %v2485 = vshrl.u32 %v2484, 7
  %v2486 = vsub.s32 %v2483, %v2485
  %v2487 = vrot.slane %v2263, %v2486
  %v2488 = vunpack.c.l.b16 %v2270
  %v2489 = vunpack.c.l.b16 %v2277
  %v2490 = vunpack.c.l.b16 %v2284
  %v2491 = vunpack.c.l.b16 %v2291
  %v2492 = vunpack.c.l.b16 %v2298
  %v2493 = vunpack.c.l.b16 %v2305
  %v2494 = vunpack.c.l.b16 %v2312
  %v2495 = vunpack.c.l.b16 %v2319
  %v2496 = vunpack.c.l.b16 %v2326
  %v2497 = vunpack.c.l.b16 %v2333
  %v2498 = vunpack.c.l.b16 %v2340
  %v2499 = vunpack.c.l.b16 %v2347
  %v2500 = vunpack.c.l.b16 %v2354
  %v2501 = vunpack.c.l.b16 %v2361
  %v2502 = vunpack.c.l.b16 %v2368
  %v2503 = vunpack.c.l.b16 %v2375
  %v2504 = vunpack.c.l.b16 %v2382
  %v2505 = vunpack.c.l.b16 %v2389
  %v2506 = vunpack.c.l.b16 %v2396
  %v2507 = vunpack.c.l.b16 %v2403
  %v2508 = vunpack.c.l.b16 %v2410
  %v2509 = vunpack.c.l.b16 %v2417
  %v2510 = vunpack.c.l.b16 %v2424
  %v2511 = vunpack.c.l.b16 %v2431
  %v2512 = vunpack.c.l.b16 %v2438
  %v2513 = vunpack.c.l.b16 %v2445
  %v2514 = vunpack.c.l.b16 %v2452
  %v2515 = vunpack.c.l.b16 %v2459
  %v2516 = vunpack.c.l.b16 %v2466
  %v2517 = vunpack.c.l.b16 %v2473
  %v2518 = vunpack.c.l.b16 %v2480
  %v2519 = vunpack.c.l.b16 %v2487
  %v2520 = vrot.slane %v2489, 7
  %vm2521 = vcmask 1041409
  %v2522 = vsel %vm2521, %v2520, %v2488
  %v2523 = vrot.slane %v2490, 6
  %vm2524 = vcmask 1042434
  %v2525 = vsel %vm2524, %v2523, %v2522
  %v2526 = vrot.slane %v2491, 5
  %vm2527 = vcmask 1043459
  %v2528 = vsel %vm2527, %v2526, %v2525
  %v2529 = vrot.slane %v2493, 7
  %v2530 = vsel %vm2521, %v2529, %v2492
  %v2531 = vrot.slane %v2494, 6
  %v2532 = vsel %vm2524, %v2531, %v2530
  %v2533 = vrot.slane %v2495, 5
  %v2534 = vsel %vm2527, %v2533, %v2532
  %v2535 = vrot.slane %v2497, 7
  %v2536 = vsel %vm2521, %v2535, %v2496
  %v2537 = vrot.slane %v2498, 6
  %v2538 = vsel %vm2524, %v2537, %v2536
  %v2539 = vrot.slane %v2499, 5
  %v2540 = vsel %vm2527, %v2539, %v2538
  %v2541 = vrot.slane %v2501, 7
  %v2542 = vsel %vm2521, %v2541, %v2500
  %v2543 = vrot.slane %v2502, 6
  %v2544 = vsel %vm2524, %v2543, %v2542
  %v2545 = vrot.slane %v2503, 5
  %v2546 = vsel %vm2527, %v2545, %v2544
  %v2547 = vrot.slane %v2505, 7
  %v2548 = vsel %vm2521, %v2547, %v2504
  %v2549 = vrot.slane %v2506, 6
  %v2550 = vsel %vm2524, %v2549, %v2548
  %v2551 = vrot.slane %v2507, 5
  %v2552 = vsel %vm2527, %v2551, %v2550
  %v2553 = vrot.slane %v2509, 7
  %v2554 = vsel %vm2521, %v2553, %v2508
  %v2555 = vrot.slane %v2510, 6
  %v2556 = vsel %vm2524, %v2555, %v2554
  %v2557 = vrot.slane %v2511, 5
  %v2558 = vsel %vm2527, %v2557, %v2556
  %v2559 = vrot.slane %v2513, 7
  %v2560 = vsel %vm2521, %v2559, %v2512
  %v2561 = vrot.slane %v2514, 6
  %v2562 = vsel %vm2524, %v2561, %v2560
  %v2563 = vrot.slane %v2515, 5
  %v2564 = vsel %vm2527, %v2563, %v2562
  %v2565 = vrot.slane %v2517, 7
  %v2566 = vsel %vm2521, %v2565, %v2516
  %v2567 = vrot.slane %v2518, 6
  %v2568 = vsel %vm2524, %v2567, %v2566
  %v2569 = vrot.slane %v2519, 5
  %v2570 = vsel %vm2527, %v2569, %v2568
  %v2571 = vpack.c.b16 %v2528, %v2528
  %v2572 = vpack.c.b16 %v2534, %v2534
  %v2573 = vpack.c.b16 %v2540, %v2540
  %v2574 = vpack.c.b16 %v2546, %v2546
  %v2575 = vpack.c.b16 %v2552, %v2552
  %v2576 = vpack.c.b16 %v2558, %v2558
  %v2577 = vpack.c.b16 %v2564, %v2564
  %v2578 = vpack.c.b16 %v2570, %v2570
  %v2580 = vunpack.c.l.s4 1983009808
  %v2581 = vunpack.c.0.s8 %v2580
  %v2582 = vlaneseq
  %v2583 = vshrl.u32 %v2582, 7
  %v2584 = vsub.s32 %v2581, %v2583
  %v2585 = vrot.slane %v2571, %v2584
  %v2587 = vunpack.c.l.s4 1983009808
  %v2588 = vunpack.c.0.s8 %v2587
  %v2589 = vlaneseq
  %v2590 = vshrl.u32 %v2589, 7
  %v2591 = vsub.s32 %v2588, %v2590
  %v2592 = vrot.slane %v2572, %v2591
  %v2594 = vunpack.c.l.s4 1983009808
  %v2595 = vunpack.c.0.s8 %v2594
  %v2596 = vlaneseq
  %v2597 = vshrl.u32 %v2596, 7
  %v2598 = vsub.s32 %v2595, %v2597
  %v2599 = vrot.slane %v2573, %v2598
  %v2601 = vunpack.c.l.s4 1983009808
  %v2602 = vunpack.c.0.s8 %v2601
  %v2603 = vlaneseq
  %v2604 = vshrl.u32 %v2603, 7
  %v2605 = vsub.s32 %v2602, %v2604
  %v2606 = vrot.slane %v2574, %v2605
  %v2608 = vunpack.c.l.s4 1983009808
  %v2609 = vunpack.c.0.s8 %v2608
  %v2610 = vlaneseq
  %v2611 = vshrl.u32 %v2610, 7
  %v2612 = vsub.s32 %v2609, %v2611
  %v2613 = vrot.slane %v2575, %v2612
  %v2615 = vunpack.c.l.s4 1983009808
  %v2616 = vunpack.c.0.s8 %v2615
  %v2617 = vlaneseq
  %v2618 = vshrl.u32 %v2617, 7
  %v2619 = vsub.s32 %v2616, %v2618
  %v2620 = vrot.slane %v2576, %v2619
  %v2622 = vunpack.c.l.s4 1983009808
  %v2623 = vunpack.c.0.s8 %v2622
  %v2624 = vlaneseq
  %v2625 = vshrl.u32 %v2624, 7
  %v2626 = vsub.s32 %v2623, %v2625
  %v2627 = vrot.slane %v2577, %v2626
  %v2629 = vunpack.c.l.s4 1983009808
  %v2630 = vunpack.c.0.s8 %v2629
  %v2631 = vlaneseq
  %v2632 = vshrl.u32 %v2631, 7
  %v2633 = vsub.s32 %v2630, %v2632
  %v2634 = vrot.slane %v2578, %v2633
  %vm2643 = vcmask 254976
  %2644 = vst.msk [vmem:[%s4] sm:$0x3] %vm2643, %v2585
  %2645 = vst.msk [vmem:[%s4 + $0x2] sm:$0x3] %vm2643, %v2592
  %2646 = vst.msk [vmem:[%s4 + $0x4] sm:$0x3] %vm2643, %v2599
  %2647 = vst.msk [vmem:[%s4 + $0x6] sm:$0x3] %vm2643, %v2606
  %2648 = vst.msk [vmem:[%s4 + $0x8] sm:$0x3] %vm2643, %v2613
  %2649 = vst.msk [vmem:[%s4 + $0xa] sm:$0x3] %vm2643, %v2620
  %2650 = vst.msk [vmem:[%s4 + $0xc] sm:$0x3] %vm2643, %v2627
  %2651 = vst.msk [vmem:[%s4 + $0xe] sm:$0x3] %vm2643, %v2634
  // Predicated region
  $region18: #{faster_style_transfer.8} parent=0 // pred_check
    _
  $region19: #{faster_style_transfer.8} parent=0 // pred_check_branch
    %2653 = sbr.rel (0) target = $region21
  $region20: #{faster_style_transfer.8} parent=0 // pred_region
    _
  $region21: #{faster_style_transfer.8} parent=0 // pred_fallthru
    _
  // Predicated region
  $region22: #{faster_style_transfer.8} parent=0 // pred_check
    _
  $region23: #{faster_style_transfer.8} parent=0 // pred_check_branch
    %2655 = sbr.rel (0) target = $region25
  $region24: #{faster_style_transfer.8} parent=0 // pred_region
    _
  $region25: #{faster_style_transfer.8} parent=0 // pred_fallthru
    _

// kernel: faster_style_transfer.10
$region0: #{faster_style_transfer.10}
  #allocation0 [shape = 'u32[]', space=smem, size = 0x4, offset = 0x4, fixed_abs, tag = 'smem constant byte address 0x4 - core index']
  #allocation1 [shape = 'u32[144,128]{1,0:T(1,128)}', space=vmem, size = 0x12000, scoped, tag = 'internal scratch']
  %s0 = inlined_call_operand.vmem [shape: bf16[2,2,2,64], index: 0, kind: input, shape index: {}]
  %s1 = inlined_call_operand.vmem [shape: bf16[576,64], index: 1, kind: input, shape index: {}]
  %s2 = inlined_call_operand.vmem [shape: f32[1,64], index: 2, kind: input, shape index: {}]
  %s3 = inlined_call_operand.vmem [shape: f32[1,64], index: 3, kind: input, shape index: {}]
  %s4 = inlined_call_operand.vmem [shape: bf16[576,64], index: 4, kind: input, shape index: {}]
  %s5 = inlined_call_operand.vmem [shape: f32[1,64], index: 5, kind: input, shape index: {}]
  %s6 = inlined_call_operand.vmem [shape: f32[1,64], index: 6, kind: input, shape index: {}]
  %s7 = inlined_call_operand.vmem [shape: bf16[2,2,2,64], index: 7, kind: output, shape index: {}]
  %s8 = sld [smem:[#allocation0]]
  $region38: #{faster_style_transfer.10} parent=0
    _
  %s10 = ssub.s32 1, %s8
  %s11 = scalar_select 0, %s10, %s8
  // Predicated region
  $region2: #{faster_style_transfer.10} parent=0 // pred_check
    _
  $region3: #{faster_style_transfer.10} parent=0 // pred_check_branch
    %13 = sbr.rel (0) target = $region5
  $region4: #{faster_style_transfer.10} parent=0 // pred_region
    _
  $region5: #{faster_style_transfer.10} parent=0 // pred_fallthru
    _
  // Predicated region
  $region6: #{faster_style_transfer.10} parent=0 // pred_check
    _
  $region7: #{faster_style_transfer.10} parent=0 // pred_check_branch
    %15 = sbr.rel (0) target = $region9
  $region8: #{faster_style_transfer.10} parent=0 // pred_region
    _
  $region9: #{faster_style_transfer.10} parent=0 // pred_fallthru
    _
  // Predicated region
  $region10: #{faster_style_transfer.10} parent=0 // pred_check
    _
  $region11: #{faster_style_transfer.10} parent=0 // pred_check_branch
    %17 = sbr.rel (0) target = $region13
  $region12: #{faster_style_transfer.10} parent=0 // pred_region
    _
  $region13: #{faster_style_transfer.10} parent=0 // pred_fallthru
    _
  // Predicated region
  $region14: #{faster_style_transfer.10} parent=0 // pred_check
    _
  $region15: #{faster_style_transfer.10} parent=0 // pred_check_branch
    %19 = sbr.rel (0) target = $region17
  $region16: #{faster_style_transfer.10} parent=0 // pred_region
    _
  $region17: #{faster_style_transfer.10} parent=0 // pred_fallthru
    _
  // Predicated region
  $region18: #{faster_style_transfer.10} parent=0 // pred_check
    _
  $region19: #{faster_style_transfer.10} parent=0 // pred_check_branch
    %21 = sbr.rel (0) target = $region21
  $region20: #{faster_style_transfer.10} parent=0 // pred_region
    _
  $region21: #{faster_style_transfer.10} parent=0 // pred_fallthru
    _
  // Predicated region
  $region22: #{faster_style_transfer.10} parent=0 // pred_check
    _
  $region23: #{faster_style_transfer.10} parent=0 // pred_check_branch
    %23 = sbr.rel (0) target = $region25
  $region24: #{faster_style_transfer.10} parent=0 // pred_region
    _
  $region25: #{faster_style_transfer.10} parent=0 // pred_fallthru
    _
  // Predicated region
  $region26: #{faster_style_transfer.10} parent=0 // pred_check
    _
  $region27: #{faster_style_transfer.10} parent=0 // pred_check_branch
    %25 = sbr.rel (0) target = $region29
  $region28: #{faster_style_transfer.10} parent=0 // pred_region
    _
  $region29: #{faster_style_transfer.10} parent=0 // pred_fallthru
    _
  %v27 = vld [vmem:[%s0] sm:$0x1]
  %v28 = vld [vmem:[%s0 + $0x1] sm:$0x1]
  %v29 = vld [vmem:[%s0 + $0x2] sm:$0x1]
  %v30 = vld [vmem:[%s0 + $0x3] sm:$0x1]
  %v31 = vunpack.c.l.bf16 %v27
  %v32 = vunpack.c.l.bf16 %v28
  %v33 = vunpack.c.l.bf16 %v29
  %v34 = vunpack.c.l.bf16 %v30
  %v35 = vld [vmem:[%s1] sm:$0xf]
  %v36 = vld [vmem:[%s1 + $0x4] sm:$0xf]
  %v37 = vld [vmem:[%s1 + $0x8] sm:$0xf]
  %v38 = vld [vmem:[%s1 + $0xc] sm:$0xf]
  %v39 = vld [vmem:[%s1 + $0x10] sm:$0xf]
  %v40 = vld [vmem:[%s1 + $0x14] sm:$0xf]
  %v41 = vld [vmem:[%s1 + $0x18] sm:$0xf]
  %v42 = vld [vmem:[%s1 + $0x1c] sm:$0xf]
  %v43 = vld [vmem:[%s1 + $0x20] sm:$0xf]
  %v44 = vld [vmem:[%s1 + $0x24] sm:$0xf]
  %v45 = vld [vmem:[%s1 + $0x28] sm:$0xf]
  %v46 = vld [vmem:[%s1 + $0x2c] sm:$0xf]
  %v47 = vld [vmem:[%s1 + $0x30] sm:$0xf]
  %v48 = vld [vmem:[%s1 + $0x34] sm:$0xf]
  %v49 = vld [vmem:[%s1 + $0x38] sm:$0xf]
  %v50 = vld [vmem:[%s1 + $0x3c] sm:$0xf]
  %v51 = vld [vmem:[%s1 + $0x40] sm:$0xf]
  %v52 = vld [vmem:[%s1 + $0x44] sm:$0xf]
  %v53 = vld [vmem:[%s1 + $0x48] sm:$0xf]
  %v54 = vld [vmem:[%s1 + $0x4c] sm:$0xf]
  %v55 = vld [vmem:[%s1 + $0x50] sm:$0xf]
  %v56 = vld [vmem:[%s1 + $0x54] sm:$0xf]
  %v57 = vld [vmem:[%s1 + $0x58] sm:$0xf]
  %v58 = vld [vmem:[%s1 + $0x5c] sm:$0xf]
  %v59 = vld [vmem:[%s1 + $0x60] sm:$0xf]
  %v60 = vld [vmem:[%s1 + $0x64] sm:$0xf]
  %v61 = vld [vmem:[%s1 + $0x68] sm:$0xf]
  %v62 = vld [vmem:[%s1 + $0x6c] sm:$0xf]
  %v63 = vld [vmem:[%s1 + $0x70] sm:$0xf]
  %v64 = vld [vmem:[%s1 + $0x74] sm:$0xf]
  %v65 = vld [vmem:[%s1 + $0x78] sm:$0xf]
  %v66 = vld [vmem:[%s1 + $0x7c] sm:$0xf]
  %v67 = vld [vmem:[%s1 + $0x80] sm:$0xf]
  %v68 = vld [vmem:[%s1 + $0x84] sm:$0xf]
  %v69 = vld [vmem:[%s1 + $0x88] sm:$0xf]
  %v70 = vld [vmem:[%s1 + $0x8c] sm:$0xf]
  %v71 = vld [vmem:[%s1 + $0x90] sm:$0xf]
  %v72 = vld [vmem:[%s1 + $0x94] sm:$0xf]
  %v73 = vld [vmem:[%s1 + $0x98] sm:$0xf]
  %v74 = vld [vmem:[%s1 + $0x9c] sm:$0xf]
  %v75 = vld [vmem:[%s1 + $0xa0] sm:$0xf]
  %v76 = vld [vmem:[%s1 + $0xa4] sm:$0xf]
  %v77 = vld [vmem:[%s1 + $0xa8] sm:$0xf]
  %v78 = vld [vmem:[%s1 + $0xac] sm:$0xf]
  %v79 = vld [vmem:[%s1 + $0xb0] sm:$0xf]
  %v80 = vld [vmem:[%s1 + $0xb4] sm:$0xf]
  %v81 = vld [vmem:[%s1 + $0xb8] sm:$0xf]
  %v82 = vld [vmem:[%s1 + $0xbc] sm:$0xf]
  %v83 = vld [vmem:[%s1 + $0xc0] sm:$0xf]
  %v84 = vld [vmem:[%s1 + $0xc4] sm:$0xf]
  %v85 = vld [vmem:[%s1 + $0xc8] sm:$0xf]
  %v86 = vld [vmem:[%s1 + $0xcc] sm:$0xf]
  %v87 = vld [vmem:[%s1 + $0xd0] sm:$0xf]
  %v88 = vld [vmem:[%s1 + $0xd4] sm:$0xf]
  %v89 = vld [vmem:[%s1 + $0xd8] sm:$0xf]
  %v90 = vld [vmem:[%s1 + $0xdc] sm:$0xf]
  %v91 = vld [vmem:[%s1 + $0xe0] sm:$0xf]
  %v92 = vld [vmem:[%s1 + $0xe4] sm:$0xf]
  %v93 = vld [vmem:[%s1 + $0xe8] sm:$0xf]
  %v94 = vld [vmem:[%s1 + $0xec] sm:$0xf]
  %v95 = vld [vmem:[%s1 + $0xf0] sm:$0xf]
  %v96 = vld [vmem:[%s1 + $0xf4] sm:$0xf]
  %v97 = vld [vmem:[%s1 + $0xf8] sm:$0xf]
  %v98 = vld [vmem:[%s1 + $0xfc] sm:$0xf]
  %v99 = vld [vmem:[%s1 + $0x100] sm:$0xf]
  %v100 = vld [vmem:[%s1 + $0x104] sm:$0xf]
  %v101 = vld [vmem:[%s1 + $0x108] sm:$0xf]
  %v102 = vld [vmem:[%s1 + $0x10c] sm:$0xf]
  %v103 = vld [vmem:[%s1 + $0x110] sm:$0xf]
  %v104 = vld [vmem:[%s1 + $0x114] sm:$0xf]
  %v105 = vld [vmem:[%s1 + $0x118] sm:$0xf]
  %v106 = vld [vmem:[%s1 + $0x11c] sm:$0xf]
  %v107 = vld [vmem:[%s2] sm:$0x1]
  %v108 = vld [vmem:[%s3] sm:$0x1]
  %v114 = vunpack.c.l.s4 1966171168
  %v115 = vunpack.c.0.s8 %v114
  %v116 = vlaneseq
  %v117 = vshrl.u32 %v116, 7
  %v118 = vsub.s32 %v115, %v117
  %v119 = vrot.slane %v27, %v118
  %v121 = vunpack.c.l.s4 1966171168
  %v122 = vunpack.c.0.s8 %v121
  %v123 = vlaneseq
  %v124 = vshrl.u32 %v123, 7
  %v125 = vsub.s32 %v122, %v124
  %v126 = vrot.slane %v119, %v125
  %v128 = vunpack.c.l.s4 1966171168
  %v129 = vunpack.c.0.s8 %v128
  %v130 = vlaneseq
  %v131 = vshrl.u32 %v130, 7
  %v132 = vsub.s32 %v129, %v131
  %v133 = vrot.slane %v28, %v132
  %v135 = vunpack.c.l.s4 1966171168
  %v136 = vunpack.c.0.s8 %v135
  %v137 = vlaneseq
  %v138 = vshrl.u32 %v137, 7
  %v139 = vsub.s32 %v136, %v138
  %v140 = vrot.slane %v133, %v139
  %v142 = vunpack.c.l.s4 1966171168
  %v143 = vunpack.c.0.s8 %v142
  %v144 = vlaneseq
  %v145 = vshrl.u32 %v144, 7
  %v146 = vsub.s32 %v143, %v145
  %v147 = vrot.slane %v29, %v146
  %v149 = vunpack.c.l.s4 1966171168
  %v150 = vunpack.c.0.s8 %v149
  %v151 = vlaneseq
  %v152 = vshrl.u32 %v151, 7
  %v153 = vsub.s32 %v150, %v152
  %v154 = vrot.slane %v147, %v153
  %v156 = vunpack.c.l.s4 1966171168
  %v157 = vunpack.c.0.s8 %v156
  %v158 = vlaneseq
  %v159 = vshrl.u32 %v158, 7
  %v160 = vsub.s32 %v157, %v159
  %v161 = vrot.slane %v30, %v160
  %v163 = vunpack.c.l.s4 1966171168
  %v164 = vunpack.c.0.s8 %v163
  %v165 = vlaneseq
  %v166 = vshrl.u32 %v165, 7
  %v167 = vsub.s32 %v164, %v166
  %v168 = vrot.slane %v161, %v167
  %v170 = vshrl.u32 %v126, 16
  %v172 = vrot.slane %v170, 7
  %v173 = vshll.u32 %v126, 16
  %v175 = vor.u32 %v172, %v173
  %v177 = vshrl.u32 %v140, 16
  %v179 = vrot.slane %v177, 7
  %v180 = vshll.u32 %v140, 16
  %v182 = vor.u32 %v179, %v180
  %v184 = vshrl.u32 %v154, 16
  %v186 = vrot.slane %v184, 7
  %v187 = vshll.u32 %v154, 16
  %v189 = vor.u32 %v186, %v187
  %v191 = vshrl.u32 %v168, 16
  %v193 = vrot.slane %v191, 7
  %v194 = vshll.u32 %v168, 16
  %v196 = vor.u32 %v193, %v194
  %vm201 = vcmask 1040384
  %vm202 = vsmask.f32 256
  %vm203 = vmand %vm201, %vm202
  %v204 = vsel %vm203, 0, %v175
  %v205 = vsel %vm203, 0, %v182
  %v206 = vsel %vm203, 0, %v189
  %v207 = vsel %vm203, 0, %v196
  %vm208 = vcmask 1041408
  %vm209 = vsmask.f32 1280
  %vm210 = vmand %vm208, %vm209
  %v211 = vsel %vm210, %v204, 0
  %v212 = vsel %vm210, %v205, 0
  %v213 = vsel %vm210, %v206, 0
  %v214 = vsel %vm210, %v207, 0
  %v219 = vunpack.c.l.s4 1966171168
  %v220 = vunpack.c.0.s8 %v219
  %v221 = vlaneseq
  %v222 = vshrl.u32 %v221, 7
  %v223 = vsub.s32 %v220, %v222
  %v224 = vrot.slane 0, %v223
  %v225 = vcombine.high %v224, %v224
  %v227 = vunpack.c.l.s4 1966171168
  %v228 = vunpack.c.0.s8 %v227
  %v229 = vlaneseq
  %v230 = vshrl.u32 %v229, 7
  %v231 = vsub.s32 %v228, %v230
  %v232 = vrot.slane %v224, %v231
  %v234 = vunpack.c.l.s4 1966171168
  %v235 = vunpack.c.0.s8 %v234
  %v236 = vlaneseq
  %v237 = vshrl.u32 %v236, 7
  %v238 = vsub.s32 %v235, %v237
  %v239 = vrot.slane %v225, %v238
  %v241 = vunpack.c.l.s4 1966171168
  %v242 = vunpack.c.0.s8 %v241
  %v243 = vlaneseq
  %v244 = vshrl.u32 %v243, 7
  %v245 = vsub.s32 %v242, %v244
  %v246 = vrot.slane %v211, %v245
  %v247 = vcombine.high %v246, %v246
  %v249 = vunpack.c.l.s4 1966171168
  %v250 = vunpack.c.0.s8 %v249
  %v251 = vlaneseq
  %v252 = vshrl.u32 %v251, 7
  %v253 = vsub.s32 %v250, %v252
  %v254 = vrot.slane %v246, %v253
  %v256 = vunpack.c.l.s4 1966171168
  %v257 = vunpack.c.0.s8 %v256
  %v258 = vlaneseq
  %v259 = vshrl.u32 %v258, 7
  %v260 = vsub.s32 %v257, %v259
  %v261 = vrot.slane %v247, %v260
  %v263 = vunpack.c.l.s4 1966171168
  %v264 = vunpack.c.0.s8 %v263
  %v265 = vlaneseq
  %v266 = vshrl.u32 %v265, 7
  %v267 = vsub.s32 %v264, %v266
  %v268 = vrot.slane %v213, %v267
  %v269 = vcombine.high %v268, %v268
  %v271 = vunpack.c.l.s4 1966171168
  %v272 = vunpack.c.0.s8 %v271
  %v273 = vlaneseq
  %v274 = vshrl.u32 %v273, 7
  %v275 = vsub.s32 %v272, %v274
  %v276 = vrot.slane %v268, %v275
  %v278 = vunpack.c.l.s4 1966171168
  %v279 = vunpack.c.0.s8 %v278
  %v280 = vlaneseq
  %v281 = vshrl.u32 %v280, 7
  %v282 = vsub.s32 %v279, %v281
  %v283 = vrot.slane %v269, %v282
  %vm284 = vsmask.f32 1284
  %vm285 = vmor %vm202, %vm284
  %vm286 = vsmask.f32 2312
  %vm287 = vmor %vm285, %vm286
  %vm288 = vsmask.f32 3340
  %vm289 = vmor %vm287, %vm288
  %vm290 = vsmask.f32 4368
  %vm291 = vmor %vm289, %vm290
  %vm292 = vsmask.f32 5396
  %vm293 = vmor %vm291, %vm292
  %vm294 = vsmask.f32 6424
  %vm295 = vmor %vm293, %vm294
  %vm296 = vsmask.f32 7452
  %vm297 = vmor %vm295, %vm296
  %v299 = vshrl.u32 %v232, 16
  %v301 = vrot.slane %v299, 7
  %v302 = vrot.slane %v301, 1
  %v304 = vshll.u32 %v239, 16
  %v306 = vsel %vm297, %v302, %v304
  %v308 = vshrl.u32 %v254, 16
  %v310 = vrot.slane %v308, 7
  %v311 = vrot.slane %v310, 1
  %v313 = vshll.u32 %v261, 16
  %v315 = vsel %vm297, %v311, %v313
  %v317 = vshrl.u32 %v276, 16
  %v319 = vrot.slane %v317, 7
  %v320 = vrot.slane %v319, 1
  %v322 = vshll.u32 %v283, 16
  %v324 = vsel %vm297, %v320, %v322
  %v328 = vunpack.c.l.s4 1966171168
  %v329 = vunpack.c.0.s8 %v328
  %v330 = vlaneseq
  %v331 = vshrl.u32 %v330, 7
  %v332 = vsub.s32 %v329, %v331
  %v333 = vrot.slane %v212, %v332
  %v334 = vcombine.high %v333, %v333
  %v336 = vunpack.c.l.s4 1966171168
  %v337 = vunpack.c.0.s8 %v336
  %v338 = vlaneseq
  %v339 = vshrl.u32 %v338, 7
  %v340 = vsub.s32 %v337, %v339
  %v341 = vrot.slane %v333, %v340
  %v343 = vunpack.c.l.s4 1966171168
  %v344 = vunpack.c.0.s8 %v343
  %v345 = vlaneseq
  %v346 = vshrl.u32 %v345, 7
  %v347 = vsub.s32 %v344, %v346
  %v348 = vrot.slane %v334, %v347
  %v350 = vunpack.c.l.s4 1966171168
  %v351 = vunpack.c.0.s8 %v350
  %v352 = vlaneseq
  %v353 = vshrl.u32 %v352, 7
  %v354 = vsub.s32 %v351, %v353
  %v355 = vrot.slane %v214, %v354
  %v356 = vcombine.high %v355, %v355
  %v358 = vunpack.c.l.s4 1966171168
  %v359 = vunpack.c.0.s8 %v358
  %v360 = vlaneseq
  %v361 = vshrl.u32 %v360, 7
  %v362 = vsub.s32 %v359, %v361
  %v363 = vrot.slane %v355, %v362
  %v365 = vunpack.c.l.s4 1966171168
  %v366 = vunpack.c.0.s8 %v365
  %v367 = vlaneseq
  %v368 = vshrl.u32 %v367, 7
  %v369 = vsub.s32 %v366, %v368
  %v370 = vrot.slane %v356, %v369
  %v372 = vshrl.u32 %v341, 16
  %v374 = vrot.slane %v372, 7
  %v375 = vrot.slane %v374, 1
  %v377 = vshll.u32 %v348, 16
  %v379 = vsel %vm297, %v375, %v377
  %v381 = vshrl.u32 %v363, 16
  %v383 = vrot.slane %v381, 7
  %v384 = vrot.slane %v383, 1
  %v386 = vshll.u32 %v370, 16
  %v388 = vsel %vm297, %v384, %v386
  %v389 = vcombine.low 0, %v211
  %v390 = vcombine.low 0, %v213
  %v392 = vunpack.c.l.s4 1966171168
  %v393 = vunpack.c.0.s8 %v392
  %v394 = vlaneseq
  %v395 = vshrl.u32 %v394, 7
  %v396 = vsub.s32 %v393, %v395
  %v397 = vrot.slane %v389, %v396
  %v399 = vunpack.c.l.s4 1966171168
  %v400 = vunpack.c.0.s8 %v399
  %v401 = vlaneseq
  %v402 = vshrl.u32 %v401, 7
  %v403 = vsub.s32 %v400, %v402
  %v404 = vrot.slane %v390, %v403
  %v405 = vcombine.low %v397, %v404
  %v407 = vunpack.c.l.s4 1966171168
  %v408 = vunpack.c.0.s8 %v407
  %v409 = vlaneseq
  %v410 = vshrl.u32 %v409, 7
  %v411 = vsub.s32 %v408, %v410
  %v412 = vrot.slane %v405, %v411
  %v413 = vcombine.low %v306, %v315
  %v414 = vcombine.low %v306, %v324
  %v416 = vunpack.c.l.s4 1966171168
  %v417 = vunpack.c.0.s8 %v416
  %v418 = vlaneseq
  %v419 = vshrl.u32 %v418, 7
  %v420 = vsub.s32 %v417, %v419
  %v421 = vrot.slane %v413, %v420
  %v423 = vunpack.c.l.s4 1966171168
  %v424 = vunpack.c.0.s8 %v423
  %v425 = vlaneseq
  %v426 = vshrl.u32 %v425, 7
  %v427 = vsub.s32 %v424, %v426
  %v428 = vrot.slane %v414, %v427
  %v429 = vcombine.low %v421, %v428
  %v431 = vunpack.c.l.s4 1966171168
  %v432 = vunpack.c.0.s8 %v431
  %v433 = vlaneseq
  %v434 = vshrl.u32 %v433, 7
  %v435 = vsub.s32 %v432, %v434
  %v436 = vrot.slane %v429, %v435
  %437 = vrot.lane.b32.xlu0 %v436, 64
  %v438 = vpop.permute.xlu0 %437
  %v439 = vcombine.low %v239, %v261
  %v440 = vcombine.low %v239, %v283
  %v442 = vunpack.c.l.s4 1966171168
  %v443 = vunpack.c.0.s8 %v442
  %v444 = vlaneseq
  %v445 = vshrl.u32 %v444, 7
  %v446 = vsub.s32 %v443, %v445
  %v447 = vrot.slane %v439, %v446
  %v449 = vunpack.c.l.s4 1966171168
  %v450 = vunpack.c.0.s8 %v449
  %v451 = vlaneseq
  %v452 = vshrl.u32 %v451, 7
  %v453 = vsub.s32 %v450, %v452
  %v454 = vrot.slane %v440, %v453
  %v455 = vcombine.low %v447, %v454
  %v457 = vunpack.c.l.s4 1966171168
  %v458 = vunpack.c.0.s8 %v457
  %v459 = vlaneseq
  %v460 = vshrl.u32 %v459, 7
  %v461 = vsub.s32 %v458, %v460
  %v462 = vrot.slane %v455, %v461
  %v463 = vcombine.low %v211, %v212
  %v464 = vcombine.low %v213, %v214
  %v466 = vunpack.c.l.s4 1966171168
  %v467 = vunpack.c.0.s8 %v466
  %v468 = vlaneseq
  %v469 = vshrl.u32 %v468, 7
  %v470 = vsub.s32 %v467, %v469
  %v471 = vrot.slane %v463, %v470
  %v473 = vunpack.c.l.s4 1966171168
  %v474 = vunpack.c.0.s8 %v473
  %v475 = vlaneseq
  %v476 = vshrl.u32 %v475, 7
  %v477 = vsub.s32 %v474, %v476
  %v478 = vrot.slane %v464, %v477
  %v479 = vcombine.low %v471, %v478
  %v481 = vunpack.c.l.s4 1966171168
  %v482 = vunpack.c.0.s8 %v481
  %v483 = vlaneseq
  %v484 = vshrl.u32 %v483, 7
  %v485 = vsub.s32 %v482, %v484
  %v486 = vrot.slane %v479, %v485
  %487 = vrot.lane.b32.xlu0 %v486, 64
  %v488 = vpop.permute.xlu0 %487
  %v489 = vcombine.low %v315, %v379
  %v490 = vcombine.low %v324, %v388
  %v492 = vunpack.c.l.s4 1966171168
  %v493 = vunpack.c.0.s8 %v492
  %v494 = vlaneseq
  %v495 = vshrl.u32 %v494, 7
  %v496 = vsub.s32 %v493, %v495
  %v497 = vrot.slane %v489, %v496
  %v499 = vunpack.c.l.s4 1966171168
  %v500 = vunpack.c.0.s8 %v499
  %v501 = vlaneseq
  %v502 = vshrl.u32 %v501, 7
  %v503 = vsub.s32 %v500, %v502
  %v504 = vrot.slane %v490, %v503
  %v505 = vcombine.low %v497, %v504
  %v507 = vunpack.c.l.s4 1966171168
  %v508 = vunpack.c.0.s8 %v507
  %v509 = vlaneseq
  %v510 = vshrl.u32 %v509, 7
  %v511 = vsub.s32 %v508, %v510
  %v512 = vrot.slane %v505, %v511
  %v513 = vcombine.low %v261, %v348
  %v514 = vcombine.low %v283, %v370
  %v516 = vunpack.c.l.s4 1966171168
  %v517 = vunpack.c.0.s8 %v516
  %v518 = vlaneseq
  %v519 = vshrl.u32 %v518, 7
  %v520 = vsub.s32 %v517, %v519
  %v521 = vrot.slane %v513, %v520
  %v523 = vunpack.c.l.s4 1966171168
  %v524 = vunpack.c.0.s8 %v523
  %v525 = vlaneseq
  %v526 = vshrl.u32 %v525, 7
  %v527 = vsub.s32 %v524, %v526
  %v528 = vrot.slane %v514, %v527
  %v529 = vcombine.low %v521, %v528
  %v531 = vunpack.c.l.s4 1966171168
  %v532 = vunpack.c.0.s8 %v531
  %v533 = vlaneseq
  %v534 = vshrl.u32 %v533, 7
  %v535 = vsub.s32 %v532, %v534
  %v536 = vrot.slane %v529, %v535
  %537 = vrot.lane.b32.xlu0 %v536, 64
  %v538 = vpop.permute.xlu0 %537
  %v539 = vcombine.low %v212, 0
  %v540 = vcombine.low %v214, 0
  %v542 = vunpack.c.l.s4 1966171168
  %v543 = vunpack.c.0.s8 %v542
  %v544 = vlaneseq
  %v545 = vshrl.u32 %v544, 7
  %v546 = vsub.s32 %v543, %v545
  %v547 = vrot.slane %v539, %v546
  %v549 = vunpack.c.l.s4 1966171168
  %v550 = vunpack.c.0.s8 %v549
  %v551 = vlaneseq
  %v552 = vshrl.u32 %v551, 7
  %v553 = vsub.s32 %v550, %v552
  %v554 = vrot.slane %v540, %v553
  %v555 = vcombine.low %v547, %v554
  %v557 = vunpack.c.l.s4 1966171168
  %v558 = vunpack.c.0.s8 %v557
  %v559 = vlaneseq
  %v560 = vshrl.u32 %v559, 7
  %v561 = vsub.s32 %v558, %v560
  %v562 = vrot.slane %v555, %v561
  %v563 = vcombine.low %v379, %v306
  %v564 = vcombine.low %v388, %v306
  %v566 = vunpack.c.l.s4 1966171168
  %v567 = vunpack.c.0.s8 %v566
  %v568 = vlaneseq
  %v569 = vshrl.u32 %v568, 7
  %v570 = vsub.s32 %v567, %v569
  %v571 = vrot.slane %v563, %v570
  %v573 = vunpack.c.l.s4 1966171168
  %v574 = vunpack.c.0.s8 %v573
  %v575 = vlaneseq
  %v576 = vshrl.u32 %v575, 7
  %v577 = vsub.s32 %v574, %v576
  %v578 = vrot.slane %v564, %v577
  %v579 = vcombine.low %v571, %v578
  %v581 = vunpack.c.l.s4 1966171168
  %v582 = vunpack.c.0.s8 %v581
  %v583 = vlaneseq
  %v584 = vshrl.u32 %v583, 7
  %v585 = vsub.s32 %v582, %v584
  %v586 = vrot.slane %v579, %v585
  %587 = vrot.lane.b32.xlu0 %v586, 64
  %v588 = vpop.permute.xlu0 %587
  %v589 = vcombine.low %v348, %v239
  %v590 = vcombine.low %v370, %v239
  %v592 = vunpack.c.l.s4 1966171168
  %v593 = vunpack.c.0.s8 %v592
  %v594 = vlaneseq
  %v595 = vshrl.u32 %v594, 7
  %v596 = vsub.s32 %v593, %v595
  %v597 = vrot.slane %v589, %v596
  %v599 = vunpack.c.l.s4 1966171168
  %v600 = vunpack.c.0.s8 %v599
  %v601 = vlaneseq
  %v602 = vshrl.u32 %v601, 7
  %v603 = vsub.s32 %v600, %v602
  %v604 = vrot.slane %v590, %v603
  %v605 = vcombine.low %v597, %v604
  %v607 = vunpack.c.l.s4 1966171168
  %v608 = vunpack.c.0.s8 %v607
  %v609 = vlaneseq
  %v610 = vshrl.u32 %v609, 7
  %v611 = vsub.s32 %v608, %v610
  %v612 = vrot.slane %v605, %v611
  %vm613 = vcmask 523264
  %v616 = vsel %vm613, %v412, %v438
  %v620 = vsel %vm613, %v462, %v488
  %v624 = vsel %vm613, %v512, %v538
  %v628 = vsel %vm613, %v562, %v588
  %v702 = vunpack.c.l.b16 %v35
  %v703 = vunpack.c.l.b16 %v36
  %v704 = vunpack.c.l.b16 %v37
  %v705 = vunpack.c.l.b16 %v38
  %v706 = vunpack.c.l.b16 %v39
  %v707 = vunpack.c.l.b16 %v40
  %v708 = vunpack.c.l.b16 %v41
  %v709 = vunpack.c.l.b16 %v42
  %v710 = vunpack.c.l.b16 %v43
  %v711 = vunpack.c.l.b16 %v44
  %v712 = vunpack.c.l.b16 %v45
  %v713 = vunpack.c.l.b16 %v46
  %v714 = vunpack.c.l.b16 %v47
  %v715 = vunpack.c.l.b16 %v48
  %v716 = vunpack.c.l.b16 %v49
  %v717 = vunpack.c.l.b16 %v50
  %v718 = vunpack.c.l.b16 %v51
  %v719 = vunpack.c.l.b16 %v52
  %v720 = vunpack.c.l.b16 %v53
  %v721 = vunpack.c.l.b16 %v54
  %v722 = vunpack.c.l.b16 %v55
  %v723 = vunpack.c.l.b16 %v56
  %v724 = vunpack.c.l.b16 %v57
  %v725 = vunpack.c.l.b16 %v58
  %v726 = vunpack.c.l.b16 %v59
  %v727 = vunpack.c.l.b16 %v60
  %v728 = vunpack.c.l.b16 %v61
  %v729 = vunpack.c.l.b16 %v62
  %v730 = vunpack.c.l.b16 %v63
  %v731 = vunpack.c.l.b16 %v64
  %v732 = vunpack.c.l.b16 %v65
  %v733 = vunpack.c.l.b16 %v66
  %v734 = vunpack.c.l.b16 %v67
  %v735 = vunpack.c.l.b16 %v68
  %v736 = vunpack.c.l.b16 %v69
  %v737 = vunpack.c.l.b16 %v70
  %v738 = vunpack.c.l.b16 %v71
  %v739 = vunpack.c.l.b16 %v72
  %v740 = vunpack.c.l.b16 %v73
  %v741 = vunpack.c.l.b16 %v74
  %v742 = vunpack.c.l.b16 %v75
  %v743 = vunpack.c.l.b16 %v76
  %v744 = vunpack.c.l.b16 %v77
  %v745 = vunpack.c.l.b16 %v78
  %v746 = vunpack.c.l.b16 %v79
  %v747 = vunpack.c.l.b16 %v80
  %v748 = vunpack.c.l.b16 %v81
  %v749 = vunpack.c.l.b16 %v82
  %v750 = vunpack.c.l.b16 %v83
  %v751 = vunpack.c.l.b16 %v84
  %v752 = vunpack.c.l.b16 %v85
  %v753 = vunpack.c.l.b16 %v86
  %v754 = vunpack.c.l.b16 %v87
  %v755 = vunpack.c.l.b16 %v88
  %v756 = vunpack.c.l.b16 %v89
  %v757 = vunpack.c.l.b16 %v90
  %v758 = vunpack.c.l.b16 %v91
  %v759 = vunpack.c.l.b16 %v92
  %v760 = vunpack.c.l.b16 %v93
  %v761 = vunpack.c.l.b16 %v94
  %v762 = vunpack.c.l.b16 %v95
  %v763 = vunpack.c.l.b16 %v96
  %v764 = vunpack.c.l.b16 %v97
  %v765 = vunpack.c.l.b16 %v98
  %v766 = vunpack.c.l.b16 %v99
  %v767 = vunpack.c.l.b16 %v100
  %v768 = vunpack.c.l.b16 %v101
  %v769 = vunpack.c.l.b16 %v102
  %v770 = vunpack.c.l.b16 %v103
  %v771 = vunpack.c.l.b16 %v104
  %v772 = vunpack.c.l.b16 %v105
  %v773 = vunpack.c.l.b16 %v106
  %v774 = vpack.c.b16 %v703, %v702
  %v775 = vpack.c.b16 %v705, %v704
  %v776 = vpack.c.b16 %v707, %v706
  %v777 = vpack.c.b16 %v709, %v708
  %v778 = vpack.c.b16 %v711, %v710
  %v779 = vpack.c.b16 %v713, %v712
  %v780 = vpack.c.b16 %v715, %v714
  %v781 = vpack.c.b16 %v717, %v716
  %v782 = vpack.c.b16 %v719, %v718
  %v783 = vpack.c.b16 %v721, %v720
  %v784 = vpack.c.b16 %v723, %v722
  %v785 = vpack.c.b16 %v725, %v724
  %v786 = vpack.c.b16 %v727, %v726
  %v787 = vpack.c.b16 %v729, %v728
  %v788 = vpack.c.b16 %v731, %v730
  %v789 = vpack.c.b16 %v733, %v732
  %v790 = vpack.c.b16 %v735, %v734
  %v791 = vpack.c.b16 %v737, %v736
  %v792 = vpack.c.b16 %v739, %v738
  %v793 = vpack.c.b16 %v741, %v740
  %v794 = vpack.c.b16 %v743, %v742
  %v795 = vpack.c.b16 %v745, %v744
  %v796 = vpack.c.b16 %v747, %v746
  %v797 = vpack.c.b16 %v749, %v748
  %v798 = vpack.c.b16 %v751, %v750
  %v799 = vpack.c.b16 %v753, %v752
  %v800 = vpack.c.b16 %v755, %v754
  %v801 = vpack.c.b16 %v757, %v756
  %v802 = vpack.c.b16 %v759, %v758
  %v803 = vpack.c.b16 %v761, %v760
  %v804 = vpack.c.b16 %v763, %v762
  %v805 = vpack.c.b16 %v765, %v764
  %v806 = vpack.c.b16 %v767, %v766
  %v807 = vpack.c.b16 %v769, %v768
  %v808 = vpack.c.b16 %v771, %v770
  %v809 = vpack.c.b16 %v773, %v772
  %v847 = vsel %vm613, %v612, 0
  %849 = vmatprep.subr.bf16.mxu0 0
  %850 = vmatpush1.bf16.msra.mxu0 %v781
  %851 = vmatprep.subr.bf16.mxu0 0
  %852 = vmatpush1.bf16.msra.mxu0 %v780
  %853 = vmatprep.subr.bf16.mxu0 0
  %854 = vmatpush1.bf16.msra.mxu0 %v779
  %855 = vmatprep.subr.bf16.mxu0 0
  %856 = vmatpush1.bf16.msra.mxu0 %v778
  %857 = vmatprep.subr.bf16.mxu0 0
  %858 = vmatpush1.bf16.msra.mxu0 %v777
  %859 = vmatprep.subr.bf16.mxu0 0
  %860 = vmatpush1.bf16.msra.mxu0 %v776
  %861 = vmatprep.subr.bf16.mxu0 0
  %862 = vmatpush1.bf16.msra.mxu0 %v775
  %863 = vmatprep.subr.bf16.mxu0 0
  %864 = vmatpush1.bf16.msra.mxu0 %v774
  %865 = vmatprep.subr.bf16.mxu0 0
  %866 = vmatpush2.bf16.msra.mxu0 %v789
  %867 = vmatprep.subr.bf16.mxu0 0
  %868 = vmatpush2.bf16.msra.mxu0 %v788
  %869 = vmatprep.subr.bf16.mxu0 0
  %870 = vmatpush2.bf16.msra.mxu0 %v787
  %871 = vmatprep.subr.bf16.mxu0 0
  %872 = vmatpush2.bf16.msra.mxu0 %v786
  %873 = vmatprep.subr.bf16.mxu0 0
  %874 = vmatpush2.bf16.msra.mxu0 %v785
  %875 = vmatprep.subr.bf16.mxu0 0
  %876 = vmatpush2.bf16.msra.mxu0 %v784
  %877 = vmatprep.subr.bf16.mxu0 0
  %878 = vmatpush2.bf16.msra.mxu0 %v783
  %879 = vmatprep.subr.bf16.mxu0 0
  %880 = vmatpush2.bf16.msra.mxu0 %v782
  %881 = vmatprep.mubr.bf16.mxu0 %v620
  %882 = vmatmul.mubr.bf16.gmra.mxu0 %v616
  %v883 = vpop.f32.mrf.mxu0
  %v884 = vadd.f32 0.0, %v883
  %v885 = vpop.f32.mrf.mxu0
  %v886 = vpop.f32.mrf.mxu0
  %v887 = vpop.f32.mrf.mxu0
  %888 = vdwg.mxu0
  %889 = vmatprep.subr.bf16.mxu0 0
  %890 = vmatpush1.bf16.msra.mxu0 %v797
  %891 = vmatprep.subr.bf16.mxu0 0
  %892 = vmatpush1.bf16.msra.mxu0 %v796
  %893 = vmatprep.subr.bf16.mxu0 0
  %894 = vmatpush1.bf16.msra.mxu0 %v795
  %895 = vmatprep.subr.bf16.mxu0 0
  %896 = vmatpush1.bf16.msra.mxu0 %v794
  %897 = vmatprep.subr.bf16.mxu0 0
  %898 = vmatpush1.bf16.msra.mxu0 %v793
  %899 = vmatprep.subr.bf16.mxu0 0
  %900 = vmatpush1.bf16.msra.mxu0 %v792
  %901 = vmatprep.subr.bf16.mxu0 0
  %902 = vmatpush1.bf16.msra.mxu0 %v791
  %903 = vmatprep.subr.bf16.mxu0 0
  %904 = vmatpush1.bf16.msra.mxu0 %v790
  %905 = vmatprep.subr.bf16.mxu0 0
  %906 = vmatpush2.bf16.msra.mxu0 %v805
  %907 = vmatprep.subr.bf16.mxu0 0
  %908 = vmatpush2.bf16.msra.mxu0 %v804
  %909 = vmatprep.subr.bf16.mxu0 0
  %910 = vmatpush2.bf16.msra.mxu0 %v803
  %911 = vmatprep.subr.bf16.mxu0 0
  %912 = vmatpush2.bf16.msra.mxu0 %v802
  %913 = vmatprep.subr.bf16.mxu0 0
  %914 = vmatpush2.bf16.msra.mxu0 %v801
  %915 = vmatprep.subr.bf16.mxu0 0
  %916 = vmatpush2.bf16.msra.mxu0 %v800
  %917 = vmatprep.subr.bf16.mxu0 0
  %918 = vmatpush2.bf16.msra.mxu0 %v799
  %919 = vmatprep.subr.bf16.mxu0 0
  %920 = vmatpush2.bf16.msra.mxu0 %v798
  %921 = vmatprep.mubr.bf16.mxu0 %v628
  %922 = vmatmul.mubr.bf16.gmra.mxu0 %v624
  %v923 = vpop.f32.mrf.mxu0
  %v924 = vadd.f32 %v884, %v923
  %v925 = vpop.f32.mrf.mxu0
  %v926 = vpop.f32.mrf.mxu0
  %v927 = vpop.f32.mrf.mxu0
  %928 = vdwg.mxu0
  %929 = vmatprep.subr.bf16.mxu0 0
  %930 = vmatpush1.bf16.msra.mxu0 0
  %931 = vmatprep.subr.bf16.mxu0 0
  %932 = vmatpush1.bf16.msra.mxu0 0
  %933 = vmatprep.subr.bf16.mxu0 0
  %934 = vmatpush1.bf16.msra.mxu0 0
  %935 = vmatprep.subr.bf16.mxu0 0
  %936 = vmatpush1.bf16.msra.mxu0 0
  %937 = vmatprep.subr.bf16.mxu0 0
  %938 = vmatpush1.bf16.msra.mxu0 %v809
  %939 = vmatprep.subr.bf16.mxu0 0
  %940 = vmatpush1.bf16.msra.mxu0 %v808
  %941 = vmatprep.subr.bf16.mxu0 0
  %942 = vmatpush1.bf16.msra.mxu0 %v807
  %943 = vmatprep.subr.bf16.mxu0 0
  %944 = vmatpush1.bf16.msra.mxu0 %v806
  %945 = vmatprep.subr.bf16.mxu0 0
  %946 = vmatpush2.bf16.msra.mxu0 0
  %947 = vmatprep.subr.bf16.mxu0 0
  %948 = vmatpush2.bf16.msra.mxu0 0
  %949 = vmatprep.subr.bf16.mxu0 0
  %950 = vmatpush2.bf16.msra.mxu0 0
  %951 = vmatprep.subr.bf16.mxu0 0
  %952 = vmatpush2.bf16.msra.mxu0 0
  %953 = vmatprep.subr.bf16.mxu0 0
  %954 = vmatpush2.bf16.msra.mxu0 0
  %955 = vmatprep.subr.bf16.mxu0 0
  %956 = vmatpush2.bf16.msra.mxu0 0
  %957 = vmatprep.subr.bf16.mxu0 0
  %958 = vmatpush2.bf16.msra.mxu0 0
  %959 = vmatprep.subr.bf16.mxu0 0
  %960 = vmatpush2.bf16.msra.mxu0 0
  %961 = vmatprep.mubr.bf16.mxu0 0
  %962 = vmatmul.mubr.bf16.gmra.mxu0 %v847
  %v963 = vpop.f32.mrf.mxu0
  %v964 = vadd.f32 %v924, %v963
  %v965 = vpop.f32.mrf.mxu0
  %v966 = vpop.f32.mrf.mxu0
  %v967 = vpop.f32.mrf.mxu0
  %968 = vdwg.mxu0
  %v969 = vsel %vm613, %v964, 0.0
  %v970 = vrot.slane %v969, 4
  %v971 = vadd.f32 %v969, %v970
  %v972 = vrot.slane %v971, 2
  %v973 = vadd.f32 %v971, %v972
  %v974 = vrot.slane %v973, 1
  %v975 = vadd.f32 %v973, %v974
  %v976 = vrcp.pop 8.0
  %v977 = vmul.f32 %v975, %v976
  %v978 = vmul.f32 %v964, %v964
  %v979 = vsel %vm613, %v978, 0.0
  %v980 = vrot.slane %v979, 4
  %v981 = vadd.f32 %v979, %v980
  %v982 = vrot.slane %v981, 2
  %v983 = vadd.f32 %v981, %v982
  %v984 = vrot.slane %v983, 1
  %v985 = vadd.f32 %v983, %v984
  %v986 = vmul.f32 %v985, %v976
  %v987 = vmul.f32 %v977, %v977
  %v988 = vsub.f32 %v986, %v987
  %v989 = vmax.f32 %v988, 0.0
  %v990 = vadd.f32 %v989, 1e-05
  %v991 = vrsqrt.pop %v990
  %v992 = vmul.f32 %v107, %v991
  %v993 = vmul.f32 %v977, %v992
  %v994 = vsub.f32 %v108, %v993
  %v996 = vlaneseq
  %v997 = vshrl.u32 %v996, 7
  %v998 = vsub.s32 0, %v997
  %v999 = vrot.slane %v992, %v998
  %v1001 = vmul.f32 %v964, %v999
  %v1003 = vlaneseq
  %v1004 = vshrl.u32 %v1003, 7
  %v1005 = vsub.s32 0, %v1004
  %v1006 = vrot.slane %v994, %v1005
  %v1008 = vadd.f32 %v1001, %v1006
  %v1013 = vcombine.low %v31, %v32
  %v1014 = vcombine.low %v33, %v34
  %v1016 = vunpack.c.l.s4 1983009808
  %v1017 = vunpack.c.0.s8 %v1016
  %v1018 = vlaneseq
  %v1019 = vshrl.u32 %v1018, 7
  %v1020 = vsub.s32 %v1017, %v1019
  %v1021 = vrot.slane %v1013, %v1020
  %v1023 = vunpack.c.l.s4 1983009808
  %v1024 = vunpack.c.0.s8 %v1023
  %v1025 = vlaneseq
  %v1026 = vshrl.u32 %v1025, 7
  %v1027 = vsub.s32 %v1024, %v1026
  %v1028 = vrot.slane %v1014, %v1027
  %v1029 = vcombine.low %v1021, %v1028
  %v1031 = vadd.f32 %v1008, %v1029
  %v1032 = vmax.f32 %v1031, 0.0
  %v1034 = vcombine.high %v1032, %v1032
  %v1036 = vunpack.c.l.s4 1983009808
  %v1037 = vunpack.c.0.s8 %v1036
  %v1038 = vlaneseq
  %v1039 = vshrl.u32 %v1038, 7
  %v1040 = vsub.s32 %v1037, %v1039
  %v1041 = vrot.slane %v1032, %v1040
  %v1043 = vunpack.c.l.s4 1983009808
  %v1044 = vunpack.c.0.s8 %v1043
  %v1045 = vlaneseq
  %v1046 = vshrl.u32 %v1045, 7
  %v1047 = vsub.s32 %v1044, %v1046
  %v1048 = vrot.slane %v1034, %v1047
  %v1049 = vcombine.high %v1041, %v1041
  %v1050 = vcombine.high %v1048, %v1048
  %v1055 = vld [vmem:[%s4] sm:$0xf]
  %v1056 = vld [vmem:[%s4 + $0x4] sm:$0xf]
  %v1057 = vld [vmem:[%s4 + $0x8] sm:$0xf]
  %v1058 = vld [vmem:[%s4 + $0xc] sm:$0xf]
  %v1059 = vld [vmem:[%s4 + $0x10] sm:$0xf]
  %v1060 = vld [vmem:[%s4 + $0x14] sm:$0xf]
  %v1061 = vld [vmem:[%s4 + $0x18] sm:$0xf]
  %v1062 = vld [vmem:[%s4 + $0x1c] sm:$0xf]
  %v1063 = vld [vmem:[%s4 + $0x20] sm:$0xf]
  %v1064 = vld [vmem:[%s4 + $0x24] sm:$0xf]
  %v1065 = vld [vmem:[%s4 + $0x28] sm:$0xf]
  %v1066 = vld [vmem:[%s4 + $0x2c] sm:$0xf]
  %v1067 = vld [vmem:[%s4 + $0x30] sm:$0xf]
  %v1068 = vld [vmem:[%s4 + $0x34] sm:$0xf]
  %v1069 = vld [vmem:[%s4 + $0x38] sm:$0xf]
  %v1070 = vld [vmem:[%s4 + $0x3c] sm:$0xf]
  %v1071 = vld [vmem:[%s4 + $0x40] sm:$0xf]
  %v1072 = vld [vmem:[%s4 + $0x44] sm:$0xf]
  %v1073 = vld [vmem:[%s4 + $0x48] sm:$0xf]
  %v1074 = vld [vmem:[%s4 + $0x4c] sm:$0xf]
  %v1075 = vld [vmem:[%s4 + $0x50] sm:$0xf]
  %v1076 = vld [vmem:[%s4 + $0x54] sm:$0xf]
  %v1077 = vld [vmem:[%s4 + $0x58] sm:$0xf]
  %v1078 = vld [vmem:[%s4 + $0x5c] sm:$0xf]
  %v1079 = vld [vmem:[%s4 + $0x60] sm:$0xf]
  %v1080 = vld [vmem:[%s4 + $0x64] sm:$0xf]
  %v1081 = vld [vmem:[%s4 + $0x68] sm:$0xf]
  %v1082 = vld [vmem:[%s4 + $0x6c] sm:$0xf]
  %v1083 = vld [vmem:[%s4 + $0x70] sm:$0xf]
  %v1084 = vld [vmem:[%s4 + $0x74] sm:$0xf]
  %v1085 = vld [vmem:[%s4 + $0x78] sm:$0xf]
  %v1086 = vld [vmem:[%s4 + $0x7c] sm:$0xf]
  %v1087 = vld [vmem:[%s4 + $0x80] sm:$0xf]
  %v1088 = vld [vmem:[%s4 + $0x84] sm:$0xf]
  %v1089 = vld [vmem:[%s4 + $0x88] sm:$0xf]
  %v1090 = vld [vmem:[%s4 + $0x8c] sm:$0xf]
  %v1091 = vld [vmem:[%s4 + $0x90] sm:$0xf]
  %v1092 = vld [vmem:[%s4 + $0x94] sm:$0xf]
  %v1093 = vld [vmem:[%s4 + $0x98] sm:$0xf]
  %v1094 = vld [vmem:[%s4 + $0x9c] sm:$0xf]
  %v1095 = vld [vmem:[%s4 + $0xa0] sm:$0xf]
  %v1096 = vld [vmem:[%s4 + $0xa4] sm:$0xf]
  %v1097 = vld [vmem:[%s4 + $0xa8] sm:$0xf]
  %v1098 = vld [vmem:[%s4 + $0xac] sm:$0xf]
  %v1099 = vld [vmem:[%s4 + $0xb0] sm:$0xf]
  %v1100 = vld [vmem:[%s4 + $0xb4] sm:$0xf]
  %v1101 = vld [vmem:[%s4 + $0xb8] sm:$0xf]
  %v1102 = vld [vmem:[%s4 + $0xbc] sm:$0xf]
  %v1103 = vld [vmem:[%s4 + $0xc0] sm:$0xf]
  %v1104 = vld [vmem:[%s4 + $0xc4] sm:$0xf]
  %v1105 = vld [vmem:[%s4 + $0xc8] sm:$0xf]
  %v1106 = vld [vmem:[%s4 + $0xcc] sm:$0xf]
  %v1107 = vld [vmem:[%s4 + $0xd0] sm:$0xf]
  %v1108 = vld [vmem:[%s4 + $0xd4] sm:$0xf]
  %v1109 = vld [vmem:[%s4 + $0xd8] sm:$0xf]
  %v1110 = vld [vmem:[%s4 + $0xdc] sm:$0xf]
  %v1111 = vld [vmem:[%s4 + $0xe0] sm:$0xf]
  %v1112 = vld [vmem:[%s4 + $0xe4] sm:$0xf]
  %v1113 = vld [vmem:[%s4 + $0xe8] sm:$0xf]
  %v1114 = vld [vmem:[%s4 + $0xec] sm:$0xf]
  %v1115 = vld [vmem:[%s4 + $0xf0] sm:$0xf]
  %v1116 = vld [vmem:[%s4 + $0xf4] sm:$0xf]
  %v1117 = vld [vmem:[%s4 + $0xf8] sm:$0xf]
  %v1118 = vld [vmem:[%s4 + $0xfc] sm:$0xf]
  %v1119 = vld [vmem:[%s4 + $0x100] sm:$0xf]
  %v1120 = vld [vmem:[%s4 + $0x104] sm:$0xf]
  %v1121 = vld [vmem:[%s4 + $0x108] sm:$0xf]
  %v1122 = vld [vmem:[%s4 + $0x10c] sm:$0xf]
  %v1123 = vld [vmem:[%s4 + $0x110] sm:$0xf]
  %v1124 = vld [vmem:[%s4 + $0x114] sm:$0xf]
  %v1125 = vld [vmem:[%s4 + $0x118] sm:$0xf]
  %v1126 = vld [vmem:[%s4 + $0x11c] sm:$0xf]
  %v1127 = vld [vmem:[%s5] sm:$0x1]
  %v1128 = vld [vmem:[%s6] sm:$0x1]
  %v1129 = vpack.c.bf16 %v1041, %v1041
  %v1130 = vpack.c.bf16 %v1049, %v1049
  %v1131 = vpack.c.bf16 %v1048, %v1048
  %v1132 = vpack.c.bf16 %v1050, %v1050
  %v1134 = vshrl.u32 %v1129, 16
  %v1136 = vrot.slane %v1134, 7
  %v1137 = vshll.u32 %v1129, 16
  %v1139 = vor.u32 %v1136, %v1137
  %v1141 = vshrl.u32 %v1130, 16
  %v1143 = vrot.slane %v1141, 7
  %v1144 = vshll.u32 %v1130, 16
  %v1146 = vor.u32 %v1143, %v1144
  %v1148 = vshrl.u32 %v1131, 16
  %v1150 = vrot.slane %v1148, 7
  %v1151 = vshll.u32 %v1131, 16
  %v1153 = vor.u32 %v1150, %v1151
  %v1155 = vshrl.u32 %v1132, 16
  %v1157 = vrot.slane %v1155, 7
  %v1158 = vshll.u32 %v1132, 16
  %v1160 = vor.u32 %v1157, %v1158
  %v1165 = vsel %vm203, 0, %v1139
  %v1166 = vsel %vm203, 0, %v1146
  %v1167 = vsel %vm203, 0, %v1153
  %v1168 = vsel %vm203, 0, %v1160
  %v1169 = vsel %vm210, %v1165, 0
  %v1170 = vsel %vm210, %v1166, 0
  %v1171 = vsel %vm210, %v1167, 0
  %v1172 = vsel %vm210, %v1168, 0
  %v1176 = vunpack.c.l.s4 1966171168
  %v1177 = vunpack.c.0.s8 %v1176
  %v1178 = vlaneseq
  %v1179 = vshrl.u32 %v1178, 7
  %v1180 = vsub.s32 %v1177, %v1179
  %v1181 = vrot.slane %v1169, %v1180
  %v1182 = vcombine.high %v1181, %v1181
  %v1184 = vunpack.c.l.s4 1966171168
  %v1185 = vunpack.c.0.s8 %v1184
  %v1186 = vlaneseq
  %v1187 = vshrl.u32 %v1186, 7
  %v1188 = vsub.s32 %v1185, %v1187
  %v1189 = vrot.slane %v1181, %v1188
  %v1191 = vunpack.c.l.s4 1966171168
  %v1192 = vunpack.c.0.s8 %v1191
  %v1193 = vlaneseq
  %v1194 = vshrl.u32 %v1193, 7
  %v1195 = vsub.s32 %v1192, %v1194
  %v1196 = vrot.slane %v1182, %v1195
  %v1198 = vunpack.c.l.s4 1966171168
  %v1199 = vunpack.c.0.s8 %v1198
  %v1200 = vlaneseq
  %v1201 = vshrl.u32 %v1200, 7
  %v1202 = vsub.s32 %v1199, %v1201
  %v1203 = vrot.slane %v1171, %v1202
  %v1204 = vcombine.high %v1203, %v1203
  %v1206 = vunpack.c.l.s4 1966171168
  %v1207 = vunpack.c.0.s8 %v1206
  %v1208 = vlaneseq
  %v1209 = vshrl.u32 %v1208, 7
  %v1210 = vsub.s32 %v1207, %v1209
  %v1211 = vrot.slane %v1203, %v1210
  %v1213 = vunpack.c.l.s4 1966171168
  %v1214 = vunpack.c.0.s8 %v1213
  %v1215 = vlaneseq
  %v1216 = vshrl.u32 %v1215, 7
  %v1217 = vsub.s32 %v1214, %v1216
  %v1218 = vrot.slane %v1204, %v1217
  %v1220 = vshrl.u32 %v1189, 16
  %v1222 = vrot.slane %v1220, 7
  %v1223 = vrot.slane %v1222, 1
  %v1225 = vshll.u32 %v1196, 16
  %v1227 = vsel %vm297, %v1223, %v1225
  %v1229 = vshrl.u32 %v1211, 16
  %v1231 = vrot.slane %v1229, 7
  %v1232 = vrot.slane %v1231, 1
  %v1234 = vshll.u32 %v1218, 16
  %v1236 = vsel %vm297, %v1232, %v1234
  %v1240 = vunpack.c.l.s4 1966171168
  %v1241 = vunpack.c.0.s8 %v1240
  %v1242 = vlaneseq
  %v1243 = vshrl.u32 %v1242, 7
  %v1244 = vsub.s32 %v1241, %v1243
  %v1245 = vrot.slane %v1170, %v1244
  %v1246 = vcombine.high %v1245, %v1245
  %v1248 = vunpack.c.l.s4 1966171168
  %v1249 = vunpack.c.0.s8 %v1248
  %v1250 = vlaneseq
  %v1251 = vshrl.u32 %v1250, 7
  %v1252 = vsub.s32 %v1249, %v1251
  %v1253 = vrot.slane %v1245, %v1252
  %v1255 = vunpack.c.l.s4 1966171168
  %v1256 = vunpack.c.0.s8 %v1255
  %v1257 = vlaneseq
  %v1258 = vshrl.u32 %v1257, 7
  %v1259 = vsub.s32 %v1256, %v1258
  %v1260 = vrot.slane %v1246, %v1259
  %v1262 = vunpack.c.l.s4 1966171168
  %v1263 = vunpack.c.0.s8 %v1262
  %v1264 = vlaneseq
  %v1265 = vshrl.u32 %v1264, 7
  %v1266 = vsub.s32 %v1263, %v1265
  %v1267 = vrot.slane %v1172, %v1266
  %v1268 = vcombine.high %v1267, %v1267
  %v1270 = vunpack.c.l.s4 1966171168
  %v1271 = vunpack.c.0.s8 %v1270
  %v1272 = vlaneseq
  %v1273 = vshrl.u32 %v1272, 7
  %v1274 = vsub.s32 %v1271, %v1273
  %v1275 = vrot.slane %v1267, %v1274
  %v1277 = vunpack.c.l.s4 1966171168
  %v1278 = vunpack.c.0.s8 %v1277
  %v1279 = vlaneseq
  %v1280 = vshrl.u32 %v1279, 7
  %v1281 = vsub.s32 %v1278, %v1280
  %v1282 = vrot.slane %v1268, %v1281
  %v1284 = vshrl.u32 %v1253, 16
  %v1286 = vrot.slane %v1284, 7
  %v1287 = vrot.slane %v1286, 1
  %v1289 = vshll.u32 %v1260, 16
  %v1291 = vsel %vm297, %v1287, %v1289
  %v1293 = vshrl.u32 %v1275, 16
  %v1295 = vrot.slane %v1293, 7
  %v1296 = vrot.slane %v1295, 1
  %v1298 = vshll.u32 %v1282, 16
  %v1300 = vsel %vm297, %v1296, %v1298
  %v1301 = vcombine.low 0, %v1169
  %v1302 = vcombine.low 0, %v1171
  %v1304 = vunpack.c.l.s4 1966171168
  %v1305 = vunpack.c.0.s8 %v1304
  %v1306 = vlaneseq
  %v1307 = vshrl.u32 %v1306, 7
  %v1308 = vsub.s32 %v1305, %v1307
  %v1309 = vrot.slane %v1301, %v1308
  %v1311 = vunpack.c.l.s4 1966171168
  %v1312 = vunpack.c.0.s8 %v1311
  %v1313 = vlaneseq
  %v1314 = vshrl.u32 %v1313, 7
  %v1315 = vsub.s32 %v1312, %v1314
  %v1316 = vrot.slane %v1302, %v1315
  %v1317 = vcombine.low %v1309, %v1316
  %v1319 = vunpack.c.l.s4 1966171168
  %v1320 = vunpack.c.0.s8 %v1319
  %v1321 = vlaneseq
  %v1322 = vshrl.u32 %v1321, 7
  %v1323 = vsub.s32 %v1320, %v1322
  %v1324 = vrot.slane %v1317, %v1323
  %v1325 = vcombine.low %v306, %v1227
  %v1326 = vcombine.low %v306, %v1236
  %v1328 = vunpack.c.l.s4 1966171168
  %v1329 = vunpack.c.0.s8 %v1328
  %v1330 = vlaneseq
  %v1331 = vshrl.u32 %v1330, 7
  %v1332 = vsub.s32 %v1329, %v1331
  %v1333 = vrot.slane %v1325, %v1332
  %v1335 = vunpack.c.l.s4 1966171168
  %v1336 = vunpack.c.0.s8 %v1335
  %v1337 = vlaneseq
  %v1338 = vshrl.u32 %v1337, 7
  %v1339 = vsub.s32 %v1336, %v1338
  %v1340 = vrot.slane %v1326, %v1339
  %v1341 = vcombine.low %v1333, %v1340
  %v1343 = vunpack.c.l.s4 1966171168
  %v1344 = vunpack.c.0.s8 %v1343
  %v1345 = vlaneseq
  %v1346 = vshrl.u32 %v1345, 7
  %v1347 = vsub.s32 %v1344, %v1346
  %v1348 = vrot.slane %v1341, %v1347
  %1349 = vrot.lane.b32.xlu0 %v1348, 64
  %v1350 = vpop.permute.xlu0 %1349
  %v1351 = vcombine.low %v239, %v1196
  %v1352 = vcombine.low %v239, %v1218
  %v1354 = vunpack.c.l.s4 1966171168
  %v1355 = vunpack.c.0.s8 %v1354
  %v1356 = vlaneseq
  %v1357 = vshrl.u32 %v1356, 7
  %v1358 = vsub.s32 %v1355, %v1357
  %v1359 = vrot.slane %v1351, %v1358
  %v1361 = vunpack.c.l.s4 1966171168
  %v1362 = vunpack.c.0.s8 %v1361
  %v1363 = vlaneseq
  %v1364 = vshrl.u32 %v1363, 7
  %v1365 = vsub.s32 %v1362, %v1364
  %v1366 = vrot.slane %v1352, %v1365
  %v1367 = vcombine.low %v1359, %v1366
  %v1369 = vunpack.c.l.s4 1966171168
  %v1370 = vunpack.c.0.s8 %v1369
  %v1371 = vlaneseq
  %v1372 = vshrl.u32 %v1371, 7
  %v1373 = vsub.s32 %v1370, %v1372
  %v1374 = vrot.slane %v1367, %v1373
  %v1375 = vcombine.low %v1169, %v1170
  %v1376 = vcombine.low %v1171, %v1172
  %v1378 = vunpack.c.l.s4 1966171168
  %v1379 = vunpack.c.0.s8 %v1378
  %v1380 = vlaneseq
  %v1381 = vshrl.u32 %v1380, 7
  %v1382 = vsub.s32 %v1379, %v1381
  %v1383 = vrot.slane %v1375, %v1382
  %v1385 = vunpack.c.l.s4 1966171168
  %v1386 = vunpack.c.0.s8 %v1385
  %v1387 = vlaneseq
  %v1388 = vshrl.u32 %v1387, 7
  %v1389 = vsub.s32 %v1386, %v1388
  %v1390 = vrot.slane %v1376, %v1389
  %v1391 = vcombine.low %v1383, %v1390
  %v1393 = vunpack.c.l.s4 1966171168
  %v1394 = vunpack.c.0.s8 %v1393
  %v1395 = vlaneseq
  %v1396 = vshrl.u32 %v1395, 7
  %v1397 = vsub.s32 %v1394, %v1396
  %v1398 = vrot.slane %v1391, %v1397
  %1399 = vrot.lane.b32.xlu0 %v1398, 64
  %v1400 = vpop.permute.xlu0 %1399
  %v1401 = vcombine.low %v1227, %v1291
  %v1402 = vcombine.low %v1236, %v1300
  %v1404 = vunpack.c.l.s4 1966171168
  %v1405 = vunpack.c.0.s8 %v1404
  %v1406 = vlaneseq
  %v1407 = vshrl.u32 %v1406, 7
  %v1408 = vsub.s32 %v1405, %v1407
  %v1409 = vrot.slane %v1401, %v1408
  %v1411 = vunpack.c.l.s4 1966171168
  %v1412 = vunpack.c.0.s8 %v1411
  %v1413 = vlaneseq
  %v1414 = vshrl.u32 %v1413, 7
  %v1415 = vsub.s32 %v1412, %v1414
  %v1416 = vrot.slane %v1402, %v1415
  %v1417 = vcombine.low %v1409, %v1416
  %v1419 = vunpack.c.l.s4 1966171168
  %v1420 = vunpack.c.0.s8 %v1419
  %v1421 = vlaneseq
  %v1422 = vshrl.u32 %v1421, 7
  %v1423 = vsub.s32 %v1420, %v1422
  %v1424 = vrot.slane %v1417, %v1423
  %v1425 = vcombine.low %v1196, %v1260
  %v1426 = vcombine.low %v1218, %v1282
  %v1428 = vunpack.c.l.s4 1966171168
  %v1429 = vunpack.c.0.s8 %v1428
  %v1430 = vlaneseq
  %v1431 = vshrl.u32 %v1430, 7
  %v1432 = vsub.s32 %v1429, %v1431
  %v1433 = vrot.slane %v1425, %v1432
  %v1435 = vunpack.c.l.s4 1966171168
  %v1436 = vunpack.c.0.s8 %v1435
  %v1437 = vlaneseq
  %v1438 = vshrl.u32 %v1437, 7
  %v1439 = vsub.s32 %v1436, %v1438
  %v1440 = vrot.slane %v1426, %v1439
  %v1441 = vcombine.low %v1433, %v1440
  %v1443 = vunpack.c.l.s4 1966171168
  %v1444 = vunpack.c.0.s8 %v1443
  %v1445 = vlaneseq
  %v1446 = vshrl.u32 %v1445, 7
  %v1447 = vsub.s32 %v1444, %v1446
  %v1448 = vrot.slane %v1441, %v1447
  %1449 = vrot.lane.b32.xlu0 %v1448, 64
  %v1450 = vpop.permute.xlu0 %1449
  %v1451 = vcombine.low %v1170, 0
  %v1452 = vcombine.low %v1172, 0
  %v1454 = vunpack.c.l.s4 1966171168
  %v1455 = vunpack.c.0.s8 %v1454
  %v1456 = vlaneseq
  %v1457 = vshrl.u32 %v1456, 7
  %v1458 = vsub.s32 %v1455, %v1457
  %v1459 = vrot.slane %v1451, %v1458
  %v1461 = vunpack.c.l.s4 1966171168
  %v1462 = vunpack.c.0.s8 %v1461
  %v1463 = vlaneseq
  %v1464 = vshrl.u32 %v1463, 7
  %v1465 = vsub.s32 %v1462, %v1464
  %v1466 = vrot.slane %v1452, %v1465
  %v1467 = vcombine.low %v1459, %v1466
  %v1469 = vunpack.c.l.s4 1966171168
  %v1470 = vunpack.c.0.s8 %v1469
  %v1471 = vlaneseq
  %v1472 = vshrl.u32 %v1471, 7
  %v1473 = vsub.s32 %v1470, %v1472
  %v1474 = vrot.slane %v1467, %v1473
  %v1475 = vcombine.low %v1291, %v306
  %v1476 = vcombine.low %v1300, %v306
  %v1478 = vunpack.c.l.s4 1966171168
  %v1479 = vunpack.c.0.s8 %v1478
  %v1480 = vlaneseq
  %v1481 = vshrl.u32 %v1480, 7
  %v1482 = vsub.s32 %v1479, %v1481
  %v1483 = vrot.slane %v1475, %v1482
  %v1485 = vunpack.c.l.s4 1966171168
  %v1486 = vunpack.c.0.s8 %v1485
  %v1487 = vlaneseq
  %v1488 = vshrl.u32 %v1487, 7
  %v1489 = vsub.s32 %v1486, %v1488
  %v1490 = vrot.slane %v1476, %v1489
  %v1491 = vcombine.low %v1483, %v1490
  %v1493 = vunpack.c.l.s4 1966171168
  %v1494 = vunpack.c.0.s8 %v1493
  %v1495 = vlaneseq
  %v1496 = vshrl.u32 %v1495, 7
  %v1497 = vsub.s32 %v1494, %v1496
  %v1498 = vrot.slane %v1491, %v1497
  %1499 = vrot.lane.b32.xlu0 %v1498, 64
  %v1500 = vpop.permute.xlu0 %1499
  %v1501 = vcombine.low %v1260, %v239
  %v1502 = vcombine.low %v1282, %v239
  %v1504 = vunpack.c.l.s4 1966171168
  %v1505 = vunpack.c.0.s8 %v1504
  %v1506 = vlaneseq
  %v1507 = vshrl.u32 %v1506, 7
  %v1508 = vsub.s32 %v1505, %v1507
  %v1509 = vrot.slane %v1501, %v1508
  %v1511 = vunpack.c.l.s4 1966171168
  %v1512 = vunpack.c.0.s8 %v1511
  %v1513 = vlaneseq
  %v1514 = vshrl.u32 %v1513, 7
  %v1515 = vsub.s32 %v1512, %v1514
  %v1516 = vrot.slane %v1502, %v1515
  %v1517 = vcombine.low %v1509, %v1516
  %v1519 = vunpack.c.l.s4 1966171168
  %v1520 = vunpack.c.0.s8 %v1519
  %v1521 = vlaneseq
  %v1522 = vshrl.u32 %v1521, 7
  %v1523 = vsub.s32 %v1520, %v1522
  %v1524 = vrot.slane %v1517, %v1523
  %v1527 = vsel %vm613, %v1324, %v1350
  %v1531 = vsel %vm613, %v1374, %v1400
  %v1535 = vsel %vm613, %v1424, %v1450
  %v1539 = vsel %vm613, %v1474, %v1500
  %v1613 = vunpack.c.l.b16 %v1055
  %v1614 = vunpack.c.l.b16 %v1056
  %v1615 = vunpack.c.l.b16 %v1057
  %v1616 = vunpack.c.l.b16 %v1058
  %v1617 = vunpack.c.l.b16 %v1059
  %v1618 = vunpack.c.l.b16 %v1060
  %v1619 = vunpack.c.l.b16 %v1061
  %v1620 = vunpack.c.l.b16 %v1062
  %v1621 = vunpack.c.l.b16 %v1063
  %v1622 = vunpack.c.l.b16 %v1064
  %v1623 = vunpack.c.l.b16 %v1065
  %v1624 = vunpack.c.l.b16 %v1066
  %v1625 = vunpack.c.l.b16 %v1067
  %v1626 = vunpack.c.l.b16 %v1068
  %v1627 = vunpack.c.l.b16 %v1069
  %v1628 = vunpack.c.l.b16 %v1070
  %v1629 = vunpack.c.l.b16 %v1071
  %v1630 = vunpack.c.l.b16 %v1072
  %v1631 = vunpack.c.l.b16 %v1073
  %v1632 = vunpack.c.l.b16 %v1074
  %v1633 = vunpack.c.l.b16 %v1075
  %v1634 = vunpack.c.l.b16 %v1076
  %v1635 = vunpack.c.l.b16 %v1077
  %v1636 = vunpack.c.l.b16 %v1078
  %v1637 = vunpack.c.l.b16 %v1079
  %v1638 = vunpack.c.l.b16 %v1080
  %v1639 = vunpack.c.l.b16 %v1081
  %v1640 = vunpack.c.l.b16 %v1082
  %v1641 = vunpack.c.l.b16 %v1083
  %v1642 = vunpack.c.l.b16 %v1084
  %v1643 = vunpack.c.l.b16 %v1085
  %v1644 = vunpack.c.l.b16 %v1086
  %v1645 = vunpack.c.l.b16 %v1087
  %v1646 = vunpack.c.l.b16 %v1088
  %v1647 = vunpack.c.l.b16 %v1089
  %v1648 = vunpack.c.l.b16 %v1090
  %v1649 = vunpack.c.l.b16 %v1091
  %v1650 = vunpack.c.l.b16 %v1092
  %v1651 = vunpack.c.l.b16 %v1093
  %v1652 = vunpack.c.l.b16 %v1094
  %v1653 = vunpack.c.l.b16 %v1095
  %v1654 = vunpack.c.l.b16 %v1096
  %v1655 = vunpack.c.l.b16 %v1097
  %v1656 = vunpack.c.l.b16 %v1098
  %v1657 = vunpack.c.l.b16 %v1099
  %v1658 = vunpack.c.l.b16 %v1100
  %v1659 = vunpack.c.l.b16 %v1101
  %v1660 = vunpack.c.l.b16 %v1102
  %v1661 = vunpack.c.l.b16 %v1103
  %v1662 = vunpack.c.l.b16 %v1104
  %v1663 = vunpack.c.l.b16 %v1105
  %v1664 = vunpack.c.l.b16 %v1106
  %v1665 = vunpack.c.l.b16 %v1107
  %v1666 = vunpack.c.l.b16 %v1108
  %v1667 = vunpack.c.l.b16 %v1109
  %v1668 = vunpack.c.l.b16 %v1110
  %v1669 = vunpack.c.l.b16 %v1111
  %v1670 = vunpack.c.l.b16 %v1112
  %v1671 = vunpack.c.l.b16 %v1113
  %v1672 = vunpack.c.l.b16 %v1114
  %v1673 = vunpack.c.l.b16 %v1115
  %v1674 = vunpack.c.l.b16 %v1116
  %v1675 = vunpack.c.l.b16 %v1117
  %v1676 = vunpack.c.l.b16 %v1118
  %v1677 = vunpack.c.l.b16 %v1119
  %v1678 = vunpack.c.l.b16 %v1120
  %v1679 = vunpack.c.l.b16 %v1121
  %v1680 = vunpack.c.l.b16 %v1122
  %v1681 = vunpack.c.l.b16 %v1123
  %v1682 = vunpack.c.l.b16 %v1124
  %v1683 = vunpack.c.l.b16 %v1125
  %v1684 = vunpack.c.l.b16 %v1126
  %v1685 = vpack.c.b16 %v1614, %v1613
  %v1686 = vpack.c.b16 %v1616, %v1615
  %v1687 = vpack.c.b16 %v1618, %v1617
  %v1688 = vpack.c.b16 %v1620, %v1619
  %v1689 = vpack.c.b16 %v1622, %v1621
  %v1690 = vpack.c.b16 %v1624, %v1623
  %v1691 = vpack.c.b16 %v1626, %v1625
  %v1692 = vpack.c.b16 %v1628, %v1627
  %v1693 = vpack.c.b16 %v1630, %v1629
  %v1694 = vpack.c.b16 %v1632, %v1631
  %v1695 = vpack.c.b16 %v1634, %v1633
  %v1696 = vpack.c.b16 %v1636, %v1635
  %v1697 = vpack.c.b16 %v1638, %v1637
  %v1698 = vpack.c.b16 %v1640, %v1639
  %v1699 = vpack.c.b16 %v1642, %v1641
  %v1700 = vpack.c.b16 %v1644, %v1643
  %v1701 = vpack.c.b16 %v1646, %v1645
  %v1702 = vpack.c.b16 %v1648, %v1647
  %v1703 = vpack.c.b16 %v1650, %v1649
  %v1704 = vpack.c.b16 %v1652, %v1651
  %v1705 = vpack.c.b16 %v1654, %v1653
  %v1706 = vpack.c.b16 %v1656, %v1655
  %v1707 = vpack.c.b16 %v1658, %v1657
  %v1708 = vpack.c.b16 %v1660, %v1659
  %v1709 = vpack.c.b16 %v1662, %v1661
  %v1710 = vpack.c.b16 %v1664, %v1663
  %v1711 = vpack.c.b16 %v1666, %v1665
  %v1712 = vpack.c.b16 %v1668, %v1667
  %v1713 = vpack.c.b16 %v1670, %v1669
  %v1714 = vpack.c.b16 %v1672, %v1671
  %v1715 = vpack.c.b16 %v1674, %v1673
  %v1716 = vpack.c.b16 %v1676, %v1675
  %v1717 = vpack.c.b16 %v1678, %v1677
  %v1718 = vpack.c.b16 %v1680, %v1679
  %v1719 = vpack.c.b16 %v1682, %v1681
  %v1720 = vpack.c.b16 %v1684, %v1683
  %v1758 = vsel %vm613, %v1524, 0
  %1760 = vmatprep.subr.bf16.mxu0 0
  %1761 = vmatpush1.bf16.msra.mxu0 %v1692
  %1762 = vmatprep.subr.bf16.mxu0 0
  %1763 = vmatpush1.bf16.msra.mxu0 %v1691
  %1764 = vmatprep.subr.bf16.mxu0 0
  %1765 = vmatpush1.bf16.msra.mxu0 %v1690
  %1766 = vmatprep.subr.bf16.mxu0 0
  %1767 = vmatpush1.bf16.msra.mxu0 %v1689
  %1768 = vmatprep.subr.bf16.mxu0 0
  %1769 = vmatpush1.bf16.msra.mxu0 %v1688
  %1770 = vmatprep.subr.bf16.mxu0 0
  %1771 = vmatpush1.bf16.msra.mxu0 %v1687
  %1772 = vmatprep.subr.bf16.mxu0 0
  %1773 = vmatpush1.bf16.msra.mxu0 %v1686
  %1774 = vmatprep.subr.bf16.mxu0 0
  %1775 = vmatpush1.bf16.msra.mxu0 %v1685
  %1776 = vmatprep.subr.bf16.mxu0 0
  %1777 = vmatpush2.bf16.msra.mxu0 %v1700
  %1778 = vmatprep.subr.bf16.mxu0 0
  %1779 = vmatpush2.bf16.msra.mxu0 %v1699
  %1780 = vmatprep.subr.bf16.mxu0 0
  %1781 = vmatpush2.bf16.msra.mxu0 %v1698
  %1782 = vmatprep.subr.bf16.mxu0 0
  %1783 = vmatpush2.bf16.msra.mxu0 %v1697
  %1784 = vmatprep.subr.bf16.mxu0 0
  %1785 = vmatpush2.bf16.msra.mxu0 %v1696
  %1786 = vmatprep.subr.bf16.mxu0 0
  %1787 = vmatpush2.bf16.msra.mxu0 %v1695
  %1788 = vmatprep.subr.bf16.mxu0 0
  %1789 = vmatpush2.bf16.msra.mxu0 %v1694
  %1790 = vmatprep.subr.bf16.mxu0 0
  %1791 = vmatpush2.bf16.msra.mxu0 %v1693
  %1792 = vmatprep.mubr.bf16.mxu0 %v1531
  %1793 = vmatmul.mubr.bf16.gmra.mxu0 %v1527
  %v1794 = vpop.f32.mrf.mxu0
  %v1795 = vadd.f32 0.0, %v1794
  %v1796 = vpop.f32.mrf.mxu0
  %v1797 = vpop.f32.mrf.mxu0
  %v1798 = vpop.f32.mrf.mxu0
  %1799 = vdwg.mxu0
  %1800 = vmatprep.subr.bf16.mxu0 0
  %1801 = vmatpush1.bf16.msra.mxu0 %v1708
  %1802 = vmatprep.subr.bf16.mxu0 0
  %1803 = vmatpush1.bf16.msra.mxu0 %v1707
  %1804 = vmatprep.subr.bf16.mxu0 0
  %1805 = vmatpush1.bf16.msra.mxu0 %v1706
  %1806 = vmatprep.subr.bf16.mxu0 0
  %1807 = vmatpush1.bf16.msra.mxu0 %v1705
  %1808 = vmatprep.subr.bf16.mxu0 0
  %1809 = vmatpush1.bf16.msra.mxu0 %v1704
  %1810 = vmatprep.subr.bf16.mxu0 0
  %1811 = vmatpush1.bf16.msra.mxu0 %v1703
  %1812 = vmatprep.subr.bf16.mxu0 0
  %1813 = vmatpush1.bf16.msra.mxu0 %v1702
  %1814 = vmatprep.subr.bf16.mxu0 0
  %1815 = vmatpush1.bf16.msra.mxu0 %v1701
  %1816 = vmatprep.subr.bf16.mxu0 0
  %1817 = vmatpush2.bf16.msra.mxu0 %v1716
  %1818 = vmatprep.subr.bf16.mxu0 0
  %1819 = vmatpush2.bf16.msra.mxu0 %v1715
  %1820 = vmatprep.subr.bf16.mxu0 0
  %1821 = vmatpush2.bf16.msra.mxu0 %v1714
  %1822 = vmatprep.subr.bf16.mxu0 0
  %1823 = vmatpush2.bf16.msra.mxu0 %v1713
  %1824 = vmatprep.subr.bf16.mxu0 0
  %1825 = vmatpush2.bf16.msra.mxu0 %v1712
  %1826 = vmatprep.subr.bf16.mxu0 0
  %1827 = vmatpush2.bf16.msra.mxu0 %v1711
  %1828 = vmatprep.subr.bf16.mxu0 0
  %1829 = vmatpush2.bf16.msra.mxu0 %v1710
  %1830 = vmatprep.subr.bf16.mxu0 0
  %1831 = vmatpush2.bf16.msra.mxu0 %v1709
  %1832 = vmatprep.mubr.bf16.mxu0 %v1539
  %1833 = vmatmul.mubr.bf16.gmra.mxu0 %v1535
  %v1834 = vpop.f32.mrf.mxu0
  %v1835 = vadd.f32 %v1795, %v1834
  %v1836 = vpop.f32.mrf.mxu0
  %v1837 = vpop.f32.mrf.mxu0
  %v1838 = vpop.f32.mrf.mxu0
  %1839 = vdwg.mxu0
  %1840 = vmatprep.subr.bf16.mxu0 0
  %1841 = vmatpush1.bf16.msra.mxu0 0
  %1842 = vmatprep.subr.bf16.mxu0 0
  %1843 = vmatpush1.bf16.msra.mxu0 0
  %1844 = vmatprep.subr.bf16.mxu0 0
  %1845 = vmatpush1.bf16.msra.mxu0 0
  %1846 = vmatprep.subr.bf16.mxu0 0
  %1847 = vmatpush1.bf16.msra.mxu0 0
  %1848 = vmatprep.subr.bf16.mxu0 0
  %1849 = vmatpush1.bf16.msra.mxu0 %v1720
  %1850 = vmatprep.subr.bf16.mxu0 0
  %1851 = vmatpush1.bf16.msra.mxu0 %v1719
  %1852 = vmatprep.subr.bf16.mxu0 0
  %1853 = vmatpush1.bf16.msra.mxu0 %v1718
  %1854 = vmatprep.subr.bf16.mxu0 0
  %1855 = vmatpush1.bf16.msra.mxu0 %v1717
  %1856 = vmatprep.subr.bf16.mxu0 0
  %1857 = vmatpush2.bf16.msra.mxu0 0
  %1858 = vmatprep.subr.bf16.mxu0 0
  %1859 = vmatpush2.bf16.msra.mxu0 0
  %1860 = vmatprep.subr.bf16.mxu0 0
  %1861 = vmatpush2.bf16.msra.mxu0 0
  %1862 = vmatprep.subr.bf16.mxu0 0
  %1863 = vmatpush2.bf16.msra.mxu0 0
  %1864 = vmatprep.subr.bf16.mxu0 0
  %1865 = vmatpush2.bf16.msra.mxu0 0
  %1866 = vmatprep.subr.bf16.mxu0 0
  %1867 = vmatpush2.bf16.msra.mxu0 0
  %1868 = vmatprep.subr.bf16.mxu0 0
  %1869 = vmatpush2.bf16.msra.mxu0 0
  %1870 = vmatprep.subr.bf16.mxu0 0
  %1871 = vmatpush2.bf16.msra.mxu0 0
  %1872 = vmatprep.mubr.bf16.mxu0 0
  %1873 = vmatmul.mubr.bf16.gmra.mxu0 %v1758
  %v1874 = vpop.f32.mrf.mxu0
  %v1875 = vadd.f32 %v1835, %v1874
  %v1876 = vpop.f32.mrf.mxu0
  %v1877 = vpop.f32.mrf.mxu0
  %v1878 = vpop.f32.mrf.mxu0
  %1879 = vdwg.mxu0
  %v1880 = vsel %vm613, %v1875, 0.0
  %v1881 = vrot.slane %v1880, 4
  %v1882 = vadd.f32 %v1880, %v1881
  %v1883 = vrot.slane %v1882, 2
  %v1884 = vadd.f32 %v1882, %v1883
  %v1885 = vrot.slane %v1884, 1
  %v1886 = vadd.f32 %v1884, %v1885
  %v1887 = vmul.f32 %v1886, %v976
  %v1888 = vmul.f32 %v1875, %v1875
  %v1889 = vsel %vm613, %v1888, 0.0
  %v1890 = vrot.slane %v1889, 4
  %v1891 = vadd.f32 %v1889, %v1890
  %v1892 = vrot.slane %v1891, 2
  %v1893 = vadd.f32 %v1891, %v1892
  %v1894 = vrot.slane %v1893, 1
  %v1895 = vadd.f32 %v1893, %v1894
  %v1896 = vmul.f32 %v1895, %v976
  %v1897 = vmul.f32 %v1887, %v1887
  %v1898 = vsub.f32 %v1896, %v1897
  %v1899 = vmax.f32 %v1898, 0.0
  %v1900 = vadd.f32 %v1899, 1e-05
  %v1901 = vrsqrt.pop %v1900
  %v1902 = vmul.f32 %v1127, %v1901
  %v1903 = vmul.f32 %v1887, %v1902
  %v1904 = vsub.f32 %v1128, %v1903
  %v1906 = vlaneseq
  %v1907 = vshrl.u32 %v1906, 7
  %v1908 = vsub.s32 0, %v1907
  %v1909 = vrot.slane %v1902, %v1908
  %v1911 = vmul.f32 %v1875, %v1909
  %v1913 = vlaneseq
  %v1914 = vshrl.u32 %v1913, 7
  %v1915 = vsub.s32 0, %v1914
  %v1916 = vrot.slane %v1904, %v1915
  %v1918 = vadd.f32 %v1911, %v1916
  %v1919 = vadd.f32 %v1918, %v1032
  %v1920 = vmax.f32 %v1919, 0.0
  %v1922 = vcombine.high %v1920, %v1920
  %v1924 = vunpack.c.l.s4 1983009808
  %v1925 = vunpack.c.0.s8 %v1924
  %v1926 = vlaneseq
  %v1927 = vshrl.u32 %v1926, 7
  %v1928 = vsub.s32 %v1925, %v1927
  %v1929 = vrot.slane %v1920, %v1928
  %v1931 = vunpack.c.l.s4 1983009808
  %v1932 = vunpack.c.0.s8 %v1931
  %v1933 = vlaneseq
  %v1934 = vshrl.u32 %v1933, 7
  %v1935 = vsub.s32 %v1932, %v1934
  %v1936 = vrot.slane %v1922, %v1935
  %v1937 = vcombine.high %v1929, %v1929
  %v1938 = vcombine.high %v1936, %v1936
  %v1943 = vpack.c.bf16 %v1929, %v1929
  %v1944 = vpack.c.bf16 %v1937, %v1937
  %v1945 = vpack.c.bf16 %v1936, %v1936
  %v1946 = vpack.c.bf16 %v1938, %v1938
  %vm1947 = vcmask 516096
  %1948 = vst.msk [vmem:[%s7] sm:$0x1] %vm1947, %v1943
  %1949 = vst.msk [vmem:[%s7 + $0x1] sm:$0x1] %vm1947, %v1944
  %1950 = vst.msk [vmem:[%s7 + $0x2] sm:$0x1] %vm1947, %v1945
  %1951 = vst.msk [vmem:[%s7 + $0x3] sm:$0x1] %vm1947, %v1946
  // Predicated region
  $region30: #{faster_style_transfer.10} parent=0 // pred_check
    _
  $region31: #{faster_style_transfer.10} parent=0 // pred_check_branch
    %1953 = sbr.rel (0) target = $region33
  $region32: #{faster_style_transfer.10} parent=0 // pred_region
    _
  $region33: #{faster_style_transfer.10} parent=0 // pred_fallthru
    _
  // Predicated region
  $region34: #{faster_style_transfer.10} parent=0 // pred_check
    _
  $region35: #{faster_style_transfer.10} parent=0 // pred_check_branch
    %1955 = sbr.rel (0) target = $region37
  $region36: #{faster_style_transfer.10} parent=0 // pred_region
    _
  $region37: #{faster_style_transfer.10} parent=0 // pred_fallthru
    _

// kernel: faster_style_transfer.11
$region0: #{faster_style_transfer.11}
  #allocation0 [shape = 'u32[]', space=smem, size = 0x4, offset = 0x4, fixed_abs, tag = 'smem constant byte address 0x4 - core index']
  #allocation1 [shape = 'u32[144,128]{1,0:T(1,128)}', space=vmem, size = 0x12000, scoped, tag = 'internal scratch']
  %s0 = inlined_call_operand.vmem [shape: bf16[2,2,2,64], index: 0, kind: input, shape index: {}]
  %s1 = inlined_call_operand.vmem [shape: bf16[256,128], index: 1, kind: input, shape index: {}]
  %s2 = inlined_call_operand.vmem [shape: f32[1,32], index: 2, kind: input, shape index: {}]
  %s3 = inlined_call_operand.vmem [shape: f32[1,32], index: 3, kind: input, shape index: {}]
  %s4 = inlined_call_operand.vmem [shape: bf16[2,2,2,128], index: 4, kind: output, shape index: {}]
  %s5 = sld [smem:[#allocation0]]
  $region26: #{faster_style_transfer.11} parent=0
    _
  %s7 = ssub.s32 1, %s5
  %s8 = scalar_select 0, %s7, %s5
  // Predicated region
  $region2: #{faster_style_transfer.11} parent=0 // pred_check
    _
  $region3: #{faster_style_transfer.11} parent=0 // pred_check_branch
    %10 = sbr.rel (0) target = $region5
  $region4: #{faster_style_transfer.11} parent=0 // pred_region
    _
  $region5: #{faster_style_transfer.11} parent=0 // pred_fallthru
    _
  // Predicated region
  $region6: #{faster_style_transfer.11} parent=0 // pred_check
    _
  $region7: #{faster_style_transfer.11} parent=0 // pred_check_branch
    %12 = sbr.rel (0) target = $region9
  $region8: #{faster_style_transfer.11} parent=0 // pred_region
    _
  $region9: #{faster_style_transfer.11} parent=0 // pred_fallthru
    _
  // Predicated region
  $region10: #{faster_style_transfer.11} parent=0 // pred_check
    _
  $region11: #{faster_style_transfer.11} parent=0 // pred_check_branch
    %14 = sbr.rel (0) target = $region13
  $region12: #{faster_style_transfer.11} parent=0 // pred_region
    _
  $region13: #{faster_style_transfer.11} parent=0 // pred_fallthru
    _
  // Predicated region
  $region14: #{faster_style_transfer.11} parent=0 // pred_check
    _
  $region15: #{faster_style_transfer.11} parent=0 // pred_check_branch
    %16 = sbr.rel (0) target = $region17
  $region16: #{faster_style_transfer.11} parent=0 // pred_region
    _
  $region17: #{faster_style_transfer.11} parent=0 // pred_fallthru
    _
  %v18 = vld [vmem:[%s0] sm:$0x1]
  %v19 = vld [vmem:[%s0 + $0x1] sm:$0x1]
  %v20 = vld [vmem:[%s0 + $0x2] sm:$0x1]
  %v21 = vld [vmem:[%s0 + $0x3] sm:$0x1]
  %vm22 = vcmask 1040384
  %v25 = vsel %vm22, %v18, 0
  %v27 = vsel %vm22, %v19, 0
  %v29 = vsel %vm22, %v20, 0
  %v31 = vsel %vm22, %v21, 0
  %v37 = vunpack.c.l.s4 1966171168
  %v38 = vunpack.c.0.s8 %v37
  %v39 = vlaneseq
  %v40 = vshrl.u32 %v39, 7
  %v41 = vsub.s32 %v38, %v40
  %v42 = vrot.slane %v25, %v41
  %v43 = vcombine.high %v42, %v42
  %v45 = vunpack.c.l.s4 1966171168
  %v46 = vunpack.c.0.s8 %v45
  %v47 = vlaneseq
  %v48 = vshrl.u32 %v47, 7
  %v49 = vsub.s32 %v46, %v48
  %v50 = vrot.slane %v42, %v49
  %v52 = vunpack.c.l.s4 1966171168
  %v53 = vunpack.c.0.s8 %v52
  %v54 = vlaneseq
  %v55 = vshrl.u32 %v54, 7
  %v56 = vsub.s32 %v53, %v55
  %v57 = vrot.slane %v43, %v56
  %v59 = vunpack.c.l.s4 1966171168
  %v60 = vunpack.c.0.s8 %v59
  %v61 = vlaneseq
  %v62 = vshrl.u32 %v61, 7
  %v63 = vsub.s32 %v60, %v62
  %v64 = vrot.slane %v27, %v63
  %v65 = vcombine.high %v64, %v64
  %v67 = vunpack.c.l.s4 1966171168
  %v68 = vunpack.c.0.s8 %v67
  %v69 = vlaneseq
  %v70 = vshrl.u32 %v69, 7
  %v71 = vsub.s32 %v68, %v70
  %v72 = vrot.slane %v64, %v71
  %v74 = vunpack.c.l.s4 1966171168
  %v75 = vunpack.c.0.s8 %v74
  %v76 = vlaneseq
  %v77 = vshrl.u32 %v76, 7
  %v78 = vsub.s32 %v75, %v77
  %v79 = vrot.slane %v65, %v78
  %v81 = vunpack.c.l.s4 1966171168
  %v82 = vunpack.c.0.s8 %v81
  %v83 = vlaneseq
  %v84 = vshrl.u32 %v83, 7
  %v85 = vsub.s32 %v82, %v84
  %v86 = vrot.slane %v29, %v85
  %v87 = vcombine.high %v86, %v86
  %v89 = vunpack.c.l.s4 1966171168
  %v90 = vunpack.c.0.s8 %v89
  %v91 = vlaneseq
  %v92 = vshrl.u32 %v91, 7
  %v93 = vsub.s32 %v90, %v92
  %v94 = vrot.slane %v86, %v93
  %v96 = vunpack.c.l.s4 1966171168
  %v97 = vunpack.c.0.s8 %v96
  %v98 = vlaneseq
  %v99 = vshrl.u32 %v98, 7
  %v100 = vsub.s32 %v97, %v99
  %v101 = vrot.slane %v87, %v100
  %v103 = vunpack.c.l.s4 1966171168
  %v104 = vunpack.c.0.s8 %v103
  %v105 = vlaneseq
  %v106 = vshrl.u32 %v105, 7
  %v107 = vsub.s32 %v104, %v106
  %v108 = vrot.slane %v31, %v107
  %v109 = vcombine.high %v108, %v108
  %v111 = vunpack.c.l.s4 1966171168
  %v112 = vunpack.c.0.s8 %v111
  %v113 = vlaneseq
  %v114 = vshrl.u32 %v113, 7
  %v115 = vsub.s32 %v112, %v114
  %v116 = vrot.slane %v108, %v115
  %v118 = vunpack.c.l.s4 1966171168
  %v119 = vunpack.c.0.s8 %v118
  %v120 = vlaneseq
  %v121 = vshrl.u32 %v120, 7
  %v122 = vsub.s32 %v119, %v121
  %v123 = vrot.slane %v109, %v122
  %vm124 = vsmask.f32 256
  %vm125 = vsmask.f32 1284
  %vm126 = vmor %vm124, %vm125
  %vm127 = vsmask.f32 2312
  %vm128 = vmor %vm126, %vm127
  %vm129 = vsmask.f32 3340
  %vm130 = vmor %vm128, %vm129
  %vm131 = vsmask.f32 4368
  %vm132 = vmor %vm130, %vm131
  %vm133 = vsmask.f32 5396
  %vm134 = vmor %vm132, %vm133
  %vm135 = vsmask.f32 6424
  %vm136 = vmor %vm134, %vm135
  %vm137 = vsmask.f32 7452
  %vm138 = vmor %vm136, %vm137
  %v140 = vshrl.u32 %v50, 16
  %v142 = vrot.slane %v140, 7
  %v143 = vrot.slane %v142, 1
  %v145 = vshll.u32 %v57, 16
  %v147 = vsel %vm138, %v143, %v145
  %v149 = vshrl.u32 %v72, 16
  %v151 = vrot.slane %v149, 7
  %v152 = vrot.slane %v151, 1
  %v154 = vshll.u32 %v79, 16
  %v156 = vsel %vm138, %v152, %v154
  %v158 = vshrl.u32 %v94, 16
  %v160 = vrot.slane %v158, 7
  %v161 = vrot.slane %v160, 1
  %v163 = vshll.u32 %v101, 16
  %v165 = vsel %vm138, %v161, %v163
  %v167 = vshrl.u32 %v116, 16
  %v169 = vrot.slane %v167, 7
  %v170 = vrot.slane %v169, 1
  %v172 = vshll.u32 %v123, 16
  %v174 = vsel %vm138, %v170, %v172
  %v177 = vunpack.c.l.s4 1966171168
  %v178 = vunpack.c.0.s8 %v177
  %v179 = vlaneseq
  %v180 = vshrl.u32 %v179, 7
  %v181 = vsub.s32 %v178, %v180
  %v182 = vrot.slane 0, %v181
  %v183 = vcombine.high %v182, %v182
  %v185 = vunpack.c.l.s4 1966171168
  %v186 = vunpack.c.0.s8 %v185
  %v187 = vlaneseq
  %v188 = vshrl.u32 %v187, 7
  %v189 = vsub.s32 %v186, %v188
  %v190 = vrot.slane %v182, %v189
  %v192 = vunpack.c.l.s4 1966171168
  %v193 = vunpack.c.0.s8 %v192
  %v194 = vlaneseq
  %v195 = vshrl.u32 %v194, 7
  %v196 = vsub.s32 %v193, %v195
  %v197 = vrot.slane %v183, %v196
  %v199 = vshrl.u32 %v190, 16
  %v201 = vrot.slane %v199, 7
  %v202 = vrot.slane %v201, 1
  %v204 = vshll.u32 %v197, 16
  %v206 = vsel %vm138, %v202, %v204
  %v211 = vcombine.low %v18, %v19
  %v212 = vcombine.low %v20, %v21
  %v214 = vunpack.c.l.s4 1966171168
  %v215 = vunpack.c.0.s8 %v214
  %v216 = vlaneseq
  %v217 = vshrl.u32 %v216, 7
  %v218 = vsub.s32 %v215, %v217
  %v219 = vrot.slane %v211, %v218
  %v221 = vunpack.c.l.s4 1966171168
  %v222 = vunpack.c.0.s8 %v221
  %v223 = vlaneseq
  %v224 = vshrl.u32 %v223, 7
  %v225 = vsub.s32 %v222, %v224
  %v226 = vrot.slane %v212, %v225
  %v227 = vcombine.low %v219, %v226
  %v229 = vunpack.c.l.s4 1966171168
  %v230 = vunpack.c.0.s8 %v229
  %v231 = vlaneseq
  %v232 = vshrl.u32 %v231, 7
  %v233 = vsub.s32 %v230, %v232
  %v234 = vrot.slane %v227, %v233
  %v235 = vcombine.low %v147, %v156
  %v236 = vcombine.low %v165, %v174
  %v238 = vunpack.c.l.s4 1966171168
  %v239 = vunpack.c.0.s8 %v238
  %v240 = vlaneseq
  %v241 = vshrl.u32 %v240, 7
  %v242 = vsub.s32 %v239, %v241
  %v243 = vrot.slane %v235, %v242
  %v245 = vunpack.c.l.s4 1966171168
  %v246 = vunpack.c.0.s8 %v245
  %v247 = vlaneseq
  %v248 = vshrl.u32 %v247, 7
  %v249 = vsub.s32 %v246, %v248
  %v250 = vrot.slane %v236, %v249
  %v251 = vcombine.low %v243, %v250
  %v253 = vunpack.c.l.s4 1966171168
  %v254 = vunpack.c.0.s8 %v253
  %v255 = vlaneseq
  %v256 = vshrl.u32 %v255, 7
  %v257 = vsub.s32 %v254, %v256
  %v258 = vrot.slane %v251, %v257
  %259 = vrot.lane.b32.xlu0 %v258, 64
  %v260 = vpop.permute.xlu0 %259
  %v261 = vcombine.low %v27, 0
  %v262 = vcombine.low %v31, 0
  %v264 = vunpack.c.l.s4 1966171168
  %v265 = vunpack.c.0.s8 %v264
  %v266 = vlaneseq
  %v267 = vshrl.u32 %v266, 7
  %v268 = vsub.s32 %v265, %v267
  %v269 = vrot.slane %v261, %v268
  %v271 = vunpack.c.l.s4 1966171168
  %v272 = vunpack.c.0.s8 %v271
  %v273 = vlaneseq
  %v274 = vshrl.u32 %v273, 7
  %v275 = vsub.s32 %v272, %v274
  %v276 = vrot.slane %v262, %v275
  %v277 = vcombine.low %v269, %v276
  %v279 = vunpack.c.l.s4 1966171168
  %v280 = vunpack.c.0.s8 %v279
  %v281 = vlaneseq
  %v282 = vshrl.u32 %v281, 7
  %v283 = vsub.s32 %v280, %v282
  %v284 = vrot.slane %v277, %v283
  %v285 = vcombine.low %v156, %v206
  %v286 = vcombine.low %v174, %v206
  %v288 = vunpack.c.l.s4 1966171168
  %v289 = vunpack.c.0.s8 %v288
  %v290 = vlaneseq
  %v291 = vshrl.u32 %v290, 7
  %v292 = vsub.s32 %v289, %v291
  %v293 = vrot.slane %v285, %v292
  %v295 = vunpack.c.l.s4 1966171168
  %v296 = vunpack.c.0.s8 %v295
  %v297 = vlaneseq
  %v298 = vshrl.u32 %v297, 7
  %v299 = vsub.s32 %v296, %v298
  %v300 = vrot.slane %v286, %v299
  %v301 = vcombine.low %v293, %v300
  %v303 = vunpack.c.l.s4 1966171168
  %v304 = vunpack.c.0.s8 %v303
  %v305 = vlaneseq
  %v306 = vshrl.u32 %v305, 7
  %v307 = vsub.s32 %v304, %v306
  %v308 = vrot.slane %v301, %v307
  %309 = vrot.lane.b32.xlu0 %v308, 64
  %v310 = vpop.permute.xlu0 %309
  %vm311 = vcmask 523264
  %v314 = vsel %vm311, %v234, %v260
  %v318 = vsel %vm311, %v284, %v310
  %v320 = vld [vmem:[%s1] sm:$0xf]
  %v321 = vld [vmem:[%s1 + $0x4] sm:$0xf]
  %v322 = vld [vmem:[%s1 + $0x8] sm:$0xf]
  %v323 = vld [vmem:[%s1 + $0xc] sm:$0xf]
  %v324 = vld [vmem:[%s1 + $0x10] sm:$0xf]
  %v325 = vld [vmem:[%s1 + $0x14] sm:$0xf]
  %v326 = vld [vmem:[%s1 + $0x18] sm:$0xf]
  %v327 = vld [vmem:[%s1 + $0x1c] sm:$0xf]
  %v328 = vld [vmem:[%s1 + $0x20] sm:$0xf]
  %v329 = vld [vmem:[%s1 + $0x24] sm:$0xf]
  %v330 = vld [vmem:[%s1 + $0x28] sm:$0xf]
  %v331 = vld [vmem:[%s1 + $0x2c] sm:$0xf]
  %v332 = vld [vmem:[%s1 + $0x30] sm:$0xf]
  %v333 = vld [vmem:[%s1 + $0x34] sm:$0xf]
  %v334 = vld [vmem:[%s1 + $0x38] sm:$0xf]
  %v335 = vld [vmem:[%s1 + $0x3c] sm:$0xf]
  %v336 = vld [vmem:[%s1 + $0x40] sm:$0xf]
  %v337 = vld [vmem:[%s1 + $0x44] sm:$0xf]
  %v338 = vld [vmem:[%s1 + $0x48] sm:$0xf]
  %v339 = vld [vmem:[%s1 + $0x4c] sm:$0xf]
  %v340 = vld [vmem:[%s1 + $0x50] sm:$0xf]
  %v341 = vld [vmem:[%s1 + $0x54] sm:$0xf]
  %v342 = vld [vmem:[%s1 + $0x58] sm:$0xf]
  %v343 = vld [vmem:[%s1 + $0x5c] sm:$0xf]
  %v344 = vld [vmem:[%s1 + $0x60] sm:$0xf]
  %v345 = vld [vmem:[%s1 + $0x64] sm:$0xf]
  %v346 = vld [vmem:[%s1 + $0x68] sm:$0xf]
  %v347 = vld [vmem:[%s1 + $0x6c] sm:$0xf]
  %v348 = vld [vmem:[%s1 + $0x70] sm:$0xf]
  %v349 = vld [vmem:[%s1 + $0x74] sm:$0xf]
  %v350 = vld [vmem:[%s1 + $0x78] sm:$0xf]
  %v351 = vld [vmem:[%s1 + $0x7c] sm:$0xf]
  %v384 = vunpack.c.l.b16 %v320
  %v385 = vunpack.c.l.b16 %v321
  %v386 = vunpack.c.l.b16 %v322
  %v387 = vunpack.c.l.b16 %v323
  %v388 = vunpack.c.l.b16 %v324
  %v389 = vunpack.c.l.b16 %v325
  %v390 = vunpack.c.l.b16 %v326
  %v391 = vunpack.c.l.b16 %v327
  %v392 = vunpack.c.l.b16 %v328
  %v393 = vunpack.c.l.b16 %v329
  %v394 = vunpack.c.l.b16 %v330
  %v395 = vunpack.c.l.b16 %v331
  %v396 = vunpack.c.l.b16 %v332
  %v397 = vunpack.c.l.b16 %v333
  %v398 = vunpack.c.l.b16 %v334
  %v399 = vunpack.c.l.b16 %v335
  %v400 = vunpack.c.l.b16 %v336
  %v401 = vunpack.c.l.b16 %v337
  %v402 = vunpack.c.l.b16 %v338
  %v403 = vunpack.c.l.b16 %v339
  %v404 = vunpack.c.l.b16 %v340
  %v405 = vunpack.c.l.b16 %v341
  %v406 = vunpack.c.l.b16 %v342
  %v407 = vunpack.c.l.b16 %v343
  %v408 = vunpack.c.l.b16 %v344
  %v409 = vunpack.c.l.b16 %v345
  %v410 = vunpack.c.l.b16 %v346
  %v411 = vunpack.c.l.b16 %v347
  %v412 = vunpack.c.l.b16 %v348
  %v413 = vunpack.c.l.b16 %v349
  %v414 = vunpack.c.l.b16 %v350
  %v415 = vunpack.c.l.b16 %v351
  %v416 = vpack.c.b16 %v385, %v384
  %v417 = vpack.c.b16 %v387, %v386
  %v418 = vpack.c.b16 %v389, %v388
  %v419 = vpack.c.b16 %v391, %v390
  %v420 = vpack.c.b16 %v393, %v392
  %v421 = vpack.c.b16 %v395, %v394
  %v422 = vpack.c.b16 %v397, %v396
  %v423 = vpack.c.b16 %v399, %v398
  %v424 = vpack.c.b16 %v401, %v400
  %v425 = vpack.c.b16 %v403, %v402
  %v426 = vpack.c.b16 %v405, %v404
  %v427 = vpack.c.b16 %v407, %v406
  %v428 = vpack.c.b16 %v409, %v408
  %v429 = vpack.c.b16 %v411, %v410
  %v430 = vpack.c.b16 %v413, %v412
  %v431 = vpack.c.b16 %v415, %v414
  %448 = vmatprep.subr.bf16.mxu0 0
  %449 = vmatpush1.bf16.msra.mxu0 %v423
  %450 = vmatprep.subr.bf16.mxu0 0
  %451 = vmatpush1.bf16.msra.mxu0 %v422
  %452 = vmatprep.subr.bf16.mxu0 0
  %453 = vmatpush1.bf16.msra.mxu0 %v421
  %454 = vmatprep.subr.bf16.mxu0 0
  %455 = vmatpush1.bf16.msra.mxu0 %v420
  %456 = vmatprep.subr.bf16.mxu0 0
  %457 = vmatpush1.bf16.msra.mxu0 %v419
  %458 = vmatprep.subr.bf16.mxu0 0
  %459 = vmatpush1.bf16.msra.mxu0 %v418
  %460 = vmatprep.subr.bf16.mxu0 0
  %461 = vmatpush1.bf16.msra.mxu0 %v417
  %462 = vmatprep.subr.bf16.mxu0 0
  %463 = vmatpush1.bf16.msra.mxu0 %v416
  %464 = vmatprep.subr.bf16.mxu0 0
  %465 = vmatpush2.bf16.msra.mxu0 %v431
  %466 = vmatprep.subr.bf16.mxu0 0
  %467 = vmatpush2.bf16.msra.mxu0 %v430
  %468 = vmatprep.subr.bf16.mxu0 0
  %469 = vmatpush2.bf16.msra.mxu0 %v429
  %470 = vmatprep.subr.bf16.mxu0 0
  %471 = vmatpush2.bf16.msra.mxu0 %v428
  %472 = vmatprep.subr.bf16.mxu0 0
  %473 = vmatpush2.bf16.msra.mxu0 %v427
  %474 = vmatprep.subr.bf16.mxu0 0
  %475 = vmatpush2.bf16.msra.mxu0 %v426
  %476 = vmatprep.subr.bf16.mxu0 0
  %477 = vmatpush2.bf16.msra.mxu0 %v425
  %478 = vmatprep.subr.bf16.mxu0 0
  %479 = vmatpush2.bf16.msra.mxu0 %v424
  %480 = vmatprep.mubr.bf16.mxu0 %v318
  %481 = vmatmul.mubr.bf16.gmra.mxu0 %v314
  %v482 = vpop.f32.mrf.mxu0
  %v483 = vadd.f32 0.0, %v482
  %v484 = vpop.f32.mrf.mxu0
  %v485 = vpop.f32.mrf.mxu0
  %v486 = vpop.f32.mrf.mxu0
  %487 = vdwg.mxu0
  %v488 = vrot.slane %v483, 4
  %v489 = vadd.f32 %v483, %v488
  %v490 = vrot.slane %v489, 2
  %v491 = vadd.f32 %v489, %v490
  %v492 = vrot.slane %v491, 1
  %v493 = vadd.f32 %v491, %v492
  %v494 = vrcp.pop 8.0
  %v495 = vmul.f32 %v493, %v494
  %v496 = vmul.f32 %v483, %v483
  %v497 = vrot.slane %v496, 4
  %v498 = vadd.f32 %v496, %v497
  %v499 = vrot.slane %v498, 2
  %v500 = vadd.f32 %v498, %v499
  %v501 = vrot.slane %v500, 1
  %v502 = vadd.f32 %v500, %v501
  %v503 = vmul.f32 %v502, %v494
  %505 = vrot.lane.b32.xlu0 %v495, 96
  %v506 = vpop.permute.xlu0 %505
  %v508 = vadd.f32 %v495, %v506
  %509 = vrot.lane.b32.xlu0 %v495, 64
  %v510 = vpop.permute.xlu0 %509
  %v512 = vadd.f32 %v508, %v510
  %513 = vrot.lane.b32.xlu0 %v495, 32
  %v514 = vpop.permute.xlu0 %513
  %v516 = vadd.f32 %v512, %v514
  %v517 = vmul.f32 %v516, 0.25
  %519 = vrot.lane.b32.xlu0 %v503, 96
  %v520 = vpop.permute.xlu0 %519
  %v522 = vadd.f32 %v503, %v520
  %523 = vrot.lane.b32.xlu0 %v503, 64
  %v524 = vpop.permute.xlu0 %523
  %v526 = vadd.f32 %v522, %v524
  %527 = vrot.lane.b32.xlu0 %v503, 32
  %v528 = vpop.permute.xlu0 %527
  %v530 = vadd.f32 %v526, %v528
  %v531 = vmul.f32 %v530, 0.25
  %v532 = vmul.f32 %v517, %v517
  %v533 = vsub.f32 %v531, %v532
  %v534 = vmax.f32 %v533, 0.0
  %v535 = vld [vmem:[%s2] sm:$0x1]
  %v536 = vadd.f32 %v534, 1e-05
  %v537 = vrsqrt.pop %v536
  %v538 = vmul.f32 %v535, %v537
  %v539 = vld [vmem:[%s3] sm:$0x1]
  %v540 = vmul.f32 %v517, %v538
  %v541 = vsub.f32 %v539, %v540
  %v543 = vlaneseq
  %v544 = vshrl.u32 %v543, 7
  %v545 = vsub.s32 0, %v544
  %v546 = vrot.slane %v538, %v545
  %547 = vrot.lane.b32.xlu0 %v546, 32
  %v548 = vpop.permute.xlu0 %547
  %550 = vrot.lane.b32.xlu0 %v546, 64
  %v551 = vpop.permute.xlu0 %550
  %553 = vrot.lane.b32.xlu0 %v546, 96
  %v554 = vpop.permute.xlu0 %553
  %vm556 = vcmask 261120
  %v557 = vsel %vm556, %v538, %v548
  %v558 = vsel %vm311, %v557, %v551
  %vm559 = vcmask 785408
  %v560 = vsel %vm559, %v558, %v554
  %v562 = vlaneseq
  %v563 = vshrl.u32 %v562, 7
  %v564 = vsub.s32 0, %v563
  %v565 = vrot.slane %v541, %v564
  %566 = vrot.lane.b32.xlu0 %v565, 32
  %v567 = vpop.permute.xlu0 %566
  %569 = vrot.lane.b32.xlu0 %v565, 64
  %v570 = vpop.permute.xlu0 %569
  %572 = vrot.lane.b32.xlu0 %v565, 96
  %v573 = vpop.permute.xlu0 %572
  %v575 = vsel %vm556, %v541, %v567
  %v576 = vsel %vm311, %v575, %v570
  %v577 = vsel %vm559, %v576, %v573
  %v578 = vlaneseq
  %v579 = vshrl.u32 %v578, 7
  %v580 = vsub.s32 0, %v579
  %v581 = vrot.slane %v560, %v580
  %v582 = vmul.f32 %v483, %v581
  %v583 = vlaneseq
  %v584 = vshrl.u32 %v583, 7
  %v585 = vsub.s32 0, %v584
  %v586 = vrot.slane %v577, %v585
  %v587 = vadd.f32 %v582, %v586
  %v588 = vmax.f32 %v587, 0.0
  %v590 = vcombine.high %v588, %v588
  %v592 = vunpack.c.l.s4 1983009808
  %v593 = vunpack.c.0.s8 %v592
  %v594 = vlaneseq
  %v595 = vshrl.u32 %v594, 7
  %v596 = vsub.s32 %v593, %v595
  %v597 = vrot.slane %v588, %v596
  %v599 = vunpack.c.l.s4 1983009808
  %v600 = vunpack.c.0.s8 %v599
  %v601 = vlaneseq
  %v602 = vshrl.u32 %v601, 7
  %v603 = vsub.s32 %v600, %v602
  %v604 = vrot.slane %v590, %v603
  %v605 = vcombine.high %v597, %v597
  %v606 = vcombine.high %v604, %v604
  %v611 = vpack.c.bf16 %v597, %v597
  %v612 = vpack.c.bf16 %v605, %v605
  %v613 = vpack.c.bf16 %v604, %v604
  %v614 = vpack.c.bf16 %v606, %v606
  %615 = vst [vmem:[%s4] sm:$0x1] %v611
  %616 = vst [vmem:[%s4 + $0x1] sm:$0x1] %v612
  %617 = vst [vmem:[%s4 + $0x2] sm:$0x1] %v613
  %618 = vst [vmem:[%s4 + $0x3] sm:$0x1] %v614
  // Predicated region
  $region18: #{faster_style_transfer.11} parent=0 // pred_check
    _
  $region19: #{faster_style_transfer.11} parent=0 // pred_check_branch
    %620 = sbr.rel (0) target = $region21
  $region20: #{faster_style_transfer.11} parent=0 // pred_region
    _
  $region21: #{faster_style_transfer.11} parent=0 // pred_fallthru
    _
  // Predicated region
  $region22: #{faster_style_transfer.11} parent=0 // pred_check
    _
  $region23: #{faster_style_transfer.11} parent=0 // pred_check_branch
    %622 = sbr.rel (0) target = $region25
  $region24: #{faster_style_transfer.11} parent=0 // pred_region
    _
  $region25: #{faster_style_transfer.11} parent=0 // pred_fallthru
    _

// kernel: faster_style_transfer.7
$region0: #{faster_style_transfer.7}
  #allocation0 [shape = 'u32[]', space=smem, size = 0x4, offset = 0x4, fixed_abs, tag = 'smem constant byte address 0x4 - core index']
  #allocation1 [shape = 'u32[144,128]{1,0:T(1,128)}', space=vmem, size = 0x12000, scoped, tag = 'internal scratch']
  %s0 = inlined_call_operand.vmem [shape: f32[2,16,16,3], index: 0, kind: input, shape index: {}]
  %s1 = inlined_call_operand.vmem [shape: bf16[27,16], index: 1, kind: input, shape index: {}]
  %s2 = inlined_call_operand.vmem [shape: f32[1,16], index: 2, kind: input, shape index: {}]
  %s3 = inlined_call_operand.vmem [shape: f32[1,16], index: 3, kind: input, shape index: {}]
  %s4 = inlined_call_operand.vmem [shape: bf16[2,8,8,16], index: 4, kind: output, shape index: {}]
  %s5 = sld [smem:[#allocation0]]
  $region26: #{faster_style_transfer.7} parent=0
    _
  %s7 = ssub.s32 1, %s5
  %s8 = scalar_select 0, %s7, %s5
  // Predicated region
  $region2: #{faster_style_transfer.7} parent=0 // pred_check
    _
  $region3: #{faster_style_transfer.7} parent=0 // pred_check_branch
    %10 = sbr.rel (0) target = $region5
  $region4: #{faster_style_transfer.7} parent=0 // pred_region
    _
  $region5: #{faster_style_transfer.7} parent=0 // pred_fallthru
    _
  // Predicated region
  $region6: #{faster_style_transfer.7} parent=0 // pred_check
    _
  $region7: #{faster_style_transfer.7} parent=0 // pred_check_branch
    %12 = sbr.rel (0) target = $region9
  $region8: #{faster_style_transfer.7} parent=0 // pred_region
    _
  $region9: #{faster_style_transfer.7} parent=0 // pred_fallthru
    _
  // Predicated region
  $region10: #{faster_style_transfer.7} parent=0 // pred_check
    _
  $region11: #{faster_style_transfer.7} parent=0 // pred_check_branch
    %14 = sbr.rel (0) target = $region13
  $region12: #{faster_style_transfer.7} parent=0 // pred_region
    _
  $region13: #{faster_style_transfer.7} parent=0 // pred_fallthru
    _
  // Predicated region
  $region14: #{faster_style_transfer.7} parent=0 // pred_check
    _
  $region15: #{faster_style_transfer.7} parent=0 // pred_check_branch
    %16 = sbr.rel (0) target = $region17
  $region16: #{faster_style_transfer.7} parent=0 // pred_region
    _
  $region17: #{faster_style_transfer.7} parent=0 // pred_fallthru
    _
  %v18 = vld [vmem:[%s0] sm:$0xff]
  %v19 = vld [vmem:[%s0 + $0x8] sm:$0xff]
  %v20 = vld [vmem:[%s0 + $0x10] sm:$0xff]
  %v21 = vld [vmem:[%s0 + $0x18] sm:$0xff]
  %v22 = vld [vmem:[%s0 + $0x20] sm:$0xff]
  %v23 = vld [vmem:[%s0 + $0x28] sm:$0xff]
  %v24 = vld [vmem:[%s0 + $0x30] sm:$0xff]
  %v25 = vld [vmem:[%s0 + $0x38] sm:$0xff]
  %v26 = vld [vmem:[%s0 + $0x40] sm:$0xff]
  %v27 = vld [vmem:[%s0 + $0x48] sm:$0xff]
  %v28 = vld [vmem:[%s0 + $0x50] sm:$0xff]
  %v29 = vld [vmem:[%s0 + $0x58] sm:$0xff]
  %v30 = vld [vmem:[%s0 + $0x60] sm:$0xff]
  %v31 = vld [vmem:[%s0 + $0x68] sm:$0xff]
  %v32 = vld [vmem:[%s0 + $0x70] sm:$0xff]
  %v33 = vld [vmem:[%s0 + $0x78] sm:$0xff]
  %v34 = vld [vmem:[%s0 + $0x80] sm:$0xff]
  %v35 = vld [vmem:[%s0 + $0x88] sm:$0xff]
  %v36 = vld [vmem:[%s0 + $0x90] sm:$0xff]
  %v37 = vld [vmem:[%s0 + $0x98] sm:$0xff]
  %v38 = vld [vmem:[%s0 + $0xa0] sm:$0xff]
  %v39 = vld [vmem:[%s0 + $0xa8] sm:$0xff]
  %v40 = vld [vmem:[%s0 + $0xb0] sm:$0xff]
  %v41 = vld [vmem:[%s0 + $0xb8] sm:$0xff]
  %v42 = vld [vmem:[%s0 + $0xc0] sm:$0xff]
  %v43 = vld [vmem:[%s0 + $0xc8] sm:$0xff]
  %v44 = vld [vmem:[%s0 + $0xd0] sm:$0xff]
  %v45 = vld [vmem:[%s0 + $0xd8] sm:$0xff]
  %v46 = vld [vmem:[%s0 + $0xe0] sm:$0xff]
  %v47 = vld [vmem:[%s0 + $0xe8] sm:$0xff]
  %v48 = vld [vmem:[%s0 + $0xf0] sm:$0xff]
  %v49 = vld [vmem:[%s0 + $0xf8] sm:$0xff]
  %v50 = vld [vmem:[%s0 + $0x100] sm:$0xff]
  %v51 = vld [vmem:[%s0 + $0x108] sm:$0xff]
  %v52 = vld [vmem:[%s0 + $0x110] sm:$0xff]
  %v53 = vld [vmem:[%s0 + $0x118] sm:$0xff]
  %v54 = vld [vmem:[%s0 + $0x120] sm:$0xff]
  %v55 = vld [vmem:[%s0 + $0x128] sm:$0xff]
  %v56 = vld [vmem:[%s0 + $0x130] sm:$0xff]
  %v57 = vld [vmem:[%s0 + $0x138] sm:$0xff]
  %v58 = vld [vmem:[%s0 + $0x140] sm:$0xff]
  %v59 = vld [vmem:[%s0 + $0x148] sm:$0xff]
  %v60 = vld [vmem:[%s0 + $0x150] sm:$0xff]
  %v61 = vld [vmem:[%s0 + $0x158] sm:$0xff]
  %v62 = vld [vmem:[%s0 + $0x160] sm:$0xff]
  %v63 = vld [vmem:[%s0 + $0x168] sm:$0xff]
  %v64 = vld [vmem:[%s0 + $0x170] sm:$0xff]
  %v65 = vld [vmem:[%s0 + $0x178] sm:$0xff]
  %v66 = vld [vmem:[%s0 + $0x180] sm:$0xff]
  %v67 = vld [vmem:[%s0 + $0x188] sm:$0xff]
  %v68 = vld [vmem:[%s0 + $0x190] sm:$0xff]
  %v69 = vld [vmem:[%s0 + $0x198] sm:$0xff]
  %v70 = vld [vmem:[%s0 + $0x1a0] sm:$0xff]
  %v71 = vld [vmem:[%s0 + $0x1a8] sm:$0xff]
  %v72 = vld [vmem:[%s0 + $0x1b0] sm:$0xff]
  %v73 = vld [vmem:[%s0 + $0x1b8] sm:$0xff]
  %v74 = vld [vmem:[%s0 + $0x1c0] sm:$0xff]
  %v75 = vld [vmem:[%s0 + $0x1c8] sm:$0xff]
  %v76 = vld [vmem:[%s0 + $0x1d0] sm:$0xff]
  %v77 = vld [vmem:[%s0 + $0x1d8] sm:$0xff]
  %v78 = vld [vmem:[%s0 + $0x1e0] sm:$0xff]
  %v79 = vld [vmem:[%s0 + $0x1e8] sm:$0xff]
  %v80 = vld [vmem:[%s0 + $0x1f0] sm:$0xff]
  %v81 = vld [vmem:[%s0 + $0x1f8] sm:$0xff]
  %v82 = vpack.c.bf16 %v19, %v18
  %v83 = vpack.c.bf16 %v21, %v20
  %v84 = vpack.c.bf16 %v23, %v22
  %v85 = vpack.c.bf16 %v25, %v24
  %v86 = vpack.c.bf16 %v27, %v26
  %v87 = vpack.c.bf16 %v29, %v28
  %v88 = vpack.c.bf16 %v31, %v30
  %v89 = vpack.c.bf16 %v33, %v32
  %v90 = vpack.c.bf16 %v35, %v34
  %v91 = vpack.c.bf16 %v37, %v36
  %v92 = vpack.c.bf16 %v39, %v38
  %v93 = vpack.c.bf16 %v41, %v40
  %v94 = vpack.c.bf16 %v43, %v42
  %v95 = vpack.c.bf16 %v45, %v44
  %v96 = vpack.c.bf16 %v47, %v46
  %v97 = vpack.c.bf16 %v49, %v48
  %v98 = vpack.c.bf16 %v51, %v50
  %v99 = vpack.c.bf16 %v53, %v52
  %v100 = vpack.c.bf16 %v55, %v54
  %v101 = vpack.c.bf16 %v57, %v56
  %v102 = vpack.c.bf16 %v59, %v58
  %v103 = vpack.c.bf16 %v61, %v60
  %v104 = vpack.c.bf16 %v63, %v62
  %v105 = vpack.c.bf16 %v65, %v64
  %v106 = vpack.c.bf16 %v67, %v66
  %v107 = vpack.c.bf16 %v69, %v68
  %v108 = vpack.c.bf16 %v71, %v70
  %v109 = vpack.c.bf16 %v73, %v72
  %v110 = vpack.c.bf16 %v75, %v74
  %v111 = vpack.c.bf16 %v77, %v76
  %v112 = vpack.c.bf16 %v79, %v78
  %v113 = vpack.c.bf16 %v81, %v80
  %v115 = vshrl.u32 %v82, 16
  %v117 = vrot.slane %v115, 7
  %v118 = vshll.u32 %v82, 16
  %v120 = vor.u32 %v117, %v118
  %v122 = vshrl.u32 %v83, 16
  %v124 = vrot.slane %v122, 7
  %v125 = vshll.u32 %v83, 16
  %v127 = vor.u32 %v124, %v125
  %v129 = vshrl.u32 %v84, 16
  %v131 = vrot.slane %v129, 7
  %v132 = vshll.u32 %v84, 16
  %v134 = vor.u32 %v131, %v132
  %v136 = vshrl.u32 %v85, 16
  %v138 = vrot.slane %v136, 7
  %v139 = vshll.u32 %v85, 16
  %v141 = vor.u32 %v138, %v139
  %v143 = vshrl.u32 %v86, 16
  %v145 = vrot.slane %v143, 7
  %v146 = vshll.u32 %v86, 16
  %v148 = vor.u32 %v145, %v146
  %v150 = vshrl.u32 %v87, 16
  %v152 = vrot.slane %v150, 7
  %v153 = vshll.u32 %v87, 16
  %v155 = vor.u32 %v152, %v153
  %v157 = vshrl.u32 %v88, 16
  %v159 = vrot.slane %v157, 7
  %v160 = vshll.u32 %v88, 16
  %v162 = vor.u32 %v159, %v160
  %v164 = vshrl.u32 %v89, 16
  %v166 = vrot.slane %v164, 7
  %v167 = vshll.u32 %v89, 16
  %v169 = vor.u32 %v166, %v167
  %v171 = vshrl.u32 %v90, 16
  %v173 = vrot.slane %v171, 7
  %v174 = vshll.u32 %v90, 16
  %v176 = vor.u32 %v173, %v174
  %v178 = vshrl.u32 %v91, 16
  %v180 = vrot.slane %v178, 7
  %v181 = vshll.u32 %v91, 16
  %v183 = vor.u32 %v180, %v181
  %v185 = vshrl.u32 %v92, 16
  %v187 = vrot.slane %v185, 7
  %v188 = vshll.u32 %v92, 16
  %v190 = vor.u32 %v187, %v188
  %v192 = vshrl.u32 %v93, 16
  %v194 = vrot.slane %v192, 7
  %v195 = vshll.u32 %v93, 16
  %v197 = vor.u32 %v194, %v195
  %v199 = vshrl.u32 %v94, 16
  %v201 = vrot.slane %v199, 7
  %v202 = vshll.u32 %v94, 16
  %v204 = vor.u32 %v201, %v202
  %v206 = vshrl.u32 %v95, 16
  %v208 = vrot.slane %v206, 7
  %v209 = vshll.u32 %v95, 16
  %v211 = vor.u32 %v208, %v209
  %v213 = vshrl.u32 %v96, 16
  %v215 = vrot.slane %v213, 7
  %v216 = vshll.u32 %v96, 16
  %v218 = vor.u32 %v215, %v216
  %v220 = vshrl.u32 %v97, 16
  %v222 = vrot.slane %v220, 7
  %v223 = vshll.u32 %v97, 16
  %v225 = vor.u32 %v222, %v223
  %v227 = vshrl.u32 %v98, 16
  %v229 = vrot.slane %v227, 7
  %v230 = vshll.u32 %v98, 16
  %v232 = vor.u32 %v229, %v230
  %v234 = vshrl.u32 %v99, 16
  %v236 = vrot.slane %v234, 7
  %v237 = vshll.u32 %v99, 16
  %v239 = vor.u32 %v236, %v237
  %v241 = vshrl.u32 %v100, 16
  %v243 = vrot.slane %v241, 7
  %v244 = vshll.u32 %v100, 16
  %v246 = vor.u32 %v243, %v244
  %v248 = vshrl.u32 %v101, 16
  %v250 = vrot.slane %v248, 7
  %v251 = vshll.u32 %v101, 16
  %v253 = vor.u32 %v250, %v251
  %v255 = vshrl.u32 %v102, 16
  %v257 = vrot.slane %v255, 7
  %v258 = vshll.u32 %v102, 16
  %v260 = vor.u32 %v257, %v258
  %v262 = vshrl.u32 %v103, 16
  %v264 = vrot.slane %v262, 7
  %v265 = vshll.u32 %v103, 16
  %v267 = vor.u32 %v264, %v265
  %v269 = vshrl.u32 %v104, 16
  %v271 = vrot.slane %v269, 7
  %v272 = vshll.u32 %v104, 16
  %v274 = vor.u32 %v271, %v272
  %v276 = vshrl.u32 %v105, 16
  %v278 = vrot.slane %v276, 7
  %v279 = vshll.u32 %v105, 16
  %v281 = vor.u32 %v278, %v279
  %v283 = vshrl.u32 %v106, 16
  %v285 = vrot.slane %v283, 7
  %v286 = vshll.u32 %v106, 16
  %v288 = vor.u32 %v285, %v286
  %v290 = vshrl.u32 %v107, 16
  %v292 = vrot.slane %v290, 7
  %v293 = vshll.u32 %v107, 16
  %v295 = vor.u32 %v292, %v293
  %v297 = vshrl.u32 %v108, 16
  %v299 = vrot.slane %v297, 7
  %v300 = vshll.u32 %v108, 16
  %v302 = vor.u32 %v299, %v300
  %v304 = vshrl.u32 %v109, 16
  %v306 = vrot.slane %v304, 7
  %v307 = vshll.u32 %v109, 16
  %v309 = vor.u32 %v306, %v307
  %v311 = vshrl.u32 %v110, 16
  %v313 = vrot.slane %v311, 7
  %v314 = vshll.u32 %v110, 16
  %v316 = vor.u32 %v313, %v314
  %v318 = vshrl.u32 %v111, 16
  %v320 = vrot.slane %v318, 7
  %v321 = vshll.u32 %v111, 16
  %v323 = vor.u32 %v320, %v321
  %v325 = vshrl.u32 %v112, 16
  %v327 = vrot.slane %v325, 7
  %v328 = vshll.u32 %v112, 16
  %v330 = vor.u32 %v327, %v328
  %v332 = vshrl.u32 %v113, 16
  %v334 = vrot.slane %v332, 7
  %v335 = vshll.u32 %v113, 16
  %v337 = vor.u32 %v334, %v335
  %vm402 = vcmask 1040384
  %vm403 = vsmask.f32 256
  %vm404 = vmand %vm402, %vm403
  %v405 = vsel %vm404, 0, %v120
  %v406 = vsel %vm404, 0, %v127
  %v407 = vsel %vm404, 0, %v134
  %v408 = vsel %vm404, 0, %v141
  %v409 = vsel %vm404, 0, %v148
  %v410 = vsel %vm404, 0, %v155
  %v411 = vsel %vm404, 0, %v162
  %v412 = vsel %vm404, 0, %v169
  %v413 = vsel %vm404, 0, %v176
  %v414 = vsel %vm404, 0, %v183
  %v415 = vsel %vm404, 0, %v190
  %v416 = vsel %vm404, 0, %v197
  %v417 = vsel %vm404, 0, %v204
  %v418 = vsel %vm404, 0, %v211
  %v419 = vsel %vm404, 0, %v218
  %v420 = vsel %vm404, 0, %v225
  %v421 = vsel %vm404, 0, %v232
  %v422 = vsel %vm404, 0, %v239
  %v423 = vsel %vm404, 0, %v246
  %v424 = vsel %vm404, 0, %v253
  %v425 = vsel %vm404, 0, %v260
  %v426 = vsel %vm404, 0, %v267
  %v427 = vsel %vm404, 0, %v274
  %v428 = vsel %vm404, 0, %v281
  %v429 = vsel %vm404, 0, %v288
  %v430 = vsel %vm404, 0, %v295
  %v431 = vsel %vm404, 0, %v302
  %v432 = vsel %vm404, 0, %v309
  %v433 = vsel %vm404, 0, %v316
  %v434 = vsel %vm404, 0, %v323
  %v435 = vsel %vm404, 0, %v330
  %v436 = vsel %vm404, 0, %v337
  %v437 = vsel %vm404, %v117, 0
  %v438 = vsel %vm404, %v124, 0
  %v439 = vsel %vm404, %v131, 0
  %v440 = vsel %vm404, %v138, 0
  %v441 = vsel %vm404, %v145, 0
  %v442 = vsel %vm404, %v152, 0
  %v443 = vsel %vm404, %v159, 0
  %v444 = vsel %vm404, %v166, 0
  %v445 = vsel %vm404, %v173, 0
  %v446 = vsel %vm404, %v180, 0
  %v447 = vsel %vm404, %v187, 0
  %v448 = vsel %vm404, %v194, 0
  %v449 = vsel %vm404, %v201, 0
  %v450 = vsel %vm404, %v208, 0
  %v451 = vsel %vm404, %v215, 0
  %v452 = vsel %vm404, %v222, 0
  %v453 = vsel %vm404, %v229, 0
  %v454 = vsel %vm404, %v236, 0
  %v455 = vsel %vm404, %v243, 0
  %v456 = vsel %vm404, %v250, 0
  %v457 = vsel %vm404, %v257, 0
  %v458 = vsel %vm404, %v264, 0
  %v459 = vsel %vm404, %v271, 0
  %v460 = vsel %vm404, %v278, 0
  %v461 = vsel %vm404, %v285, 0
  %v462 = vsel %vm404, %v292, 0
  %v463 = vsel %vm404, %v299, 0
  %v464 = vsel %vm404, %v306, 0
  %v465 = vsel %vm404, %v313, 0
  %v466 = vsel %vm404, %v320, 0
  %v467 = vsel %vm404, %v327, 0
  %v468 = vsel %vm404, %v334, 0
  %vm469 = vsmask.f32 7424
  %v471 = vshrl.u32 0, 16
  %v473 = vshll.u32 0, 16
  %v475 = vrot.slane %v473, 1
  %v476 = vor.u32 %v471, %v475
  %v477 = vsel %vm469, %v476, %v475
  %v479 = vshrl.u32 %v405, 16
  %v481 = vshll.u32 %v405, 16
  %v483 = vrot.slane %v481, 1
  %v484 = vor.u32 %v479, %v483
  %v486 = vshll.u32 %v437, 16
  %v488 = vrot.slane %v486, 1
  %v489 = vsel %vm469, %v484, %v488
  %v491 = vshrl.u32 %v406, 16
  %v493 = vshll.u32 %v406, 16
  %v495 = vrot.slane %v493, 1
  %v496 = vor.u32 %v491, %v495
  %v498 = vshll.u32 %v438, 16
  %v500 = vrot.slane %v498, 1
  %v501 = vsel %vm469, %v496, %v500
  %v503 = vshrl.u32 %v407, 16
  %v505 = vshll.u32 %v407, 16
  %v507 = vrot.slane %v505, 1
  %v508 = vor.u32 %v503, %v507
  %v510 = vshll.u32 %v439, 16
  %v512 = vrot.slane %v510, 1
  %v513 = vsel %vm469, %v508, %v512
  %v515 = vshrl.u32 %v408, 16
  %v517 = vshll.u32 %v408, 16
  %v519 = vrot.slane %v517, 1
  %v520 = vor.u32 %v515, %v519
  %v522 = vshll.u32 %v440, 16
  %v524 = vrot.slane %v522, 1
  %v525 = vsel %vm469, %v520, %v524
  %v527 = vshrl.u32 %v409, 16
  %v529 = vshll.u32 %v409, 16
  %v531 = vrot.slane %v529, 1
  %v532 = vor.u32 %v527, %v531
  %v534 = vshll.u32 %v441, 16
  %v536 = vrot.slane %v534, 1
  %v537 = vsel %vm469, %v532, %v536
  %v539 = vshrl.u32 %v410, 16
  %v541 = vshll.u32 %v410, 16
  %v543 = vrot.slane %v541, 1
  %v544 = vor.u32 %v539, %v543
  %v546 = vshll.u32 %v442, 16
  %v548 = vrot.slane %v546, 1
  %v549 = vsel %vm469, %v544, %v548
  %v551 = vshrl.u32 %v411, 16
  %v553 = vshll.u32 %v411, 16
  %v555 = vrot.slane %v553, 1
  %v556 = vor.u32 %v551, %v555
  %v558 = vshll.u32 %v443, 16
  %v560 = vrot.slane %v558, 1
  %v561 = vsel %vm469, %v556, %v560
  %v563 = vshrl.u32 %v412, 16
  %v565 = vshll.u32 %v412, 16
  %v567 = vrot.slane %v565, 1
  %v568 = vor.u32 %v563, %v567
  %v570 = vshll.u32 %v444, 16
  %v572 = vrot.slane %v570, 1
  %v573 = vsel %vm469, %v568, %v572
  %v575 = vshrl.u32 %v413, 16
  %v577 = vshll.u32 %v413, 16
  %v579 = vrot.slane %v577, 1
  %v580 = vor.u32 %v575, %v579
  %v582 = vshll.u32 %v445, 16
  %v584 = vrot.slane %v582, 1
  %v585 = vsel %vm469, %v580, %v584
  %v587 = vshrl.u32 %v414, 16
  %v589 = vshll.u32 %v414, 16
  %v591 = vrot.slane %v589, 1
  %v592 = vor.u32 %v587, %v591
  %v594 = vshll.u32 %v446, 16
  %v596 = vrot.slane %v594, 1
  %v597 = vsel %vm469, %v592, %v596
  %v599 = vshrl.u32 %v415, 16
  %v601 = vshll.u32 %v415, 16
  %v603 = vrot.slane %v601, 1
  %v604 = vor.u32 %v599, %v603
  %v606 = vshll.u32 %v447, 16
  %v608 = vrot.slane %v606, 1
  %v609 = vsel %vm469, %v604, %v608
  %v611 = vshrl.u32 %v416, 16
  %v613 = vshll.u32 %v416, 16
  %v615 = vrot.slane %v613, 1
  %v616 = vor.u32 %v611, %v615
  %v618 = vshll.u32 %v448, 16
  %v620 = vrot.slane %v618, 1
  %v621 = vsel %vm469, %v616, %v620
  %v623 = vshrl.u32 %v417, 16
  %v625 = vshll.u32 %v417, 16
  %v627 = vrot.slane %v625, 1
  %v628 = vor.u32 %v623, %v627
  %v630 = vshll.u32 %v449, 16
  %v632 = vrot.slane %v630, 1
  %v633 = vsel %vm469, %v628, %v632
  %v635 = vshrl.u32 %v418, 16
  %v637 = vshll.u32 %v418, 16
  %v639 = vrot.slane %v637, 1
  %v640 = vor.u32 %v635, %v639
  %v642 = vshll.u32 %v450, 16
  %v644 = vrot.slane %v642, 1
  %v645 = vsel %vm469, %v640, %v644
  %v647 = vshrl.u32 %v419, 16
  %v649 = vshll.u32 %v419, 16
  %v651 = vrot.slane %v649, 1
  %v652 = vor.u32 %v647, %v651
  %v654 = vshll.u32 %v451, 16
  %v656 = vrot.slane %v654, 1
  %v657 = vsel %vm469, %v652, %v656
  %v659 = vshrl.u32 %v421, 16
  %v661 = vshll.u32 %v421, 16
  %v663 = vrot.slane %v661, 1
  %v664 = vor.u32 %v659, %v663
  %v666 = vshll.u32 %v453, 16
  %v668 = vrot.slane %v666, 1
  %v669 = vsel %vm469, %v664, %v668
  %v671 = vshrl.u32 %v422, 16
  %v673 = vshll.u32 %v422, 16
  %v675 = vrot.slane %v673, 1
  %v676 = vor.u32 %v671, %v675
  %v678 = vshll.u32 %v454, 16
  %v680 = vrot.slane %v678, 1
  %v681 = vsel %vm469, %v676, %v680
  %v683 = vshrl.u32 %v423, 16
  %v685 = vshll.u32 %v423, 16
  %v687 = vrot.slane %v685, 1
  %v688 = vor.u32 %v683, %v687
  %v690 = vshll.u32 %v455, 16
  %v692 = vrot.slane %v690, 1
  %v693 = vsel %vm469, %v688, %v692
  %v695 = vshrl.u32 %v424, 16
  %v697 = vshll.u32 %v424, 16
  %v699 = vrot.slane %v697, 1
  %v700 = vor.u32 %v695, %v699
  %v702 = vshll.u32 %v456, 16
  %v704 = vrot.slane %v702, 1
  %v705 = vsel %vm469, %v700, %v704
  %v707 = vshrl.u32 %v425, 16
  %v709 = vshll.u32 %v425, 16
  %v711 = vrot.slane %v709, 1
  %v712 = vor.u32 %v707, %v711
  %v714 = vshll.u32 %v457, 16
  %v716 = vrot.slane %v714, 1
  %v717 = vsel %vm469, %v712, %v716
  %v719 = vshrl.u32 %v426, 16
  %v721 = vshll.u32 %v426, 16
  %v723 = vrot.slane %v721, 1
  %v724 = vor.u32 %v719, %v723
  %v726 = vshll.u32 %v458, 16
  %v728 = vrot.slane %v726, 1
  %v729 = vsel %vm469, %v724, %v728
  %v731 = vshrl.u32 %v427, 16
  %v733 = vshll.u32 %v427, 16
  %v735 = vrot.slane %v733, 1
  %v736 = vor.u32 %v731, %v735
  %v738 = vshll.u32 %v459, 16
  %v740 = vrot.slane %v738, 1
  %v741 = vsel %vm469, %v736, %v740
  %v743 = vshrl.u32 %v428, 16
  %v745 = vshll.u32 %v428, 16
  %v747 = vrot.slane %v745, 1
  %v748 = vor.u32 %v743, %v747
  %v750 = vshll.u32 %v460, 16
  %v752 = vrot.slane %v750, 1
  %v753 = vsel %vm469, %v748, %v752
  %v755 = vshrl.u32 %v429, 16
  %v757 = vshll.u32 %v429, 16
  %v759 = vrot.slane %v757, 1
  %v760 = vor.u32 %v755, %v759
  %v762 = vshll.u32 %v461, 16
  %v764 = vrot.slane %v762, 1
  %v765 = vsel %vm469, %v760, %v764
  %v767 = vshrl.u32 %v430, 16
  %v769 = vshll.u32 %v430, 16
  %v771 = vrot.slane %v769, 1
  %v772 = vor.u32 %v767, %v771
  %v774 = vshll.u32 %v462, 16
  %v776 = vrot.slane %v774, 1
  %v777 = vsel %vm469, %v772, %v776
  %v779 = vshrl.u32 %v431, 16
  %v781 = vshll.u32 %v431, 16
  %v783 = vrot.slane %v781, 1
  %v784 = vor.u32 %v779, %v783
  %v786 = vshll.u32 %v463, 16
  %v788 = vrot.slane %v786, 1
  %v789 = vsel %vm469, %v784, %v788
  %v791 = vshrl.u32 %v432, 16
  %v793 = vshll.u32 %v432, 16
  %v795 = vrot.slane %v793, 1
  %v796 = vor.u32 %v791, %v795
  %v798 = vshll.u32 %v464, 16
  %v800 = vrot.slane %v798, 1
  %v801 = vsel %vm469, %v796, %v800
  %v803 = vshrl.u32 %v433, 16
  %v805 = vshll.u32 %v433, 16
  %v807 = vrot.slane %v805, 1
  %v808 = vor.u32 %v803, %v807
  %v810 = vshll.u32 %v465, 16
  %v812 = vrot.slane %v810, 1
  %v813 = vsel %vm469, %v808, %v812
  %v815 = vshrl.u32 %v434, 16
  %v817 = vshll.u32 %v434, 16
  %v819 = vrot.slane %v817, 1
  %v820 = vor.u32 %v815, %v819
  %v822 = vshll.u32 %v466, 16
  %v824 = vrot.slane %v822, 1
  %v825 = vsel %vm469, %v820, %v824
  %v827 = vshrl.u32 %v435, 16
  %v829 = vshll.u32 %v435, 16
  %v831 = vrot.slane %v829, 1
  %v832 = vor.u32 %v827, %v831
  %v834 = vshll.u32 %v467, 16
  %v836 = vrot.slane %v834, 1
  %v837 = vsel %vm469, %v832, %v836
  %vm899 = vcmask 1046528
  %v900 = vrot.slane 0, 1
  %v901 = vsel %vm899, %v900, %v900
  %v902 = vrot.slane %v405, 1
  %v903 = vrot.slane %v437, 1
  %v904 = vsel %vm899, %v902, %v903
  %v905 = vrot.slane %v406, 1
  %v906 = vrot.slane %v438, 1
  %v907 = vsel %vm899, %v905, %v906
  %v908 = vrot.slane %v407, 1
  %v909 = vrot.slane %v439, 1
  %v910 = vsel %vm899, %v908, %v909
  %v911 = vrot.slane %v408, 1
  %v912 = vrot.slane %v440, 1
  %v913 = vsel %vm899, %v911, %v912
  %v914 = vrot.slane %v409, 1
  %v915 = vrot.slane %v441, 1
  %v916 = vsel %vm899, %v914, %v915
  %v917 = vrot.slane %v410, 1
  %v918 = vrot.slane %v442, 1
  %v919 = vsel %vm899, %v917, %v918
  %v920 = vrot.slane %v411, 1
  %v921 = vrot.slane %v443, 1
  %v922 = vsel %vm899, %v920, %v921
  %v923 = vrot.slane %v412, 1
  %v924 = vrot.slane %v444, 1
  %v925 = vsel %vm899, %v923, %v924
  %v926 = vrot.slane %v413, 1
  %v927 = vrot.slane %v445, 1
  %v928 = vsel %vm899, %v926, %v927
  %v929 = vrot.slane %v414, 1
  %v930 = vrot.slane %v446, 1
  %v931 = vsel %vm899, %v929, %v930
  %v932 = vrot.slane %v415, 1
  %v933 = vrot.slane %v447, 1
  %v934 = vsel %vm899, %v932, %v933
  %v935 = vrot.slane %v416, 1
  %v936 = vrot.slane %v448, 1
  %v937 = vsel %vm899, %v935, %v936
  %v938 = vrot.slane %v417, 1
  %v939 = vrot.slane %v449, 1
  %v940 = vsel %vm899, %v938, %v939
  %v941 = vrot.slane %v418, 1
  %v942 = vrot.slane %v450, 1
  %v943 = vsel %vm899, %v941, %v942
  %v944 = vrot.slane %v419, 1
  %v945 = vrot.slane %v451, 1
  %v946 = vsel %vm899, %v944, %v945
  %v947 = vrot.slane %v421, 1
  %v948 = vrot.slane %v453, 1
  %v949 = vsel %vm899, %v947, %v948
  %v950 = vrot.slane %v422, 1
  %v951 = vrot.slane %v454, 1
  %v952 = vsel %vm899, %v950, %v951
  %v953 = vrot.slane %v423, 1
  %v954 = vrot.slane %v455, 1
  %v955 = vsel %vm899, %v953, %v954
  %v956 = vrot.slane %v424, 1
  %v957 = vrot.slane %v456, 1
  %v958 = vsel %vm899, %v956, %v957
  %v959 = vrot.slane %v425, 1
  %v960 = vrot.slane %v457, 1
  %v961 = vsel %vm899, %v959, %v960
  %v962 = vrot.slane %v426, 1
  %v963 = vrot.slane %v458, 1
  %v964 = vsel %vm899, %v962, %v963
  %v965 = vrot.slane %v427, 1
  %v966 = vrot.slane %v459, 1
  %v967 = vsel %vm899, %v965, %v966
  %v968 = vrot.slane %v428, 1
  %v969 = vrot.slane %v460, 1
  %v970 = vsel %vm899, %v968, %v969
  %v971 = vrot.slane %v429, 1
  %v972 = vrot.slane %v461, 1
  %v973 = vsel %vm899, %v971, %v972
  %v974 = vrot.slane %v430, 1
  %v975 = vrot.slane %v462, 1
  %v976 = vsel %vm899, %v974, %v975
  %v977 = vrot.slane %v431, 1
  %v978 = vrot.slane %v463, 1
  %v979 = vsel %vm899, %v977, %v978
  %v980 = vrot.slane %v432, 1
  %v981 = vrot.slane %v464, 1
  %v982 = vsel %vm899, %v980, %v981
  %v983 = vrot.slane %v433, 1
  %v984 = vrot.slane %v465, 1
  %v985 = vsel %vm899, %v983, %v984
  %v986 = vrot.slane %v434, 1
  %v987 = vrot.slane %v466, 1
  %v988 = vsel %vm899, %v986, %v987
  %v989 = vrot.slane %v435, 1
  %v990 = vrot.slane %v467, 1
  %v991 = vsel %vm899, %v989, %v990
  %v993 = vshrl.u32 %v420, 16
  %v995 = vshll.u32 %v420, 16
  %v997 = vrot.slane %v995, 1
  %v998 = vor.u32 %v993, %v997
  %v1000 = vshll.u32 %v452, 16
  %v1002 = vrot.slane %v1000, 1
  %v1003 = vsel %vm469, %v998, %v1002
  %v1005 = vshrl.u32 %v436, 16
  %v1007 = vshll.u32 %v436, 16
  %v1009 = vrot.slane %v1007, 1
  %v1010 = vor.u32 %v1005, %v1009
  %v1012 = vshll.u32 %v468, 16
  %v1014 = vrot.slane %v1012, 1
  %v1015 = vsel %vm469, %v1010, %v1014
  %v1020 = vrot.slane %v420, 1
  %v1021 = vrot.slane %v452, 1
  %v1022 = vsel %vm899, %v1020, %v1021
  %v1023 = vrot.slane %v436, 1
  %v1024 = vrot.slane %v468, 1
  %v1025 = vsel %vm899, %v1023, %v1024
  %1026 = vrot.lane.b32.xlu0 %v477, 3
  %v1027 = vpop.permute.xlu0 %1026
  %1028 = vrot.lane.b32.xlu0 %v489, 3
  %v1029 = vpop.permute.xlu0 %1028
  %1030 = vrot.lane.b32.xlu0 %v501, 3
  %v1031 = vpop.permute.xlu0 %1030
  %1032 = vrot.lane.b32.xlu0 %v513, 3
  %v1033 = vpop.permute.xlu0 %1032
  %1034 = vrot.lane.b32.xlu0 %v525, 3
  %v1035 = vpop.permute.xlu0 %1034
  %1036 = vrot.lane.b32.xlu0 %v537, 3
  %v1037 = vpop.permute.xlu0 %1036
  %1038 = vrot.lane.b32.xlu0 %v549, 3
  %v1039 = vpop.permute.xlu0 %1038
  %1040 = vrot.lane.b32.xlu0 %v561, 3
  %v1041 = vpop.permute.xlu0 %1040
  %1042 = vrot.lane.b32.xlu0 %v573, 3
  %v1043 = vpop.permute.xlu0 %1042
  %1044 = vrot.lane.b32.xlu0 %v585, 3
  %v1045 = vpop.permute.xlu0 %1044
  %1046 = vrot.lane.b32.xlu0 %v597, 3
  %v1047 = vpop.permute.xlu0 %1046
  %1048 = vrot.lane.b32.xlu0 %v609, 3
  %v1049 = vpop.permute.xlu0 %1048
  %1050 = vrot.lane.b32.xlu0 %v621, 3
  %v1051 = vpop.permute.xlu0 %1050
  %1052 = vrot.lane.b32.xlu0 %v633, 3
  %v1053 = vpop.permute.xlu0 %1052
  %1054 = vrot.lane.b32.xlu0 %v645, 3
  %v1055 = vpop.permute.xlu0 %1054
  %1056 = vrot.lane.b32.xlu0 %v657, 3
  %v1057 = vpop.permute.xlu0 %1056
  %1058 = vrot.lane.b32.xlu0 %v669, 3
  %v1059 = vpop.permute.xlu0 %1058
  %1060 = vrot.lane.b32.xlu0 %v681, 3
  %v1061 = vpop.permute.xlu0 %1060
  %1062 = vrot.lane.b32.xlu0 %v693, 3
  %v1063 = vpop.permute.xlu0 %1062
  %1064 = vrot.lane.b32.xlu0 %v705, 3
  %v1065 = vpop.permute.xlu0 %1064
  %1066 = vrot.lane.b32.xlu0 %v717, 3
  %v1067 = vpop.permute.xlu0 %1066
  %1068 = vrot.lane.b32.xlu0 %v729, 3
  %v1069 = vpop.permute.xlu0 %1068
  %1070 = vrot.lane.b32.xlu0 %v741, 3
  %v1071 = vpop.permute.xlu0 %1070
  %1072 = vrot.lane.b32.xlu0 %v753, 3
  %v1073 = vpop.permute.xlu0 %1072
  %1074 = vrot.lane.b32.xlu0 %v765, 3
  %v1075 = vpop.permute.xlu0 %1074
  %1076 = vrot.lane.b32.xlu0 %v777, 3
  %v1077 = vpop.permute.xlu0 %1076
  %1078 = vrot.lane.b32.xlu0 %v789, 3
  %v1079 = vpop.permute.xlu0 %1078
  %1080 = vrot.lane.b32.xlu0 %v801, 3
  %v1081 = vpop.permute.xlu0 %1080
  %1082 = vrot.lane.b32.xlu0 %v813, 3
  %v1083 = vpop.permute.xlu0 %1082
  %1084 = vrot.lane.b32.xlu0 %v825, 3
  %v1085 = vpop.permute.xlu0 %1084
  %1086 = vrot.lane.b32.xlu0 %v837, 3
  %v1087 = vpop.permute.xlu0 %1086
  %1088 = vrot.lane.b32.xlu0 %v901, 6
  %v1089 = vpop.permute.xlu0 %1088
  %1090 = vrot.lane.b32.xlu0 %v904, 6
  %v1091 = vpop.permute.xlu0 %1090
  %1092 = vrot.lane.b32.xlu0 %v907, 6
  %v1093 = vpop.permute.xlu0 %1092
  %1094 = vrot.lane.b32.xlu0 %v910, 6
  %v1095 = vpop.permute.xlu0 %1094
  %1096 = vrot.lane.b32.xlu0 %v913, 6
  %v1097 = vpop.permute.xlu0 %1096
  %1098 = vrot.lane.b32.xlu0 %v916, 6
  %v1099 = vpop.permute.xlu0 %1098
  %1100 = vrot.lane.b32.xlu0 %v919, 6
  %v1101 = vpop.permute.xlu0 %1100
  %1102 = vrot.lane.b32.xlu0 %v922, 6
  %v1103 = vpop.permute.xlu0 %1102
  %1104 = vrot.lane.b32.xlu0 %v925, 6
  %v1105 = vpop.permute.xlu0 %1104
  %1106 = vrot.lane.b32.xlu0 %v928, 6
  %v1107 = vpop.permute.xlu0 %1106
  %1108 = vrot.lane.b32.xlu0 %v931, 6
  %v1109 = vpop.permute.xlu0 %1108
  %1110 = vrot.lane.b32.xlu0 %v934, 6
  %v1111 = vpop.permute.xlu0 %1110
  %1112 = vrot.lane.b32.xlu0 %v937, 6
  %v1113 = vpop.permute.xlu0 %1112
  %1114 = vrot.lane.b32.xlu0 %v940, 6
  %v1115 = vpop.permute.xlu0 %1114
  %1116 = vrot.lane.b32.xlu0 %v943, 6
  %v1117 = vpop.permute.xlu0 %1116
  %1118 = vrot.lane.b32.xlu0 %v946, 6
  %v1119 = vpop.permute.xlu0 %1118
  %1120 = vrot.lane.b32.xlu0 %v949, 6
  %v1121 = vpop.permute.xlu0 %1120
  %1122 = vrot.lane.b32.xlu0 %v952, 6
  %v1123 = vpop.permute.xlu0 %1122
  %1124 = vrot.lane.b32.xlu0 %v955, 6
  %v1125 = vpop.permute.xlu0 %1124
  %1126 = vrot.lane.b32.xlu0 %v958, 6
  %v1127 = vpop.permute.xlu0 %1126
  %1128 = vrot.lane.b32.xlu0 %v961, 6
  %v1129 = vpop.permute.xlu0 %1128
  %1130 = vrot.lane.b32.xlu0 %v964, 6
  %v1131 = vpop.permute.xlu0 %1130
  %1132 = vrot.lane.b32.xlu0 %v967, 6
  %v1133 = vpop.permute.xlu0 %1132
  %1134 = vrot.lane.b32.xlu0 %v970, 6
  %v1135 = vpop.permute.xlu0 %1134
  %1136 = vrot.lane.b32.xlu0 %v973, 6
  %v1137 = vpop.permute.xlu0 %1136
  %1138 = vrot.lane.b32.xlu0 %v976, 6
  %v1139 = vpop.permute.xlu0 %1138
  %1140 = vrot.lane.b32.xlu0 %v979, 6
  %v1141 = vpop.permute.xlu0 %1140
  %1142 = vrot.lane.b32.xlu0 %v982, 6
  %v1143 = vpop.permute.xlu0 %1142
  %1144 = vrot.lane.b32.xlu0 %v985, 6
  %v1145 = vpop.permute.xlu0 %1144
  %1146 = vrot.lane.b32.xlu0 %v988, 6
  %v1147 = vpop.permute.xlu0 %1146
  %1148 = vrot.lane.b32.xlu0 %v991, 6
  %v1149 = vpop.permute.xlu0 %1148
  %1150 = vrot.lane.b32.xlu0 %v405, 9
  %v1151 = vpop.permute.xlu0 %1150
  %1152 = vrot.lane.b32.xlu0 %v406, 9
  %v1153 = vpop.permute.xlu0 %1152
  %1154 = vrot.lane.b32.xlu0 %v407, 9
  %v1155 = vpop.permute.xlu0 %1154
  %1156 = vrot.lane.b32.xlu0 %v408, 9
  %v1157 = vpop.permute.xlu0 %1156
  %1158 = vrot.lane.b32.xlu0 %v409, 9
  %v1159 = vpop.permute.xlu0 %1158
  %1160 = vrot.lane.b32.xlu0 %v410, 9
  %v1161 = vpop.permute.xlu0 %1160
  %1162 = vrot.lane.b32.xlu0 %v411, 9
  %v1163 = vpop.permute.xlu0 %1162
  %1164 = vrot.lane.b32.xlu0 %v412, 9
  %v1165 = vpop.permute.xlu0 %1164
  %1166 = vrot.lane.b32.xlu0 %v413, 9
  %v1167 = vpop.permute.xlu0 %1166
  %1168 = vrot.lane.b32.xlu0 %v414, 9
  %v1169 = vpop.permute.xlu0 %1168
  %1170 = vrot.lane.b32.xlu0 %v415, 9
  %v1171 = vpop.permute.xlu0 %1170
  %1172 = vrot.lane.b32.xlu0 %v416, 9
  %v1173 = vpop.permute.xlu0 %1172
  %1174 = vrot.lane.b32.xlu0 %v417, 9
  %v1175 = vpop.permute.xlu0 %1174
  %1176 = vrot.lane.b32.xlu0 %v418, 9
  %v1177 = vpop.permute.xlu0 %1176
  %1178 = vrot.lane.b32.xlu0 %v419, 9
  %v1179 = vpop.permute.xlu0 %1178
  %1180 = vrot.lane.b32.xlu0 %v420, 9
  %v1181 = vpop.permute.xlu0 %1180
  %1182 = vrot.lane.b32.xlu0 %v421, 9
  %v1183 = vpop.permute.xlu0 %1182
  %1184 = vrot.lane.b32.xlu0 %v422, 9
  %v1185 = vpop.permute.xlu0 %1184
  %1186 = vrot.lane.b32.xlu0 %v423, 9
  %v1187 = vpop.permute.xlu0 %1186
  %1188 = vrot.lane.b32.xlu0 %v424, 9
  %v1189 = vpop.permute.xlu0 %1188
  %1190 = vrot.lane.b32.xlu0 %v425, 9
  %v1191 = vpop.permute.xlu0 %1190
  %1192 = vrot.lane.b32.xlu0 %v426, 9
  %v1193 = vpop.permute.xlu0 %1192
  %1194 = vrot.lane.b32.xlu0 %v427, 9
  %v1195 = vpop.permute.xlu0 %1194
  %1196 = vrot.lane.b32.xlu0 %v428, 9
  %v1197 = vpop.permute.xlu0 %1196
  %1198 = vrot.lane.b32.xlu0 %v429, 9
  %v1199 = vpop.permute.xlu0 %1198
  %1200 = vrot.lane.b32.xlu0 %v430, 9
  %v1201 = vpop.permute.xlu0 %1200
  %1202 = vrot.lane.b32.xlu0 %v431, 9
  %v1203 = vpop.permute.xlu0 %1202
  %1204 = vrot.lane.b32.xlu0 %v432, 9
  %v1205 = vpop.permute.xlu0 %1204
  %1206 = vrot.lane.b32.xlu0 %v433, 9
  %v1207 = vpop.permute.xlu0 %1206
  %1208 = vrot.lane.b32.xlu0 %v434, 9
  %v1209 = vpop.permute.xlu0 %1208
  %1210 = vrot.lane.b32.xlu0 %v435, 9
  %v1211 = vpop.permute.xlu0 %1210
  %1212 = vrot.lane.b32.xlu0 %v436, 9
  %v1213 = vpop.permute.xlu0 %1212
  %1214 = vrot.lane.b32.xlu0 %v489, 12
  %v1215 = vpop.permute.xlu0 %1214
  %1216 = vrot.lane.b32.xlu0 %v501, 12
  %v1217 = vpop.permute.xlu0 %1216
  %1218 = vrot.lane.b32.xlu0 %v513, 12
  %v1219 = vpop.permute.xlu0 %1218
  %1220 = vrot.lane.b32.xlu0 %v525, 12
  %v1221 = vpop.permute.xlu0 %1220
  %1222 = vrot.lane.b32.xlu0 %v537, 12
  %v1223 = vpop.permute.xlu0 %1222
  %1224 = vrot.lane.b32.xlu0 %v549, 12
  %v1225 = vpop.permute.xlu0 %1224
  %1226 = vrot.lane.b32.xlu0 %v561, 12
  %v1227 = vpop.permute.xlu0 %1226
  %1228 = vrot.lane.b32.xlu0 %v573, 12
  %v1229 = vpop.permute.xlu0 %1228
  %1230 = vrot.lane.b32.xlu0 %v585, 12
  %v1231 = vpop.permute.xlu0 %1230
  %1232 = vrot.lane.b32.xlu0 %v597, 12
  %v1233 = vpop.permute.xlu0 %1232
  %1234 = vrot.lane.b32.xlu0 %v609, 12
  %v1235 = vpop.permute.xlu0 %1234
  %1236 = vrot.lane.b32.xlu0 %v621, 12
  %v1237 = vpop.permute.xlu0 %1236
  %1238 = vrot.lane.b32.xlu0 %v633, 12
  %v1239 = vpop.permute.xlu0 %1238
  %1240 = vrot.lane.b32.xlu0 %v645, 12
  %v1241 = vpop.permute.xlu0 %1240
  %1242 = vrot.lane.b32.xlu0 %v657, 12
  %v1243 = vpop.permute.xlu0 %1242
  %1244 = vrot.lane.b32.xlu0 %v1003, 12
  %v1245 = vpop.permute.xlu0 %1244
  %1246 = vrot.lane.b32.xlu0 %v669, 12
  %v1247 = vpop.permute.xlu0 %1246
  %1248 = vrot.lane.b32.xlu0 %v681, 12
  %v1249 = vpop.permute.xlu0 %1248
  %1250 = vrot.lane.b32.xlu0 %v693, 12
  %v1251 = vpop.permute.xlu0 %1250
  %1252 = vrot.lane.b32.xlu0 %v705, 12
  %v1253 = vpop.permute.xlu0 %1252
  %1254 = vrot.lane.b32.xlu0 %v717, 12
  %v1255 = vpop.permute.xlu0 %1254
  %1256 = vrot.lane.b32.xlu0 %v729, 12
  %v1257 = vpop.permute.xlu0 %1256
  %1258 = vrot.lane.b32.xlu0 %v741, 12
  %v1259 = vpop.permute.xlu0 %1258
  %1260 = vrot.lane.b32.xlu0 %v753, 12
  %v1261 = vpop.permute.xlu0 %1260
  %1262 = vrot.lane.b32.xlu0 %v765, 12
  %v1263 = vpop.permute.xlu0 %1262
  %1264 = vrot.lane.b32.xlu0 %v777, 12
  %v1265 = vpop.permute.xlu0 %1264
  %1266 = vrot.lane.b32.xlu0 %v789, 12
  %v1267 = vpop.permute.xlu0 %1266
  %1268 = vrot.lane.b32.xlu0 %v801, 12
  %v1269 = vpop.permute.xlu0 %1268
  %1270 = vrot.lane.b32.xlu0 %v813, 12
  %v1271 = vpop.permute.xlu0 %1270
  %1272 = vrot.lane.b32.xlu0 %v825, 12
  %v1273 = vpop.permute.xlu0 %1272
  %1274 = vrot.lane.b32.xlu0 %v837, 12
  %v1275 = vpop.permute.xlu0 %1274
  %1276 = vrot.lane.b32.xlu0 %v1015, 12
  %v1277 = vpop.permute.xlu0 %1276
  %1278 = vrot.lane.b32.xlu0 %v904, 15
  %v1279 = vpop.permute.xlu0 %1278
  %1280 = vrot.lane.b32.xlu0 %v907, 15
  %v1281 = vpop.permute.xlu0 %1280
  %1282 = vrot.lane.b32.xlu0 %v910, 15
  %v1283 = vpop.permute.xlu0 %1282
  %1284 = vrot.lane.b32.xlu0 %v913, 15
  %v1285 = vpop.permute.xlu0 %1284
  %1286 = vrot.lane.b32.xlu0 %v916, 15
  %v1287 = vpop.permute.xlu0 %1286
  %1288 = vrot.lane.b32.xlu0 %v919, 15
  %v1289 = vpop.permute.xlu0 %1288
  %1290 = vrot.lane.b32.xlu0 %v922, 15
  %v1291 = vpop.permute.xlu0 %1290
  %1292 = vrot.lane.b32.xlu0 %v925, 15
  %v1293 = vpop.permute.xlu0 %1292
  %1294 = vrot.lane.b32.xlu0 %v928, 15
  %v1295 = vpop.permute.xlu0 %1294
  %1296 = vrot.lane.b32.xlu0 %v931, 15
  %v1297 = vpop.permute.xlu0 %1296
  %1298 = vrot.lane.b32.xlu0 %v934, 15
  %v1299 = vpop.permute.xlu0 %1298
  %1300 = vrot.lane.b32.xlu0 %v937, 15
  %v1301 = vpop.permute.xlu0 %1300
  %1302 = vrot.lane.b32.xlu0 %v940, 15
  %v1303 = vpop.permute.xlu0 %1302
  %1304 = vrot.lane.b32.xlu0 %v943, 15
  %v1305 = vpop.permute.xlu0 %1304
  %1306 = vrot.lane.b32.xlu0 %v946, 15
  %v1307 = vpop.permute.xlu0 %1306
  %1308 = vrot.lane.b32.xlu0 %v1022, 15
  %v1309 = vpop.permute.xlu0 %1308
  %1310 = vrot.lane.b32.xlu0 %v949, 15
  %v1311 = vpop.permute.xlu0 %1310
  %1312 = vrot.lane.b32.xlu0 %v952, 15
  %v1313 = vpop.permute.xlu0 %1312
  %1314 = vrot.lane.b32.xlu0 %v955, 15
  %v1315 = vpop.permute.xlu0 %1314
  %1316 = vrot.lane.b32.xlu0 %v958, 15
  %v1317 = vpop.permute.xlu0 %1316
  %1318 = vrot.lane.b32.xlu0 %v961, 15
  %v1319 = vpop.permute.xlu0 %1318
  %1320 = vrot.lane.b32.xlu0 %v964, 15
  %v1321 = vpop.permute.xlu0 %1320
  %1322 = vrot.lane.b32.xlu0 %v967, 15
  %v1323 = vpop.permute.xlu0 %1322
  %1324 = vrot.lane.b32.xlu0 %v970, 15
  %v1325 = vpop.permute.xlu0 %1324
  %1326 = vrot.lane.b32.xlu0 %v973, 15
  %v1327 = vpop.permute.xlu0 %1326
  %1328 = vrot.lane.b32.xlu0 %v976, 15
  %v1329 = vpop.permute.xlu0 %1328
  %1330 = vrot.lane.b32.xlu0 %v979, 15
  %v1331 = vpop.permute.xlu0 %1330
  %1332 = vrot.lane.b32.xlu0 %v982, 15
  %v1333 = vpop.permute.xlu0 %1332
  %1334 = vrot.lane.b32.xlu0 %v985, 15
  %v1335 = vpop.permute.xlu0 %1334
  %1336 = vrot.lane.b32.xlu0 %v988, 15
  %v1337 = vpop.permute.xlu0 %1336
  %1338 = vrot.lane.b32.xlu0 %v991, 15
  %v1339 = vpop.permute.xlu0 %1338
  %1340 = vrot.lane.b32.xlu0 %v1025, 15
  %v1341 = vpop.permute.xlu0 %1340
  %1342 = vrot.lane.b32.xlu0 %v406, 18
  %v1343 = vpop.permute.xlu0 %1342
  %1344 = vrot.lane.b32.xlu0 %v407, 18
  %v1345 = vpop.permute.xlu0 %1344
  %1346 = vrot.lane.b32.xlu0 %v408, 18
  %v1347 = vpop.permute.xlu0 %1346
  %1348 = vrot.lane.b32.xlu0 %v409, 18
  %v1349 = vpop.permute.xlu0 %1348
  %1350 = vrot.lane.b32.xlu0 %v410, 18
  %v1351 = vpop.permute.xlu0 %1350
  %1352 = vrot.lane.b32.xlu0 %v411, 18
  %v1353 = vpop.permute.xlu0 %1352
  %1354 = vrot.lane.b32.xlu0 %v412, 18
  %v1355 = vpop.permute.xlu0 %1354
  %1356 = vrot.lane.b32.xlu0 %v413, 18
  %v1357 = vpop.permute.xlu0 %1356
  %1358 = vrot.lane.b32.xlu0 %v414, 18
  %v1359 = vpop.permute.xlu0 %1358
  %1360 = vrot.lane.b32.xlu0 %v415, 18
  %v1361 = vpop.permute.xlu0 %1360
  %1362 = vrot.lane.b32.xlu0 %v416, 18
  %v1363 = vpop.permute.xlu0 %1362
  %1364 = vrot.lane.b32.xlu0 %v417, 18
  %v1365 = vpop.permute.xlu0 %1364
  %1366 = vrot.lane.b32.xlu0 %v418, 18
  %v1367 = vpop.permute.xlu0 %1366
  %1368 = vrot.lane.b32.xlu0 %v419, 18
  %v1369 = vpop.permute.xlu0 %1368
  %1370 = vrot.lane.b32.xlu0 %v420, 18
  %v1371 = vpop.permute.xlu0 %1370
  %1372 = vrot.lane.b32.xlu0 0, 18
  %v1373 = vpop.permute.xlu0 %1372
  %1374 = vrot.lane.b32.xlu0 %v422, 18
  %v1375 = vpop.permute.xlu0 %1374
  %1376 = vrot.lane.b32.xlu0 %v423, 18
  %v1377 = vpop.permute.xlu0 %1376
  %1378 = vrot.lane.b32.xlu0 %v424, 18
  %v1379 = vpop.permute.xlu0 %1378
  %1380 = vrot.lane.b32.xlu0 %v425, 18
  %v1381 = vpop.permute.xlu0 %1380
  %1382 = vrot.lane.b32.xlu0 %v426, 18
  %v1383 = vpop.permute.xlu0 %1382
  %1384 = vrot.lane.b32.xlu0 %v427, 18
  %v1385 = vpop.permute.xlu0 %1384
  %1386 = vrot.lane.b32.xlu0 %v428, 18
  %v1387 = vpop.permute.xlu0 %1386
  %1388 = vrot.lane.b32.xlu0 %v429, 18
  %v1389 = vpop.permute.xlu0 %1388
  %1390 = vrot.lane.b32.xlu0 %v430, 18
  %v1391 = vpop.permute.xlu0 %1390
  %1392 = vrot.lane.b32.xlu0 %v431, 18
  %v1393 = vpop.permute.xlu0 %1392
  %1394 = vrot.lane.b32.xlu0 %v432, 18
  %v1395 = vpop.permute.xlu0 %1394
  %1396 = vrot.lane.b32.xlu0 %v433, 18
  %v1397 = vpop.permute.xlu0 %1396
  %1398 = vrot.lane.b32.xlu0 %v434, 18
  %v1399 = vpop.permute.xlu0 %1398
  %1400 = vrot.lane.b32.xlu0 %v435, 18
  %v1401 = vpop.permute.xlu0 %1400
  %1402 = vrot.lane.b32.xlu0 %v436, 18
  %v1403 = vpop.permute.xlu0 %1402
  %1404 = vrot.lane.b32.xlu0 %v501, 21
  %v1405 = vpop.permute.xlu0 %1404
  %1406 = vrot.lane.b32.xlu0 %v513, 21
  %v1407 = vpop.permute.xlu0 %1406
  %1408 = vrot.lane.b32.xlu0 %v525, 21
  %v1409 = vpop.permute.xlu0 %1408
  %1410 = vrot.lane.b32.xlu0 %v537, 21
  %v1411 = vpop.permute.xlu0 %1410
  %1412 = vrot.lane.b32.xlu0 %v549, 21
  %v1413 = vpop.permute.xlu0 %1412
  %1414 = vrot.lane.b32.xlu0 %v561, 21
  %v1415 = vpop.permute.xlu0 %1414
  %1416 = vrot.lane.b32.xlu0 %v573, 21
  %v1417 = vpop.permute.xlu0 %1416
  %1418 = vrot.lane.b32.xlu0 %v585, 21
  %v1419 = vpop.permute.xlu0 %1418
  %1420 = vrot.lane.b32.xlu0 %v597, 21
  %v1421 = vpop.permute.xlu0 %1420
  %1422 = vrot.lane.b32.xlu0 %v609, 21
  %v1423 = vpop.permute.xlu0 %1422
  %1424 = vrot.lane.b32.xlu0 %v621, 21
  %v1425 = vpop.permute.xlu0 %1424
  %1426 = vrot.lane.b32.xlu0 %v633, 21
  %v1427 = vpop.permute.xlu0 %1426
  %1428 = vrot.lane.b32.xlu0 %v645, 21
  %v1429 = vpop.permute.xlu0 %1428
  %1430 = vrot.lane.b32.xlu0 %v657, 21
  %v1431 = vpop.permute.xlu0 %1430
  %1432 = vrot.lane.b32.xlu0 %v1003, 21
  %v1433 = vpop.permute.xlu0 %1432
  %1434 = vrot.lane.b32.xlu0 %v477, 21
  %v1435 = vpop.permute.xlu0 %1434
  %1436 = vrot.lane.b32.xlu0 %v681, 21
  %v1437 = vpop.permute.xlu0 %1436
  %1438 = vrot.lane.b32.xlu0 %v693, 21
  %v1439 = vpop.permute.xlu0 %1438
  %1440 = vrot.lane.b32.xlu0 %v705, 21
  %v1441 = vpop.permute.xlu0 %1440
  %1442 = vrot.lane.b32.xlu0 %v717, 21
  %v1443 = vpop.permute.xlu0 %1442
  %1444 = vrot.lane.b32.xlu0 %v729, 21
  %v1445 = vpop.permute.xlu0 %1444
  %1446 = vrot.lane.b32.xlu0 %v741, 21
  %v1447 = vpop.permute.xlu0 %1446
  %1448 = vrot.lane.b32.xlu0 %v753, 21
  %v1449 = vpop.permute.xlu0 %1448
  %1450 = vrot.lane.b32.xlu0 %v765, 21
  %v1451 = vpop.permute.xlu0 %1450
  %1452 = vrot.lane.b32.xlu0 %v777, 21
  %v1453 = vpop.permute.xlu0 %1452
  %1454 = vrot.lane.b32.xlu0 %v789, 21
  %v1455 = vpop.permute.xlu0 %1454
  %1456 = vrot.lane.b32.xlu0 %v801, 21
  %v1457 = vpop.permute.xlu0 %1456
  %1458 = vrot.lane.b32.xlu0 %v813, 21
  %v1459 = vpop.permute.xlu0 %1458
  %1460 = vrot.lane.b32.xlu0 %v825, 21
  %v1461 = vpop.permute.xlu0 %1460
  %1462 = vrot.lane.b32.xlu0 %v837, 21
  %v1463 = vpop.permute.xlu0 %1462
  %1464 = vrot.lane.b32.xlu0 %v1015, 21
  %v1465 = vpop.permute.xlu0 %1464
  %1466 = vrot.lane.b32.xlu0 %v907, 24
  %v1467 = vpop.permute.xlu0 %1466
  %1468 = vrot.lane.b32.xlu0 %v910, 24
  %v1469 = vpop.permute.xlu0 %1468
  %1470 = vrot.lane.b32.xlu0 %v913, 24
  %v1471 = vpop.permute.xlu0 %1470
  %1472 = vrot.lane.b32.xlu0 %v916, 24
  %v1473 = vpop.permute.xlu0 %1472
  %1474 = vrot.lane.b32.xlu0 %v919, 24
  %v1475 = vpop.permute.xlu0 %1474
  %1476 = vrot.lane.b32.xlu0 %v922, 24
  %v1477 = vpop.permute.xlu0 %1476
  %1478 = vrot.lane.b32.xlu0 %v925, 24
  %v1479 = vpop.permute.xlu0 %1478
  %1480 = vrot.lane.b32.xlu0 %v928, 24
  %v1481 = vpop.permute.xlu0 %1480
  %1482 = vrot.lane.b32.xlu0 %v931, 24
  %v1483 = vpop.permute.xlu0 %1482
  %1484 = vrot.lane.b32.xlu0 %v934, 24
  %v1485 = vpop.permute.xlu0 %1484
  %1486 = vrot.lane.b32.xlu0 %v937, 24
  %v1487 = vpop.permute.xlu0 %1486
  %1488 = vrot.lane.b32.xlu0 %v940, 24
  %v1489 = vpop.permute.xlu0 %1488
  %1490 = vrot.lane.b32.xlu0 %v943, 24
  %v1491 = vpop.permute.xlu0 %1490
  %1492 = vrot.lane.b32.xlu0 %v946, 24
  %v1493 = vpop.permute.xlu0 %1492
  %1494 = vrot.lane.b32.xlu0 %v1022, 24
  %v1495 = vpop.permute.xlu0 %1494
  %1496 = vrot.lane.b32.xlu0 %v901, 24
  %v1497 = vpop.permute.xlu0 %1496
  %1498 = vrot.lane.b32.xlu0 %v952, 24
  %v1499 = vpop.permute.xlu0 %1498
  %1500 = vrot.lane.b32.xlu0 %v955, 24
  %v1501 = vpop.permute.xlu0 %1500
  %1502 = vrot.lane.b32.xlu0 %v958, 24
  %v1503 = vpop.permute.xlu0 %1502
  %1504 = vrot.lane.b32.xlu0 %v961, 24
  %v1505 = vpop.permute.xlu0 %1504
  %1506 = vrot.lane.b32.xlu0 %v964, 24
  %v1507 = vpop.permute.xlu0 %1506
  %1508 = vrot.lane.b32.xlu0 %v967, 24
  %v1509 = vpop.permute.xlu0 %1508
  %1510 = vrot.lane.b32.xlu0 %v970, 24
  %v1511 = vpop.permute.xlu0 %1510
  %1512 = vrot.lane.b32.xlu0 %v973, 24
  %v1513 = vpop.permute.xlu0 %1512
  %1514 = vrot.lane.b32.xlu0 %v976, 24
  %v1515 = vpop.permute.xlu0 %1514
  %1516 = vrot.lane.b32.xlu0 %v979, 24
  %v1517 = vpop.permute.xlu0 %1516
  %1518 = vrot.lane.b32.xlu0 %v982, 24
  %v1519 = vpop.permute.xlu0 %1518
  %1520 = vrot.lane.b32.xlu0 %v985, 24
  %v1521 = vpop.permute.xlu0 %1520
  %1522 = vrot.lane.b32.xlu0 %v988, 24
  %v1523 = vpop.permute.xlu0 %1522
  %1524 = vrot.lane.b32.xlu0 %v991, 24
  %v1525 = vpop.permute.xlu0 %1524
  %1526 = vrot.lane.b32.xlu0 %v1025, 24
  %v1527 = vpop.permute.xlu0 %1526
  %vm1528 = vcmask 23552
  %v1530 = vsel %vm1528, 0, %v1027
  %v1532 = vsel %vm1528, %v405, %v1029
  %v1534 = vsel %vm1528, %v406, %v1031
  %v1536 = vsel %vm1528, %v407, %v1033
  %v1538 = vsel %vm1528, %v408, %v1035
  %v1540 = vsel %vm1528, %v409, %v1037
  %v1542 = vsel %vm1528, %v410, %v1039
  %v1544 = vsel %vm1528, %v411, %v1041
  %v1546 = vsel %vm1528, %v412, %v1043
  %v1548 = vsel %vm1528, %v413, %v1045
  %v1550 = vsel %vm1528, %v414, %v1047
  %v1552 = vsel %vm1528, %v415, %v1049
  %v1554 = vsel %vm1528, %v416, %v1051
  %v1556 = vsel %vm1528, %v417, %v1053
  %v1558 = vsel %vm1528, %v418, %v1055
  %v1560 = vsel %vm1528, %v419, %v1057
  %v1562 = vsel %vm1528, %v421, %v1059
  %v1564 = vsel %vm1528, %v422, %v1061
  %v1566 = vsel %vm1528, %v423, %v1063
  %v1568 = vsel %vm1528, %v424, %v1065
  %v1570 = vsel %vm1528, %v425, %v1067
  %v1572 = vsel %vm1528, %v426, %v1069
  %v1574 = vsel %vm1528, %v427, %v1071
  %v1576 = vsel %vm1528, %v428, %v1073
  %v1578 = vsel %vm1528, %v429, %v1075
  %v1580 = vsel %vm1528, %v430, %v1077
  %v1582 = vsel %vm1528, %v431, %v1079
  %v1584 = vsel %vm1528, %v432, %v1081
  %v1586 = vsel %vm1528, %v433, %v1083
  %v1588 = vsel %vm1528, %v434, %v1085
  %v1590 = vsel %vm1528, %v435, %v1087
  %vm1591 = vcmask 48128
  %v1593 = vsel %vm1591, %v1530, %v1089
  %v1595 = vsel %vm1591, %v1532, %v1091
  %v1597 = vsel %vm1591, %v1534, %v1093
  %v1599 = vsel %vm1591, %v1536, %v1095
  %v1601 = vsel %vm1591, %v1538, %v1097
  %v1603 = vsel %vm1591, %v1540, %v1099
  %v1605 = vsel %vm1591, %v1542, %v1101
  %v1607 = vsel %vm1591, %v1544, %v1103
  %v1609 = vsel %vm1591, %v1546, %v1105
  %v1611 = vsel %vm1591, %v1548, %v1107
  %v1613 = vsel %vm1591, %v1550, %v1109
  %v1615 = vsel %vm1591, %v1552, %v1111
  %v1617 = vsel %vm1591, %v1554, %v1113
  %v1619 = vsel %vm1591, %v1556, %v1115
  %v1621 = vsel %vm1591, %v1558, %v1117
  %v1623 = vsel %vm1591, %v1560, %v1119
  %v1625 = vsel %vm1591, %v1562, %v1121
  %v1627 = vsel %vm1591, %v1564, %v1123
  %v1629 = vsel %vm1591, %v1566, %v1125
  %v1631 = vsel %vm1591, %v1568, %v1127
  %v1633 = vsel %vm1591, %v1570, %v1129
  %v1635 = vsel %vm1591, %v1572, %v1131
  %v1637 = vsel %vm1591, %v1574, %v1133
  %v1639 = vsel %vm1591, %v1576, %v1135
  %v1641 = vsel %vm1591, %v1578, %v1137
  %v1643 = vsel %vm1591, %v1580, %v1139
  %v1645 = vsel %vm1591, %v1582, %v1141
  %v1647 = vsel %vm1591, %v1584, %v1143
  %v1649 = vsel %vm1591, %v1586, %v1145
  %v1651 = vsel %vm1591, %v1588, %v1147
  %v1653 = vsel %vm1591, %v1590, %v1149
  %vm1654 = vcmask 72704
  %v1656 = vsel %vm1654, %v1593, %v1151
  %v1658 = vsel %vm1654, %v1595, %v1153
  %v1660 = vsel %vm1654, %v1597, %v1155
  %v1662 = vsel %vm1654, %v1599, %v1157
  %v1664 = vsel %vm1654, %v1601, %v1159
  %v1666 = vsel %vm1654, %v1603, %v1161
  %v1668 = vsel %vm1654, %v1605, %v1163
  %v1670 = vsel %vm1654, %v1607, %v1165
  %v1672 = vsel %vm1654, %v1609, %v1167
  %v1674 = vsel %vm1654, %v1611, %v1169
  %v1676 = vsel %vm1654, %v1613, %v1171
  %v1678 = vsel %vm1654, %v1615, %v1173
  %v1680 = vsel %vm1654, %v1617, %v1175
  %v1682 = vsel %vm1654, %v1619, %v1177
  %v1684 = vsel %vm1654, %v1621, %v1179
  %v1686 = vsel %vm1654, %v1623, %v1181
  %v1688 = vsel %vm1654, %v1593, %v1183
  %v1690 = vsel %vm1654, %v1625, %v1185
  %v1692 = vsel %vm1654, %v1627, %v1187
  %v1694 = vsel %vm1654, %v1629, %v1189
  %v1696 = vsel %vm1654, %v1631, %v1191
  %v1698 = vsel %vm1654, %v1633, %v1193
  %v1700 = vsel %vm1654, %v1635, %v1195
  %v1702 = vsel %vm1654, %v1637, %v1197
  %v1704 = vsel %vm1654, %v1639, %v1199
  %v1706 = vsel %vm1654, %v1641, %v1201
  %v1708 = vsel %vm1654, %v1643, %v1203
  %v1710 = vsel %vm1654, %v1645, %v1205
  %v1712 = vsel %vm1654, %v1647, %v1207
  %v1714 = vsel %vm1654, %v1649, %v1209
  %v1716 = vsel %vm1654, %v1651, %v1211
  %v1718 = vsel %vm1654, %v1653, %v1213
  %vm1719 = vcmask 97280
  %v1721 = vsel %vm1719, %v1656, %v1215
  %v1723 = vsel %vm1719, %v1658, %v1217
  %v1725 = vsel %vm1719, %v1660, %v1219
  %v1727 = vsel %vm1719, %v1662, %v1221
  %v1729 = vsel %vm1719, %v1664, %v1223
  %v1731 = vsel %vm1719, %v1666, %v1225
  %v1733 = vsel %vm1719, %v1668, %v1227
  %v1735 = vsel %vm1719, %v1670, %v1229
  %v1737 = vsel %vm1719, %v1672, %v1231
  %v1739 = vsel %vm1719, %v1674, %v1233
  %v1741 = vsel %vm1719, %v1676, %v1235
  %v1743 = vsel %vm1719, %v1678, %v1237
  %v1745 = vsel %vm1719, %v1680, %v1239
  %v1747 = vsel %vm1719, %v1682, %v1241
  %v1749 = vsel %vm1719, %v1684, %v1243
  %v1751 = vsel %vm1719, %v1686, %v1245
  %v1753 = vsel %vm1719, %v1688, %v1247
  %v1755 = vsel %vm1719, %v1690, %v1249
  %v1757 = vsel %vm1719, %v1692, %v1251
  %v1759 = vsel %vm1719, %v1694, %v1253
  %v1761 = vsel %vm1719, %v1696, %v1255
  %v1763 = vsel %vm1719, %v1698, %v1257
  %v1765 = vsel %vm1719, %v1700, %v1259
  %v1767 = vsel %vm1719, %v1702, %v1261
  %v1769 = vsel %vm1719, %v1704, %v1263
  %v1771 = vsel %vm1719, %v1706, %v1265
  %v1773 = vsel %vm1719, %v1708, %v1267
  %v1775 = vsel %vm1719, %v1710, %v1269
  %v1777 = vsel %vm1719, %v1712, %v1271
  %v1779 = vsel %vm1719, %v1714, %v1273
  %v1781 = vsel %vm1719, %v1716, %v1275
  %v1783 = vsel %vm1719, %v1718, %v1277
  %vm1784 = vcmask 121856
  %v1786 = vsel %vm1784, %v1721, %v1279
  %v1788 = vsel %vm1784, %v1723, %v1281
  %v1790 = vsel %vm1784, %v1725, %v1283
  %v1792 = vsel %vm1784, %v1727, %v1285
  %v1794 = vsel %vm1784, %v1729, %v1287
  %v1796 = vsel %vm1784, %v1731, %v1289
  %v1798 = vsel %vm1784, %v1733, %v1291
  %v1800 = vsel %vm1784, %v1735, %v1293
  %v1802 = vsel %vm1784, %v1737, %v1295
  %v1804 = vsel %vm1784, %v1739, %v1297
  %v1806 = vsel %vm1784, %v1741, %v1299
  %v1808 = vsel %vm1784, %v1743, %v1301
  %v1810 = vsel %vm1784, %v1745, %v1303
  %v1812 = vsel %vm1784, %v1747, %v1305
  %v1814 = vsel %vm1784, %v1749, %v1307
  %v1816 = vsel %vm1784, %v1751, %v1309
  %v1818 = vsel %vm1784, %v1753, %v1311
  %v1820 = vsel %vm1784, %v1755, %v1313
  %v1822 = vsel %vm1784, %v1757, %v1315
  %v1824 = vsel %vm1784, %v1759, %v1317
  %v1826 = vsel %vm1784, %v1761, %v1319
  %v1828 = vsel %vm1784, %v1763, %v1321
  %v1830 = vsel %vm1784, %v1765, %v1323
  %v1832 = vsel %vm1784, %v1767, %v1325
  %v1834 = vsel %vm1784, %v1769, %v1327
  %v1836 = vsel %vm1784, %v1771, %v1329
  %v1838 = vsel %vm1784, %v1773, %v1331
  %v1840 = vsel %vm1784, %v1775, %v1333
  %v1842 = vsel %vm1784, %v1777, %v1335
  %v1844 = vsel %vm1784, %v1779, %v1337
  %v1846 = vsel %vm1784, %v1781, %v1339
  %v1848 = vsel %vm1784, %v1783, %v1341
  %vm1849 = vcmask 146432
  %v1851 = vsel %vm1849, %v1786, %v1343
  %v1853 = vsel %vm1849, %v1788, %v1345
  %v1855 = vsel %vm1849, %v1790, %v1347
  %v1857 = vsel %vm1849, %v1792, %v1349
  %v1859 = vsel %vm1849, %v1794, %v1351
  %v1861 = vsel %vm1849, %v1796, %v1353
  %v1863 = vsel %vm1849, %v1798, %v1355
  %v1865 = vsel %vm1849, %v1800, %v1357
  %v1867 = vsel %vm1849, %v1802, %v1359
  %v1869 = vsel %vm1849, %v1804, %v1361
  %v1871 = vsel %vm1849, %v1806, %v1363
  %v1873 = vsel %vm1849, %v1808, %v1365
  %v1875 = vsel %vm1849, %v1810, %v1367
  %v1877 = vsel %vm1849, %v1812, %v1369
  %v1879 = vsel %vm1849, %v1814, %v1371
  %v1881 = vsel %vm1849, %v1816, %v1373
  %v1883 = vsel %vm1849, %v1818, %v1375
  %v1885 = vsel %vm1849, %v1820, %v1377
  %v1887 = vsel %vm1849, %v1822, %v1379
  %v1889 = vsel %vm1849, %v1824, %v1381
  %v1891 = vsel %vm1849, %v1826, %v1383
  %v1893 = vsel %vm1849, %v1828, %v1385
  %v1895 = vsel %vm1849, %v1830, %v1387
  %v1897 = vsel %vm1849, %v1832, %v1389
  %v1899 = vsel %vm1849, %v1834, %v1391
  %v1901 = vsel %vm1849, %v1836, %v1393
  %v1903 = vsel %vm1849, %v1838, %v1395
  %v1905 = vsel %vm1849, %v1840, %v1397
  %v1907 = vsel %vm1849, %v1842, %v1399
  %v1909 = vsel %vm1849, %v1844, %v1401
  %v1911 = vsel %vm1849, %v1846, %v1403
  %v1912 = vsel %vm1849, %v1848, %v1373
  %vm1913 = vcmask 171008
  %v1915 = vsel %vm1913, %v1851, %v1405
  %v1917 = vsel %vm1913, %v1853, %v1407
  %v1919 = vsel %vm1913, %v1855, %v1409
  %v1921 = vsel %vm1913, %v1857, %v1411
  %v1923 = vsel %vm1913, %v1859, %v1413
  %v1925 = vsel %vm1913, %v1861, %v1415
  %v1927 = vsel %vm1913, %v1863, %v1417
  %v1929 = vsel %vm1913, %v1865, %v1419
  %v1931 = vsel %vm1913, %v1867, %v1421
  %v1933 = vsel %vm1913, %v1869, %v1423
  %v1935 = vsel %vm1913, %v1871, %v1425
  %v1937 = vsel %vm1913, %v1873, %v1427
  %v1939 = vsel %vm1913, %v1875, %v1429
  %v1941 = vsel %vm1913, %v1877, %v1431
  %v1943 = vsel %vm1913, %v1879, %v1433
  %v1945 = vsel %vm1913, %v1881, %v1435
  %v1947 = vsel %vm1913, %v1883, %v1437
  %v1949 = vsel %vm1913, %v1885, %v1439
  %v1951 = vsel %vm1913, %v1887, %v1441
  %v1953 = vsel %vm1913, %v1889, %v1443
  %v1955 = vsel %vm1913, %v1891, %v1445
  %v1957 = vsel %vm1913, %v1893, %v1447
  %v1959 = vsel %vm1913, %v1895, %v1449
  %v1961 = vsel %vm1913, %v1897, %v1451
  %v1963 = vsel %vm1913, %v1899, %v1453
  %v1965 = vsel %vm1913, %v1901, %v1455
  %v1967 = vsel %vm1913, %v1903, %v1457
  %v1969 = vsel %vm1913, %v1905, %v1459
  %v1971 = vsel %vm1913, %v1907, %v1461
  %v1973 = vsel %vm1913, %v1909, %v1463
  %v1975 = vsel %vm1913, %v1911, %v1465
  %v1976 = vsel %vm1913, %v1912, %v1435
  %vm1977 = vcmask 195584
  %v1979 = vsel %vm1977, %v1915, %v1467
  %v1981 = vsel %vm1977, %v1917, %v1469
  %v1983 = vsel %vm1977, %v1919, %v1471
  %v1985 = vsel %vm1977, %v1921, %v1473
  %v1987 = vsel %vm1977, %v1923, %v1475
  %v1989 = vsel %vm1977, %v1925, %v1477
  %v1991 = vsel %vm1977, %v1927, %v1479
  %v1993 = vsel %vm1977, %v1929, %v1481
  %v1995 = vsel %vm1977, %v1931, %v1483
  %v1997 = vsel %vm1977, %v1933, %v1485
  %v1999 = vsel %vm1977, %v1935, %v1487
  %v2001 = vsel %vm1977, %v1937, %v1489
  %v2003 = vsel %vm1977, %v1939, %v1491
  %v2005 = vsel %vm1977, %v1941, %v1493
  %v2007 = vsel %vm1977, %v1943, %v1495
  %v2009 = vsel %vm1977, %v1945, %v1497
  %v2011 = vsel %vm1977, %v1947, %v1499
  %v2013 = vsel %vm1977, %v1949, %v1501
  %v2015 = vsel %vm1977, %v1951, %v1503
  %v2017 = vsel %vm1977, %v1953, %v1505
  %v2019 = vsel %vm1977, %v1955, %v1507
  %v2021 = vsel %vm1977, %v1957, %v1509
  %v2023 = vsel %vm1977, %v1959, %v1511
  %v2025 = vsel %vm1977, %v1961, %v1513
  %v2027 = vsel %vm1977, %v1963, %v1515
  %v2029 = vsel %vm1977, %v1965, %v1517
  %v2031 = vsel %vm1977, %v1967, %v1519
  %v2033 = vsel %vm1977, %v1969, %v1521
  %v2035 = vsel %vm1977, %v1971, %v1523
  %v2037 = vsel %vm1977, %v1973, %v1525
  %v2039 = vsel %vm1977, %v1975, %v1527
  %v2040 = vsel %vm1977, %v1976, %v1497
  %v2041 = vld [vmem:[%s1] sm:$0xf]
  %v2042 = vld [vmem:[%s1 + $0x4] sm:$0xf]
  %v2043 = vld [vmem:[%s1 + $0x8] sm:$0xf]
  %v2044 = vld [vmem:[%s1 + $0xc] sm:$0x3]
  %v2049 = vunpack.c.l.b16 %v2041
  %v2050 = vunpack.c.l.b16 %v2042
  %v2051 = vunpack.c.l.b16 %v2043
  %v2052 = vunpack.c.l.b16 %v2044
  %v2053 = vpack.c.b16 %v2050, %v2049
  %v2054 = vpack.c.b16 %v2052, %v2051
  %vm2056 = vcmask 220160
  %v2057 = vsel %vm2056, %v1979, 0
  %v2059 = vsel %vm2056, %v1981, 0
  %v2061 = vsel %vm2056, %v1983, 0
  %v2063 = vsel %vm2056, %v1985, 0
  %v2065 = vsel %vm2056, %v1987, 0
  %v2067 = vsel %vm2056, %v1989, 0
  %v2069 = vsel %vm2056, %v1991, 0
  %v2071 = vsel %vm2056, %v1993, 0
  %v2073 = vsel %vm2056, %v1995, 0
  %v2075 = vsel %vm2056, %v1997, 0
  %v2077 = vsel %vm2056, %v1999, 0
  %v2079 = vsel %vm2056, %v2001, 0
  %v2081 = vsel %vm2056, %v2003, 0
  %v2083 = vsel %vm2056, %v2005, 0
  %v2085 = vsel %vm2056, %v2007, 0
  %v2087 = vsel %vm2056, %v2009, 0
  %v2089 = vsel %vm2056, %v2011, 0
  %v2091 = vsel %vm2056, %v2013, 0
  %v2093 = vsel %vm2056, %v2015, 0
  %v2095 = vsel %vm2056, %v2017, 0
  %v2097 = vsel %vm2056, %v2019, 0
  %v2099 = vsel %vm2056, %v2021, 0
  %v2101 = vsel %vm2056, %v2023, 0
  %v2103 = vsel %vm2056, %v2025, 0
  %v2105 = vsel %vm2056, %v2027, 0
  %v2107 = vsel %vm2056, %v2029, 0
  %v2109 = vsel %vm2056, %v2031, 0
  %v2111 = vsel %vm2056, %v2033, 0
  %v2113 = vsel %vm2056, %v2035, 0
  %v2115 = vsel %vm2056, %v2037, 0
  %v2117 = vsel %vm2056, %v2039, 0
  %v2119 = vsel %vm2056, %v2040, 0
  %vm2121 = vcmask 1044480
  %vm2122 = vcmask 1045504
  %v2123 = vsel %vm2121, 4294967295, 65535
  %v2124 = vsel %vm2122, %v2123, 0
  %v2126 = vand.u32 %v2054, %v2124
  %2128 = vmatprep.subr.bf16.mxu0 0
  %2129 = vmatpush1.bf16.msra.mxu0 0
  %2130 = vmatprep.subr.bf16.mxu0 0
  %2131 = vmatpush1.bf16.msra.mxu0 0
  %2132 = vmatprep.subr.bf16.mxu0 0
  %2133 = vmatpush1.bf16.msra.mxu0 0
  %2134 = vmatprep.subr.bf16.mxu0 0
  %2135 = vmatpush1.bf16.msra.mxu0 0
  %2136 = vmatprep.subr.bf16.mxu0 0
  %2137 = vmatpush1.bf16.msra.mxu0 0
  %2138 = vmatprep.subr.bf16.mxu0 0
  %2139 = vmatpush1.bf16.msra.mxu0 0
  %2140 = vmatprep.subr.bf16.mxu0 0
  %2141 = vmatpush1.bf16.msra.mxu0 %v2126
  %2142 = vmatprep.subr.bf16.mxu0 0
  %2143 = vmatpush1.bf16.msra.mxu0 %v2053
  %2144 = vmatprep.subr.bf16.mxu0 0
  %2145 = vmatpush2.bf16.msra.mxu0 0
  %2146 = vmatprep.subr.bf16.mxu0 0
  %2147 = vmatpush2.bf16.msra.mxu0 0
  %2148 = vmatprep.subr.bf16.mxu0 0
  %2149 = vmatpush2.bf16.msra.mxu0 0
  %2150 = vmatprep.subr.bf16.mxu0 0
  %2151 = vmatpush2.bf16.msra.mxu0 0
  %2152 = vmatprep.subr.bf16.mxu0 0
  %2153 = vmatpush2.bf16.msra.mxu0 0
  %2154 = vmatprep.subr.bf16.mxu0 0
  %2155 = vmatpush2.bf16.msra.mxu0 0
  %2156 = vmatprep.subr.bf16.mxu0 0
  %2157 = vmatpush2.bf16.msra.mxu0 0
  %2158 = vmatprep.subr.bf16.mxu0 0
  %2159 = vmatpush2.bf16.msra.mxu0 0
  %2160 = vmatprep.mubr.bf16.mxu0 0
  %2161 = vmatmul.mubr.bf16.gmra.mxu0 %v2057
  %v2162 = vpop.f32.mrf.mxu0
  %v2163 = vadd.f32 0.0, %v2162
  %v2164 = vpop.f32.mrf.mxu0
  %v2165 = vpop.f32.mrf.mxu0
  %v2166 = vadd.f32 0.0, %v2165
  %v2167 = vpop.f32.mrf.mxu0
  %2168 = vmatprep.mubr.bf16.mxu0 0
  %2169 = vmatmul.mubr.bf16.gmra.mxu0 %v2059
  %v2170 = vpop.f32.mrf.mxu0
  %v2171 = vadd.f32 0.0, %v2170
  %v2172 = vpop.f32.mrf.mxu0
  %v2173 = vpop.f32.mrf.mxu0
  %v2174 = vadd.f32 0.0, %v2173
  %v2175 = vpop.f32.mrf.mxu0
  %2176 = vmatprep.mubr.bf16.mxu0 0
  %2177 = vmatmul.mubr.bf16.gmra.mxu0 %v2061
  %v2178 = vpop.f32.mrf.mxu0
  %v2179 = vadd.f32 0.0, %v2178
  %v2180 = vpop.f32.mrf.mxu0
  %v2181 = vpop.f32.mrf.mxu0
  %v2182 = vadd.f32 0.0, %v2181
  %v2183 = vpop.f32.mrf.mxu0
  %2184 = vmatprep.mubr.bf16.mxu0 0
  %2185 = vmatmul.mubr.bf16.gmra.mxu0 %v2063
  %v2186 = vpop.f32.mrf.mxu0
  %v2187 = vadd.f32 0.0, %v2186
  %v2188 = vpop.f32.mrf.mxu0
  %v2189 = vpop.f32.mrf.mxu0
  %v2190 = vadd.f32 0.0, %v2189
  %v2191 = vpop.f32.mrf.mxu0
  %2192 = vmatprep.mubr.bf16.mxu0 0
  %2193 = vmatmul.mubr.bf16.gmra.mxu0 %v2065
  %v2194 = vpop.f32.mrf.mxu0
  %v2195 = vadd.f32 0.0, %v2194
  %v2196 = vpop.f32.mrf.mxu0
  %v2197 = vpop.f32.mrf.mxu0
  %v2198 = vadd.f32 0.0, %v2197
  %v2199 = vpop.f32.mrf.mxu0
  %2200 = vmatprep.mubr.bf16.mxu0 0
  %2201 = vmatmul.mubr.bf16.gmra.mxu0 %v2067
  %v2202 = vpop.f32.mrf.mxu0
  %v2203 = vadd.f32 0.0, %v2202
  %v2204 = vpop.f32.mrf.mxu0
  %v2205 = vpop.f32.mrf.mxu0
  %v2206 = vadd.f32 0.0, %v2205
  %v2207 = vpop.f32.mrf.mxu0
  %2208 = vmatprep.mubr.bf16.mxu0 0
  %2209 = vmatmul.mubr.bf16.gmra.mxu0 %v2069
  %v2210 = vpop.f32.mrf.mxu0
  %v2211 = vadd.f32 0.0, %v2210
  %v2212 = vpop.f32.mrf.mxu0
  %v2213 = vpop.f32.mrf.mxu0
  %v2214 = vadd.f32 0.0, %v2213
  %v2215 = vpop.f32.mrf.mxu0
  %2216 = vmatprep.mubr.bf16.mxu0 0
  %2217 = vmatmul.mubr.bf16.gmra.mxu0 %v2071
  %v2218 = vpop.f32.mrf.mxu0
  %v2219 = vadd.f32 0.0, %v2218
  %v2220 = vpop.f32.mrf.mxu0
  %v2221 = vpop.f32.mrf.mxu0
  %v2222 = vadd.f32 0.0, %v2221
  %v2223 = vpop.f32.mrf.mxu0
  %2224 = vmatprep.mubr.bf16.mxu0 0
  %2225 = vmatmul.mubr.bf16.gmra.mxu0 %v2073
  %v2226 = vpop.f32.mrf.mxu0
  %v2227 = vadd.f32 0.0, %v2226
  %v2228 = vpop.f32.mrf.mxu0
  %v2229 = vpop.f32.mrf.mxu0
  %v2230 = vadd.f32 0.0, %v2229
  %v2231 = vpop.f32.mrf.mxu0
  %2232 = vmatprep.mubr.bf16.mxu0 0
  %2233 = vmatmul.mubr.bf16.gmra.mxu0 %v2075
  %v2234 = vpop.f32.mrf.mxu0
  %v2235 = vadd.f32 0.0, %v2234
  %v2236 = vpop.f32.mrf.mxu0
  %v2237 = vpop.f32.mrf.mxu0
  %v2238 = vadd.f32 0.0, %v2237
  %v2239 = vpop.f32.mrf.mxu0
  %2240 = vmatprep.mubr.bf16.mxu0 0
  %2241 = vmatmul.mubr.bf16.gmra.mxu0 %v2077
  %v2242 = vpop.f32.mrf.mxu0
  %v2243 = vadd.f32 0.0, %v2242
  %v2244 = vpop.f32.mrf.mxu0
  %v2245 = vpop.f32.mrf.mxu0
  %v2246 = vadd.f32 0.0, %v2245
  %v2247 = vpop.f32.mrf.mxu0
  %2248 = vmatprep.mubr.bf16.mxu0 0
  %2249 = vmatmul.mubr.bf16.gmra.mxu0 %v2079
  %v2250 = vpop.f32.mrf.mxu0
  %v2251 = vadd.f32 0.0, %v2250
  %v2252 = vpop.f32.mrf.mxu0
  %v2253 = vpop.f32.mrf.mxu0
  %v2254 = vadd.f32 0.0, %v2253
  %v2255 = vpop.f32.mrf.mxu0
  %2256 = vmatprep.mubr.bf16.mxu0 0
  %2257 = vmatmul.mubr.bf16.gmra.mxu0 %v2081
  %v2258 = vpop.f32.mrf.mxu0
  %v2259 = vadd.f32 0.0, %v2258
  %v2260 = vpop.f32.mrf.mxu0
  %v2261 = vpop.f32.mrf.mxu0
  %v2262 = vadd.f32 0.0, %v2261
  %v2263 = vpop.f32.mrf.mxu0
  %2264 = vmatprep.mubr.bf16.mxu0 0
  %2265 = vmatmul.mubr.bf16.gmra.mxu0 %v2083
  %v2266 = vpop.f32.mrf.mxu0
  %v2267 = vadd.f32 0.0, %v2266
  %v2268 = vpop.f32.mrf.mxu0
  %v2269 = vpop.f32.mrf.mxu0
  %v2270 = vadd.f32 0.0, %v2269
  %v2271 = vpop.f32.mrf.mxu0
  %2272 = vmatprep.mubr.bf16.mxu0 0
  %2273 = vmatmul.mubr.bf16.gmra.mxu0 %v2085
  %v2274 = vpop.f32.mrf.mxu0
  %v2275 = vadd.f32 0.0, %v2274
  %v2276 = vpop.f32.mrf.mxu0
  %v2277 = vpop.f32.mrf.mxu0
  %v2278 = vadd.f32 0.0, %v2277
  %v2279 = vpop.f32.mrf.mxu0
  %2280 = vmatprep.mubr.bf16.mxu0 0
  %2281 = vmatmul.mubr.bf16.gmra.mxu0 %v2087
  %v2282 = vpop.f32.mrf.mxu0
  %v2283 = vadd.f32 0.0, %v2282
  %v2284 = vpop.f32.mrf.mxu0
  %v2285 = vpop.f32.mrf.mxu0
  %v2286 = vadd.f32 0.0, %v2285
  %v2287 = vpop.f32.mrf.mxu0
  %2288 = vmatprep.mubr.bf16.mxu0 0
  %2289 = vmatmul.mubr.bf16.gmra.mxu0 %v2089
  %v2290 = vpop.f32.mrf.mxu0
  %v2291 = vadd.f32 0.0, %v2290
  %v2292 = vpop.f32.mrf.mxu0
  %v2293 = vpop.f32.mrf.mxu0
  %v2294 = vadd.f32 0.0, %v2293
  %v2295 = vpop.f32.mrf.mxu0
  %2296 = vmatprep.mubr.bf16.mxu0 0
  %2297 = vmatmul.mubr.bf16.gmra.mxu0 %v2091
  %v2298 = vpop.f32.mrf.mxu0
  %v2299 = vadd.f32 0.0, %v2298
  %v2300 = vpop.f32.mrf.mxu0
  %v2301 = vpop.f32.mrf.mxu0
  %v2302 = vadd.f32 0.0, %v2301
  %v2303 = vpop.f32.mrf.mxu0
  %2304 = vmatprep.mubr.bf16.mxu0 0
  %2305 = vmatmul.mubr.bf16.gmra.mxu0 %v2093
  %v2306 = vpop.f32.mrf.mxu0
  %v2307 = vadd.f32 0.0, %v2306
  %v2308 = vpop.f32.mrf.mxu0
  %v2309 = vpop.f32.mrf.mxu0
  %v2310 = vadd.f32 0.0, %v2309
  %v2311 = vpop.f32.mrf.mxu0
  %2312 = vmatprep.mubr.bf16.mxu0 0
  %2313 = vmatmul.mubr.bf16.gmra.mxu0 %v2095
  %v2314 = vpop.f32.mrf.mxu0
  %v2315 = vadd.f32 0.0, %v2314
  %v2316 = vpop.f32.mrf.mxu0
  %v2317 = vpop.f32.mrf.mxu0
  %v2318 = vadd.f32 0.0, %v2317
  %v2319 = vpop.f32.mrf.mxu0
  %2320 = vmatprep.mubr.bf16.mxu0 0
  %2321 = vmatmul.mubr.bf16.gmra.mxu0 %v2097
  %v2322 = vpop.f32.mrf.mxu0
  %v2323 = vadd.f32 0.0, %v2322
  %v2324 = vpop.f32.mrf.mxu0
  %v2325 = vpop.f32.mrf.mxu0
  %v2326 = vadd.f32 0.0, %v2325
  %v2327 = vpop.f32.mrf.mxu0
  %2328 = vmatprep.mubr.bf16.mxu0 0
  %2329 = vmatmul.mubr.bf16.gmra.mxu0 %v2099
  %v2330 = vpop.f32.mrf.mxu0
  %v2331 = vadd.f32 0.0, %v2330
  %v2332 = vpop.f32.mrf.mxu0
  %v2333 = vpop.f32.mrf.mxu0
  %v2334 = vadd.f32 0.0, %v2333
  %v2335 = vpop.f32.mrf.mxu0
  %2336 = vmatprep.mubr.bf16.mxu0 0
  %2337 = vmatmul.mubr.bf16.gmra.mxu0 %v2101
  %v2338 = vpop.f32.mrf.mxu0
  %v2339 = vadd.f32 0.0, %v2338
  %v2340 = vpop.f32.mrf.mxu0
  %v2341 = vpop.f32.mrf.mxu0
  %v2342 = vadd.f32 0.0, %v2341
  %v2343 = vpop.f32.mrf.mxu0
  %2344 = vmatprep.mubr.bf16.mxu0 0
  %2345 = vmatmul.mubr.bf16.gmra.mxu0 %v2103
  %v2346 = vpop.f32.mrf.mxu0
  %v2347 = vadd.f32 0.0, %v2346
  %v2348 = vpop.f32.mrf.mxu0
  %v2349 = vpop.f32.mrf.mxu0
  %v2350 = vadd.f32 0.0, %v2349
  %v2351 = vpop.f32.mrf.mxu0
  %2352 = vmatprep.mubr.bf16.mxu0 0
  %2353 = vmatmul.mubr.bf16.gmra.mxu0 %v2105
  %v2354 = vpop.f32.mrf.mxu0
  %v2355 = vadd.f32 0.0, %v2354
  %v2356 = vpop.f32.mrf.mxu0
  %v2357 = vpop.f32.mrf.mxu0
  %v2358 = vadd.f32 0.0, %v2357
  %v2359 = vpop.f32.mrf.mxu0
  %2360 = vmatprep.mubr.bf16.mxu0 0
  %2361 = vmatmul.mubr.bf16.gmra.mxu0 %v2107
  %v2362 = vpop.f32.mrf.mxu0
  %v2363 = vadd.f32 0.0, %v2362
  %v2364 = vpop.f32.mrf.mxu0
  %v2365 = vpop.f32.mrf.mxu0
  %v2366 = vadd.f32 0.0, %v2365
  %v2367 = vpop.f32.mrf.mxu0
  %2368 = vmatprep.mubr.bf16.mxu0 0
  %2369 = vmatmul.mubr.bf16.gmra.mxu0 %v2109
  %v2370 = vpop.f32.mrf.mxu0
  %v2371 = vadd.f32 0.0, %v2370
  %v2372 = vpop.f32.mrf.mxu0
  %v2373 = vpop.f32.mrf.mxu0
  %v2374 = vadd.f32 0.0, %v2373
  %v2375 = vpop.f32.mrf.mxu0
  %2376 = vmatprep.mubr.bf16.mxu0 0
  %2377 = vmatmul.mubr.bf16.gmra.mxu0 %v2111
  %v2378 = vpop.f32.mrf.mxu0
  %v2379 = vadd.f32 0.0, %v2378
  %v2380 = vpop.f32.mrf.mxu0
  %v2381 = vpop.f32.mrf.mxu0
  %v2382 = vadd.f32 0.0, %v2381
  %v2383 = vpop.f32.mrf.mxu0
  %2384 = vmatprep.mubr.bf16.mxu0 0
  %2385 = vmatmul.mubr.bf16.gmra.mxu0 %v2113
  %v2386 = vpop.f32.mrf.mxu0
  %v2387 = vadd.f32 0.0, %v2386
  %v2388 = vpop.f32.mrf.mxu0
  %v2389 = vpop.f32.mrf.mxu0
  %v2390 = vadd.f32 0.0, %v2389
  %v2391 = vpop.f32.mrf.mxu0
  %2392 = vmatprep.mubr.bf16.mxu0 0
  %2393 = vmatmul.mubr.bf16.gmra.mxu0 %v2115
  %v2394 = vpop.f32.mrf.mxu0
  %v2395 = vadd.f32 0.0, %v2394
  %v2396 = vpop.f32.mrf.mxu0
  %v2397 = vpop.f32.mrf.mxu0
  %v2398 = vadd.f32 0.0, %v2397
  %v2399 = vpop.f32.mrf.mxu0
  %2400 = vmatprep.mubr.bf16.mxu0 0
  %2401 = vmatmul.mubr.bf16.gmra.mxu0 %v2117
  %v2402 = vpop.f32.mrf.mxu0
  %v2403 = vadd.f32 0.0, %v2402
  %v2404 = vpop.f32.mrf.mxu0
  %v2405 = vpop.f32.mrf.mxu0
  %v2406 = vadd.f32 0.0, %v2405
  %v2407 = vpop.f32.mrf.mxu0
  %2408 = vmatprep.mubr.bf16.mxu0 0
  %2409 = vmatmul.mubr.bf16.gmra.mxu0 %v2119
  %v2410 = vpop.f32.mrf.mxu0
  %v2411 = vadd.f32 0.0, %v2410
  %v2412 = vpop.f32.mrf.mxu0
  %v2413 = vpop.f32.mrf.mxu0
  %v2414 = vadd.f32 0.0, %v2413
  %v2415 = vpop.f32.mrf.mxu0
  %2416 = vdwg.mxu0
  %v2417 = vld [vmem:[%s2] sm:$0x1]
  %v2418 = vld [vmem:[%s3] sm:$0x1]
  %vm2419 = vcmask 130048
  %v2420 = vsel %vm2419, %v2163, 0.0
  %v2421 = vsel %vm2419, %v2166, 0.0
  %v2422 = vadd.f32 %v2420, %v2421
  %v2423 = vsel %vm2419, %v2171, 0.0
  %v2424 = vadd.f32 %v2422, %v2423
  %v2425 = vsel %vm2419, %v2174, 0.0
  %v2426 = vadd.f32 %v2424, %v2425
  %v2427 = vsel %vm2419, %v2179, 0.0
  %v2428 = vadd.f32 %v2426, %v2427
  %v2429 = vsel %vm2419, %v2182, 0.0
  %v2430 = vadd.f32 %v2428, %v2429
  %v2431 = vsel %vm2419, %v2187, 0.0
  %v2432 = vadd.f32 %v2430, %v2431
  %v2433 = vsel %vm2419, %v2190, 0.0
  %v2434 = vadd.f32 %v2432, %v2433
  %v2435 = vsel %vm2419, %v2195, 0.0
  %v2436 = vadd.f32 %v2434, %v2435
  %v2437 = vsel %vm2419, %v2198, 0.0
  %v2438 = vadd.f32 %v2436, %v2437
  %v2439 = vsel %vm2419, %v2203, 0.0
  %v2440 = vadd.f32 %v2438, %v2439
  %v2441 = vsel %vm2419, %v2206, 0.0
  %v2442 = vadd.f32 %v2440, %v2441
  %v2443 = vsel %vm2419, %v2211, 0.0
  %v2444 = vadd.f32 %v2442, %v2443
  %v2445 = vsel %vm2419, %v2214, 0.0
  %v2446 = vadd.f32 %v2444, %v2445
  %v2447 = vsel %vm2419, %v2219, 0.0
  %v2448 = vadd.f32 %v2446, %v2447
  %v2449 = vsel %vm2419, %v2222, 0.0
  %v2450 = vadd.f32 %v2448, %v2449
  %v2451 = vsel %vm2419, %v2227, 0.0
  %v2452 = vadd.f32 %v2450, %v2451
  %v2453 = vsel %vm2419, %v2230, 0.0
  %v2454 = vadd.f32 %v2452, %v2453
  %v2455 = vsel %vm2419, %v2235, 0.0
  %v2456 = vadd.f32 %v2454, %v2455
  %v2457 = vsel %vm2419, %v2238, 0.0
  %v2458 = vadd.f32 %v2456, %v2457
  %v2459 = vsel %vm2419, %v2243, 0.0
  %v2460 = vadd.f32 %v2458, %v2459
  %v2461 = vsel %vm2419, %v2246, 0.0
  %v2462 = vadd.f32 %v2460, %v2461
  %v2463 = vsel %vm2419, %v2251, 0.0
  %v2464 = vadd.f32 %v2462, %v2463
  %v2465 = vsel %vm2419, %v2254, 0.0
  %v2466 = vadd.f32 %v2464, %v2465
  %v2467 = vsel %vm2419, %v2259, 0.0
  %v2468 = vadd.f32 %v2466, %v2467
  %v2469 = vsel %vm2419, %v2262, 0.0
  %v2470 = vadd.f32 %v2468, %v2469
  %v2471 = vsel %vm2419, %v2267, 0.0
  %v2472 = vadd.f32 %v2470, %v2471
  %v2473 = vsel %vm2419, %v2270, 0.0
  %v2474 = vadd.f32 %v2472, %v2473
  %v2475 = vsel %vm2419, %v2275, 0.0
  %v2476 = vadd.f32 %v2474, %v2475
  %v2477 = vsel %vm2419, %v2278, 0.0
  %v2478 = vadd.f32 %v2476, %v2477
  %v2479 = vsel %vm2419, %v2283, 0.0
  %v2480 = vadd.f32 %v2478, %v2479
  %v2481 = vsel %vm2419, %v2286, 0.0
  %v2482 = vadd.f32 %v2480, %v2481
  %v2483 = vsel %vm2419, %v2291, 0.0
  %v2484 = vadd.f32 %v2482, %v2483
  %v2485 = vsel %vm2419, %v2294, 0.0
  %v2486 = vadd.f32 %v2484, %v2485
  %v2487 = vsel %vm2419, %v2299, 0.0
  %v2488 = vadd.f32 %v2486, %v2487
  %v2489 = vsel %vm2419, %v2302, 0.0
  %v2490 = vadd.f32 %v2488, %v2489
  %v2491 = vsel %vm2419, %v2307, 0.0
  %v2492 = vadd.f32 %v2490, %v2491
  %v2493 = vsel %vm2419, %v2310, 0.0
  %v2494 = vadd.f32 %v2492, %v2493
  %v2495 = vsel %vm2419, %v2315, 0.0
  %v2496 = vadd.f32 %v2494, %v2495
  %v2497 = vsel %vm2419, %v2318, 0.0
  %v2498 = vadd.f32 %v2496, %v2497
  %v2499 = vsel %vm2419, %v2323, 0.0
  %v2500 = vadd.f32 %v2498, %v2499
  %v2501 = vsel %vm2419, %v2326, 0.0
  %v2502 = vadd.f32 %v2500, %v2501
  %v2503 = vsel %vm2419, %v2331, 0.0
  %v2504 = vadd.f32 %v2502, %v2503
  %v2505 = vsel %vm2419, %v2334, 0.0
  %v2506 = vadd.f32 %v2504, %v2505
  %v2507 = vsel %vm2419, %v2339, 0.0
  %v2508 = vadd.f32 %v2506, %v2507
  %v2509 = vsel %vm2419, %v2342, 0.0
  %v2510 = vadd.f32 %v2508, %v2509
  %v2511 = vsel %vm2419, %v2347, 0.0
  %v2512 = vadd.f32 %v2510, %v2511
  %v2513 = vsel %vm2419, %v2350, 0.0
  %v2514 = vadd.f32 %v2512, %v2513
  %v2515 = vsel %vm2419, %v2355, 0.0
  %v2516 = vadd.f32 %v2514, %v2515
  %v2517 = vsel %vm2419, %v2358, 0.0
  %v2518 = vadd.f32 %v2516, %v2517
  %v2519 = vsel %vm2419, %v2363, 0.0
  %v2520 = vadd.f32 %v2518, %v2519
  %v2521 = vsel %vm2419, %v2366, 0.0
  %v2522 = vadd.f32 %v2520, %v2521
  %v2523 = vsel %vm2419, %v2371, 0.0
  %v2524 = vadd.f32 %v2522, %v2523
  %v2525 = vsel %vm2419, %v2374, 0.0
  %v2526 = vadd.f32 %v2524, %v2525
  %v2527 = vsel %vm2419, %v2379, 0.0
  %v2528 = vadd.f32 %v2526, %v2527
  %v2529 = vsel %vm2419, %v2382, 0.0
  %v2530 = vadd.f32 %v2528, %v2529
  %v2531 = vsel %vm2419, %v2387, 0.0
  %v2532 = vadd.f32 %v2530, %v2531
  %v2533 = vsel %vm2419, %v2390, 0.0
  %v2534 = vadd.f32 %v2532, %v2533
  %v2535 = vsel %vm2419, %v2395, 0.0
  %v2536 = vadd.f32 %v2534, %v2535
  %v2537 = vsel %vm2419, %v2398, 0.0
  %v2538 = vadd.f32 %v2536, %v2537
  %v2539 = vsel %vm2419, %v2403, 0.0
  %v2540 = vadd.f32 %v2538, %v2539
  %v2541 = vsel %vm2419, %v2406, 0.0
  %v2542 = vadd.f32 %v2540, %v2541
  %v2543 = vsel %vm2419, %v2411, 0.0
  %v2544 = vadd.f32 %v2542, %v2543
  %v2545 = vsel %vm2419, %v2414, 0.0
  %v2546 = vadd.f32 %v2544, %v2545
  %v2547 = vrot.slane %v2546, 4
  %v2548 = vadd.f32 %v2546, %v2547
  %v2549 = vrot.slane %v2548, 2
  %v2550 = vadd.f32 %v2548, %v2549
  %v2551 = vrot.slane %v2550, 1
  %v2552 = vadd.f32 %v2550, %v2551
  %v2553 = vrcp.pop 512.0
  %v2554 = vmul.f32 %v2552, %v2553
  %v2555 = vmul.f32 %v2163, %v2163
  %v2556 = vmul.f32 %v2166, %v2166
  %v2557 = vmul.f32 %v2171, %v2171
  %v2558 = vmul.f32 %v2174, %v2174
  %v2559 = vmul.f32 %v2179, %v2179
  %v2560 = vmul.f32 %v2182, %v2182
  %v2561 = vmul.f32 %v2187, %v2187
  %v2562 = vmul.f32 %v2190, %v2190
  %v2563 = vmul.f32 %v2195, %v2195
  %v2564 = vmul.f32 %v2198, %v2198
  %v2565 = vmul.f32 %v2203, %v2203
  %v2566 = vmul.f32 %v2206, %v2206
  %v2567 = vmul.f32 %v2211, %v2211
  %v2568 = vmul.f32 %v2214, %v2214
  %v2569 = vmul.f32 %v2219, %v2219
  %v2570 = vmul.f32 %v2222, %v2222
  %v2571 = vmul.f32 %v2227, %v2227
  %v2572 = vmul.f32 %v2230, %v2230
  %v2573 = vmul.f32 %v2235, %v2235
  %v2574 = vmul.f32 %v2238, %v2238
  %v2575 = vmul.f32 %v2243, %v2243
  %v2576 = vmul.f32 %v2246, %v2246
  %v2577 = vmul.f32 %v2251, %v2251
  %v2578 = vmul.f32 %v2254, %v2254
  %v2579 = vmul.f32 %v2259, %v2259
  %v2580 = vmul.f32 %v2262, %v2262
  %v2581 = vmul.f32 %v2267, %v2267
  %v2582 = vmul.f32 %v2270, %v2270
  %v2583 = vmul.f32 %v2275, %v2275
  %v2584 = vmul.f32 %v2278, %v2278
  %v2585 = vmul.f32 %v2283, %v2283
  %v2586 = vmul.f32 %v2286, %v2286
  %v2587 = vmul.f32 %v2291, %v2291
  %v2588 = vmul.f32 %v2294, %v2294
  %v2589 = vmul.f32 %v2299, %v2299
  %v2590 = vmul.f32 %v2302, %v2302
  %v2591 = vmul.f32 %v2307, %v2307
  %v2592 = vmul.f32 %v2310, %v2310
  %v2593 = vmul.f32 %v2315, %v2315
  %v2594 = vmul.f32 %v2318, %v2318
  %v2595 = vmul.f32 %v2323, %v2323
  %v2596 = vmul.f32 %v2326, %v2326
  %v2597 = vmul.f32 %v2331, %v2331
  %v2598 = vmul.f32 %v2334, %v2334
  %v2599 = vmul.f32 %v2339, %v2339
  %v2600 = vmul.f32 %v2342, %v2342
  %v2601 = vmul.f32 %v2347, %v2347
  %v2602 = vmul.f32 %v2350, %v2350
  %v2603 = vmul.f32 %v2355, %v2355
  %v2604 = vmul.f32 %v2358, %v2358
  %v2605 = vmul.f32 %v2363, %v2363
  %v2606 = vmul.f32 %v2366, %v2366
  %v2607 = vmul.f32 %v2371, %v2371
  %v2608 = vmul.f32 %v2374, %v2374
  %v2609 = vmul.f32 %v2379, %v2379
  %v2610 = vmul.f32 %v2382, %v2382
  %v2611 = vmul.f32 %v2387, %v2387
  %v2612 = vmul.f32 %v2390, %v2390
  %v2613 = vmul.f32 %v2395, %v2395
  %v2614 = vmul.f32 %v2398, %v2398
  %v2615 = vmul.f32 %v2403, %v2403
  %v2616 = vmul.f32 %v2406, %v2406
  %v2617 = vmul.f32 %v2411, %v2411
  %v2618 = vmul.f32 %v2414, %v2414
  %v2619 = vsel %vm2419, %v2555, 0.0
  %v2620 = vsel %vm2419, %v2556, 0.0
  %v2621 = vadd.f32 %v2619, %v2620
  %v2622 = vsel %vm2419, %v2557, 0.0
  %v2623 = vadd.f32 %v2621, %v2622
  %v2624 = vsel %vm2419, %v2558, 0.0
  %v2625 = vadd.f32 %v2623, %v2624
  %v2626 = vsel %vm2419, %v2559, 0.0
  %v2627 = vadd.f32 %v2625, %v2626
  %v2628 = vsel %vm2419, %v2560, 0.0
  %v2629 = vadd.f32 %v2627, %v2628
  %v2630 = vsel %vm2419, %v2561, 0.0
  %v2631 = vadd.f32 %v2629, %v2630
  %v2632 = vsel %vm2419, %v2562, 0.0
  %v2633 = vadd.f32 %v2631, %v2632
  %v2634 = vsel %vm2419, %v2563, 0.0
  %v2635 = vadd.f32 %v2633, %v2634
  %v2636 = vsel %vm2419, %v2564, 0.0
  %v2637 = vadd.f32 %v2635, %v2636
  %v2638 = vsel %vm2419, %v2565, 0.0
  %v2639 = vadd.f32 %v2637, %v2638
  %v2640 = vsel %vm2419, %v2566, 0.0
  %v2641 = vadd.f32 %v2639, %v2640
  %v2642 = vsel %vm2419, %v2567, 0.0
  %v2643 = vadd.f32 %v2641, %v2642
  %v2644 = vsel %vm2419, %v2568, 0.0
  %v2645 = vadd.f32 %v2643, %v2644
  %v2646 = vsel %vm2419, %v2569, 0.0
  %v2647 = vadd.f32 %v2645, %v2646
  %v2648 = vsel %vm2419, %v2570, 0.0
  %v2649 = vadd.f32 %v2647, %v2648
  %v2650 = vsel %vm2419, %v2571, 0.0
  %v2651 = vadd.f32 %v2649, %v2650
  %v2652 = vsel %vm2419, %v2572, 0.0
  %v2653 = vadd.f32 %v2651, %v2652
  %v2654 = vsel %vm2419, %v2573, 0.0
  %v2655 = vadd.f32 %v2653, %v2654
  %v2656 = vsel %vm2419, %v2574, 0.0
  %v2657 = vadd.f32 %v2655, %v2656
  %v2658 = vsel %vm2419, %v2575, 0.0
  %v2659 = vadd.f32 %v2657, %v2658
  %v2660 = vsel %vm2419, %v2576, 0.0
  %v2661 = vadd.f32 %v2659, %v2660
  %v2662 = vsel %vm2419, %v2577, 0.0
  %v2663 = vadd.f32 %v2661, %v2662
  %v2664 = vsel %vm2419, %v2578, 0.0
  %v2665 = vadd.f32 %v2663, %v2664
  %v2666 = vsel %vm2419, %v2579, 0.0
  %v2667 = vadd.f32 %v2665, %v2666
  %v2668 = vsel %vm2419, %v2580, 0.0
  %v2669 = vadd.f32 %v2667, %v2668
  %v2670 = vsel %vm2419, %v2581, 0.0
  %v2671 = vadd.f32 %v2669, %v2670
  %v2672 = vsel %vm2419, %v2582, 0.0
  %v2673 = vadd.f32 %v2671, %v2672
  %v2674 = vsel %vm2419, %v2583, 0.0
  %v2675 = vadd.f32 %v2673, %v2674
  %v2676 = vsel %vm2419, %v2584, 0.0
  %v2677 = vadd.f32 %v2675, %v2676
  %v2678 = vsel %vm2419, %v2585, 0.0
  %v2679 = vadd.f32 %v2677, %v2678
  %v2680 = vsel %vm2419, %v2586, 0.0
  %v2681 = vadd.f32 %v2679, %v2680
  %v2682 = vsel %vm2419, %v2587, 0.0
  %v2683 = vadd.f32 %v2681, %v2682
  %v2684 = vsel %vm2419, %v2588, 0.0
  %v2685 = vadd.f32 %v2683, %v2684
  %v2686 = vsel %vm2419, %v2589, 0.0
  %v2687 = vadd.f32 %v2685, %v2686
  %v2688 = vsel %vm2419, %v2590, 0.0
  %v2689 = vadd.f32 %v2687, %v2688
  %v2690 = vsel %vm2419, %v2591, 0.0
  %v2691 = vadd.f32 %v2689, %v2690
  %v2692 = vsel %vm2419, %v2592, 0.0
  %v2693 = vadd.f32 %v2691, %v2692
  %v2694 = vsel %vm2419, %v2593, 0.0
  %v2695 = vadd.f32 %v2693, %v2694
  %v2696 = vsel %vm2419, %v2594, 0.0
  %v2697 = vadd.f32 %v2695, %v2696
  %v2698 = vsel %vm2419, %v2595, 0.0
  %v2699 = vadd.f32 %v2697, %v2698
  %v2700 = vsel %vm2419, %v2596, 0.0
  %v2701 = vadd.f32 %v2699, %v2700
  %v2702 = vsel %vm2419, %v2597, 0.0
  %v2703 = vadd.f32 %v2701, %v2702
  %v2704 = vsel %vm2419, %v2598, 0.0
  %v2705 = vadd.f32 %v2703, %v2704
  %v2706 = vsel %vm2419, %v2599, 0.0
  %v2707 = vadd.f32 %v2705, %v2706
  %v2708 = vsel %vm2419, %v2600, 0.0
  %v2709 = vadd.f32 %v2707, %v2708
  %v2710 = vsel %vm2419, %v2601, 0.0
  %v2711 = vadd.f32 %v2709, %v2710
  %v2712 = vsel %vm2419, %v2602, 0.0
  %v2713 = vadd.f32 %v2711, %v2712
  %v2714 = vsel %vm2419, %v2603, 0.0
  %v2715 = vadd.f32 %v2713, %v2714
  %v2716 = vsel %vm2419, %v2604, 0.0
  %v2717 = vadd.f32 %v2715, %v2716
  %v2718 = vsel %vm2419, %v2605, 0.0
  %v2719 = vadd.f32 %v2717, %v2718
  %v2720 = vsel %vm2419, %v2606, 0.0
  %v2721 = vadd.f32 %v2719, %v2720
  %v2722 = vsel %vm2419, %v2607, 0.0
  %v2723 = vadd.f32 %v2721, %v2722
  %v2724 = vsel %vm2419, %v2608, 0.0
  %v2725 = vadd.f32 %v2723, %v2724
  %v2726 = vsel %vm2419, %v2609, 0.0
  %v2727 = vadd.f32 %v2725, %v2726
  %v2728 = vsel %vm2419, %v2610, 0.0
  %v2729 = vadd.f32 %v2727, %v2728
  %v2730 = vsel %vm2419, %v2611, 0.0
  %v2731 = vadd.f32 %v2729, %v2730
  %v2732 = vsel %vm2419, %v2612, 0.0
  %v2733 = vadd.f32 %v2731, %v2732
  %v2734 = vsel %vm2419, %v2613, 0.0
  %v2735 = vadd.f32 %v2733, %v2734
  %v2736 = vsel %vm2419, %v2614, 0.0
  %v2737 = vadd.f32 %v2735, %v2736
  %v2738 = vsel %vm2419, %v2615, 0.0
  %v2739 = vadd.f32 %v2737, %v2738
  %v2740 = vsel %vm2419, %v2616, 0.0
  %v2741 = vadd.f32 %v2739, %v2740
  %v2742 = vsel %vm2419, %v2617, 0.0
  %v2743 = vadd.f32 %v2741, %v2742
  %v2744 = vsel %vm2419, %v2618, 0.0
  %v2745 = vadd.f32 %v2743, %v2744
  %v2746 = vrot.slane %v2745, 4
  %v2747 = vadd.f32 %v2745, %v2746
  %v2748 = vrot.slane %v2747, 2
  %v2749 = vadd.f32 %v2747, %v2748
  %v2750 = vrot.slane %v2749, 1
  %v2751 = vadd.f32 %v2749, %v2750
  %v2752 = vmul.f32 %v2751, %v2553
  %v2753 = vmul.f32 %v2554, %v2554
  %v2754 = vsub.f32 %v2752, %v2753
  %v2755 = vmax.f32 %v2754, 0.0
  %v2756 = vadd.f32 %v2755, 1e-05
  %v2757 = vrsqrt.pop %v2756
  %v2758 = vmul.f32 %v2417, %v2757
  %v2759 = vmul.f32 %v2554, %v2758
  %v2760 = vsub.f32 %v2418, %v2759
  %v2762 = vlaneseq
  %v2763 = vshrl.u32 %v2762, 7
  %v2764 = vsub.s32 0, %v2763
  %v2765 = vrot.slane %v2758, %v2764
  %v2767 = vmul.f32 %v2163, %v2765
  %v2768 = vmul.f32 %v2166, %v2765
  %v2769 = vmul.f32 %v2171, %v2765
  %v2770 = vmul.f32 %v2174, %v2765
  %v2771 = vmul.f32 %v2179, %v2765
  %v2772 = vmul.f32 %v2182, %v2765
  %v2773 = vmul.f32 %v2187, %v2765
  %v2774 = vmul.f32 %v2190, %v2765
  %v2775 = vmul.f32 %v2195, %v2765
  %v2776 = vmul.f32 %v2198, %v2765
  %v2777 = vmul.f32 %v2203, %v2765
  %v2778 = vmul.f32 %v2206, %v2765
  %v2779 = vmul.f32 %v2211, %v2765
  %v2780 = vmul.f32 %v2214, %v2765
  %v2781 = vmul.f32 %v2219, %v2765
  %v2782 = vmul.f32 %v2222, %v2765
  %v2783 = vmul.f32 %v2227, %v2765
  %v2784 = vmul.f32 %v2230, %v2765
  %v2785 = vmul.f32 %v2235, %v2765
  %v2786 = vmul.f32 %v2238, %v2765
  %v2787 = vmul.f32 %v2243, %v2765
  %v2788 = vmul.f32 %v2246, %v2765
  %v2789 = vmul.f32 %v2251, %v2765
  %v2790 = vmul.f32 %v2254, %v2765
  %v2791 = vmul.f32 %v2259, %v2765
  %v2792 = vmul.f32 %v2262, %v2765
  %v2793 = vmul.f32 %v2267, %v2765
  %v2794 = vmul.f32 %v2270, %v2765
  %v2795 = vmul.f32 %v2275, %v2765
  %v2796 = vmul.f32 %v2278, %v2765
  %v2797 = vmul.f32 %v2283, %v2765
  %v2798 = vmul.f32 %v2286, %v2765
  %v2799 = vmul.f32 %v2291, %v2765
  %v2800 = vmul.f32 %v2294, %v2765
  %v2801 = vmul.f32 %v2299, %v2765
  %v2802 = vmul.f32 %v2302, %v2765
  %v2803 = vmul.f32 %v2307, %v2765
  %v2804 = vmul.f32 %v2310, %v2765
  %v2805 = vmul.f32 %v2315, %v2765
  %v2806 = vmul.f32 %v2318, %v2765
  %v2807 = vmul.f32 %v2323, %v2765
  %v2808 = vmul.f32 %v2326, %v2765
  %v2809 = vmul.f32 %v2331, %v2765
  %v2810 = vmul.f32 %v2334, %v2765
  %v2811 = vmul.f32 %v2339, %v2765
  %v2812 = vmul.f32 %v2342, %v2765
  %v2813 = vmul.f32 %v2347, %v2765
  %v2814 = vmul.f32 %v2350, %v2765
  %v2815 = vmul.f32 %v2355, %v2765
  %v2816 = vmul.f32 %v2358, %v2765
  %v2817 = vmul.f32 %v2363, %v2765
  %v2818 = vmul.f32 %v2366, %v2765
  %v2819 = vmul.f32 %v2371, %v2765
  %v2820 = vmul.f32 %v2374, %v2765
  %v2821 = vmul.f32 %v2379, %v2765
  %v2822 = vmul.f32 %v2382, %v2765
  %v2823 = vmul.f32 %v2387, %v2765
  %v2824 = vmul.f32 %v2390, %v2765
  %v2825 = vmul.f32 %v2395, %v2765
  %v2826 = vmul.f32 %v2398, %v2765
  %v2827 = vmul.f32 %v2403, %v2765
  %v2828 = vmul.f32 %v2406, %v2765
  %v2829 = vmul.f32 %v2411, %v2765
  %v2830 = vmul.f32 %v2414, %v2765
  %v2832 = vlaneseq
  %v2833 = vshrl.u32 %v2832, 7
  %v2834 = vsub.s32 0, %v2833
  %v2835 = vrot.slane %v2760, %v2834
  %v2837 = vadd.f32 %v2767, %v2835
  %v2838 = vadd.f32 %v2768, %v2835
  %v2839 = vadd.f32 %v2769, %v2835
  %v2840 = vadd.f32 %v2770, %v2835
  %v2841 = vadd.f32 %v2771, %v2835
  %v2842 = vadd.f32 %v2772, %v2835
  %v2843 = vadd.f32 %v2773, %v2835
  %v2844 = vadd.f32 %v2774, %v2835
  %v2845 = vadd.f32 %v2775, %v2835
  %v2846 = vadd.f32 %v2776, %v2835
  %v2847 = vadd.f32 %v2777, %v2835
  %v2848 = vadd.f32 %v2778, %v2835
  %v2849 = vadd.f32 %v2779, %v2835
  %v2850 = vadd.f32 %v2780, %v2835
  %v2851 = vadd.f32 %v2781, %v2835
  %v2852 = vadd.f32 %v2782, %v2835
  %v2853 = vadd.f32 %v2783, %v2835
  %v2854 = vadd.f32 %v2784, %v2835
  %v2855 = vadd.f32 %v2785, %v2835
  %v2856 = vadd.f32 %v2786, %v2835
  %v2857 = vadd.f32 %v2787, %v2835
  %v2858 = vadd.f32 %v2788, %v2835
  %v2859 = vadd.f32 %v2789, %v2835
  %v2860 = vadd.f32 %v2790, %v2835
  %v2861 = vadd.f32 %v2791, %v2835
  %v2862 = vadd.f32 %v2792, %v2835
  %v2863 = vadd.f32 %v2793, %v2835
  %v2864 = vadd.f32 %v2794, %v2835
  %v2865 = vadd.f32 %v2795, %v2835
  %v2866 = vadd.f32 %v2796, %v2835
  %v2867 = vadd.f32 %v2797, %v2835
  %v2868 = vadd.f32 %v2798, %v2835
  %v2869 = vadd.f32 %v2799, %v2835
  %v2870 = vadd.f32 %v2800, %v2835
  %v2871 = vadd.f32 %v2801, %v2835
  %v2872 = vadd.f32 %v2802, %v2835
  %v2873 = vadd.f32 %v2803, %v2835
  %v2874 = vadd.f32 %v2804, %v2835
  %v2875 = vadd.f32 %v2805, %v2835
  %v2876 = vadd.f32 %v2806, %v2835
  %v2877 = vadd.f32 %v2807, %v2835
  %v2878 = vadd.f32 %v2808, %v2835
  %v2879 = vadd.f32 %v2809, %v2835
  %v2880 = vadd.f32 %v2810, %v2835
  %v2881 = vadd.f32 %v2811, %v2835
  %v2882 = vadd.f32 %v2812, %v2835
  %v2883 = vadd.f32 %v2813, %v2835
  %v2884 = vadd.f32 %v2814, %v2835
  %v2885 = vadd.f32 %v2815, %v2835
  %v2886 = vadd.f32 %v2816, %v2835
  %v2887 = vadd.f32 %v2817, %v2835
  %v2888 = vadd.f32 %v2818, %v2835
  %v2889 = vadd.f32 %v2819, %v2835
  %v2890 = vadd.f32 %v2820, %v2835
  %v2891 = vadd.f32 %v2821, %v2835
  %v2892 = vadd.f32 %v2822, %v2835
  %v2893 = vadd.f32 %v2823, %v2835
  %v2894 = vadd.f32 %v2824, %v2835
  %v2895 = vadd.f32 %v2825, %v2835
  %v2896 = vadd.f32 %v2826, %v2835
  %v2897 = vadd.f32 %v2827, %v2835
  %v2898 = vadd.f32 %v2828, %v2835
  %v2899 = vadd.f32 %v2829, %v2835
  %v2900 = vadd.f32 %v2830, %v2835
  %v2901 = vmax.f32 %v2837, 0.0
  %v2902 = vmax.f32 %v2838, 0.0
  %v2903 = vmax.f32 %v2839, 0.0
  %v2904 = vmax.f32 %v2840, 0.0
  %v2905 = vmax.f32 %v2841, 0.0
  %v2906 = vmax.f32 %v2842, 0.0
  %v2907 = vmax.f32 %v2843, 0.0
  %v2908 = vmax.f32 %v2844, 0.0
  %v2909 = vmax.f32 %v2845, 0.0
  %v2910 = vmax.f32 %v2846, 0.0
  %v2911 = vmax.f32 %v2847, 0.0
  %v2912 = vmax.f32 %v2848, 0.0
  %v2913 = vmax.f32 %v2849, 0.0
  %v2914 = vmax.f32 %v2850, 0.0
  %v2915 = vmax.f32 %v2851, 0.0
  %v2916 = vmax.f32 %v2852, 0.0
  %v2917 = vmax.f32 %v2853, 0.0
  %v2918 = vmax.f32 %v2854, 0.0
  %v2919 = vmax.f32 %v2855, 0.0
  %v2920 = vmax.f32 %v2856, 0.0
  %v2921 = vmax.f32 %v2857, 0.0
  %v2922 = vmax.f32 %v2858, 0.0
  %v2923 = vmax.f32 %v2859, 0.0
  %v2924 = vmax.f32 %v2860, 0.0
  %v2925 = vmax.f32 %v2861, 0.0
  %v2926 = vmax.f32 %v2862, 0.0
  %v2927 = vmax.f32 %v2863, 0.0
  %v2928 = vmax.f32 %v2864, 0.0
  %v2929 = vmax.f32 %v2865, 0.0
  %v2930 = vmax.f32 %v2866, 0.0
  %v2931 = vmax.f32 %v2867, 0.0
  %v2932 = vmax.f32 %v2868, 0.0
  %v2933 = vmax.f32 %v2869, 0.0
  %v2934 = vmax.f32 %v2870, 0.0
  %v2935 = vmax.f32 %v2871, 0.0
  %v2936 = vmax.f32 %v2872, 0.0
  %v2937 = vmax.f32 %v2873, 0.0
  %v2938 = vmax.f32 %v2874, 0.0
  %v2939 = vmax.f32 %v2875, 0.0
  %v2940 = vmax.f32 %v2876, 0.0
  %v2941 = vmax.f32 %v2877, 0.0
  %v2942 = vmax.f32 %v2878, 0.0
  %v2943 = vmax.f32 %v2879, 0.0
  %v2944 = vmax.f32 %v2880, 0.0
  %v2945 = vmax.f32 %v2881, 0.0
  %v2946 = vmax.f32 %v2882, 0.0
  %v2947 = vmax.f32 %v2883, 0.0
  %v2948 = vmax.f32 %v2884, 0.0
  %v2949 = vmax.f32 %v2885, 0.0
  %v2950 = vmax.f32 %v2886, 0.0
  %v2951 = vmax.f32 %v2887, 0.0
  %v2952 = vmax.f32 %v2888, 0.0
  %v2953 = vmax.f32 %v2889, 0.0
  %v2954 = vmax.f32 %v2890, 0.0
  %v2955 = vmax.f32 %v2891, 0.0
  %v2956 = vmax.f32 %v2892, 0.0
  %v2957 = vmax.f32 %v2893, 0.0
  %v2958 = vmax.f32 %v2894, 0.0
  %v2959 = vmax.f32 %v2895, 0.0
  %v2960 = vmax.f32 %v2896, 0.0
  %v2961 = vmax.f32 %v2897, 0.0
  %v2962 = vmax.f32 %v2898, 0.0
  %v2963 = vmax.f32 %v2899, 0.0
  %v2964 = vmax.f32 %v2900, 0.0
  %v3029 = vcombine.high %v2901, %v2901
  %v3031 = vunpack.c.l.s4 1983009808
  %v3032 = vunpack.c.0.s8 %v3031
  %v3033 = vlaneseq
  %v3034 = vshrl.u32 %v3033, 7
  %v3035 = vsub.s32 %v3032, %v3034
  %v3036 = vrot.slane %v2901, %v3035
  %v3038 = vunpack.c.l.s4 1983009808
  %v3039 = vunpack.c.0.s8 %v3038
  %v3040 = vlaneseq
  %v3041 = vshrl.u32 %v3040, 7
  %v3042 = vsub.s32 %v3039, %v3041
  %v3043 = vrot.slane %v3029, %v3042
  %v3044 = vcombine.high %v3036, %v3036
  %v3045 = vcombine.high %v3043, %v3043
  %v3046 = vcombine.high %v2902, %v2902
  %v3048 = vunpack.c.l.s4 1983009808
  %v3049 = vunpack.c.0.s8 %v3048
  %v3050 = vlaneseq
  %v3051 = vshrl.u32 %v3050, 7
  %v3052 = vsub.s32 %v3049, %v3051
  %v3053 = vrot.slane %v2902, %v3052
  %v3055 = vunpack.c.l.s4 1983009808
  %v3056 = vunpack.c.0.s8 %v3055
  %v3057 = vlaneseq
  %v3058 = vshrl.u32 %v3057, 7
  %v3059 = vsub.s32 %v3056, %v3058
  %v3060 = vrot.slane %v3046, %v3059
  %v3061 = vcombine.high %v3053, %v3053
  %v3062 = vcombine.high %v3060, %v3060
  %v3063 = vcombine.high %v2903, %v2903
  %v3065 = vunpack.c.l.s4 1983009808
  %v3066 = vunpack.c.0.s8 %v3065
  %v3067 = vlaneseq
  %v3068 = vshrl.u32 %v3067, 7
  %v3069 = vsub.s32 %v3066, %v3068
  %v3070 = vrot.slane %v2903, %v3069
  %v3072 = vunpack.c.l.s4 1983009808
  %v3073 = vunpack.c.0.s8 %v3072
  %v3074 = vlaneseq
  %v3075 = vshrl.u32 %v3074, 7
  %v3076 = vsub.s32 %v3073, %v3075
  %v3077 = vrot.slane %v3063, %v3076
  %v3078 = vcombine.high %v3070, %v3070
  %v3079 = vcombine.high %v3077, %v3077
  %v3080 = vcombine.high %v2904, %v2904
  %v3082 = vunpack.c.l.s4 1983009808
  %v3083 = vunpack.c.0.s8 %v3082
  %v3084 = vlaneseq
  %v3085 = vshrl.u32 %v3084, 7
  %v3086 = vsub.s32 %v3083, %v3085
  %v3087 = vrot.slane %v2904, %v3086
  %v3089 = vunpack.c.l.s4 1983009808
  %v3090 = vunpack.c.0.s8 %v3089
  %v3091 = vlaneseq
  %v3092 = vshrl.u32 %v3091, 7
  %v3093 = vsub.s32 %v3090, %v3092
  %v3094 = vrot.slane %v3080, %v3093
  %v3095 = vcombine.high %v3087, %v3087
  %v3096 = vcombine.high %v3094, %v3094
  %v3097 = vcombine.high %v2905, %v2905
  %v3099 = vunpack.c.l.s4 1983009808
  %v3100 = vunpack.c.0.s8 %v3099
  %v3101 = vlaneseq
  %v3102 = vshrl.u32 %v3101, 7
  %v3103 = vsub.s32 %v3100, %v3102
  %v3104 = vrot.slane %v2905, %v3103
  %v3106 = vunpack.c.l.s4 1983009808
  %v3107 = vunpack.c.0.s8 %v3106
  %v3108 = vlaneseq
  %v3109 = vshrl.u32 %v3108, 7
  %v3110 = vsub.s32 %v3107, %v3109
  %v3111 = vrot.slane %v3097, %v3110
  %v3112 = vcombine.high %v3104, %v3104
  %v3113 = vcombine.high %v3111, %v3111
  %v3114 = vcombine.high %v2906, %v2906
  %v3116 = vunpack.c.l.s4 1983009808
  %v3117 = vunpack.c.0.s8 %v3116
  %v3118 = vlaneseq
  %v3119 = vshrl.u32 %v3118, 7
  %v3120 = vsub.s32 %v3117, %v3119
  %v3121 = vrot.slane %v2906, %v3120
  %v3123 = vunpack.c.l.s4 1983009808
  %v3124 = vunpack.c.0.s8 %v3123
  %v3125 = vlaneseq
  %v3126 = vshrl.u32 %v3125, 7
  %v3127 = vsub.s32 %v3124, %v3126
  %v3128 = vrot.slane %v3114, %v3127
  %v3129 = vcombine.high %v3121, %v3121
  %v3130 = vcombine.high %v3128, %v3128
  %v3131 = vcombine.high %v2907, %v2907
  %v3133 = vunpack.c.l.s4 1983009808
  %v3134 = vunpack.c.0.s8 %v3133
  %v3135 = vlaneseq
  %v3136 = vshrl.u32 %v3135, 7
  %v3137 = vsub.s32 %v3134, %v3136
  %v3138 = vrot.slane %v2907, %v3137
  %v3140 = vunpack.c.l.s4 1983009808
  %v3141 = vunpack.c.0.s8 %v3140
  %v3142 = vlaneseq
  %v3143 = vshrl.u32 %v3142, 7
  %v3144 = vsub.s32 %v3141, %v3143
  %v3145 = vrot.slane %v3131, %v3144
  %v3146 = vcombine.high %v3138, %v3138
  %v3147 = vcombine.high %v3145, %v3145
  %v3148 = vcombine.high %v2908, %v2908
  %v3150 = vunpack.c.l.s4 1983009808
  %v3151 = vunpack.c.0.s8 %v3150
  %v3152 = vlaneseq
  %v3153 = vshrl.u32 %v3152, 7
  %v3154 = vsub.s32 %v3151, %v3153
  %v3155 = vrot.slane %v2908, %v3154
  %v3157 = vunpack.c.l.s4 1983009808
  %v3158 = vunpack.c.0.s8 %v3157
  %v3159 = vlaneseq
  %v3160 = vshrl.u32 %v3159, 7
  %v3161 = vsub.s32 %v3158, %v3160
  %v3162 = vrot.slane %v3148, %v3161
  %v3163 = vcombine.high %v3155, %v3155
  %v3164 = vcombine.high %v3162, %v3162
  %v3165 = vcombine.high %v2909, %v2909
  %v3167 = vunpack.c.l.s4 1983009808
  %v3168 = vunpack.c.0.s8 %v3167
  %v3169 = vlaneseq
  %v3170 = vshrl.u32 %v3169, 7
  %v3171 = vsub.s32 %v3168, %v3170
  %v3172 = vrot.slane %v2909, %v3171
  %v3174 = vunpack.c.l.s4 1983009808
  %v3175 = vunpack.c.0.s8 %v3174
  %v3176 = vlaneseq
  %v3177 = vshrl.u32 %v3176, 7
  %v3178 = vsub.s32 %v3175, %v3177
  %v3179 = vrot.slane %v3165, %v3178
  %v3180 = vcombine.high %v3172, %v3172
  %v3181 = vcombine.high %v3179, %v3179
  %v3182 = vcombine.high %v2910, %v2910
  %v3184 = vunpack.c.l.s4 1983009808
  %v3185 = vunpack.c.0.s8 %v3184
  %v3186 = vlaneseq
  %v3187 = vshrl.u32 %v3186, 7
  %v3188 = vsub.s32 %v3185, %v3187
  %v3189 = vrot.slane %v2910, %v3188
  %v3191 = vunpack.c.l.s4 1983009808
  %v3192 = vunpack.c.0.s8 %v3191
  %v3193 = vlaneseq
  %v3194 = vshrl.u32 %v3193, 7
  %v3195 = vsub.s32 %v3192, %v3194
  %v3196 = vrot.slane %v3182, %v3195
  %v3197 = vcombine.high %v3189, %v3189
  %v3198 = vcombine.high %v3196, %v3196
  %v3199 = vcombine.high %v2911, %v2911
  %v3201 = vunpack.c.l.s4 1983009808
  %v3202 = vunpack.c.0.s8 %v3201
  %v3203 = vlaneseq
  %v3204 = vshrl.u32 %v3203, 7
  %v3205 = vsub.s32 %v3202, %v3204
  %v3206 = vrot.slane %v2911, %v3205
  %v3208 = vunpack.c.l.s4 1983009808
  %v3209 = vunpack.c.0.s8 %v3208
  %v3210 = vlaneseq
  %v3211 = vshrl.u32 %v3210, 7
  %v3212 = vsub.s32 %v3209, %v3211
  %v3213 = vrot.slane %v3199, %v3212
  %v3214 = vcombine.high %v3206, %v3206
  %v3215 = vcombine.high %v3213, %v3213
  %v3216 = vcombine.high %v2912, %v2912
  %v3218 = vunpack.c.l.s4 1983009808
  %v3219 = vunpack.c.0.s8 %v3218
  %v3220 = vlaneseq
  %v3221 = vshrl.u32 %v3220, 7
  %v3222 = vsub.s32 %v3219, %v3221
  %v3223 = vrot.slane %v2912, %v3222
  %v3225 = vunpack.c.l.s4 1983009808
  %v3226 = vunpack.c.0.s8 %v3225
  %v3227 = vlaneseq
  %v3228 = vshrl.u32 %v3227, 7
  %v3229 = vsub.s32 %v3226, %v3228
  %v3230 = vrot.slane %v3216, %v3229
  %v3231 = vcombine.high %v3223, %v3223
  %v3232 = vcombine.high %v3230, %v3230
  %v3233 = vcombine.high %v2913, %v2913
  %v3235 = vunpack.c.l.s4 1983009808
  %v3236 = vunpack.c.0.s8 %v3235
  %v3237 = vlaneseq
  %v3238 = vshrl.u32 %v3237, 7
  %v3239 = vsub.s32 %v3236, %v3238
  %v3240 = vrot.slane %v2913, %v3239
  %v3242 = vunpack.c.l.s4 1983009808
  %v3243 = vunpack.c.0.s8 %v3242
  %v3244 = vlaneseq
  %v3245 = vshrl.u32 %v3244, 7
  %v3246 = vsub.s32 %v3243, %v3245
  %v3247 = vrot.slane %v3233, %v3246
  %v3248 = vcombine.high %v3240, %v3240
  %v3249 = vcombine.high %v3247, %v3247
  %v3250 = vcombine.high %v2914, %v2914
  %v3252 = vunpack.c.l.s4 1983009808
  %v3253 = vunpack.c.0.s8 %v3252
  %v3254 = vlaneseq
  %v3255 = vshrl.u32 %v3254, 7
  %v3256 = vsub.s32 %v3253, %v3255
  %v3257 = vrot.slane %v2914, %v3256
  %v3259 = vunpack.c.l.s4 1983009808
  %v3260 = vunpack.c.0.s8 %v3259
  %v3261 = vlaneseq
  %v3262 = vshrl.u32 %v3261, 7
  %v3263 = vsub.s32 %v3260, %v3262
  %v3264 = vrot.slane %v3250, %v3263
  %v3265 = vcombine.high %v3257, %v3257
  %v3266 = vcombine.high %v3264, %v3264
  %v3267 = vcombine.high %v2915, %v2915
  %v3269 = vunpack.c.l.s4 1983009808
  %v3270 = vunpack.c.0.s8 %v3269
  %v3271 = vlaneseq
  %v3272 = vshrl.u32 %v3271, 7
  %v3273 = vsub.s32 %v3270, %v3272
  %v3274 = vrot.slane %v2915, %v3273
  %v3276 = vunpack.c.l.s4 1983009808
  %v3277 = vunpack.c.0.s8 %v3276
  %v3278 = vlaneseq
  %v3279 = vshrl.u32 %v3278, 7
  %v3280 = vsub.s32 %v3277, %v3279
  %v3281 = vrot.slane %v3267, %v3280
  %v3282 = vcombine.high %v3274, %v3274
  %v3283 = vcombine.high %v3281, %v3281
  %v3284 = vcombine.high %v2916, %v2916
  %v3286 = vunpack.c.l.s4 1983009808
  %v3287 = vunpack.c.0.s8 %v3286
  %v3288 = vlaneseq
  %v3289 = vshrl.u32 %v3288, 7
  %v3290 = vsub.s32 %v3287, %v3289
  %v3291 = vrot.slane %v2916, %v3290
  %v3293 = vunpack.c.l.s4 1983009808
  %v3294 = vunpack.c.0.s8 %v3293
  %v3295 = vlaneseq
  %v3296 = vshrl.u32 %v3295, 7
  %v3297 = vsub.s32 %v3294, %v3296
  %v3298 = vrot.slane %v3284, %v3297
  %v3299 = vcombine.high %v3291, %v3291
  %v3300 = vcombine.high %v3298, %v3298
  %v3301 = vcombine.high %v2917, %v2917
  %v3303 = vunpack.c.l.s4 1983009808
  %v3304 = vunpack.c.0.s8 %v3303
  %v3305 = vlaneseq
  %v3306 = vshrl.u32 %v3305, 7
  %v3307 = vsub.s32 %v3304, %v3306
  %v3308 = vrot.slane %v2917, %v3307
  %v3310 = vunpack.c.l.s4 1983009808
  %v3311 = vunpack.c.0.s8 %v3310
  %v3312 = vlaneseq
  %v3313 = vshrl.u32 %v3312, 7
  %v3314 = vsub.s32 %v3311, %v3313
  %v3315 = vrot.slane %v3301, %v3314
  %v3316 = vcombine.high %v3308, %v3308
  %v3317 = vcombine.high %v3315, %v3315
  %v3318 = vcombine.high %v2918, %v2918
  %v3320 = vunpack.c.l.s4 1983009808
  %v3321 = vunpack.c.0.s8 %v3320
  %v3322 = vlaneseq
  %v3323 = vshrl.u32 %v3322, 7
  %v3324 = vsub.s32 %v3321, %v3323
  %v3325 = vrot.slane %v2918, %v3324
  %v3327 = vunpack.c.l.s4 1983009808
  %v3328 = vunpack.c.0.s8 %v3327
  %v3329 = vlaneseq
  %v3330 = vshrl.u32 %v3329, 7
  %v3331 = vsub.s32 %v3328, %v3330
  %v3332 = vrot.slane %v3318, %v3331
  %v3333 = vcombine.high %v3325, %v3325
  %v3334 = vcombine.high %v3332, %v3332
  %v3335 = vcombine.high %v2919, %v2919
  %v3337 = vunpack.c.l.s4 1983009808
  %v3338 = vunpack.c.0.s8 %v3337
  %v3339 = vlaneseq
  %v3340 = vshrl.u32 %v3339, 7
  %v3341 = vsub.s32 %v3338, %v3340
  %v3342 = vrot.slane %v2919, %v3341
  %v3344 = vunpack.c.l.s4 1983009808
  %v3345 = vunpack.c.0.s8 %v3344
  %v3346 = vlaneseq
  %v3347 = vshrl.u32 %v3346, 7
  %v3348 = vsub.s32 %v3345, %v3347
  %v3349 = vrot.slane %v3335, %v3348
  %v3350 = vcombine.high %v3342, %v3342
  %v3351 = vcombine.high %v3349, %v3349
  %v3352 = vcombine.high %v2920, %v2920
  %v3354 = vunpack.c.l.s4 1983009808
  %v3355 = vunpack.c.0.s8 %v3354
  %v3356 = vlaneseq
  %v3357 = vshrl.u32 %v3356, 7
  %v3358 = vsub.s32 %v3355, %v3357
  %v3359 = vrot.slane %v2920, %v3358
  %v3361 = vunpack.c.l.s4 1983009808
  %v3362 = vunpack.c.0.s8 %v3361
  %v3363 = vlaneseq
  %v3364 = vshrl.u32 %v3363, 7
  %v3365 = vsub.s32 %v3362, %v3364
  %v3366 = vrot.slane %v3352, %v3365
  %v3367 = vcombine.high %v3359, %v3359
  %v3368 = vcombine.high %v3366, %v3366
  %v3369 = vcombine.high %v2921, %v2921
  %v3371 = vunpack.c.l.s4 1983009808
  %v3372 = vunpack.c.0.s8 %v3371
  %v3373 = vlaneseq
  %v3374 = vshrl.u32 %v3373, 7
  %v3375 = vsub.s32 %v3372, %v3374
  %v3376 = vrot.slane %v2921, %v3375
  %v3378 = vunpack.c.l.s4 1983009808
  %v3379 = vunpack.c.0.s8 %v3378
  %v3380 = vlaneseq
  %v3381 = vshrl.u32 %v3380, 7
  %v3382 = vsub.s32 %v3379, %v3381
  %v3383 = vrot.slane %v3369, %v3382
  %v3384 = vcombine.high %v3376, %v3376
  %v3385 = vcombine.high %v3383, %v3383
  %v3386 = vcombine.high %v2922, %v2922
  %v3388 = vunpack.c.l.s4 1983009808
  %v3389 = vunpack.c.0.s8 %v3388
  %v3390 = vlaneseq
  %v3391 = vshrl.u32 %v3390, 7
  %v3392 = vsub.s32 %v3389, %v3391
  %v3393 = vrot.slane %v2922, %v3392
  %v3395 = vunpack.c.l.s4 1983009808
  %v3396 = vunpack.c.0.s8 %v3395
  %v3397 = vlaneseq
  %v3398 = vshrl.u32 %v3397, 7
  %v3399 = vsub.s32 %v3396, %v3398
  %v3400 = vrot.slane %v3386, %v3399
  %v3401 = vcombine.high %v3393, %v3393
  %v3402 = vcombine.high %v3400, %v3400
  %v3403 = vcombine.high %v2923, %v2923
  %v3405 = vunpack.c.l.s4 1983009808
  %v3406 = vunpack.c.0.s8 %v3405
  %v3407 = vlaneseq
  %v3408 = vshrl.u32 %v3407, 7
  %v3409 = vsub.s32 %v3406, %v3408
  %v3410 = vrot.slane %v2923, %v3409
  %v3412 = vunpack.c.l.s4 1983009808
  %v3413 = vunpack.c.0.s8 %v3412
  %v3414 = vlaneseq
  %v3415 = vshrl.u32 %v3414, 7
  %v3416 = vsub.s32 %v3413, %v3415
  %v3417 = vrot.slane %v3403, %v3416
  %v3418 = vcombine.high %v3410, %v3410
  %v3419 = vcombine.high %v3417, %v3417
  %v3420 = vcombine.high %v2924, %v2924
  %v3422 = vunpack.c.l.s4 1983009808
  %v3423 = vunpack.c.0.s8 %v3422
  %v3424 = vlaneseq
  %v3425 = vshrl.u32 %v3424, 7
  %v3426 = vsub.s32 %v3423, %v3425
  %v3427 = vrot.slane %v2924, %v3426
  %v3429 = vunpack.c.l.s4 1983009808
  %v3430 = vunpack.c.0.s8 %v3429
  %v3431 = vlaneseq
  %v3432 = vshrl.u32 %v3431, 7
  %v3433 = vsub.s32 %v3430, %v3432
  %v3434 = vrot.slane %v3420, %v3433
  %v3435 = vcombine.high %v3427, %v3427
  %v3436 = vcombine.high %v3434, %v3434
  %v3437 = vcombine.high %v2925, %v2925
  %v3439 = vunpack.c.l.s4 1983009808
  %v3440 = vunpack.c.0.s8 %v3439
  %v3441 = vlaneseq
  %v3442 = vshrl.u32 %v3441, 7
  %v3443 = vsub.s32 %v3440, %v3442
  %v3444 = vrot.slane %v2925, %v3443
  %v3446 = vunpack.c.l.s4 1983009808
  %v3447 = vunpack.c.0.s8 %v3446
  %v3448 = vlaneseq
  %v3449 = vshrl.u32 %v3448, 7
  %v3450 = vsub.s32 %v3447, %v3449
  %v3451 = vrot.slane %v3437, %v3450
  %v3452 = vcombine.high %v3444, %v3444
  %v3453 = vcombine.high %v3451, %v3451
  %v3454 = vcombine.high %v2926, %v2926
  %v3456 = vunpack.c.l.s4 1983009808
  %v3457 = vunpack.c.0.s8 %v3456
  %v3458 = vlaneseq
  %v3459 = vshrl.u32 %v3458, 7
  %v3460 = vsub.s32 %v3457, %v3459
  %v3461 = vrot.slane %v2926, %v3460
  %v3463 = vunpack.c.l.s4 1983009808
  %v3464 = vunpack.c.0.s8 %v3463
  %v3465 = vlaneseq
  %v3466 = vshrl.u32 %v3465, 7
  %v3467 = vsub.s32 %v3464, %v3466
  %v3468 = vrot.slane %v3454, %v3467
  %v3469 = vcombine.high %v3461, %v3461
  %v3470 = vcombine.high %v3468, %v3468
  %v3471 = vcombine.high %v2927, %v2927
  %v3473 = vunpack.c.l.s4 1983009808
  %v3474 = vunpack.c.0.s8 %v3473
  %v3475 = vlaneseq
  %v3476 = vshrl.u32 %v3475, 7
  %v3477 = vsub.s32 %v3474, %v3476
  %v3478 = vrot.slane %v2927, %v3477
  %v3480 = vunpack.c.l.s4 1983009808
  %v3481 = vunpack.c.0.s8 %v3480
  %v3482 = vlaneseq
  %v3483 = vshrl.u32 %v3482, 7
  %v3484 = vsub.s32 %v3481, %v3483
  %v3485 = vrot.slane %v3471, %v3484
  %v3486 = vcombine.high %v3478, %v3478
  %v3487 = vcombine.high %v3485, %v3485
  %v3488 = vcombine.high %v2928, %v2928
  %v3490 = vunpack.c.l.s4 1983009808
  %v3491 = vunpack.c.0.s8 %v3490
  %v3492 = vlaneseq
  %v3493 = vshrl.u32 %v3492, 7
  %v3494 = vsub.s32 %v3491, %v3493
  %v3495 = vrot.slane %v2928, %v3494
  %v3497 = vunpack.c.l.s4 1983009808
  %v3498 = vunpack.c.0.s8 %v3497
  %v3499 = vlaneseq
  %v3500 = vshrl.u32 %v3499, 7
  %v3501 = vsub.s32 %v3498, %v3500
  %v3502 = vrot.slane %v3488, %v3501
  %v3503 = vcombine.high %v3495, %v3495
  %v3504 = vcombine.high %v3502, %v3502
  %v3505 = vcombine.high %v2929, %v2929
  %v3507 = vunpack.c.l.s4 1983009808
  %v3508 = vunpack.c.0.s8 %v3507
  %v3509 = vlaneseq
  %v3510 = vshrl.u32 %v3509, 7
  %v3511 = vsub.s32 %v3508, %v3510
  %v3512 = vrot.slane %v2929, %v3511
  %v3514 = vunpack.c.l.s4 1983009808
  %v3515 = vunpack.c.0.s8 %v3514
  %v3516 = vlaneseq
  %v3517 = vshrl.u32 %v3516, 7
  %v3518 = vsub.s32 %v3515, %v3517
  %v3519 = vrot.slane %v3505, %v3518
  %v3520 = vcombine.high %v3512, %v3512
  %v3521 = vcombine.high %v3519, %v3519
  %v3522 = vcombine.high %v2930, %v2930
  %v3524 = vunpack.c.l.s4 1983009808
  %v3525 = vunpack.c.0.s8 %v3524
  %v3526 = vlaneseq
  %v3527 = vshrl.u32 %v3526, 7
  %v3528 = vsub.s32 %v3525, %v3527
  %v3529 = vrot.slane %v2930, %v3528
  %v3531 = vunpack.c.l.s4 1983009808
  %v3532 = vunpack.c.0.s8 %v3531
  %v3533 = vlaneseq
  %v3534 = vshrl.u32 %v3533, 7
  %v3535 = vsub.s32 %v3532, %v3534
  %v3536 = vrot.slane %v3522, %v3535
  %v3537 = vcombine.high %v3529, %v3529
  %v3538 = vcombine.high %v3536, %v3536
  %v3539 = vcombine.high %v2931, %v2931
  %v3541 = vunpack.c.l.s4 1983009808
  %v3542 = vunpack.c.0.s8 %v3541
  %v3543 = vlaneseq
  %v3544 = vshrl.u32 %v3543, 7
  %v3545 = vsub.s32 %v3542, %v3544
  %v3546 = vrot.slane %v2931, %v3545
  %v3548 = vunpack.c.l.s4 1983009808
  %v3549 = vunpack.c.0.s8 %v3548
  %v3550 = vlaneseq
  %v3551 = vshrl.u32 %v3550, 7
  %v3552 = vsub.s32 %v3549, %v3551
  %v3553 = vrot.slane %v3539, %v3552
  %v3554 = vcombine.high %v3546, %v3546
  %v3555 = vcombine.high %v3553, %v3553
  %v3556 = vcombine.high %v2932, %v2932
  %v3558 = vunpack.c.l.s4 1983009808
  %v3559 = vunpack.c.0.s8 %v3558
  %v3560 = vlaneseq
  %v3561 = vshrl.u32 %v3560, 7
  %v3562 = vsub.s32 %v3559, %v3561
  %v3563 = vrot.slane %v2932, %v3562
  %v3565 = vunpack.c.l.s4 1983009808
  %v3566 = vunpack.c.0.s8 %v3565
  %v3567 = vlaneseq
  %v3568 = vshrl.u32 %v3567, 7
  %v3569 = vsub.s32 %v3566, %v3568
  %v3570 = vrot.slane %v3556, %v3569
  %v3571 = vcombine.high %v3563, %v3563
  %v3572 = vcombine.high %v3570, %v3570
  %v3573 = vcombine.high %v2933, %v2933
  %v3575 = vunpack.c.l.s4 1983009808
  %v3576 = vunpack.c.0.s8 %v3575
  %v3577 = vlaneseq
  %v3578 = vshrl.u32 %v3577, 7
  %v3579 = vsub.s32 %v3576, %v3578
  %v3580 = vrot.slane %v2933, %v3579
  %v3582 = vunpack.c.l.s4 1983009808
  %v3583 = vunpack.c.0.s8 %v3582
  %v3584 = vlaneseq
  %v3585 = vshrl.u32 %v3584, 7
  %v3586 = vsub.s32 %v3583, %v3585
  %v3587 = vrot.slane %v3573, %v3586
  %v3588 = vcombine.high %v3580, %v3580
  %v3589 = vcombine.high %v3587, %v3587
  %v3590 = vcombine.high %v2934, %v2934
  %v3592 = vunpack.c.l.s4 1983009808
  %v3593 = vunpack.c.0.s8 %v3592
  %v3594 = vlaneseq
  %v3595 = vshrl.u32 %v3594, 7
  %v3596 = vsub.s32 %v3593, %v3595
  %v3597 = vrot.slane %v2934, %v3596
  %v3599 = vunpack.c.l.s4 1983009808
  %v3600 = vunpack.c.0.s8 %v3599
  %v3601 = vlaneseq
  %v3602 = vshrl.u32 %v3601, 7
  %v3603 = vsub.s32 %v3600, %v3602
  %v3604 = vrot.slane %v3590, %v3603
  %v3605 = vcombine.high %v3597, %v3597
  %v3606 = vcombine.high %v3604, %v3604
  %v3607 = vcombine.high %v2935, %v2935
  %v3609 = vunpack.c.l.s4 1983009808
  %v3610 = vunpack.c.0.s8 %v3609
  %v3611 = vlaneseq
  %v3612 = vshrl.u32 %v3611, 7
  %v3613 = vsub.s32 %v3610, %v3612
  %v3614 = vrot.slane %v2935, %v3613
  %v3616 = vunpack.c.l.s4 1983009808
  %v3617 = vunpack.c.0.s8 %v3616
  %v3618 = vlaneseq
  %v3619 = vshrl.u32 %v3618, 7
  %v3620 = vsub.s32 %v3617, %v3619
  %v3621 = vrot.slane %v3607, %v3620
  %v3622 = vcombine.high %v3614, %v3614
  %v3623 = vcombine.high %v3621, %v3621
  %v3624 = vcombine.high %v2936, %v2936
  %v3626 = vunpack.c.l.s4 1983009808
  %v3627 = vunpack.c.0.s8 %v3626
  %v3628 = vlaneseq
  %v3629 = vshrl.u32 %v3628, 7
  %v3630 = vsub.s32 %v3627, %v3629
  %v3631 = vrot.slane %v2936, %v3630
  %v3633 = vunpack.c.l.s4 1983009808
  %v3634 = vunpack.c.0.s8 %v3633
  %v3635 = vlaneseq
  %v3636 = vshrl.u32 %v3635, 7
  %v3637 = vsub.s32 %v3634, %v3636
  %v3638 = vrot.slane %v3624, %v3637
  %v3639 = vcombine.high %v3631, %v3631
  %v3640 = vcombine.high %v3638, %v3638
  %v3641 = vcombine.high %v2937, %v2937
  %v3643 = vunpack.c.l.s4 1983009808
  %v3644 = vunpack.c.0.s8 %v3643
  %v3645 = vlaneseq
  %v3646 = vshrl.u32 %v3645, 7
  %v3647 = vsub.s32 %v3644, %v3646
  %v3648 = vrot.slane %v2937, %v3647
  %v3650 = vunpack.c.l.s4 1983009808
  %v3651 = vunpack.c.0.s8 %v3650
  %v3652 = vlaneseq
  %v3653 = vshrl.u32 %v3652, 7
  %v3654 = vsub.s32 %v3651, %v3653
  %v3655 = vrot.slane %v3641, %v3654
  %v3656 = vcombine.high %v3648, %v3648
  %v3657 = vcombine.high %v3655, %v3655
  %v3658 = vcombine.high %v2938, %v2938
  %v3660 = vunpack.c.l.s4 1983009808
  %v3661 = vunpack.c.0.s8 %v3660
  %v3662 = vlaneseq
  %v3663 = vshrl.u32 %v3662, 7
  %v3664 = vsub.s32 %v3661, %v3663
  %v3665 = vrot.slane %v2938, %v3664
  %v3667 = vunpack.c.l.s4 1983009808
  %v3668 = vunpack.c.0.s8 %v3667
  %v3669 = vlaneseq
  %v3670 = vshrl.u32 %v3669, 7
  %v3671 = vsub.s32 %v3668, %v3670
  %v3672 = vrot.slane %v3658, %v3671
  %v3673 = vcombine.high %v3665, %v3665
  %v3674 = vcombine.high %v3672, %v3672
  %v3675 = vcombine.high %v2939, %v2939
  %v3677 = vunpack.c.l.s4 1983009808
  %v3678 = vunpack.c.0.s8 %v3677
  %v3679 = vlaneseq
  %v3680 = vshrl.u32 %v3679, 7
  %v3681 = vsub.s32 %v3678, %v3680
  %v3682 = vrot.slane %v2939, %v3681
  %v3684 = vunpack.c.l.s4 1983009808
  %v3685 = vunpack.c.0.s8 %v3684
  %v3686 = vlaneseq
  %v3687 = vshrl.u32 %v3686, 7
  %v3688 = vsub.s32 %v3685, %v3687
  %v3689 = vrot.slane %v3675, %v3688
  %v3690 = vcombine.high %v3682, %v3682
  %v3691 = vcombine.high %v3689, %v3689
  %v3692 = vcombine.high %v2940, %v2940
  %v3694 = vunpack.c.l.s4 1983009808
  %v3695 = vunpack.c.0.s8 %v3694
  %v3696 = vlaneseq
  %v3697 = vshrl.u32 %v3696, 7
  %v3698 = vsub.s32 %v3695, %v3697
  %v3699 = vrot.slane %v2940, %v3698
  %v3701 = vunpack.c.l.s4 1983009808
  %v3702 = vunpack.c.0.s8 %v3701
  %v3703 = vlaneseq
  %v3704 = vshrl.u32 %v3703, 7
  %v3705 = vsub.s32 %v3702, %v3704
  %v3706 = vrot.slane %v3692, %v3705
  %v3707 = vcombine.high %v3699, %v3699
  %v3708 = vcombine.high %v3706, %v3706
  %v3709 = vcombine.high %v2941, %v2941
  %v3711 = vunpack.c.l.s4 1983009808
  %v3712 = vunpack.c.0.s8 %v3711
  %v3713 = vlaneseq
  %v3714 = vshrl.u32 %v3713, 7
  %v3715 = vsub.s32 %v3712, %v3714
  %v3716 = vrot.slane %v2941, %v3715
  %v3718 = vunpack.c.l.s4 1983009808
  %v3719 = vunpack.c.0.s8 %v3718
  %v3720 = vlaneseq
  %v3721 = vshrl.u32 %v3720, 7
  %v3722 = vsub.s32 %v3719, %v3721
  %v3723 = vrot.slane %v3709, %v3722
  %v3724 = vcombine.high %v3716, %v3716
  %v3725 = vcombine.high %v3723, %v3723
  %v3726 = vcombine.high %v2942, %v2942
  %v3728 = vunpack.c.l.s4 1983009808
  %v3729 = vunpack.c.0.s8 %v3728
  %v3730 = vlaneseq
  %v3731 = vshrl.u32 %v3730, 7
  %v3732 = vsub.s32 %v3729, %v3731
  %v3733 = vrot.slane %v2942, %v3732
  %v3735 = vunpack.c.l.s4 1983009808
  %v3736 = vunpack.c.0.s8 %v3735
  %v3737 = vlaneseq
  %v3738 = vshrl.u32 %v3737, 7
  %v3739 = vsub.s32 %v3736, %v3738
  %v3740 = vrot.slane %v3726, %v3739
  %v3741 = vcombine.high %v3733, %v3733
  %v3742 = vcombine.high %v3740, %v3740
  %v3743 = vcombine.high %v2943, %v2943
  %v3745 = vunpack.c.l.s4 1983009808
  %v3746 = vunpack.c.0.s8 %v3745
  %v3747 = vlaneseq
  %v3748 = vshrl.u32 %v3747, 7
  %v3749 = vsub.s32 %v3746, %v3748
  %v3750 = vrot.slane %v2943, %v3749
  %v3752 = vunpack.c.l.s4 1983009808
  %v3753 = vunpack.c.0.s8 %v3752
  %v3754 = vlaneseq
  %v3755 = vshrl.u32 %v3754, 7
  %v3756 = vsub.s32 %v3753, %v3755
  %v3757 = vrot.slane %v3743, %v3756
  %v3758 = vcombine.high %v3750, %v3750
  %v3759 = vcombine.high %v3757, %v3757
  %v3760 = vcombine.high %v2944, %v2944
  %v3762 = vunpack.c.l.s4 1983009808
  %v3763 = vunpack.c.0.s8 %v3762
  %v3764 = vlaneseq
  %v3765 = vshrl.u32 %v3764, 7
  %v3766 = vsub.s32 %v3763, %v3765
  %v3767 = vrot.slane %v2944, %v3766
  %v3769 = vunpack.c.l.s4 1983009808
  %v3770 = vunpack.c.0.s8 %v3769
  %v3771 = vlaneseq
  %v3772 = vshrl.u32 %v3771, 7
  %v3773 = vsub.s32 %v3770, %v3772
  %v3774 = vrot.slane %v3760, %v3773
  %v3775 = vcombine.high %v3767, %v3767
  %v3776 = vcombine.high %v3774, %v3774
  %v3777 = vcombine.high %v2945, %v2945
  %v3779 = vunpack.c.l.s4 1983009808
  %v3780 = vunpack.c.0.s8 %v3779
  %v3781 = vlaneseq
  %v3782 = vshrl.u32 %v3781, 7
  %v3783 = vsub.s32 %v3780, %v3782
  %v3784 = vrot.slane %v2945, %v3783
  %v3786 = vunpack.c.l.s4 1983009808
  %v3787 = vunpack.c.0.s8 %v3786
  %v3788 = vlaneseq
  %v3789 = vshrl.u32 %v3788, 7
  %v3790 = vsub.s32 %v3787, %v3789
  %v3791 = vrot.slane %v3777, %v3790
  %v3792 = vcombine.high %v3784, %v3784
  %v3793 = vcombine.high %v3791, %v3791
  %v3794 = vcombine.high %v2946, %v2946
  %v3796 = vunpack.c.l.s4 1983009808
  %v3797 = vunpack.c.0.s8 %v3796
  %v3798 = vlaneseq
  %v3799 = vshrl.u32 %v3798, 7
  %v3800 = vsub.s32 %v3797, %v3799
  %v3801 = vrot.slane %v2946, %v3800
  %v3803 = vunpack.c.l.s4 1983009808
  %v3804 = vunpack.c.0.s8 %v3803
  %v3805 = vlaneseq
  %v3806 = vshrl.u32 %v3805, 7
  %v3807 = vsub.s32 %v3804, %v3806
  %v3808 = vrot.slane %v3794, %v3807
  %v3809 = vcombine.high %v3801, %v3801
  %v3810 = vcombine.high %v3808, %v3808
  %v3811 = vcombine.high %v2947, %v2947
  %v3813 = vunpack.c.l.s4 1983009808
  %v3814 = vunpack.c.0.s8 %v3813
  %v3815 = vlaneseq
  %v3816 = vshrl.u32 %v3815, 7
  %v3817 = vsub.s32 %v3814, %v3816
  %v3818 = vrot.slane %v2947, %v3817
  %v3820 = vunpack.c.l.s4 1983009808
  %v3821 = vunpack.c.0.s8 %v3820
  %v3822 = vlaneseq
  %v3823 = vshrl.u32 %v3822, 7
  %v3824 = vsub.s32 %v3821, %v3823
  %v3825 = vrot.slane %v3811, %v3824
  %v3826 = vcombine.high %v3818, %v3818
  %v3827 = vcombine.high %v3825, %v3825
  %v3828 = vcombine.high %v2948, %v2948
  %v3830 = vunpack.c.l.s4 1983009808
  %v3831 = vunpack.c.0.s8 %v3830
  %v3832 = vlaneseq
  %v3833 = vshrl.u32 %v3832, 7
  %v3834 = vsub.s32 %v3831, %v3833
  %v3835 = vrot.slane %v2948, %v3834
  %v3837 = vunpack.c.l.s4 1983009808
  %v3838 = vunpack.c.0.s8 %v3837
  %v3839 = vlaneseq
  %v3840 = vshrl.u32 %v3839, 7
  %v3841 = vsub.s32 %v3838, %v3840
  %v3842 = vrot.slane %v3828, %v3841
  %v3843 = vcombine.high %v3835, %v3835
  %v3844 = vcombine.high %v3842, %v3842
  %v3845 = vcombine.high %v2949, %v2949
  %v3847 = vunpack.c.l.s4 1983009808
  %v3848 = vunpack.c.0.s8 %v3847
  %v3849 = vlaneseq
  %v3850 = vshrl.u32 %v3849, 7
  %v3851 = vsub.s32 %v3848, %v3850
  %v3852 = vrot.slane %v2949, %v3851
  %v3854 = vunpack.c.l.s4 1983009808
  %v3855 = vunpack.c.0.s8 %v3854
  %v3856 = vlaneseq
  %v3857 = vshrl.u32 %v3856, 7
  %v3858 = vsub.s32 %v3855, %v3857
  %v3859 = vrot.slane %v3845, %v3858
  %v3860 = vcombine.high %v3852, %v3852
  %v3861 = vcombine.high %v3859, %v3859
  %v3862 = vcombine.high %v2950, %v2950
  %v3864 = vunpack.c.l.s4 1983009808
  %v3865 = vunpack.c.0.s8 %v3864
  %v3866 = vlaneseq
  %v3867 = vshrl.u32 %v3866, 7
  %v3868 = vsub.s32 %v3865, %v3867
  %v3869 = vrot.slane %v2950, %v3868
  %v3871 = vunpack.c.l.s4 1983009808
  %v3872 = vunpack.c.0.s8 %v3871
  %v3873 = vlaneseq
  %v3874 = vshrl.u32 %v3873, 7
  %v3875 = vsub.s32 %v3872, %v3874
  %v3876 = vrot.slane %v3862, %v3875
  %v3877 = vcombine.high %v3869, %v3869
  %v3878 = vcombine.high %v3876, %v3876
  %v3879 = vcombine.high %v2951, %v2951
  %v3881 = vunpack.c.l.s4 1983009808
  %v3882 = vunpack.c.0.s8 %v3881
  %v3883 = vlaneseq
  %v3884 = vshrl.u32 %v3883, 7
  %v3885 = vsub.s32 %v3882, %v3884
  %v3886 = vrot.slane %v2951, %v3885
  %v3888 = vunpack.c.l.s4 1983009808
  %v3889 = vunpack.c.0.s8 %v3888
  %v3890 = vlaneseq
  %v3891 = vshrl.u32 %v3890, 7
  %v3892 = vsub.s32 %v3889, %v3891
  %v3893 = vrot.slane %v3879, %v3892
  %v3894 = vcombine.high %v3886, %v3886
  %v3895 = vcombine.high %v3893, %v3893
  %v3896 = vcombine.high %v2952, %v2952
  %v3898 = vunpack.c.l.s4 1983009808
  %v3899 = vunpack.c.0.s8 %v3898
  %v3900 = vlaneseq
  %v3901 = vshrl.u32 %v3900, 7
  %v3902 = vsub.s32 %v3899, %v3901
  %v3903 = vrot.slane %v2952, %v3902
  %v3905 = vunpack.c.l.s4 1983009808
  %v3906 = vunpack.c.0.s8 %v3905
  %v3907 = vlaneseq
  %v3908 = vshrl.u32 %v3907, 7
  %v3909 = vsub.s32 %v3906, %v3908
  %v3910 = vrot.slane %v3896, %v3909
  %v3911 = vcombine.high %v3903, %v3903
  %v3912 = vcombine.high %v3910, %v3910
  %v3913 = vcombine.high %v2953, %v2953
  %v3915 = vunpack.c.l.s4 1983009808
  %v3916 = vunpack.c.0.s8 %v3915
  %v3917 = vlaneseq
  %v3918 = vshrl.u32 %v3917, 7
  %v3919 = vsub.s32 %v3916, %v3918
  %v3920 = vrot.slane %v2953, %v3919
  %v3922 = vunpack.c.l.s4 1983009808
  %v3923 = vunpack.c.0.s8 %v3922
  %v3924 = vlaneseq
  %v3925 = vshrl.u32 %v3924, 7
  %v3926 = vsub.s32 %v3923, %v3925
  %v3927 = vrot.slane %v3913, %v3926
  %v3928 = vcombine.high %v3920, %v3920
  %v3929 = vcombine.high %v3927, %v3927
  %v3930 = vcombine.high %v2954, %v2954
  %v3932 = vunpack.c.l.s4 1983009808
  %v3933 = vunpack.c.0.s8 %v3932
  %v3934 = vlaneseq
  %v3935 = vshrl.u32 %v3934, 7
  %v3936 = vsub.s32 %v3933, %v3935
  %v3937 = vrot.slane %v2954, %v3936
  %v3939 = vunpack.c.l.s4 1983009808
  %v3940 = vunpack.c.0.s8 %v3939
  %v3941 = vlaneseq
  %v3942 = vshrl.u32 %v3941, 7
  %v3943 = vsub.s32 %v3940, %v3942
  %v3944 = vrot.slane %v3930, %v3943
  %v3945 = vcombine.high %v3937, %v3937
  %v3946 = vcombine.high %v3944, %v3944
  %v3947 = vcombine.high %v2955, %v2955
  %v3949 = vunpack.c.l.s4 1983009808
  %v3950 = vunpack.c.0.s8 %v3949
  %v3951 = vlaneseq
  %v3952 = vshrl.u32 %v3951, 7
  %v3953 = vsub.s32 %v3950, %v3952
  %v3954 = vrot.slane %v2955, %v3953
  %v3956 = vunpack.c.l.s4 1983009808
  %v3957 = vunpack.c.0.s8 %v3956
  %v3958 = vlaneseq
  %v3959 = vshrl.u32 %v3958, 7
  %v3960 = vsub.s32 %v3957, %v3959
  %v3961 = vrot.slane %v3947, %v3960
  %v3962 = vcombine.high %v3954, %v3954
  %v3963 = vcombine.high %v3961, %v3961
  %v3964 = vcombine.high %v2956, %v2956
  %v3966 = vunpack.c.l.s4 1983009808
  %v3967 = vunpack.c.0.s8 %v3966
  %v3968 = vlaneseq
  %v3969 = vshrl.u32 %v3968, 7
  %v3970 = vsub.s32 %v3967, %v3969
  %v3971 = vrot.slane %v2956, %v3970
  %v3973 = vunpack.c.l.s4 1983009808
  %v3974 = vunpack.c.0.s8 %v3973
  %v3975 = vlaneseq
  %v3976 = vshrl.u32 %v3975, 7
  %v3977 = vsub.s32 %v3974, %v3976
  %v3978 = vrot.slane %v3964, %v3977
  %v3979 = vcombine.high %v3971, %v3971
  %v3980 = vcombine.high %v3978, %v3978
  %v3981 = vcombine.high %v2957, %v2957
  %v3983 = vunpack.c.l.s4 1983009808
  %v3984 = vunpack.c.0.s8 %v3983
  %v3985 = vlaneseq
  %v3986 = vshrl.u32 %v3985, 7
  %v3987 = vsub.s32 %v3984, %v3986
  %v3988 = vrot.slane %v2957, %v3987
  %v3990 = vunpack.c.l.s4 1983009808
  %v3991 = vunpack.c.0.s8 %v3990
  %v3992 = vlaneseq
  %v3993 = vshrl.u32 %v3992, 7
  %v3994 = vsub.s32 %v3991, %v3993
  %v3995 = vrot.slane %v3981, %v3994
  %v3996 = vcombine.high %v3988, %v3988
  %v3997 = vcombine.high %v3995, %v3995
  %v3998 = vcombine.high %v2958, %v2958
  %v4000 = vunpack.c.l.s4 1983009808
  %v4001 = vunpack.c.0.s8 %v4000
  %v4002 = vlaneseq
  %v4003 = vshrl.u32 %v4002, 7
  %v4004 = vsub.s32 %v4001, %v4003
  %v4005 = vrot.slane %v2958, %v4004
  %v4007 = vunpack.c.l.s4 1983009808
  %v4008 = vunpack.c.0.s8 %v4007
  %v4009 = vlaneseq
  %v4010 = vshrl.u32 %v4009, 7
  %v4011 = vsub.s32 %v4008, %v4010
  %v4012 = vrot.slane %v3998, %v4011
  %v4013 = vcombine.high %v4005, %v4005
  %v4014 = vcombine.high %v4012, %v4012
  %v4015 = vcombine.high %v2959, %v2959
  %v4017 = vunpack.c.l.s4 1983009808
  %v4018 = vunpack.c.0.s8 %v4017
  %v4019 = vlaneseq
  %v4020 = vshrl.u32 %v4019, 7
  %v4021 = vsub.s32 %v4018, %v4020
  %v4022 = vrot.slane %v2959, %v4021
  %v4024 = vunpack.c.l.s4 1983009808
  %v4025 = vunpack.c.0.s8 %v4024
  %v4026 = vlaneseq
  %v4027 = vshrl.u32 %v4026, 7
  %v4028 = vsub.s32 %v4025, %v4027
  %v4029 = vrot.slane %v4015, %v4028
  %v4030 = vcombine.high %v4022, %v4022
  %v4031 = vcombine.high %v4029, %v4029
  %v4032 = vcombine.high %v2960, %v2960
  %v4034 = vunpack.c.l.s4 1983009808
  %v4035 = vunpack.c.0.s8 %v4034
  %v4036 = vlaneseq
  %v4037 = vshrl.u32 %v4036, 7
  %v4038 = vsub.s32 %v4035, %v4037
  %v4039 = vrot.slane %v2960, %v4038
  %v4041 = vunpack.c.l.s4 1983009808
  %v4042 = vunpack.c.0.s8 %v4041
  %v4043 = vlaneseq
  %v4044 = vshrl.u32 %v4043, 7
  %v4045 = vsub.s32 %v4042, %v4044
  %v4046 = vrot.slane %v4032, %v4045
  %v4047 = vcombine.high %v4039, %v4039
  %v4048 = vcombine.high %v4046, %v4046
  %v4049 = vcombine.high %v2961, %v2961
  %v4051 = vunpack.c.l.s4 1983009808
  %v4052 = vunpack.c.0.s8 %v4051
  %v4053 = vlaneseq
  %v4054 = vshrl.u32 %v4053, 7
  %v4055 = vsub.s32 %v4052, %v4054
  %v4056 = vrot.slane %v2961, %v4055
  %v4058 = vunpack.c.l.s4 1983009808
  %v4059 = vunpack.c.0.s8 %v4058
  %v4060 = vlaneseq
  %v4061 = vshrl.u32 %v4060, 7
  %v4062 = vsub.s32 %v4059, %v4061
  %v4063 = vrot.slane %v4049, %v4062
  %v4064 = vcombine.high %v4056, %v4056
  %v4065 = vcombine.high %v4063, %v4063
  %v4066 = vcombine.high %v2962, %v2962
  %v4068 = vunpack.c.l.s4 1983009808
  %v4069 = vunpack.c.0.s8 %v4068
  %v4070 = vlaneseq
  %v4071 = vshrl.u32 %v4070, 7
  %v4072 = vsub.s32 %v4069, %v4071
  %v4073 = vrot.slane %v2962, %v4072
  %v4075 = vunpack.c.l.s4 1983009808
  %v4076 = vunpack.c.0.s8 %v4075
  %v4077 = vlaneseq
  %v4078 = vshrl.u32 %v4077, 7
  %v4079 = vsub.s32 %v4076, %v4078
  %v4080 = vrot.slane %v4066, %v4079
  %v4081 = vcombine.high %v4073, %v4073
  %v4082 = vcombine.high %v4080, %v4080
  %v4083 = vcombine.high %v2963, %v2963
  %v4085 = vunpack.c.l.s4 1983009808
  %v4086 = vunpack.c.0.s8 %v4085
  %v4087 = vlaneseq
  %v4088 = vshrl.u32 %v4087, 7
  %v4089 = vsub.s32 %v4086, %v4088
  %v4090 = vrot.slane %v2963, %v4089
  %v4092 = vunpack.c.l.s4 1983009808
  %v4093 = vunpack.c.0.s8 %v4092
  %v4094 = vlaneseq
  %v4095 = vshrl.u32 %v4094, 7
  %v4096 = vsub.s32 %v4093, %v4095
  %v4097 = vrot.slane %v4083, %v4096
  %v4098 = vcombine.high %v4090, %v4090
  %v4099 = vcombine.high %v4097, %v4097
  %v4100 = vcombine.high %v2964, %v2964
  %v4102 = vunpack.c.l.s4 1983009808
  %v4103 = vunpack.c.0.s8 %v4102
  %v4104 = vlaneseq
  %v4105 = vshrl.u32 %v4104, 7
  %v4106 = vsub.s32 %v4103, %v4105
  %v4107 = vrot.slane %v2964, %v4106
  %v4109 = vunpack.c.l.s4 1983009808
  %v4110 = vunpack.c.0.s8 %v4109
  %v4111 = vlaneseq
  %v4112 = vshrl.u32 %v4111, 7
  %v4113 = vsub.s32 %v4110, %v4112
  %v4114 = vrot.slane %v4100, %v4113
  %v4115 = vcombine.high %v4107, %v4107
  %v4116 = vcombine.high %v4114, %v4114
  %v4373 = vrot.slane %v3036, 7
  %v4374 = vrot.slane %v4373, 2
  %v4375 = vrot.slane %v3044, 7
  %v4376 = vrot.slane %v4375, 2
  %v4377 = vrot.slane %v3043, 7
  %v4378 = vrot.slane %v4377, 2
  %v4379 = vrot.slane %v3045, 7
  %v4380 = vrot.slane %v4379, 2
  %v4381 = vrot.slane %v3053, 7
  %v4382 = vrot.slane %v4381, 2
  %v4383 = vrot.slane %v3061, 7
  %v4384 = vrot.slane %v4383, 2
  %v4385 = vrot.slane %v3060, 7
  %v4386 = vrot.slane %v4385, 2
  %v4387 = vrot.slane %v3062, 7
  %v4388 = vrot.slane %v4387, 2
  %v4389 = vrot.slane %v3070, 7
  %v4390 = vrot.slane %v4389, 2
  %v4391 = vrot.slane %v3078, 7
  %v4392 = vrot.slane %v4391, 2
  %v4393 = vrot.slane %v3077, 7
  %v4394 = vrot.slane %v4393, 2
  %v4395 = vrot.slane %v3079, 7
  %v4396 = vrot.slane %v4395, 2
  %v4397 = vrot.slane %v3087, 7
  %v4398 = vrot.slane %v4397, 2
  %v4399 = vrot.slane %v3095, 7
  %v4400 = vrot.slane %v4399, 2
  %v4401 = vrot.slane %v3094, 7
  %v4402 = vrot.slane %v4401, 2
  %v4403 = vrot.slane %v3096, 7
  %v4404 = vrot.slane %v4403, 2
  %v4405 = vrot.slane %v3104, 7
  %v4406 = vrot.slane %v4405, 2
  %v4407 = vrot.slane %v3112, 7
  %v4408 = vrot.slane %v4407, 2
  %v4409 = vrot.slane %v3111, 7
  %v4410 = vrot.slane %v4409, 2
  %v4411 = vrot.slane %v3113, 7
  %v4412 = vrot.slane %v4411, 2
  %v4413 = vrot.slane %v3121, 7
  %v4414 = vrot.slane %v4413, 2
  %v4415 = vrot.slane %v3129, 7
  %v4416 = vrot.slane %v4415, 2
  %v4417 = vrot.slane %v3128, 7
  %v4418 = vrot.slane %v4417, 2
  %v4419 = vrot.slane %v3130, 7
  %v4420 = vrot.slane %v4419, 2
  %v4421 = vrot.slane %v3138, 7
  %v4422 = vrot.slane %v4421, 2
  %v4423 = vrot.slane %v3146, 7
  %v4424 = vrot.slane %v4423, 2
  %v4425 = vrot.slane %v3145, 7
  %v4426 = vrot.slane %v4425, 2
  %v4427 = vrot.slane %v3147, 7
  %v4428 = vrot.slane %v4427, 2
  %v4429 = vrot.slane %v3155, 7
  %v4430 = vrot.slane %v4429, 2
  %v4431 = vrot.slane %v3163, 7
  %v4432 = vrot.slane %v4431, 2
  %v4433 = vrot.slane %v3162, 7
  %v4434 = vrot.slane %v4433, 2
  %v4435 = vrot.slane %v3164, 7
  %v4436 = vrot.slane %v4435, 2
  %v4437 = vrot.slane %v3172, 7
  %v4438 = vrot.slane %v4437, 2
  %v4439 = vrot.slane %v3180, 7
  %v4440 = vrot.slane %v4439, 2
  %v4441 = vrot.slane %v3179, 7
  %v4442 = vrot.slane %v4441, 2
  %v4443 = vrot.slane %v3181, 7
  %v4444 = vrot.slane %v4443, 2
  %v4445 = vrot.slane %v3189, 7
  %v4446 = vrot.slane %v4445, 2
  %v4447 = vrot.slane %v3197, 7
  %v4448 = vrot.slane %v4447, 2
  %v4449 = vrot.slane %v3196, 7
  %v4450 = vrot.slane %v4449, 2
  %v4451 = vrot.slane %v3198, 7
  %v4452 = vrot.slane %v4451, 2
  %v4453 = vrot.slane %v3206, 7
  %v4454 = vrot.slane %v4453, 2
  %v4455 = vrot.slane %v3214, 7
  %v4456 = vrot.slane %v4455, 2
  %v4457 = vrot.slane %v3213, 7
  %v4458 = vrot.slane %v4457, 2
  %v4459 = vrot.slane %v3215, 7
  %v4460 = vrot.slane %v4459, 2
  %v4461 = vrot.slane %v3223, 7
  %v4462 = vrot.slane %v4461, 2
  %v4463 = vrot.slane %v3231, 7
  %v4464 = vrot.slane %v4463, 2
  %v4465 = vrot.slane %v3230, 7
  %v4466 = vrot.slane %v4465, 2
  %v4467 = vrot.slane %v3232, 7
  %v4468 = vrot.slane %v4467, 2
  %v4469 = vrot.slane %v3240, 7
  %v4470 = vrot.slane %v4469, 2
  %v4471 = vrot.slane %v3248, 7
  %v4472 = vrot.slane %v4471, 2
  %v4473 = vrot.slane %v3247, 7
  %v4474 = vrot.slane %v4473, 2
  %v4475 = vrot.slane %v3249, 7
  %v4476 = vrot.slane %v4475, 2
  %v4477 = vrot.slane %v3257, 7
  %v4478 = vrot.slane %v4477, 2
  %v4479 = vrot.slane %v3265, 7
  %v4480 = vrot.slane %v4479, 2
  %v4481 = vrot.slane %v3264, 7
  %v4482 = vrot.slane %v4481, 2
  %v4483 = vrot.slane %v3266, 7
  %v4484 = vrot.slane %v4483, 2
  %v4485 = vrot.slane %v3274, 7
  %v4486 = vrot.slane %v4485, 2
  %v4487 = vrot.slane %v3282, 7
  %v4488 = vrot.slane %v4487, 2
  %v4489 = vrot.slane %v3281, 7
  %v4490 = vrot.slane %v4489, 2
  %v4491 = vrot.slane %v3283, 7
  %v4492 = vrot.slane %v4491, 2
  %v4493 = vrot.slane %v3291, 7
  %v4494 = vrot.slane %v4493, 2
  %v4495 = vrot.slane %v3299, 7
  %v4496 = vrot.slane %v4495, 2
  %v4497 = vrot.slane %v3298, 7
  %v4498 = vrot.slane %v4497, 2
  %v4499 = vrot.slane %v3300, 7
  %v4500 = vrot.slane %v4499, 2
  %v4501 = vrot.slane %v3308, 7
  %v4502 = vrot.slane %v4501, 2
  %v4503 = vrot.slane %v3316, 7
  %v4504 = vrot.slane %v4503, 2
  %v4505 = vrot.slane %v3315, 7
  %v4506 = vrot.slane %v4505, 2
  %v4507 = vrot.slane %v3317, 7
  %v4508 = vrot.slane %v4507, 2
  %v4509 = vrot.slane %v3325, 7
  %v4510 = vrot.slane %v4509, 2
  %v4511 = vrot.slane %v3333, 7
  %v4512 = vrot.slane %v4511, 2
  %v4513 = vrot.slane %v3332, 7
  %v4514 = vrot.slane %v4513, 2
  %v4515 = vrot.slane %v3334, 7
  %v4516 = vrot.slane %v4515, 2
  %v4517 = vrot.slane %v3342, 7
  %v4518 = vrot.slane %v4517, 2
  %v4519 = vrot.slane %v3350, 7
  %v4520 = vrot.slane %v4519, 2
  %v4521 = vrot.slane %v3349, 7
  %v4522 = vrot.slane %v4521, 2
  %v4523 = vrot.slane %v3351, 7
  %v4524 = vrot.slane %v4523, 2
  %v4525 = vrot.slane %v3359, 7
  %v4526 = vrot.slane %v4525, 2
  %v4527 = vrot.slane %v3367, 7
  %v4528 = vrot.slane %v4527, 2
  %v4529 = vrot.slane %v3366, 7
  %v4530 = vrot.slane %v4529, 2
  %v4531 = vrot.slane %v3368, 7
  %v4532 = vrot.slane %v4531, 2
  %v4533 = vrot.slane %v3376, 7
  %v4534 = vrot.slane %v4533, 2
  %v4535 = vrot.slane %v3384, 7
  %v4536 = vrot.slane %v4535, 2
  %v4537 = vrot.slane %v3383, 7
  %v4538 = vrot.slane %v4537, 2
  %v4539 = vrot.slane %v3385, 7
  %v4540 = vrot.slane %v4539, 2
  %v4541 = vrot.slane %v3393, 7
  %v4542 = vrot.slane %v4541, 2
  %v4543 = vrot.slane %v3401, 7
  %v4544 = vrot.slane %v4543, 2
  %v4545 = vrot.slane %v3400, 7
  %v4546 = vrot.slane %v4545, 2
  %v4547 = vrot.slane %v3402, 7
  %v4548 = vrot.slane %v4547, 2
  %v4549 = vrot.slane %v3410, 7
  %v4550 = vrot.slane %v4549, 2
  %v4551 = vrot.slane %v3418, 7
  %v4552 = vrot.slane %v4551, 2
  %v4553 = vrot.slane %v3417, 7
  %v4554 = vrot.slane %v4553, 2
  %v4555 = vrot.slane %v3419, 7
  %v4556 = vrot.slane %v4555, 2
  %v4557 = vrot.slane %v3427, 7
  %v4558 = vrot.slane %v4557, 2
  %v4559 = vrot.slane %v3435, 7
  %v4560 = vrot.slane %v4559, 2
  %v4561 = vrot.slane %v3434, 7
  %v4562 = vrot.slane %v4561, 2
  %v4563 = vrot.slane %v3436, 7
  %v4564 = vrot.slane %v4563, 2
  %v4565 = vrot.slane %v3444, 7
  %v4566 = vrot.slane %v4565, 2
  %v4567 = vrot.slane %v3452, 7
  %v4568 = vrot.slane %v4567, 2
  %v4569 = vrot.slane %v3451, 7
  %v4570 = vrot.slane %v4569, 2
  %v4571 = vrot.slane %v3453, 7
  %v4572 = vrot.slane %v4571, 2
  %v4573 = vrot.slane %v3461, 7
  %v4574 = vrot.slane %v4573, 2
  %v4575 = vrot.slane %v3469, 7
  %v4576 = vrot.slane %v4575, 2
  %v4577 = vrot.slane %v3468, 7
  %v4578 = vrot.slane %v4577, 2
  %v4579 = vrot.slane %v3470, 7
  %v4580 = vrot.slane %v4579, 2
  %v4581 = vrot.slane %v3478, 7
  %v4582 = vrot.slane %v4581, 2
  %v4583 = vrot.slane %v3486, 7
  %v4584 = vrot.slane %v4583, 2
  %v4585 = vrot.slane %v3485, 7
  %v4586 = vrot.slane %v4585, 2
  %v4587 = vrot.slane %v3487, 7
  %v4588 = vrot.slane %v4587, 2
  %v4589 = vrot.slane %v3495, 7
  %v4590 = vrot.slane %v4589, 2
  %v4591 = vrot.slane %v3503, 7
  %v4592 = vrot.slane %v4591, 2
  %v4593 = vrot.slane %v3502, 7
  %v4594 = vrot.slane %v4593, 2
  %v4595 = vrot.slane %v3504, 7
  %v4596 = vrot.slane %v4595, 2
  %v4597 = vrot.slane %v3512, 7
  %v4598 = vrot.slane %v4597, 2
  %v4599 = vrot.slane %v3520, 7
  %v4600 = vrot.slane %v4599, 2
  %v4601 = vrot.slane %v3519, 7
  %v4602 = vrot.slane %v4601, 2
  %v4603 = vrot.slane %v3521, 7
  %v4604 = vrot.slane %v4603, 2
  %v4605 = vrot.slane %v3529, 7
  %v4606 = vrot.slane %v4605, 2
  %v4607 = vrot.slane %v3537, 7
  %v4608 = vrot.slane %v4607, 2
  %v4609 = vrot.slane %v3536, 7
  %v4610 = vrot.slane %v4609, 2
  %v4611 = vrot.slane %v3538, 7
  %v4612 = vrot.slane %v4611, 2
  %v4613 = vrot.slane %v3546, 7
  %v4614 = vrot.slane %v4613, 2
  %v4615 = vrot.slane %v3554, 7
  %v4616 = vrot.slane %v4615, 2
  %v4617 = vrot.slane %v3553, 7
  %v4618 = vrot.slane %v4617, 2
  %v4619 = vrot.slane %v3555, 7
  %v4620 = vrot.slane %v4619, 2
  %v4621 = vrot.slane %v3563, 7
  %v4622 = vrot.slane %v4621, 2
  %v4623 = vrot.slane %v3571, 7
  %v4624 = vrot.slane %v4623, 2
  %v4625 = vrot.slane %v3570, 7
  %v4626 = vrot.slane %v4625, 2
  %v4627 = vrot.slane %v3572, 7
  %v4628 = vrot.slane %v4627, 2
  %v4629 = vrot.slane %v3580, 7
  %v4630 = vrot.slane %v4629, 2
  %v4631 = vrot.slane %v3588, 7
  %v4632 = vrot.slane %v4631, 2
  %v4633 = vrot.slane %v3587, 7
  %v4634 = vrot.slane %v4633, 2
  %v4635 = vrot.slane %v3589, 7
  %v4636 = vrot.slane %v4635, 2
  %v4637 = vrot.slane %v3597, 7
  %v4638 = vrot.slane %v4637, 2
  %v4639 = vrot.slane %v3605, 7
  %v4640 = vrot.slane %v4639, 2
  %v4641 = vrot.slane %v3604, 7
  %v4642 = vrot.slane %v4641, 2
  %v4643 = vrot.slane %v3606, 7
  %v4644 = vrot.slane %v4643, 2
  %v4645 = vrot.slane %v3614, 7
  %v4646 = vrot.slane %v4645, 2
  %v4647 = vrot.slane %v3622, 7
  %v4648 = vrot.slane %v4647, 2
  %v4649 = vrot.slane %v3621, 7
  %v4650 = vrot.slane %v4649, 2
  %v4651 = vrot.slane %v3623, 7
  %v4652 = vrot.slane %v4651, 2
  %v4653 = vrot.slane %v3631, 7
  %v4654 = vrot.slane %v4653, 2
  %v4655 = vrot.slane %v3639, 7
  %v4656 = vrot.slane %v4655, 2
  %v4657 = vrot.slane %v3638, 7
  %v4658 = vrot.slane %v4657, 2
  %v4659 = vrot.slane %v3640, 7
  %v4660 = vrot.slane %v4659, 2
  %v4661 = vrot.slane %v3648, 7
  %v4662 = vrot.slane %v4661, 2
  %v4663 = vrot.slane %v3656, 7
  %v4664 = vrot.slane %v4663, 2
  %v4665 = vrot.slane %v3655, 7
  %v4666 = vrot.slane %v4665, 2
  %v4667 = vrot.slane %v3657, 7
  %v4668 = vrot.slane %v4667, 2
  %v4669 = vrot.slane %v3665, 7
  %v4670 = vrot.slane %v4669, 2
  %v4671 = vrot.slane %v3673, 7
  %v4672 = vrot.slane %v4671, 2
  %v4673 = vrot.slane %v3672, 7
  %v4674 = vrot.slane %v4673, 2
  %v4675 = vrot.slane %v3674, 7
  %v4676 = vrot.slane %v4675, 2
  %v4677 = vrot.slane %v3682, 7
  %v4678 = vrot.slane %v4677, 2
  %v4679 = vrot.slane %v3690, 7
  %v4680 = vrot.slane %v4679, 2
  %v4681 = vrot.slane %v3689, 7
  %v4682 = vrot.slane %v4681, 2
  %v4683 = vrot.slane %v3691, 7
  %v4684 = vrot.slane %v4683, 2
  %v4685 = vrot.slane %v3699, 7
  %v4686 = vrot.slane %v4685, 2
  %v4687 = vrot.slane %v3707, 7
  %v4688 = vrot.slane %v4687, 2
  %v4689 = vrot.slane %v3706, 7
  %v4690 = vrot.slane %v4689, 2
  %v4691 = vrot.slane %v3708, 7
  %v4692 = vrot.slane %v4691, 2
  %v4693 = vrot.slane %v3716, 7
  %v4694 = vrot.slane %v4693, 2
  %v4695 = vrot.slane %v3724, 7
  %v4696 = vrot.slane %v4695, 2
  %v4697 = vrot.slane %v3723, 7
  %v4698 = vrot.slane %v4697, 2
  %v4699 = vrot.slane %v3725, 7
  %v4700 = vrot.slane %v4699, 2
  %v4701 = vrot.slane %v3733, 7
  %v4702 = vrot.slane %v4701, 2
  %v4703 = vrot.slane %v3741, 7
  %v4704 = vrot.slane %v4703, 2
  %v4705 = vrot.slane %v3740, 7
  %v4706 = vrot.slane %v4705, 2
  %v4707 = vrot.slane %v3742, 7
  %v4708 = vrot.slane %v4707, 2
  %v4709 = vrot.slane %v3750, 7
  %v4710 = vrot.slane %v4709, 2
  %v4711 = vrot.slane %v3758, 7
  %v4712 = vrot.slane %v4711, 2
  %v4713 = vrot.slane %v3757, 7
  %v4714 = vrot.slane %v4713, 2
  %v4715 = vrot.slane %v3759, 7
  %v4716 = vrot.slane %v4715, 2
  %v4717 = vrot.slane %v3767, 7
  %v4718 = vrot.slane %v4717, 2
  %v4719 = vrot.slane %v3775, 7
  %v4720 = vrot.slane %v4719, 2
  %v4721 = vrot.slane %v3774, 7
  %v4722 = vrot.slane %v4721, 2
  %v4723 = vrot.slane %v3776, 7
  %v4724 = vrot.slane %v4723, 2
  %v4725 = vrot.slane %v3784, 7
  %v4726 = vrot.slane %v4725, 2
  %v4727 = vrot.slane %v3792, 7
  %v4728 = vrot.slane %v4727, 2
  %v4729 = vrot.slane %v3791, 7
  %v4730 = vrot.slane %v4729, 2
  %v4731 = vrot.slane %v3793, 7
  %v4732 = vrot.slane %v4731, 2
  %v4733 = vrot.slane %v3801, 7
  %v4734 = vrot.slane %v4733, 2
  %v4735 = vrot.slane %v3809, 7
  %v4736 = vrot.slane %v4735, 2
  %v4737 = vrot.slane %v3808, 7
  %v4738 = vrot.slane %v4737, 2
  %v4739 = vrot.slane %v3810, 7
  %v4740 = vrot.slane %v4739, 2
  %v4741 = vrot.slane %v3818, 7
  %v4742 = vrot.slane %v4741, 2
  %v4743 = vrot.slane %v3826, 7
  %v4744 = vrot.slane %v4743, 2
  %v4745 = vrot.slane %v3825, 7
  %v4746 = vrot.slane %v4745, 2
  %v4747 = vrot.slane %v3827, 7
  %v4748 = vrot.slane %v4747, 2
  %v4749 = vrot.slane %v3835, 7
  %v4750 = vrot.slane %v4749, 2
  %v4751 = vrot.slane %v3843, 7
  %v4752 = vrot.slane %v4751, 2
  %v4753 = vrot.slane %v3842, 7
  %v4754 = vrot.slane %v4753, 2
  %v4755 = vrot.slane %v3844, 7
  %v4756 = vrot.slane %v4755, 2
  %v4757 = vrot.slane %v3852, 7
  %v4758 = vrot.slane %v4757, 2
  %v4759 = vrot.slane %v3860, 7
  %v4760 = vrot.slane %v4759, 2
  %v4761 = vrot.slane %v3859, 7
  %v4762 = vrot.slane %v4761, 2
  %v4763 = vrot.slane %v3861, 7
  %v4764 = vrot.slane %v4763, 2
  %v4765 = vrot.slane %v3869, 7
  %v4766 = vrot.slane %v4765, 2
  %v4767 = vrot.slane %v3877, 7
  %v4768 = vrot.slane %v4767, 2
  %v4769 = vrot.slane %v3876, 7
  %v4770 = vrot.slane %v4769, 2
  %v4771 = vrot.slane %v3878, 7
  %v4772 = vrot.slane %v4771, 2
  %v4773 = vrot.slane %v3886, 7
  %v4774 = vrot.slane %v4773, 2
  %v4775 = vrot.slane %v3894, 7
  %v4776 = vrot.slane %v4775, 2
  %v4777 = vrot.slane %v3893, 7
  %v4778 = vrot.slane %v4777, 2
  %v4779 = vrot.slane %v3895, 7
  %v4780 = vrot.slane %v4779, 2
  %v4781 = vrot.slane %v3903, 7
  %v4782 = vrot.slane %v4781, 2
  %v4783 = vrot.slane %v3911, 7
  %v4784 = vrot.slane %v4783, 2
  %v4785 = vrot.slane %v3910, 7
  %v4786 = vrot.slane %v4785, 2
  %v4787 = vrot.slane %v3912, 7
  %v4788 = vrot.slane %v4787, 2
  %v4789 = vrot.slane %v3920, 7
  %v4790 = vrot.slane %v4789, 2
  %v4791 = vrot.slane %v3928, 7
  %v4792 = vrot.slane %v4791, 2
  %v4793 = vrot.slane %v3927, 7
  %v4794 = vrot.slane %v4793, 2
  %v4795 = vrot.slane %v3929, 7
  %v4796 = vrot.slane %v4795, 2
  %v4797 = vrot.slane %v3937, 7
  %v4798 = vrot.slane %v4797, 2
  %v4799 = vrot.slane %v3945, 7
  %v4800 = vrot.slane %v4799, 2
  %v4801 = vrot.slane %v3944, 7
  %v4802 = vrot.slane %v4801, 2
  %v4803 = vrot.slane %v3946, 7
  %v4804 = vrot.slane %v4803, 2
  %v4805 = vrot.slane %v3954, 7
  %v4806 = vrot.slane %v4805, 2
  %v4807 = vrot.slane %v3962, 7
  %v4808 = vrot.slane %v4807, 2
  %v4809 = vrot.slane %v3961, 7
  %v4810 = vrot.slane %v4809, 2
  %v4811 = vrot.slane %v3963, 7
  %v4812 = vrot.slane %v4811, 2
  %v4813 = vrot.slane %v3971, 7
  %v4814 = vrot.slane %v4813, 2
  %v4815 = vrot.slane %v3979, 7
  %v4816 = vrot.slane %v4815, 2
  %v4817 = vrot.slane %v3978, 7
  %v4818 = vrot.slane %v4817, 2
  %v4819 = vrot.slane %v3980, 7
  %v4820 = vrot.slane %v4819, 2
  %v4821 = vrot.slane %v3988, 7
  %v4822 = vrot.slane %v4821, 2
  %v4823 = vrot.slane %v3996, 7
  %v4824 = vrot.slane %v4823, 2
  %v4825 = vrot.slane %v3995, 7
  %v4826 = vrot.slane %v4825, 2
  %v4827 = vrot.slane %v3997, 7
  %v4828 = vrot.slane %v4827, 2
  %v4829 = vrot.slane %v4005, 7
  %v4830 = vrot.slane %v4829, 2
  %v4831 = vrot.slane %v4013, 7
  %v4832 = vrot.slane %v4831, 2
  %v4833 = vrot.slane %v4012, 7
  %v4834 = vrot.slane %v4833, 2
  %v4835 = vrot.slane %v4014, 7
  %v4836 = vrot.slane %v4835, 2
  %v4837 = vrot.slane %v4022, 7
  %v4838 = vrot.slane %v4837, 2
  %v4839 = vrot.slane %v4030, 7
  %v4840 = vrot.slane %v4839, 2
  %v4841 = vrot.slane %v4029, 7
  %v4842 = vrot.slane %v4841, 2
  %v4843 = vrot.slane %v4031, 7
  %v4844 = vrot.slane %v4843, 2
  %v4845 = vrot.slane %v4039, 7
  %v4846 = vrot.slane %v4845, 2
  %v4847 = vrot.slane %v4047, 7
  %v4848 = vrot.slane %v4847, 2
  %v4849 = vrot.slane %v4046, 7
  %v4850 = vrot.slane %v4849, 2
  %v4851 = vrot.slane %v4048, 7
  %v4852 = vrot.slane %v4851, 2
  %v4853 = vrot.slane %v4056, 7
  %v4854 = vrot.slane %v4853, 2
  %v4855 = vrot.slane %v4064, 7
  %v4856 = vrot.slane %v4855, 2
  %v4857 = vrot.slane %v4063, 7
  %v4858 = vrot.slane %v4857, 2
  %v4859 = vrot.slane %v4065, 7
  %v4860 = vrot.slane %v4859, 2
  %v4861 = vrot.slane %v4073, 7
  %v4862 = vrot.slane %v4861, 2
  %v4863 = vrot.slane %v4081, 7
  %v4864 = vrot.slane %v4863, 2
  %v4865 = vrot.slane %v4080, 7
  %v4866 = vrot.slane %v4865, 2
  %v4867 = vrot.slane %v4082, 7
  %v4868 = vrot.slane %v4867, 2
  %v4869 = vrot.slane %v4090, 7
  %v4870 = vrot.slane %v4869, 2
  %v4871 = vrot.slane %v4098, 7
  %v4872 = vrot.slane %v4871, 2
  %v4873 = vrot.slane %v4097, 7
  %v4874 = vrot.slane %v4873, 2
  %v4875 = vrot.slane %v4099, 7
  %v4876 = vrot.slane %v4875, 2
  %v4877 = vrot.slane %v4107, 7
  %v4878 = vrot.slane %v4877, 2
  %v4879 = vrot.slane %v4115, 7
  %v4880 = vrot.slane %v4879, 2
  %v4881 = vrot.slane %v4114, 7
  %v4882 = vrot.slane %v4881, 2
  %v4883 = vrot.slane %v4116, 7
  %v4884 = vrot.slane %v4883, 2
  %v5141 = vmax.f32 %v3036, %v4374
  %v5142 = vmax.f32 %v3044, %v4376
  %v5143 = vmax.f32 %v3043, %v4378
  %v5144 = vmax.f32 %v3045, %v4380
  %v5145 = vmax.f32 %v3053, %v4382
  %v5146 = vmax.f32 %v3061, %v4384
  %v5147 = vmax.f32 %v3060, %v4386
  %v5148 = vmax.f32 %v3062, %v4388
  %v5149 = vmax.f32 %v3070, %v4390
  %v5150 = vmax.f32 %v3078, %v4392
  %v5151 = vmax.f32 %v3077, %v4394
  %v5152 = vmax.f32 %v3079, %v4396
  %v5153 = vmax.f32 %v3087, %v4398
  %v5154 = vmax.f32 %v3095, %v4400
  %v5155 = vmax.f32 %v3094, %v4402
  %v5156 = vmax.f32 %v3096, %v4404
  %v5157 = vmax.f32 %v3104, %v4406
  %v5158 = vmax.f32 %v3112, %v4408
  %v5159 = vmax.f32 %v3111, %v4410
  %v5160 = vmax.f32 %v3113, %v4412
  %v5161 = vmax.f32 %v3121, %v4414
  %v5162 = vmax.f32 %v3129, %v4416
  %v5163 = vmax.f32 %v3128, %v4418
  %v5164 = vmax.f32 %v3130, %v4420
  %v5165 = vmax.f32 %v3138, %v4422
  %v5166 = vmax.f32 %v3146, %v4424
  %v5167 = vmax.f32 %v3145, %v4426
  %v5168 = vmax.f32 %v3147, %v4428
  %v5169 = vmax.f32 %v3155, %v4430
  %v5170 = vmax.f32 %v3163, %v4432
  %v5171 = vmax.f32 %v3162, %v4434
  %v5172 = vmax.f32 %v3164, %v4436
  %v5173 = vmax.f32 %v3172, %v4438
  %v5174 = vmax.f32 %v3180, %v4440
  %v5175 = vmax.f32 %v3179, %v4442
  %v5176 = vmax.f32 %v3181, %v4444
  %v5177 = vmax.f32 %v3189, %v4446
  %v5178 = vmax.f32 %v3197, %v4448
  %v5179 = vmax.f32 %v3196, %v4450
  %v5180 = vmax.f32 %v3198, %v4452
  %v5181 = vmax.f32 %v3206, %v4454
  %v5182 = vmax.f32 %v3214, %v4456
  %v5183 = vmax.f32 %v3213, %v4458
  %v5184 = vmax.f32 %v3215, %v4460
  %v5185 = vmax.f32 %v3223, %v4462
  %v5186 = vmax.f32 %v3231, %v4464
  %v5187 = vmax.f32 %v3230, %v4466
  %v5188 = vmax.f32 %v3232, %v4468
  %v5189 = vmax.f32 %v3240, %v4470
  %v5190 = vmax.f32 %v3248, %v4472
  %v5191 = vmax.f32 %v3247, %v4474
  %v5192 = vmax.f32 %v3249, %v4476
  %v5193 = vmax.f32 %v3257, %v4478
  %v5194 = vmax.f32 %v3265, %v4480
  %v5195 = vmax.f32 %v3264, %v4482
  %v5196 = vmax.f32 %v3266, %v4484
  %v5197 = vmax.f32 %v3274, %v4486
  %v5198 = vmax.f32 %v3282, %v4488
  %v5199 = vmax.f32 %v3281, %v4490
  %v5200 = vmax.f32 %v3283, %v4492
  %v5201 = vmax.f32 %v3291, %v4494
  %v5202 = vmax.f32 %v3299, %v4496
  %v5203 = vmax.f32 %v3298, %v4498
  %v5204 = vmax.f32 %v3300, %v4500
  %v5205 = vmax.f32 %v3308, %v4502
  %v5206 = vmax.f32 %v3316, %v4504
  %v5207 = vmax.f32 %v3315, %v4506
  %v5208 = vmax.f32 %v3317, %v4508
  %v5209 = vmax.f32 %v3325, %v4510
  %v5210 = vmax.f32 %v3333, %v4512
  %v5211 = vmax.f32 %v3332, %v4514
  %v5212 = vmax.f32 %v3334, %v4516
  %v5213 = vmax.f32 %v3342, %v4518
  %v5214 = vmax.f32 %v3350, %v4520
  %v5215 = vmax.f32 %v3349, %v4522
  %v5216 = vmax.f32 %v3351, %v4524
  %v5217 = vmax.f32 %v3359, %v4526
  %v5218 = vmax.f32 %v3367, %v4528
  %v5219 = vmax.f32 %v3366, %v4530
  %v5220 = vmax.f32 %v3368, %v4532
  %v5221 = vmax.f32 %v3376, %v4534
  %v5222 = vmax.f32 %v3384, %v4536
  %v5223 = vmax.f32 %v3383, %v4538
  %v5224 = vmax.f32 %v3385, %v4540
  %v5225 = vmax.f32 %v3393, %v4542
  %v5226 = vmax.f32 %v3401, %v4544
  %v5227 = vmax.f32 %v3400, %v4546
  %v5228 = vmax.f32 %v3402, %v4548
  %v5229 = vmax.f32 %v3410, %v4550
  %v5230 = vmax.f32 %v3418, %v4552
  %v5231 = vmax.f32 %v3417, %v4554
  %v5232 = vmax.f32 %v3419, %v4556
  %v5233 = vmax.f32 %v3427, %v4558
  %v5234 = vmax.f32 %v3435, %v4560
  %v5235 = vmax.f32 %v3434, %v4562
  %v5236 = vmax.f32 %v3436, %v4564
  %v5237 = vmax.f32 %v3444, %v4566
  %v5238 = vmax.f32 %v3452, %v4568
  %v5239 = vmax.f32 %v3451, %v4570
  %v5240 = vmax.f32 %v3453, %v4572
  %v5241 = vmax.f32 %v3461, %v4574
  %v5242 = vmax.f32 %v3469, %v4576
  %v5243 = vmax.f32 %v3468, %v4578
  %v5244 = vmax.f32 %v3470, %v4580
  %v5245 = vmax.f32 %v3478, %v4582
  %v5246 = vmax.f32 %v3486, %v4584
  %v5247 = vmax.f32 %v3485, %v4586
  %v5248 = vmax.f32 %v3487, %v4588
  %v5249 = vmax.f32 %v3495, %v4590
  %v5250 = vmax.f32 %v3503, %v4592
  %v5251 = vmax.f32 %v3502, %v4594
  %v5252 = vmax.f32 %v3504, %v4596
  %v5253 = vmax.f32 %v3512, %v4598
  %v5254 = vmax.f32 %v3520, %v4600
  %v5255 = vmax.f32 %v3519, %v4602
  %v5256 = vmax.f32 %v3521, %v4604
  %v5257 = vmax.f32 %v3529, %v4606
  %v5258 = vmax.f32 %v3537, %v4608
  %v5259 = vmax.f32 %v3536, %v4610
  %v5260 = vmax.f32 %v3538, %v4612
  %v5261 = vmax.f32 %v3546, %v4614
  %v5262 = vmax.f32 %v3554, %v4616
  %v5263 = vmax.f32 %v3553, %v4618
  %v5264 = vmax.f32 %v3555, %v4620
  %v5265 = vmax.f32 %v3563, %v4622
  %v5266 = vmax.f32 %v3571, %v4624
  %v5267 = vmax.f32 %v3570, %v4626
  %v5268 = vmax.f32 %v3572, %v4628
  %v5269 = vmax.f32 %v3580, %v4630
  %v5270 = vmax.f32 %v3588, %v4632
  %v5271 = vmax.f32 %v3587, %v4634
  %v5272 = vmax.f32 %v3589, %v4636
  %v5273 = vmax.f32 %v3597, %v4638
  %v5274 = vmax.f32 %v3605, %v4640
  %v5275 = vmax.f32 %v3604, %v4642
  %v5276 = vmax.f32 %v3606, %v4644
  %v5277 = vmax.f32 %v3614, %v4646
  %v5278 = vmax.f32 %v3622, %v4648
  %v5279 = vmax.f32 %v3621, %v4650
  %v5280 = vmax.f32 %v3623, %v4652
  %v5281 = vmax.f32 %v3631, %v4654
  %v5282 = vmax.f32 %v3639, %v4656
  %v5283 = vmax.f32 %v3638, %v4658
  %v5284 = vmax.f32 %v3640, %v4660
  %v5285 = vmax.f32 %v3648, %v4662
  %v5286 = vmax.f32 %v3656, %v4664
  %v5287 = vmax.f32 %v3655, %v4666
  %v5288 = vmax.f32 %v3657, %v4668
  %v5289 = vmax.f32 %v3665, %v4670
  %v5290 = vmax.f32 %v3673, %v4672
  %v5291 = vmax.f32 %v3672, %v4674
  %v5292 = vmax.f32 %v3674, %v4676
  %v5293 = vmax.f32 %v3682, %v4678
  %v5294 = vmax.f32 %v3690, %v4680
  %v5295 = vmax.f32 %v3689, %v4682
  %v5296 = vmax.f32 %v3691, %v4684
  %v5297 = vmax.f32 %v3699, %v4686
  %v5298 = vmax.f32 %v3707, %v4688
  %v5299 = vmax.f32 %v3706, %v4690
  %v5300 = vmax.f32 %v3708, %v4692
  %v5301 = vmax.f32 %v3716, %v4694
  %v5302 = vmax.f32 %v3724, %v4696
  %v5303 = vmax.f32 %v3723, %v4698
  %v5304 = vmax.f32 %v3725, %v4700
  %v5305 = vmax.f32 %v3733, %v4702
  %v5306 = vmax.f32 %v3741, %v4704
  %v5307 = vmax.f32 %v3740, %v4706
  %v5308 = vmax.f32 %v3742, %v4708
  %v5309 = vmax.f32 %v3750, %v4710
  %v5310 = vmax.f32 %v3758, %v4712
  %v5311 = vmax.f32 %v3757, %v4714
  %v5312 = vmax.f32 %v3759, %v4716
  %v5313 = vmax.f32 %v3767, %v4718
  %v5314 = vmax.f32 %v3775, %v4720
  %v5315 = vmax.f32 %v3774, %v4722
  %v5316 = vmax.f32 %v3776, %v4724
  %v5317 = vmax.f32 %v3784, %v4726
  %v5318 = vmax.f32 %v3792, %v4728
  %v5319 = vmax.f32 %v3791, %v4730
  %v5320 = vmax.f32 %v3793, %v4732
  %v5321 = vmax.f32 %v3801, %v4734
  %v5322 = vmax.f32 %v3809, %v4736
  %v5323 = vmax.f32 %v3808, %v4738
  %v5324 = vmax.f32 %v3810, %v4740
  %v5325 = vmax.f32 %v3818, %v4742
  %v5326 = vmax.f32 %v3826, %v4744
  %v5327 = vmax.f32 %v3825, %v4746
  %v5328 = vmax.f32 %v3827, %v4748
  %v5329 = vmax.f32 %v3835, %v4750
  %v5330 = vmax.f32 %v3843, %v4752
  %v5331 = vmax.f32 %v3842, %v4754
  %v5332 = vmax.f32 %v3844, %v4756
  %v5333 = vmax.f32 %v3852, %v4758
  %v5334 = vmax.f32 %v3860, %v4760
  %v5335 = vmax.f32 %v3859, %v4762
  %v5336 = vmax.f32 %v3861, %v4764
  %v5337 = vmax.f32 %v3869, %v4766
  %v5338 = vmax.f32 %v3877, %v4768
  %v5339 = vmax.f32 %v3876, %v4770
  %v5340 = vmax.f32 %v3878, %v4772
  %v5341 = vmax.f32 %v3886, %v4774
  %v5342 = vmax.f32 %v3894, %v4776
  %v5343 = vmax.f32 %v3893, %v4778
  %v5344 = vmax.f32 %v3895, %v4780
  %v5345 = vmax.f32 %v3903, %v4782
  %v5346 = vmax.f32 %v3911, %v4784
  %v5347 = vmax.f32 %v3910, %v4786
  %v5348 = vmax.f32 %v3912, %v4788
  %v5349 = vmax.f32 %v3920, %v4790
  %v5350 = vmax.f32 %v3928, %v4792
  %v5351 = vmax.f32 %v3927, %v4794
  %v5352 = vmax.f32 %v3929, %v4796
  %v5353 = vmax.f32 %v3937, %v4798
  %v5354 = vmax.f32 %v3945, %v4800
  %v5355 = vmax.f32 %v3944, %v4802
  %v5356 = vmax.f32 %v3946, %v4804
  %v5357 = vmax.f32 %v3954, %v4806
  %v5358 = vmax.f32 %v3962, %v4808
  %v5359 = vmax.f32 %v3961, %v4810
  %v5360 = vmax.f32 %v3963, %v4812
  %v5361 = vmax.f32 %v3971, %v4814
  %v5362 = vmax.f32 %v3979, %v4816
  %v5363 = vmax.f32 %v3978, %v4818
  %v5364 = vmax.f32 %v3980, %v4820
  %v5365 = vmax.f32 %v3988, %v4822
  %v5366 = vmax.f32 %v3996, %v4824
  %v5367 = vmax.f32 %v3995, %v4826
  %v5368 = vmax.f32 %v3997, %v4828
  %v5369 = vmax.f32 %v4005, %v4830
  %v5370 = vmax.f32 %v4013, %v4832
  %v5371 = vmax.f32 %v4012, %v4834
  %v5372 = vmax.f32 %v4014, %v4836
  %v5373 = vmax.f32 %v4022, %v4838
  %v5374 = vmax.f32 %v4030, %v4840
  %v5375 = vmax.f32 %v4029, %v4842
  %v5376 = vmax.f32 %v4031, %v4844
  %v5377 = vmax.f32 %v4039, %v4846
  %v5378 = vmax.f32 %v4047, %v4848
  %v5379 = vmax.f32 %v4046, %v4850
  %v5380 = vmax.f32 %v4048, %v4852
  %v5381 = vmax.f32 %v4056, %v4854
  %v5382 = vmax.f32 %v4064, %v4856
  %v5383 = vmax.f32 %v4063, %v4858
  %v5384 = vmax.f32 %v4065, %v4860
  %v5385 = vmax.f32 %v4073, %v4862
  %v5386 = vmax.f32 %v4081, %v4864
  %v5387 = vmax.f32 %v4080, %v4866
  %v5388 = vmax.f32 %v4082, %v4868
  %v5389 = vmax.f32 %v4090, %v4870
  %v5390 = vmax.f32 %v4098, %v4872
  %v5391 = vmax.f32 %v4097, %v4874
  %v5392 = vmax.f32 %v4099, %v4876
  %v5393 = vmax.f32 %v4107, %v4878
  %v5394 = vmax.f32 %v4115, %v4880
  %v5395 = vmax.f32 %v4114, %v4882
  %v5396 = vmax.f32 %v4116, %v4884
  %v5397 = vmax.f32 %v5141, %v5149
  %v5398 = vmax.f32 %v5142, %v5150
  %v5399 = vmax.f32 %v5143, %v5151
  %v5400 = vmax.f32 %v5144, %v5152
  %v5401 = vmax.f32 %v5145, %v5153
  %v5402 = vmax.f32 %v5146, %v5154
  %v5403 = vmax.f32 %v5147, %v5155
  %v5404 = vmax.f32 %v5148, %v5156
  %v5405 = vmax.f32 %v5157, %v5165
  %v5406 = vmax.f32 %v5158, %v5166
  %v5407 = vmax.f32 %v5159, %v5167
  %v5408 = vmax.f32 %v5160, %v5168
  %v5409 = vmax.f32 %v5161, %v5169
  %v5410 = vmax.f32 %v5162, %v5170
  %v5411 = vmax.f32 %v5163, %v5171
  %v5412 = vmax.f32 %v5164, %v5172
  %v5413 = vmax.f32 %v5173, %v5181
  %v5414 = vmax.f32 %v5174, %v5182
  %v5415 = vmax.f32 %v5175, %v5183
  %v5416 = vmax.f32 %v5176, %v5184
  %v5417 = vmax.f32 %v5177, %v5185
  %v5418 = vmax.f32 %v5178, %v5186
  %v5419 = vmax.f32 %v5179, %v5187
  %v5420 = vmax.f32 %v5180, %v5188
  %v5421 = vmax.f32 %v5189, %v5197
  %v5422 = vmax.f32 %v5190, %v5198
  %v5423 = vmax.f32 %v5191, %v5199
  %v5424 = vmax.f32 %v5192, %v5200
  %v5425 = vmax.f32 %v5193, %v5201
  %v5426 = vmax.f32 %v5194, %v5202
  %v5427 = vmax.f32 %v5195, %v5203
  %v5428 = vmax.f32 %v5196, %v5204
  %v5429 = vmax.f32 %v5205, %v5213
  %v5430 = vmax.f32 %v5206, %v5214
  %v5431 = vmax.f32 %v5207, %v5215
  %v5432 = vmax.f32 %v5208, %v5216
  %v5433 = vmax.f32 %v5209, %v5217
  %v5434 = vmax.f32 %v5210, %v5218
  %v5435 = vmax.f32 %v5211, %v5219
  %v5436 = vmax.f32 %v5212, %v5220
  %v5437 = vmax.f32 %v5221, %v5229
  %v5438 = vmax.f32 %v5222, %v5230
  %v5439 = vmax.f32 %v5223, %v5231
  %v5440 = vmax.f32 %v5224, %v5232
  %v5441 = vmax.f32 %v5225, %v5233
  %v5442 = vmax.f32 %v5226, %v5234
  %v5443 = vmax.f32 %v5227, %v5235
  %v5444 = vmax.f32 %v5228, %v5236
  %v5445 = vmax.f32 %v5237, %v5245
  %v5446 = vmax.f32 %v5238, %v5246
  %v5447 = vmax.f32 %v5239, %v5247
  %v5448 = vmax.f32 %v5240, %v5248
  %v5449 = vmax.f32 %v5241, %v5249
  %v5450 = vmax.f32 %v5242, %v5250
  %v5451 = vmax.f32 %v5243, %v5251
  %v5452 = vmax.f32 %v5244, %v5252
  %v5453 = vmax.f32 %v5253, %v5261
  %v5454 = vmax.f32 %v5254, %v5262
  %v5455 = vmax.f32 %v5255, %v5263
  %v5456 = vmax.f32 %v5256, %v5264
  %v5457 = vmax.f32 %v5257, %v5265
  %v5458 = vmax.f32 %v5258, %v5266
  %v5459 = vmax.f32 %v5259, %v5267
  %v5460 = vmax.f32 %v5260, %v5268
  %v5461 = vmax.f32 %v5269, %v5277
  %v5462 = vmax.f32 %v5270, %v5278
  %v5463 = vmax.f32 %v5271, %v5279
  %v5464 = vmax.f32 %v5272, %v5280
  %v5465 = vmax.f32 %v5273, %v5281
  %v5466 = vmax.f32 %v5274, %v5282
  %v5467 = vmax.f32 %v5275, %v5283
  %v5468 = vmax.f32 %v5276, %v5284
  %v5469 = vmax.f32 %v5285, %v5293
  %v5470 = vmax.f32 %v5286, %v5294
  %v5471 = vmax.f32 %v5287, %v5295
  %v5472 = vmax.f32 %v5288, %v5296
  %v5473 = vmax.f32 %v5289, %v5297
  %v5474 = vmax.f32 %v5290, %v5298
  %v5475 = vmax.f32 %v5291, %v5299
  %v5476 = vmax.f32 %v5292, %v5300
  %v5477 = vmax.f32 %v5301, %v5309
  %v5478 = vmax.f32 %v5302, %v5310
  %v5479 = vmax.f32 %v5303, %v5311
  %v5480 = vmax.f32 %v5304, %v5312
  %v5481 = vmax.f32 %v5305, %v5313
  %v5482 = vmax.f32 %v5306, %v5314
  %v5483 = vmax.f32 %v5307, %v5315
  %v5484 = vmax.f32 %v5308, %v5316
  %v5485 = vmax.f32 %v5317, %v5325
  %v5486 = vmax.f32 %v5318, %v5326
  %v5487 = vmax.f32 %v5319, %v5327
  %v5488 = vmax.f32 %v5320, %v5328
  %v5489 = vmax.f32 %v5321, %v5329
  %v5490 = vmax.f32 %v5322, %v5330
  %v5491 = vmax.f32 %v5323, %v5331
  %v5492 = vmax.f32 %v5324, %v5332
  %v5493 = vmax.f32 %v5333, %v5341
  %v5494 = vmax.f32 %v5334, %v5342
  %v5495 = vmax.f32 %v5335, %v5343
  %v5496 = vmax.f32 %v5336, %v5344
  %v5497 = vmax.f32 %v5337, %v5345
  %v5498 = vmax.f32 %v5338, %v5346
  %v5499 = vmax.f32 %v5339, %v5347
  %v5500 = vmax.f32 %v5340, %v5348
  %v5501 = vmax.f32 %v5349, %v5357
  %v5502 = vmax.f32 %v5350, %v5358
  %v5503 = vmax.f32 %v5351, %v5359
  %v5504 = vmax.f32 %v5352, %v5360
  %v5505 = vmax.f32 %v5353, %v5361
  %v5506 = vmax.f32 %v5354, %v5362
  %v5507 = vmax.f32 %v5355, %v5363
  %v5508 = vmax.f32 %v5356, %v5364
  %v5509 = vmax.f32 %v5365, %v5373
  %v5510 = vmax.f32 %v5366, %v5374
  %v5511 = vmax.f32 %v5367, %v5375
  %v5512 = vmax.f32 %v5368, %v5376
  %v5513 = vmax.f32 %v5369, %v5377
  %v5514 = vmax.f32 %v5370, %v5378
  %v5515 = vmax.f32 %v5371, %v5379
  %v5516 = vmax.f32 %v5372, %v5380
  %v5517 = vmax.f32 %v5381, %v5389
  %v5518 = vmax.f32 %v5382, %v5390
  %v5519 = vmax.f32 %v5383, %v5391
  %v5520 = vmax.f32 %v5384, %v5392
  %v5521 = vmax.f32 %v5385, %v5393
  %v5522 = vmax.f32 %v5386, %v5394
  %v5523 = vmax.f32 %v5387, %v5395
  %v5524 = vmax.f32 %v5388, %v5396
  %v5525 = vpack.c.bf16 %v5397, %v5397
  %v5526 = vpack.c.bf16 %v5398, %v5398
  %v5527 = vpack.c.bf16 %v5399, %v5399
  %v5528 = vpack.c.bf16 %v5400, %v5400
  %v5529 = vpack.c.bf16 %v5401, %v5401
  %v5530 = vpack.c.bf16 %v5402, %v5402
  %v5531 = vpack.c.bf16 %v5403, %v5403
  %v5532 = vpack.c.bf16 %v5404, %v5404
  %v5533 = vpack.c.bf16 %v5405, %v5405
  %v5534 = vpack.c.bf16 %v5406, %v5406
  %v5535 = vpack.c.bf16 %v5407, %v5407
  %v5536 = vpack.c.bf16 %v5408, %v5408
  %v5537 = vpack.c.bf16 %v5409, %v5409
  %v5538 = vpack.c.bf16 %v5410, %v5410
  %v5539 = vpack.c.bf16 %v5411, %v5411
  %v5540 = vpack.c.bf16 %v5412, %v5412
  %v5541 = vpack.c.bf16 %v5413, %v5413
  %v5542 = vpack.c.bf16 %v5414, %v5414
  %v5543 = vpack.c.bf16 %v5415, %v5415
  %v5544 = vpack.c.bf16 %v5416, %v5416
  %v5545 = vpack.c.bf16 %v5417, %v5417
  %v5546 = vpack.c.bf16 %v5418, %v5418
  %v5547 = vpack.c.bf16 %v5419, %v5419
  %v5548 = vpack.c.bf16 %v5420, %v5420
  %v5549 = vpack.c.bf16 %v5421, %v5421
  %v5550 = vpack.c.bf16 %v5422, %v5422
  %v5551 = vpack.c.bf16 %v5423, %v5423
  %v5552 = vpack.c.bf16 %v5424, %v5424
  %v5553 = vpack.c.bf16 %v5425, %v5425
  %v5554 = vpack.c.bf16 %v5426, %v5426
  %v5555 = vpack.c.bf16 %v5427, %v5427
  %v5556 = vpack.c.bf16 %v5428, %v5428
  %v5557 = vpack.c.bf16 %v5429, %v5429
  %v5558 = vpack.c.bf16 %v5430, %v5430
  %v5559 = vpack.c.bf16 %v5431, %v5431
  %v5560 = vpack.c.bf16 %v5432, %v5432
  %v5561 = vpack.c.bf16 %v5433, %v5433
  %v5562 = vpack.c.bf16 %v5434, %v5434
  %v5563 = vpack.c.bf16 %v5435, %v5435
  %v5564 = vpack.c.bf16 %v5436, %v5436
  %v5565 = vpack.c.bf16 %v5437, %v5437
  %v5566 = vpack.c.bf16 %v5438, %v5438
  %v5567 = vpack.c.bf16 %v5439, %v5439
  %v5568 = vpack.c.bf16 %v5440, %v5440
  %v5569 = vpack.c.bf16 %v5441, %v5441
  %v5570 = vpack.c.bf16 %v5442, %v5442
  %v5571 = vpack.c.bf16 %v5443, %v5443
  %v5572 = vpack.c.bf16 %v5444, %v5444
  %v5573 = vpack.c.bf16 %v5445, %v5445
  %v5574 = vpack.c.bf16 %v5446, %v5446
  %v5575 = vpack.c.bf16 %v5447, %v5447
  %v5576 = vpack.c.bf16 %v5448, %v5448
  %v5577 = vpack.c.bf16 %v5449, %v5449
  %v5578 = vpack.c.bf16 %v5450, %v5450
  %v5579 = vpack.c.bf16 %v5451, %v5451
  %v5580 = vpack.c.bf16 %v5452, %v5452
  %v5581 = vpack.c.bf16 %v5453, %v5453
  %v5582 = vpack.c.bf16 %v5454, %v5454
  %v5583 = vpack.c.bf16 %v5455, %v5455
  %v5584 = vpack.c.bf16 %v5456, %v5456
  %v5585 = vpack.c.bf16 %v5457, %v5457
  %v5586 = vpack.c.bf16 %v5458, %v5458
  %v5587 = vpack.c.bf16 %v5459, %v5459
  %v5588 = vpack.c.bf16 %v5460, %v5460
  %v5589 = vpack.c.bf16 %v5461, %v5461
  %v5590 = vpack.c.bf16 %v5462, %v5462
  %v5591 = vpack.c.bf16 %v5463, %v5463
  %v5592 = vpack.c.bf16 %v5464, %v5464
  %v5593 = vpack.c.bf16 %v5465, %v5465
  %v5594 = vpack.c.bf16 %v5466, %v5466
  %v5595 = vpack.c.bf16 %v5467, %v5467
  %v5596 = vpack.c.bf16 %v5468, %v5468
  %v5597 = vpack.c.bf16 %v5469, %v5469
  %v5598 = vpack.c.bf16 %v5470, %v5470
  %v5599 = vpack.c.bf16 %v5471, %v5471
  %v5600 = vpack.c.bf16 %v5472, %v5472
  %v5601 = vpack.c.bf16 %v5473, %v5473
  %v5602 = vpack.c.bf16 %v5474, %v5474
  %v5603 = vpack.c.bf16 %v5475, %v5475
  %v5604 = vpack.c.bf16 %v5476, %v5476
  %v5605 = vpack.c.bf16 %v5477, %v5477
  %v5606 = vpack.c.bf16 %v5478, %v5478
  %v5607 = vpack.c.bf16 %v5479, %v5479
  %v5608 = vpack.c.bf16 %v5480, %v5480
  %v5609 = vpack.c.bf16 %v5481, %v5481
  %v5610 = vpack.c.bf16 %v5482, %v5482
  %v5611 = vpack.c.bf16 %v5483, %v5483
  %v5612 = vpack.c.bf16 %v5484, %v5484
  %v5613 = vpack.c.bf16 %v5485, %v5485
  %v5614 = vpack.c.bf16 %v5486, %v5486
  %v5615 = vpack.c.bf16 %v5487, %v5487
  %v5616 = vpack.c.bf16 %v5488, %v5488
  %v5617 = vpack.c.bf16 %v5489, %v5489
  %v5618 = vpack.c.bf16 %v5490, %v5490
  %v5619 = vpack.c.bf16 %v5491, %v5491
  %v5620 = vpack.c.bf16 %v5492, %v5492
  %v5621 = vpack.c.bf16 %v5493, %v5493
  %v5622 = vpack.c.bf16 %v5494, %v5494
  %v5623 = vpack.c.bf16 %v5495, %v5495
  %v5624 = vpack.c.bf16 %v5496, %v5496
  %v5625 = vpack.c.bf16 %v5497, %v5497
  %v5626 = vpack.c.bf16 %v5498, %v5498
  %v5627 = vpack.c.bf16 %v5499, %v5499
  %v5628 = vpack.c.bf16 %v5500, %v5500
  %v5629 = vpack.c.bf16 %v5501, %v5501
  %v5630 = vpack.c.bf16 %v5502, %v5502
  %v5631 = vpack.c.bf16 %v5503, %v5503
  %v5632 = vpack.c.bf16 %v5504, %v5504
  %v5633 = vpack.c.bf16 %v5505, %v5505
  %v5634 = vpack.c.bf16 %v5506, %v5506
  %v5635 = vpack.c.bf16 %v5507, %v5507
  %v5636 = vpack.c.bf16 %v5508, %v5508
  %v5637 = vpack.c.bf16 %v5509, %v5509
  %v5638 = vpack.c.bf16 %v5510, %v5510
  %v5639 = vpack.c.bf16 %v5511, %v5511
  %v5640 = vpack.c.bf16 %v5512, %v5512
  %v5641 = vpack.c.bf16 %v5513, %v5513
  %v5642 = vpack.c.bf16 %v5514, %v5514
  %v5643 = vpack.c.bf16 %v5515, %v5515
  %v5644 = vpack.c.bf16 %v5516, %v5516
  %v5645 = vpack.c.bf16 %v5517, %v5517
  %v5646 = vpack.c.bf16 %v5518, %v5518
  %v5647 = vpack.c.bf16 %v5519, %v5519
  %v5648 = vpack.c.bf16 %v5520, %v5520
  %v5649 = vpack.c.bf16 %v5521, %v5521
  %v5650 = vpack.c.bf16 %v5522, %v5522
  %v5651 = vpack.c.bf16 %v5523, %v5523
  %v5652 = vpack.c.bf16 %v5524, %v5524
  %v5781 = vunpack.c.l.b16 %v5525
  %v5782 = vunpack.c.l.b16 %v5526
  %v5783 = vunpack.c.l.b16 %v5527
  %v5784 = vunpack.c.l.b16 %v5528
  %v5785 = vunpack.c.l.b16 %v5529
  %v5786 = vunpack.c.l.b16 %v5530
  %v5787 = vunpack.c.l.b16 %v5531
  %v5788 = vunpack.c.l.b16 %v5532
  %v5789 = vunpack.c.l.b16 %v5533
  %v5790 = vunpack.c.l.b16 %v5534
  %v5791 = vunpack.c.l.b16 %v5535
  %v5792 = vunpack.c.l.b16 %v5536
  %v5793 = vunpack.c.l.b16 %v5537
  %v5794 = vunpack.c.l.b16 %v5538
  %v5795 = vunpack.c.l.b16 %v5539
  %v5796 = vunpack.c.l.b16 %v5540
  %v5797 = vunpack.c.l.b16 %v5541
  %v5798 = vunpack.c.l.b16 %v5542
  %v5799 = vunpack.c.l.b16 %v5543
  %v5800 = vunpack.c.l.b16 %v5544
  %v5801 = vunpack.c.l.b16 %v5545
  %v5802 = vunpack.c.l.b16 %v5546
  %v5803 = vunpack.c.l.b16 %v5547
  %v5804 = vunpack.c.l.b16 %v5548
  %v5805 = vunpack.c.l.b16 %v5549
  %v5806 = vunpack.c.l.b16 %v5550
  %v5807 = vunpack.c.l.b16 %v5551
  %v5808 = vunpack.c.l.b16 %v5552
  %v5809 = vunpack.c.l.b16 %v5553
  %v5810 = vunpack.c.l.b16 %v5554
  %v5811 = vunpack.c.l.b16 %v5555
  %v5812 = vunpack.c.l.b16 %v5556
  %v5813 = vunpack.c.l.b16 %v5557
  %v5814 = vunpack.c.l.b16 %v5558
  %v5815 = vunpack.c.l.b16 %v5559
  %v5816 = vunpack.c.l.b16 %v5560
  %v5817 = vunpack.c.l.b16 %v5561
  %v5818 = vunpack.c.l.b16 %v5562
  %v5819 = vunpack.c.l.b16 %v5563
  %v5820 = vunpack.c.l.b16 %v5564
  %v5821 = vunpack.c.l.b16 %v5565
  %v5822 = vunpack.c.l.b16 %v5566
  %v5823 = vunpack.c.l.b16 %v5567
  %v5824 = vunpack.c.l.b16 %v5568
  %v5825 = vunpack.c.l.b16 %v5569
  %v5826 = vunpack.c.l.b16 %v5570
  %v5827 = vunpack.c.l.b16 %v5571
  %v5828 = vunpack.c.l.b16 %v5572
  %v5829 = vunpack.c.l.b16 %v5573
  %v5830 = vunpack.c.l.b16 %v5574
  %v5831 = vunpack.c.l.b16 %v5575
  %v5832 = vunpack.c.l.b16 %v5576
  %v5833 = vunpack.c.l.b16 %v5577
  %v5834 = vunpack.c.l.b16 %v5578
  %v5835 = vunpack.c.l.b16 %v5579
  %v5836 = vunpack.c.l.b16 %v5580
  %v5837 = vunpack.c.l.b16 %v5581
  %v5838 = vunpack.c.l.b16 %v5582
  %v5839 = vunpack.c.l.b16 %v5583
  %v5840 = vunpack.c.l.b16 %v5584
  %v5841 = vunpack.c.l.b16 %v5585
  %v5842 = vunpack.c.l.b16 %v5586
  %v5843 = vunpack.c.l.b16 %v5587
  %v5844 = vunpack.c.l.b16 %v5588
  %v5845 = vunpack.c.l.b16 %v5589
  %v5846 = vunpack.c.l.b16 %v5590
  %v5847 = vunpack.c.l.b16 %v5591
  %v5848 = vunpack.c.l.b16 %v5592
  %v5849 = vunpack.c.l.b16 %v5593
  %v5850 = vunpack.c.l.b16 %v5594
  %v5851 = vunpack.c.l.b16 %v5595
  %v5852 = vunpack.c.l.b16 %v5596
  %v5853 = vunpack.c.l.b16 %v5597
  %v5854 = vunpack.c.l.b16 %v5598
  %v5855 = vunpack.c.l.b16 %v5599
  %v5856 = vunpack.c.l.b16 %v5600
  %v5857 = vunpack.c.l.b16 %v5601
  %v5858 = vunpack.c.l.b16 %v5602
  %v5859 = vunpack.c.l.b16 %v5603
  %v5860 = vunpack.c.l.b16 %v5604
  %v5861 = vunpack.c.l.b16 %v5605
  %v5862 = vunpack.c.l.b16 %v5606
  %v5863 = vunpack.c.l.b16 %v5607
  %v5864 = vunpack.c.l.b16 %v5608
  %v5865 = vunpack.c.l.b16 %v5609
  %v5866 = vunpack.c.l.b16 %v5610
  %v5867 = vunpack.c.l.b16 %v5611
  %v5868 = vunpack.c.l.b16 %v5612
  %v5869 = vunpack.c.l.b16 %v5613
  %v5870 = vunpack.c.l.b16 %v5614
  %v5871 = vunpack.c.l.b16 %v5615
  %v5872 = vunpack.c.l.b16 %v5616
  %v5873 = vunpack.c.l.b16 %v5617
  %v5874 = vunpack.c.l.b16 %v5618
  %v5875 = vunpack.c.l.b16 %v5619
  %v5876 = vunpack.c.l.b16 %v5620
  %v5877 = vunpack.c.l.b16 %v5621
  %v5878 = vunpack.c.l.b16 %v5622
  %v5879 = vunpack.c.l.b16 %v5623
  %v5880 = vunpack.c.l.b16 %v5624
  %v5881 = vunpack.c.l.b16 %v5625
  %v5882 = vunpack.c.l.b16 %v5626
  %v5883 = vunpack.c.l.b16 %v5627
  %v5884 = vunpack.c.l.b16 %v5628
  %v5885 = vunpack.c.l.b16 %v5629
  %v5886 = vunpack.c.l.b16 %v5630
  %v5887 = vunpack.c.l.b16 %v5631
  %v5888 = vunpack.c.l.b16 %v5632
  %v5889 = vunpack.c.l.b16 %v5633
  %v5890 = vunpack.c.l.b16 %v5634
  %v5891 = vunpack.c.l.b16 %v5635
  %v5892 = vunpack.c.l.b16 %v5636
  %v5893 = vunpack.c.l.b16 %v5637
  %v5894 = vunpack.c.l.b16 %v5638
  %v5895 = vunpack.c.l.b16 %v5639
  %v5896 = vunpack.c.l.b16 %v5640
  %v5897 = vunpack.c.l.b16 %v5641
  %v5898 = vunpack.c.l.b16 %v5642
  %v5899 = vunpack.c.l.b16 %v5643
  %v5900 = vunpack.c.l.b16 %v5644
  %v5901 = vunpack.c.l.b16 %v5645
  %v5902 = vunpack.c.l.b16 %v5646
  %v5903 = vunpack.c.l.b16 %v5647
  %v5904 = vunpack.c.l.b16 %v5648
  %v5905 = vunpack.c.l.b16 %v5649
  %v5906 = vunpack.c.l.b16 %v5650
  %v5907 = vunpack.c.l.b16 %v5651
  %v5908 = vunpack.c.l.b16 %v5652
  %v5909 = vpack.c.b16 %v5781, %v5781
  %v5910 = vpack.c.b16 %v5782, %v5782
  %v5911 = vpack.c.b16 %v5783, %v5783
  %v5912 = vpack.c.b16 %v5784, %v5784
  %v5913 = vpack.c.b16 %v5785, %v5785
  %v5914 = vpack.c.b16 %v5786, %v5786
  %v5915 = vpack.c.b16 %v5787, %v5787
  %v5916 = vpack.c.b16 %v5788, %v5788
  %v5917 = vpack.c.b16 %v5789, %v5789
  %v5918 = vpack.c.b16 %v5790, %v5790
  %v5919 = vpack.c.b16 %v5791, %v5791
  %v5920 = vpack.c.b16 %v5792, %v5792
  %v5921 = vpack.c.b16 %v5793, %v5793
  %v5922 = vpack.c.b16 %v5794, %v5794
  %v5923 = vpack.c.b16 %v5795, %v5795
  %v5924 = vpack.c.b16 %v5796, %v5796
  %v5925 = vpack.c.b16 %v5797, %v5797
  %v5926 = vpack.c.b16 %v5798, %v5798
  %v5927 = vpack.c.b16 %v5799, %v5799
  %v5928 = vpack.c.b16 %v5800, %v5800
  %v5929 = vpack.c.b16 %v5801, %v5801
  %v5930 = vpack.c.b16 %v5802, %v5802
  %v5931 = vpack.c.b16 %v5803, %v5803
  %v5932 = vpack.c.b16 %v5804, %v5804
  %v5933 = vpack.c.b16 %v5805, %v5805
  %v5934 = vpack.c.b16 %v5806, %v5806
  %v5935 = vpack.c.b16 %v5807, %v5807
  %v5936 = vpack.c.b16 %v5808, %v5808
  %v5937 = vpack.c.b16 %v5809, %v5809
  %v5938 = vpack.c.b16 %v5810, %v5810
  %v5939 = vpack.c.b16 %v5811, %v5811
  %v5940 = vpack.c.b16 %v5812, %v5812
  %v5941 = vpack.c.b16 %v5813, %v5813
  %v5942 = vpack.c.b16 %v5814, %v5814
  %v5943 = vpack.c.b16 %v5815, %v5815
  %v5944 = vpack.c.b16 %v5816, %v5816
  %v5945 = vpack.c.b16 %v5817, %v5817
  %v5946 = vpack.c.b16 %v5818, %v5818
  %v5947 = vpack.c.b16 %v5819, %v5819
  %v5948 = vpack.c.b16 %v5820, %v5820
  %v5949 = vpack.c.b16 %v5821, %v5821
  %v5950 = vpack.c.b16 %v5822, %v5822
  %v5951 = vpack.c.b16 %v5823, %v5823
  %v5952 = vpack.c.b16 %v5824, %v5824
  %v5953 = vpack.c.b16 %v5825, %v5825
  %v5954 = vpack.c.b16 %v5826, %v5826
  %v5955 = vpack.c.b16 %v5827, %v5827
  %v5956 = vpack.c.b16 %v5828, %v5828
  %v5957 = vpack.c.b16 %v5829, %v5829
  %v5958 = vpack.c.b16 %v5830, %v5830
  %v5959 = vpack.c.b16 %v5831, %v5831
  %v5960 = vpack.c.b16 %v5832, %v5832
  %v5961 = vpack.c.b16 %v5833, %v5833
  %v5962 = vpack.c.b16 %v5834, %v5834
  %v5963 = vpack.c.b16 %v5835, %v5835
  %v5964 = vpack.c.b16 %v5836, %v5836
  %v5965 = vpack.c.b16 %v5837, %v5837
  %v5966 = vpack.c.b16 %v5838, %v5838
  %v5967 = vpack.c.b16 %v5839, %v5839
  %v5968 = vpack.c.b16 %v5840, %v5840
  %v5969 = vpack.c.b16 %v5841, %v5841
  %v5970 = vpack.c.b16 %v5842, %v5842
  %v5971 = vpack.c.b16 %v5843, %v5843
  %v5972 = vpack.c.b16 %v5844, %v5844
  %v5973 = vpack.c.b16 %v5845, %v5845
  %v5974 = vpack.c.b16 %v5846, %v5846
  %v5975 = vpack.c.b16 %v5847, %v5847
  %v5976 = vpack.c.b16 %v5848, %v5848
  %v5977 = vpack.c.b16 %v5849, %v5849
  %v5978 = vpack.c.b16 %v5850, %v5850
  %v5979 = vpack.c.b16 %v5851, %v5851
  %v5980 = vpack.c.b16 %v5852, %v5852
  %v5981 = vpack.c.b16 %v5853, %v5853
  %v5982 = vpack.c.b16 %v5854, %v5854
  %v5983 = vpack.c.b16 %v5855, %v5855
  %v5984 = vpack.c.b16 %v5856, %v5856
  %v5985 = vpack.c.b16 %v5857, %v5857
  %v5986 = vpack.c.b16 %v5858, %v5858
  %v5987 = vpack.c.b16 %v5859, %v5859
  %v5988 = vpack.c.b16 %v5860, %v5860
  %v5989 = vpack.c.b16 %v5861, %v5861
  %v5990 = vpack.c.b16 %v5862, %v5862
  %v5991 = vpack.c.b16 %v5863, %v5863
  %v5992 = vpack.c.b16 %v5864, %v5864
  %v5993 = vpack.c.b16 %v5865, %v5865
  %v5994 = vpack.c.b16 %v5866, %v5866
  %v5995 = vpack.c.b16 %v5867, %v5867
  %v5996 = vpack.c.b16 %v5868, %v5868
  %v5997 = vpack.c.b16 %v5869, %v5869
  %v5998 = vpack.c.b16 %v5870, %v5870
  %v5999 = vpack.c.b16 %v5871, %v5871
  %v6000 = vpack.c.b16 %v5872, %v5872
  %v6001 = vpack.c.b16 %v5873, %v5873
  %v6002 = vpack.c.b16 %v5874, %v5874
  %v6003 = vpack.c.b16 %v5875, %v5875
  %v6004 = vpack.c.b16 %v5876, %v5876
  %v6005 = vpack.c.b16 %v5877, %v5877
  %v6006 = vpack.c.b16 %v5878, %v5878
  %v6007 = vpack.c.b16 %v5879, %v5879
  %v6008 = vpack.c.b16 %v5880, %v5880
  %v6009 = vpack.c.b16 %v5881, %v5881
  %v6010 = vpack.c.b16 %v5882, %v5882
  %v6011 = vpack.c.b16 %v5883, %v5883
  %v6012 = vpack.c.b16 %v5884, %v5884
  %v6013 = vpack.c.b16 %v5885, %v5885
  %v6014 = vpack.c.b16 %v5886, %v5886
  %v6015 = vpack.c.b16 %v5887, %v5887
  %v6016 = vpack.c.b16 %v5888, %v5888
  %v6017 = vpack.c.b16 %v5889, %v5889
  %v6018 = vpack.c.b16 %v5890, %v5890
  %v6019 = vpack.c.b16 %v5891, %v5891
  %v6020 = vpack.c.b16 %v5892, %v5892
  %v6021 = vpack.c.b16 %v5893, %v5893
  %v6022 = vpack.c.b16 %v5894, %v5894
  %v6023 = vpack.c.b16 %v5895, %v5895
  %v6024 = vpack.c.b16 %v5896, %v5896
  %v6025 = vpack.c.b16 %v5897, %v5897
  %v6026 = vpack.c.b16 %v5898, %v5898
  %v6027 = vpack.c.b16 %v5899, %v5899
  %v6028 = vpack.c.b16 %v5900, %v5900
  %v6029 = vpack.c.b16 %v5901, %v5901
  %v6030 = vpack.c.b16 %v5902, %v5902
  %v6031 = vpack.c.b16 %v5903, %v5903
  %v6032 = vpack.c.b16 %v5904, %v5904
  %v6033 = vpack.c.b16 %v5905, %v5905
  %v6034 = vpack.c.b16 %v5906, %v5906
  %v6035 = vpack.c.b16 %v5907, %v5907
  %v6036 = vpack.c.b16 %v5908, %v5908
  %v6037 = vunpack.c.l.b16 %v5909
  %v6038 = vunpack.c.l.b16 %v5910
  %v6039 = vunpack.c.l.b16 %v5911
  %v6040 = vunpack.c.l.b16 %v5912
  %v6041 = vunpack.c.l.b16 %v5913
  %v6042 = vunpack.c.l.b16 %v5914
  %v6043 = vunpack.c.l.b16 %v5915
  %v6044 = vunpack.c.l.b16 %v5916
  %v6045 = vunpack.c.l.b16 %v5917
  %v6046 = vunpack.c.l.b16 %v5918
  %v6047 = vunpack.c.l.b16 %v5919
  %v6048 = vunpack.c.l.b16 %v5920
  %v6049 = vunpack.c.l.b16 %v5921
  %v6050 = vunpack.c.l.b16 %v5922
  %v6051 = vunpack.c.l.b16 %v5923
  %v6052 = vunpack.c.l.b16 %v5924
  %v6053 = vunpack.c.l.b16 %v5925
  %v6054 = vunpack.c.l.b16 %v5926
  %v6055 = vunpack.c.l.b16 %v5927
  %v6056 = vunpack.c.l.b16 %v5928
  %v6057 = vunpack.c.l.b16 %v5929
  %v6058 = vunpack.c.l.b16 %v5930
  %v6059 = vunpack.c.l.b16 %v5931
  %v6060 = vunpack.c.l.b16 %v5932
  %v6061 = vunpack.c.l.b16 %v5933
  %v6062 = vunpack.c.l.b16 %v5934
  %v6063 = vunpack.c.l.b16 %v5935
  %v6064 = vunpack.c.l.b16 %v5936
  %v6065 = vunpack.c.l.b16 %v5937
  %v6066 = vunpack.c.l.b16 %v5938
  %v6067 = vunpack.c.l.b16 %v5939
  %v6068 = vunpack.c.l.b16 %v5940
  %v6069 = vunpack.c.l.b16 %v5941
  %v6070 = vunpack.c.l.b16 %v5942
  %v6071 = vunpack.c.l.b16 %v5943
  %v6072 = vunpack.c.l.b16 %v5944
  %v6073 = vunpack.c.l.b16 %v5945
  %v6074 = vunpack.c.l.b16 %v5946
  %v6075 = vunpack.c.l.b16 %v5947
  %v6076 = vunpack.c.l.b16 %v5948
  %v6077 = vunpack.c.l.b16 %v5949
  %v6078 = vunpack.c.l.b16 %v5950
  %v6079 = vunpack.c.l.b16 %v5951
  %v6080 = vunpack.c.l.b16 %v5952
  %v6081 = vunpack.c.l.b16 %v5953
  %v6082 = vunpack.c.l.b16 %v5954
  %v6083 = vunpack.c.l.b16 %v5955
  %v6084 = vunpack.c.l.b16 %v5956
  %v6085 = vunpack.c.l.b16 %v5957
  %v6086 = vunpack.c.l.b16 %v5958
  %v6087 = vunpack.c.l.b16 %v5959
  %v6088 = vunpack.c.l.b16 %v5960
  %v6089 = vunpack.c.l.b16 %v5961
  %v6090 = vunpack.c.l.b16 %v5962
  %v6091 = vunpack.c.l.b16 %v5963
  %v6092 = vunpack.c.l.b16 %v5964
  %v6093 = vunpack.c.l.b16 %v5965
  %v6094 = vunpack.c.l.b16 %v5966
  %v6095 = vunpack.c.l.b16 %v5967
  %v6096 = vunpack.c.l.b16 %v5968
  %v6097 = vunpack.c.l.b16 %v5969
  %v6098 = vunpack.c.l.b16 %v5970
  %v6099 = vunpack.c.l.b16 %v5971
  %v6100 = vunpack.c.l.b16 %v5972
  %v6101 = vunpack.c.l.b16 %v5973
  %v6102 = vunpack.c.l.b16 %v5974
  %v6103 = vunpack.c.l.b16 %v5975
  %v6104 = vunpack.c.l.b16 %v5976
  %v6105 = vunpack.c.l.b16 %v5977
  %v6106 = vunpack.c.l.b16 %v5978
  %v6107 = vunpack.c.l.b16 %v5979
  %v6108 = vunpack.c.l.b16 %v5980
  %v6109 = vunpack.c.l.b16 %v5981
  %v6110 = vunpack.c.l.b16 %v5982
  %v6111 = vunpack.c.l.b16 %v5983
  %v6112 = vunpack.c.l.b16 %v5984
  %v6113 = vunpack.c.l.b16 %v5985
  %v6114 = vunpack.c.l.b16 %v5986
  %v6115 = vunpack.c.l.b16 %v5987
  %v6116 = vunpack.c.l.b16 %v5988
  %v6117 = vunpack.c.l.b16 %v5989
  %v6118 = vunpack.c.l.b16 %v5990
  %v6119 = vunpack.c.l.b16 %v5991
  %v6120 = vunpack.c.l.b16 %v5992
  %v6121 = vunpack.c.l.b16 %v5993
  %v6122 = vunpack.c.l.b16 %v5994
  %v6123 = vunpack.c.l.b16 %v5995
  %v6124 = vunpack.c.l.b16 %v5996
  %v6125 = vunpack.c.l.b16 %v5997
  %v6126 = vunpack.c.l.b16 %v5998
  %v6127 = vunpack.c.l.b16 %v5999
  %v6128 = vunpack.c.l.b16 %v6000
  %v6129 = vunpack.c.l.b16 %v6001
  %v6130 = vunpack.c.l.b16 %v6002
  %v6131 = vunpack.c.l.b16 %v6003
  %v6132 = vunpack.c.l.b16 %v6004
  %v6133 = vunpack.c.l.b16 %v6005
  %v6134 = vunpack.c.l.b16 %v6006
  %v6135 = vunpack.c.l.b16 %v6007
  %v6136 = vunpack.c.l.b16 %v6008
  %v6137 = vunpack.c.l.b16 %v6009
  %v6138 = vunpack.c.l.b16 %v6010
  %v6139 = vunpack.c.l.b16 %v6011
  %v6140 = vunpack.c.l.b16 %v6012
  %v6141 = vunpack.c.l.b16 %v6013
  %v6142 = vunpack.c.l.b16 %v6014
  %v6143 = vunpack.c.l.b16 %v6015
  %v6144 = vunpack.c.l.b16 %v6016
  %v6145 = vunpack.c.l.b16 %v6017
  %v6146 = vunpack.c.l.b16 %v6018
  %v6147 = vunpack.c.l.b16 %v6019
  %v6148 = vunpack.c.l.b16 %v6020
  %v6149 = vunpack.c.l.b16 %v6021
  %v6150 = vunpack.c.l.b16 %v6022
  %v6151 = vunpack.c.l.b16 %v6023
  %v6152 = vunpack.c.l.b16 %v6024
  %v6153 = vunpack.c.l.b16 %v6025
  %v6154 = vunpack.c.l.b16 %v6026
  %v6155 = vunpack.c.l.b16 %v6027
  %v6156 = vunpack.c.l.b16 %v6028
  %v6157 = vunpack.c.l.b16 %v6029
  %v6158 = vunpack.c.l.b16 %v6030
  %v6159 = vunpack.c.l.b16 %v6031
  %v6160 = vunpack.c.l.b16 %v6032
  %v6161 = vunpack.c.l.b16 %v6033
  %v6162 = vunpack.c.l.b16 %v6034
  %v6163 = vunpack.c.l.b16 %v6035
  %v6164 = vunpack.c.l.b16 %v6036
  %v6165 = vrot.slane %v6038, 7
  %vm6166 = vcmask 1041409
  %v6167 = vsel %vm6166, %v6165, %v6037
  %v6168 = vrot.slane %v6039, 6
  %vm6169 = vcmask 1042434
  %v6170 = vsel %vm6169, %v6168, %v6167
  %v6171 = vrot.slane %v6040, 5
  %vm6172 = vcmask 1043459
  %v6173 = vsel %vm6172, %v6171, %v6170
  %v6174 = vrot.slane %v6041, 4
  %vm6175 = vcmask 1044484
  %v6176 = vsel %vm6175, %v6174, %v6173
  %v6177 = vrot.slane %v6042, 3
  %vm6178 = vcmask 1045509
  %v6179 = vsel %vm6178, %v6177, %v6176
  %v6180 = vrot.slane %v6043, 2
  %vm6181 = vcmask 1046534
  %v6182 = vsel %vm6181, %v6180, %v6179
  %v6183 = vrot.slane %v6044, 1
  %vm6184 = vcmask 1047559
  %v6185 = vsel %vm6184, %v6183, %v6182
  %v6186 = vrot.slane %v6046, 7
  %v6187 = vsel %vm6166, %v6186, %v6045
  %v6188 = vrot.slane %v6047, 6
  %v6189 = vsel %vm6169, %v6188, %v6187
  %v6190 = vrot.slane %v6048, 5
  %v6191 = vsel %vm6172, %v6190, %v6189
  %v6192 = vrot.slane %v6049, 4
  %v6193 = vsel %vm6175, %v6192, %v6191
  %v6194 = vrot.slane %v6050, 3
  %v6195 = vsel %vm6178, %v6194, %v6193
  %v6196 = vrot.slane %v6051, 2
  %v6197 = vsel %vm6181, %v6196, %v6195
  %v6198 = vrot.slane %v6052, 1
  %v6199 = vsel %vm6184, %v6198, %v6197
  %v6200 = vrot.slane %v6054, 7
  %v6201 = vsel %vm6166, %v6200, %v6053
  %v6202 = vrot.slane %v6055, 6
  %v6203 = vsel %vm6169, %v6202, %v6201
  %v6204 = vrot.slane %v6056, 5
  %v6205 = vsel %vm6172, %v6204, %v6203
  %v6206 = vrot.slane %v6057, 4
  %v6207 = vsel %vm6175, %v6206, %v6205
  %v6208 = vrot.slane %v6058, 3
  %v6209 = vsel %vm6178, %v6208, %v6207
  %v6210 = vrot.slane %v6059, 2
  %v6211 = vsel %vm6181, %v6210, %v6209
  %v6212 = vrot.slane %v6060, 1
  %v6213 = vsel %vm6184, %v6212, %v6211
  %v6214 = vrot.slane %v6062, 7
  %v6215 = vsel %vm6166, %v6214, %v6061
  %v6216 = vrot.slane %v6063, 6
  %v6217 = vsel %vm6169, %v6216, %v6215
  %v6218 = vrot.slane %v6064, 5
  %v6219 = vsel %vm6172, %v6218, %v6217
  %v6220 = vrot.slane %v6065, 4
  %v6221 = vsel %vm6175, %v6220, %v6219
  %v6222 = vrot.slane %v6066, 3
  %v6223 = vsel %vm6178, %v6222, %v6221
  %v6224 = vrot.slane %v6067, 2
  %v6225 = vsel %vm6181, %v6224, %v6223
  %v6226 = vrot.slane %v6068, 1
  %v6227 = vsel %vm6184, %v6226, %v6225
  %v6228 = vrot.slane %v6070, 7
  %v6229 = vsel %vm6166, %v6228, %v6069
  %v6230 = vrot.slane %v6071, 6
  %v6231 = vsel %vm6169, %v6230, %v6229
  %v6232 = vrot.slane %v6072, 5
  %v6233 = vsel %vm6172, %v6232, %v6231
  %v6234 = vrot.slane %v6073, 4
  %v6235 = vsel %vm6175, %v6234, %v6233
  %v6236 = vrot.slane %v6074, 3
  %v6237 = vsel %vm6178, %v6236, %v6235
  %v6238 = vrot.slane %v6075, 2
  %v6239 = vsel %vm6181, %v6238, %v6237
  %v6240 = vrot.slane %v6076, 1
  %v6241 = vsel %vm6184, %v6240, %v6239
  %v6242 = vrot.slane %v6078, 7
  %v6243 = vsel %vm6166, %v6242, %v6077
  %v6244 = vrot.slane %v6079, 6
  %v6245 = vsel %vm6169, %v6244, %v6243
  %v6246 = vrot.slane %v6080, 5
  %v6247 = vsel %vm6172, %v6246, %v6245
  %v6248 = vrot.slane %v6081, 4
  %v6249 = vsel %vm6175, %v6248, %v6247
  %v6250 = vrot.slane %v6082, 3
  %v6251 = vsel %vm6178, %v6250, %v6249
  %v6252 = vrot.slane %v6083, 2
  %v6253 = vsel %vm6181, %v6252, %v6251
  %v6254 = vrot.slane %v6084, 1
  %v6255 = vsel %vm6184, %v6254, %v6253
  %v6256 = vrot.slane %v6086, 7
  %v6257 = vsel %vm6166, %v6256, %v6085
  %v6258 = vrot.slane %v6087, 6
  %v6259 = vsel %vm6169, %v6258, %v6257
  %v6260 = vrot.slane %v6088, 5
  %v6261 = vsel %vm6172, %v6260, %v6259
  %v6262 = vrot.slane %v6089, 4
  %v6263 = vsel %vm6175, %v6262, %v6261
  %v6264 = vrot.slane %v6090, 3
  %v6265 = vsel %vm6178, %v6264, %v6263
  %v6266 = vrot.slane %v6091, 2
  %v6267 = vsel %vm6181, %v6266, %v6265
  %v6268 = vrot.slane %v6092, 1
  %v6269 = vsel %vm6184, %v6268, %v6267
  %v6270 = vrot.slane %v6094, 7
  %v6271 = vsel %vm6166, %v6270, %v6093
  %v6272 = vrot.slane %v6095, 6
  %v6273 = vsel %vm6169, %v6272, %v6271
  %v6274 = vrot.slane %v6096, 5
  %v6275 = vsel %vm6172, %v6274, %v6273
  %v6276 = vrot.slane %v6097, 4
  %v6277 = vsel %vm6175, %v6276, %v6275
  %v6278 = vrot.slane %v6098, 3
  %v6279 = vsel %vm6178, %v6278, %v6277
  %v6280 = vrot.slane %v6099, 2
  %v6281 = vsel %vm6181, %v6280, %v6279
  %v6282 = vrot.slane %v6100, 1
  %v6283 = vsel %vm6184, %v6282, %v6281
  %v6284 = vrot.slane %v6102, 7
  %v6285 = vsel %vm6166, %v6284, %v6101
  %v6286 = vrot.slane %v6103, 6
  %v6287 = vsel %vm6169, %v6286, %v6285
  %v6288 = vrot.slane %v6104, 5
  %v6289 = vsel %vm6172, %v6288, %v6287
  %v6290 = vrot.slane %v6105, 4
  %v6291 = vsel %vm6175, %v6290, %v6289
  %v6292 = vrot.slane %v6106, 3
  %v6293 = vsel %vm6178, %v6292, %v6291
  %v6294 = vrot.slane %v6107, 2
  %v6295 = vsel %vm6181, %v6294, %v6293
  %v6296 = vrot.slane %v6108, 1
  %v6297 = vsel %vm6184, %v6296, %v6295
  %v6298 = vrot.slane %v6110, 7
  %v6299 = vsel %vm6166, %v6298, %v6109
  %v6300 = vrot.slane %v6111, 6
  %v6301 = vsel %vm6169, %v6300, %v6299
  %v6302 = vrot.slane %v6112, 5
  %v6303 = vsel %vm6172, %v6302, %v6301
  %v6304 = vrot.slane %v6113, 4
  %v6305 = vsel %vm6175, %v6304, %v6303
  %v6306 = vrot.slane %v6114, 3
  %v6307 = vsel %vm6178, %v6306, %v6305
  %v6308 = vrot.slane %v6115, 2
  %v6309 = vsel %vm6181, %v6308, %v6307
  %v6310 = vrot.slane %v6116, 1
  %v6311 = vsel %vm6184, %v6310, %v6309
  %v6312 = vrot.slane %v6118, 7
  %v6313 = vsel %vm6166, %v6312, %v6117
  %v6314 = vrot.slane %v6119, 6
  %v6315 = vsel %vm6169, %v6314, %v6313
  %v6316 = vrot.slane %v6120, 5
  %v6317 = vsel %vm6172, %v6316, %v6315
  %v6318 = vrot.slane %v6121, 4
  %v6319 = vsel %vm6175, %v6318, %v6317
  %v6320 = vrot.slane %v6122, 3
  %v6321 = vsel %vm6178, %v6320, %v6319
  %v6322 = vrot.slane %v6123, 2
  %v6323 = vsel %vm6181, %v6322, %v6321
  %v6324 = vrot.slane %v6124, 1
  %v6325 = vsel %vm6184, %v6324, %v6323
  %v6326 = vrot.slane %v6126, 7
  %v6327 = vsel %vm6166, %v6326, %v6125
  %v6328 = vrot.slane %v6127, 6
  %v6329 = vsel %vm6169, %v6328, %v6327
  %v6330 = vrot.slane %v6128, 5
  %v6331 = vsel %vm6172, %v6330, %v6329
  %v6332 = vrot.slane %v6129, 4
  %v6333 = vsel %vm6175, %v6332, %v6331
  %v6334 = vrot.slane %v6130, 3
  %v6335 = vsel %vm6178, %v6334, %v6333
  %v6336 = vrot.slane %v6131, 2
  %v6337 = vsel %vm6181, %v6336, %v6335
  %v6338 = vrot.slane %v6132, 1
  %v6339 = vsel %vm6184, %v6338, %v6337
  %v6340 = vrot.slane %v6134, 7
  %v6341 = vsel %vm6166, %v6340, %v6133
  %v6342 = vrot.slane %v6135, 6
  %v6343 = vsel %vm6169, %v6342, %v6341
  %v6344 = vrot.slane %v6136, 5
  %v6345 = vsel %vm6172, %v6344, %v6343
  %v6346 = vrot.slane %v6137, 4
  %v6347 = vsel %vm6175, %v6346, %v6345
  %v6348 = vrot.slane %v6138, 3
  %v6349 = vsel %vm6178, %v6348, %v6347
  %v6350 = vrot.slane %v6139, 2
  %v6351 = vsel %vm6181, %v6350, %v6349
  %v6352 = vrot.slane %v6140, 1
  %v6353 = vsel %vm6184, %v6352, %v6351
  %v6354 = vrot.slane %v6142, 7
  %v6355 = vsel %vm6166, %v6354, %v6141
  %v6356 = vrot.slane %v6143, 6
  %v6357 = vsel %vm6169, %v6356, %v6355
  %v6358 = vrot.slane %v6144, 5
  %v6359 = vsel %vm6172, %v6358, %v6357
  %v6360 = vrot.slane %v6145, 4
  %v6361 = vsel %vm6175, %v6360, %v6359
  %v6362 = vrot.slane %v6146, 3
  %v6363 = vsel %vm6178, %v6362, %v6361
  %v6364 = vrot.slane %v6147, 2
  %v6365 = vsel %vm6181, %v6364, %v6363
  %v6366 = vrot.slane %v6148, 1
  %v6367 = vsel %vm6184, %v6366, %v6365
  %v6368 = vrot.slane %v6150, 7
  %v6369 = vsel %vm6166, %v6368, %v6149
  %v6370 = vrot.slane %v6151, 6
  %v6371 = vsel %vm6169, %v6370, %v6369
  %v6372 = vrot.slane %v6152, 5
  %v6373 = vsel %vm6172, %v6372, %v6371
  %v6374 = vrot.slane %v6153, 4
  %v6375 = vsel %vm6175, %v6374, %v6373
  %v6376 = vrot.slane %v6154, 3
  %v6377 = vsel %vm6178, %v6376, %v6375
  %v6378 = vrot.slane %v6155, 2
  %v6379 = vsel %vm6181, %v6378, %v6377
  %v6380 = vrot.slane %v6156, 1
  %v6381 = vsel %vm6184, %v6380, %v6379
  %v6382 = vrot.slane %v6158, 7
  %v6383 = vsel %vm6166, %v6382, %v6157
  %v6384 = vrot.slane %v6159, 6
  %v6385 = vsel %vm6169, %v6384, %v6383
  %v6386 = vrot.slane %v6160, 5
  %v6387 = vsel %vm6172, %v6386, %v6385
  %v6388 = vrot.slane %v6161, 4
  %v6389 = vsel %vm6175, %v6388, %v6387
  %v6390 = vrot.slane %v6162, 3
  %v6391 = vsel %vm6178, %v6390, %v6389
  %v6392 = vrot.slane %v6163, 2
  %v6393 = vsel %vm6181, %v6392, %v6391
  %v6394 = vrot.slane %v6164, 1
  %v6395 = vsel %vm6184, %v6394, %v6393
  %v6396 = vpack.c.b16 %v6185, %v6185
  %v6397 = vpack.c.b16 %v6199, %v6199
  %v6398 = vpack.c.b16 %v6213, %v6213
  %v6399 = vpack.c.b16 %v6227, %v6227
  %v6400 = vpack.c.b16 %v6241, %v6241
  %v6401 = vpack.c.b16 %v6255, %v6255
  %v6402 = vpack.c.b16 %v6269, %v6269
  %v6403 = vpack.c.b16 %v6283, %v6283
  %v6404 = vpack.c.b16 %v6297, %v6297
  %v6405 = vpack.c.b16 %v6311, %v6311
  %v6406 = vpack.c.b16 %v6325, %v6325
  %v6407 = vpack.c.b16 %v6339, %v6339
  %v6408 = vpack.c.b16 %v6353, %v6353
  %v6409 = vpack.c.b16 %v6367, %v6367
  %v6410 = vpack.c.b16 %v6381, %v6381
  %v6411 = vpack.c.b16 %v6395, %v6395
  %vm6428 = vcmask 125952
  %6429 = vst.msk [vmem:[%s4] sm:$0xf] %vm6428, %v6396
  %6430 = vst.msk [vmem:[%s4 + $0x4] sm:$0xf] %vm6428, %v6397
  %6431 = vst.msk [vmem:[%s4 + $0x8] sm:$0xf] %vm6428, %v6398
  %6432 = vst.msk [vmem:[%s4 + $0xc] sm:$0xf] %vm6428, %v6399
  %6433 = vst.msk [vmem:[%s4 + $0x10] sm:$0xf] %vm6428, %v6400
  %6434 = vst.msk [vmem:[%s4 + $0x14] sm:$0xf] %vm6428, %v6401
  %6435 = vst.msk [vmem:[%s4 + $0x18] sm:$0xf] %vm6428, %v6402
  %6436 = vst.msk [vmem:[%s4 + $0x1c] sm:$0xf] %vm6428, %v6403
  %6437 = vst.msk [vmem:[%s4 + $0x20] sm:$0xf] %vm6428, %v6404
  %6438 = vst.msk [vmem:[%s4 + $0x24] sm:$0xf] %vm6428, %v6405
  %6439 = vst.msk [vmem:[%s4 + $0x28] sm:$0xf] %vm6428, %v6406
  %6440 = vst.msk [vmem:[%s4 + $0x2c] sm:$0xf] %vm6428, %v6407
  %6441 = vst.msk [vmem:[%s4 + $0x30] sm:$0xf] %vm6428, %v6408
  %6442 = vst.msk [vmem:[%s4 + $0x34] sm:$0xf] %vm6428, %v6409
  %6443 = vst.msk [vmem:[%s4 + $0x38] sm:$0xf] %vm6428, %v6410
  %6444 = vst.msk [vmem:[%s4 + $0x3c] sm:$0xf] %vm6428, %v6411
  // Predicated region
  $region18: #{faster_style_transfer.7} parent=0 // pred_check
    _
  $region19: #{faster_style_transfer.7} parent=0 // pred_check_branch
    %6446 = sbr.rel (0) target = $region21
  $region20: #{faster_style_transfer.7} parent=0 // pred_region
    _
  $region21: #{faster_style_transfer.7} parent=0 // pred_fallthru
    _
  // Predicated region
  $region22: #{faster_style_transfer.7} parent=0 // pred_check
    _
  $region23: #{faster_style_transfer.7} parent=0 // pred_check_branch
    %6448 = sbr.rel (0) target = $region25
  $region24: #{faster_style_transfer.7} parent=0 // pred_region
    _
  $region25: #{faster_style_transfer.7} parent=0 // pred_fallthru
    _

// kernel: faster_style_transfer.13
$region0: #{faster_style_transfer.13}
  #allocation0 [shape = 'u32[]', space=smem, size = 0x4, offset = 0x4, fixed_abs, tag = 'smem constant byte address 0x4 - core index']
  #allocation1 [shape = 'u32[144,128]{1,0:T(1,128)}', space=vmem, size = 0x12000, scoped, tag = 'internal scratch']
  %s0 = inlined_call_operand.vmem [shape: bf16[2,8,8,16], index: 0, kind: input, shape index: {}]
  %s1 = inlined_call_operand.vmem [shape: bf16[64,12], index: 1, kind: input, shape index: {}]
  %s2 = inlined_call_operand.vmem [shape: f32[1,3], index: 2, kind: input, shape index: {}]
  %s3 = inlined_call_operand.vmem [shape: f32[1,3], index: 3, kind: input, shape index: {}]
  %s4 = inlined_call_operand.vmem [shape: f32[2,8,8,12], index: 4, kind: output, shape index: {}]
  %s5 = sld [smem:[#allocation0]]
  $region26: #{faster_style_transfer.13} parent=0
    _
  %s7 = ssub.s32 1, %s5
  %s8 = scalar_select 0, %s7, %s5
  // Predicated region
  $region2: #{faster_style_transfer.13} parent=0 // pred_check
    _
  $region3: #{faster_style_transfer.13} parent=0 // pred_check_branch
    %10 = sbr.rel (0) target = $region5
  $region4: #{faster_style_transfer.13} parent=0 // pred_region
    _
  $region5: #{faster_style_transfer.13} parent=0 // pred_fallthru
    _
  // Predicated region
  $region6: #{faster_style_transfer.13} parent=0 // pred_check
    _
  $region7: #{faster_style_transfer.13} parent=0 // pred_check_branch
    %12 = sbr.rel (0) target = $region9
  $region8: #{faster_style_transfer.13} parent=0 // pred_region
    _
  $region9: #{faster_style_transfer.13} parent=0 // pred_fallthru
    _
  // Predicated region
  $region10: #{faster_style_transfer.13} parent=0 // pred_check
    _
  $region11: #{faster_style_transfer.13} parent=0 // pred_check_branch
    %14 = sbr.rel (0) target = $region13
  $region12: #{faster_style_transfer.13} parent=0 // pred_region
    _
  $region13: #{faster_style_transfer.13} parent=0 // pred_fallthru
    _
  // Predicated region
  $region14: #{faster_style_transfer.13} parent=0 // pred_check
    _
  $region15: #{faster_style_transfer.13} parent=0 // pred_check_branch
    %16 = sbr.rel (0) target = $region17
  $region16: #{faster_style_transfer.13} parent=0 // pred_region
    _
  $region17: #{faster_style_transfer.13} parent=0 // pred_fallthru
    _
  %v18 = vld [vmem:[%s0] sm:$0xf]
  %v19 = vld [vmem:[%s0 + $0x4] sm:$0xf]
  %v20 = vld [vmem:[%s0 + $0x8] sm:$0xf]
  %v21 = vld [vmem:[%s0 + $0xc] sm:$0xf]
  %v22 = vld [vmem:[%s0 + $0x10] sm:$0xf]
  %v23 = vld [vmem:[%s0 + $0x14] sm:$0xf]
  %v24 = vld [vmem:[%s0 + $0x18] sm:$0xf]
  %v25 = vld [vmem:[%s0 + $0x1c] sm:$0xf]
  %v26 = vld [vmem:[%s0 + $0x20] sm:$0xf]
  %v27 = vld [vmem:[%s0 + $0x24] sm:$0xf]
  %v28 = vld [vmem:[%s0 + $0x28] sm:$0xf]
  %v29 = vld [vmem:[%s0 + $0x2c] sm:$0xf]
  %v30 = vld [vmem:[%s0 + $0x30] sm:$0xf]
  %v31 = vld [vmem:[%s0 + $0x34] sm:$0xf]
  %v32 = vld [vmem:[%s0 + $0x38] sm:$0xf]
  %v33 = vld [vmem:[%s0 + $0x3c] sm:$0xf]
  %vm34 = vcmask 1043456
  %v37 = vsel %vm34, %v18, 0
  %v39 = vsel %vm34, %v19, 0
  %v41 = vsel %vm34, %v20, 0
  %v43 = vsel %vm34, %v21, 0
  %v45 = vsel %vm34, %v22, 0
  %v47 = vsel %vm34, %v23, 0
  %v49 = vsel %vm34, %v24, 0
  %v51 = vsel %vm34, %v25, 0
  %v53 = vsel %vm34, %v26, 0
  %v55 = vsel %vm34, %v27, 0
  %v57 = vsel %vm34, %v28, 0
  %v59 = vsel %vm34, %v29, 0
  %v61 = vsel %vm34, %v30, 0
  %v63 = vsel %vm34, %v31, 0
  %v65 = vsel %vm34, %v32, 0
  %v67 = vsel %vm34, %v33, 0
  %v84 = vunpack.c.l.b16 %v37
  %v85 = vunpack.c.h.b16 %v37
  %v86 = vunpack.c.l.b16 %v39
  %v87 = vunpack.c.h.b16 %v39
  %v88 = vunpack.c.l.b16 %v41
  %v89 = vunpack.c.h.b16 %v41
  %v90 = vunpack.c.l.b16 %v43
  %v91 = vunpack.c.h.b16 %v43
  %v92 = vunpack.c.l.b16 %v45
  %v93 = vunpack.c.h.b16 %v45
  %v94 = vunpack.c.l.b16 %v47
  %v95 = vunpack.c.h.b16 %v47
  %v96 = vunpack.c.l.b16 %v49
  %v97 = vunpack.c.h.b16 %v49
  %v98 = vunpack.c.l.b16 %v51
  %v99 = vunpack.c.h.b16 %v51
  %v100 = vunpack.c.l.b16 %v53
  %v101 = vunpack.c.h.b16 %v53
  %v102 = vunpack.c.l.b16 %v55
  %v103 = vunpack.c.h.b16 %v55
  %v104 = vunpack.c.l.b16 %v57
  %v105 = vunpack.c.h.b16 %v57
  %v106 = vunpack.c.l.b16 %v59
  %v107 = vunpack.c.h.b16 %v59
  %v108 = vunpack.c.l.b16 %v61
  %v109 = vunpack.c.h.b16 %v61
  %v110 = vunpack.c.l.b16 %v63
  %v111 = vunpack.c.h.b16 %v63
  %v112 = vunpack.c.l.b16 %v65
  %v113 = vunpack.c.h.b16 %v65
  %v114 = vunpack.c.l.b16 %v67
  %v115 = vunpack.c.h.b16 %v67
  %v116 = vpack.c.b16 %v84, %v84
  %v117 = vpack.c.b16 %v85, %v85
  %v118 = vpack.c.b16 %v86, %v86
  %v119 = vpack.c.b16 %v87, %v87
  %v120 = vpack.c.b16 %v88, %v88
  %v121 = vpack.c.b16 %v89, %v89
  %v122 = vpack.c.b16 %v90, %v90
  %v123 = vpack.c.b16 %v91, %v91
  %v124 = vpack.c.b16 %v92, %v92
  %v125 = vpack.c.b16 %v93, %v93
  %v126 = vpack.c.b16 %v94, %v94
  %v127 = vpack.c.b16 %v95, %v95
  %v128 = vpack.c.b16 %v96, %v96
  %v129 = vpack.c.b16 %v97, %v97
  %v130 = vpack.c.b16 %v98, %v98
  %v131 = vpack.c.b16 %v99, %v99
  %v132 = vpack.c.b16 %v100, %v100
  %v133 = vpack.c.b16 %v101, %v101
  %v134 = vpack.c.b16 %v102, %v102
  %v135 = vpack.c.b16 %v103, %v103
  %v136 = vpack.c.b16 %v104, %v104
  %v137 = vpack.c.b16 %v105, %v105
  %v138 = vpack.c.b16 %v106, %v106
  %v139 = vpack.c.b16 %v107, %v107
  %v140 = vpack.c.b16 %v108, %v108
  %v141 = vpack.c.b16 %v109, %v109
  %v142 = vpack.c.b16 %v110, %v110
  %v143 = vpack.c.b16 %v111, %v111
  %v144 = vpack.c.b16 %v112, %v112
  %v145 = vpack.c.b16 %v113, %v113
  %v146 = vpack.c.b16 %v114, %v114
  %v147 = vpack.c.b16 %v115, %v115
  %vm148 = vsmask.f32 3328
  %vm149 = vsmask.f32 7440
  %vm150 = vmor %vm148, %vm149
  %v152 = vshrl.u32 %v116, 16
  %v154 = vrot.slane %v152, 4
  %v155 = vshll.u32 %v116, 16
  %v157 = vrot.slane %v155, 5
  %v158 = vor.u32 %v154, %v157
  %v159 = vrot.slane %v158, 4
  %v161 = vshll.u32 %v117, 16
  %v163 = vrot.slane %v161, 5
  %v164 = vsel %vm150, %v159, %v163
  %v166 = vshrl.u32 %v118, 16
  %v168 = vrot.slane %v166, 4
  %v169 = vshll.u32 %v118, 16
  %v171 = vrot.slane %v169, 5
  %v172 = vor.u32 %v168, %v171
  %v173 = vrot.slane %v172, 4
  %v175 = vshll.u32 %v119, 16
  %v177 = vrot.slane %v175, 5
  %v178 = vsel %vm150, %v173, %v177
  %v180 = vshrl.u32 %v120, 16
  %v182 = vrot.slane %v180, 4
  %v183 = vshll.u32 %v120, 16
  %v185 = vrot.slane %v183, 5
  %v186 = vor.u32 %v182, %v185
  %v187 = vrot.slane %v186, 4
  %v189 = vshll.u32 %v121, 16
  %v191 = vrot.slane %v189, 5
  %v192 = vsel %vm150, %v187, %v191
  %v194 = vshrl.u32 %v122, 16
  %v196 = vrot.slane %v194, 4
  %v197 = vshll.u32 %v122, 16
  %v199 = vrot.slane %v197, 5
  %v200 = vor.u32 %v196, %v199
  %v201 = vrot.slane %v200, 4
  %v203 = vshll.u32 %v123, 16
  %v205 = vrot.slane %v203, 5
  %v206 = vsel %vm150, %v201, %v205
  %v208 = vshrl.u32 %v124, 16
  %v210 = vrot.slane %v208, 4
  %v211 = vshll.u32 %v124, 16
  %v213 = vrot.slane %v211, 5
  %v214 = vor.u32 %v210, %v213
  %v215 = vrot.slane %v214, 4
  %v217 = vshll.u32 %v125, 16
  %v219 = vrot.slane %v217, 5
  %v220 = vsel %vm150, %v215, %v219
  %v222 = vshrl.u32 %v126, 16
  %v224 = vrot.slane %v222, 4
  %v225 = vshll.u32 %v126, 16
  %v227 = vrot.slane %v225, 5
  %v228 = vor.u32 %v224, %v227
  %v229 = vrot.slane %v228, 4
  %v231 = vshll.u32 %v127, 16
  %v233 = vrot.slane %v231, 5
  %v234 = vsel %vm150, %v229, %v233
  %v236 = vshrl.u32 %v128, 16
  %v238 = vrot.slane %v236, 4
  %v239 = vshll.u32 %v128, 16
  %v241 = vrot.slane %v239, 5
  %v242 = vor.u32 %v238, %v241
  %v243 = vrot.slane %v242, 4
  %v245 = vshll.u32 %v129, 16
  %v247 = vrot.slane %v245, 5
  %v248 = vsel %vm150, %v243, %v247
  %v250 = vshrl.u32 %v130, 16
  %v252 = vrot.slane %v250, 4
  %v253 = vshll.u32 %v130, 16
  %v255 = vrot.slane %v253, 5
  %v256 = vor.u32 %v252, %v255
  %v257 = vrot.slane %v256, 4
  %v259 = vshll.u32 %v131, 16
  %v261 = vrot.slane %v259, 5
  %v262 = vsel %vm150, %v257, %v261
  %v264 = vshrl.u32 %v132, 16
  %v266 = vrot.slane %v264, 4
  %v267 = vshll.u32 %v132, 16
  %v269 = vrot.slane %v267, 5
  %v270 = vor.u32 %v266, %v269
  %v271 = vrot.slane %v270, 4
  %v273 = vshll.u32 %v133, 16
  %v275 = vrot.slane %v273, 5
  %v276 = vsel %vm150, %v271, %v275
  %v278 = vshrl.u32 %v134, 16
  %v280 = vrot.slane %v278, 4
  %v281 = vshll.u32 %v134, 16
  %v283 = vrot.slane %v281, 5
  %v284 = vor.u32 %v280, %v283
  %v285 = vrot.slane %v284, 4
  %v287 = vshll.u32 %v135, 16
  %v289 = vrot.slane %v287, 5
  %v290 = vsel %vm150, %v285, %v289
  %v292 = vshrl.u32 %v136, 16
  %v294 = vrot.slane %v292, 4
  %v295 = vshll.u32 %v136, 16
  %v297 = vrot.slane %v295, 5
  %v298 = vor.u32 %v294, %v297
  %v299 = vrot.slane %v298, 4
  %v301 = vshll.u32 %v137, 16
  %v303 = vrot.slane %v301, 5
  %v304 = vsel %vm150, %v299, %v303
  %v306 = vshrl.u32 %v138, 16
  %v308 = vrot.slane %v306, 4
  %v309 = vshll.u32 %v138, 16
  %v311 = vrot.slane %v309, 5
  %v312 = vor.u32 %v308, %v311
  %v313 = vrot.slane %v312, 4
  %v315 = vshll.u32 %v139, 16
  %v317 = vrot.slane %v315, 5
  %v318 = vsel %vm150, %v313, %v317
  %v320 = vshrl.u32 %v140, 16
  %v322 = vrot.slane %v320, 4
  %v323 = vshll.u32 %v140, 16
  %v325 = vrot.slane %v323, 5
  %v326 = vor.u32 %v322, %v325
  %v327 = vrot.slane %v326, 4
  %v329 = vshll.u32 %v141, 16
  %v331 = vrot.slane %v329, 5
  %v332 = vsel %vm150, %v327, %v331
  %v334 = vshrl.u32 %v142, 16
  %v336 = vrot.slane %v334, 4
  %v337 = vshll.u32 %v142, 16
  %v339 = vrot.slane %v337, 5
  %v340 = vor.u32 %v336, %v339
  %v341 = vrot.slane %v340, 4
  %v343 = vshll.u32 %v143, 16
  %v345 = vrot.slane %v343, 5
  %v346 = vsel %vm150, %v341, %v345
  %v348 = vshrl.u32 %v144, 16
  %v350 = vrot.slane %v348, 4
  %v351 = vshll.u32 %v144, 16
  %v353 = vrot.slane %v351, 5
  %v354 = vor.u32 %v350, %v353
  %v355 = vrot.slane %v354, 4
  %v357 = vshll.u32 %v145, 16
  %v359 = vrot.slane %v357, 5
  %v360 = vsel %vm150, %v355, %v359
  %v362 = vshrl.u32 %v146, 16
  %v364 = vrot.slane %v362, 4
  %v365 = vshll.u32 %v146, 16
  %v367 = vrot.slane %v365, 5
  %v368 = vor.u32 %v364, %v367
  %v369 = vrot.slane %v368, 4
  %v371 = vshll.u32 %v147, 16
  %v373 = vrot.slane %v371, 5
  %v374 = vsel %vm150, %v369, %v373
  %v376 = vunpack.c.l.b16 0
  %v377 = vunpack.c.h.b16 0
  %v378 = vpack.c.b16 %v376, %v376
  %v379 = vpack.c.b16 %v377, %v377
  %v381 = vshrl.u32 %v378, 16
  %v383 = vrot.slane %v381, 4
  %v384 = vshll.u32 %v378, 16
  %v386 = vrot.slane %v384, 5
  %v387 = vor.u32 %v383, %v386
  %v388 = vrot.slane %v387, 4
  %v390 = vshll.u32 %v379, 16
  %v392 = vrot.slane %v390, 5
  %v393 = vsel %vm150, %v388, %v392
  %v410 = vunpack.c.l.b16 %v18
  %v411 = vunpack.c.l.b16 %v19
  %v412 = vunpack.c.l.b16 %v20
  %v413 = vunpack.c.l.b16 %v21
  %v414 = vunpack.c.l.b16 %v22
  %v415 = vunpack.c.l.b16 %v23
  %v416 = vunpack.c.l.b16 %v24
  %v417 = vunpack.c.l.b16 %v25
  %v418 = vunpack.c.l.b16 %v26
  %v419 = vunpack.c.l.b16 %v27
  %v420 = vunpack.c.l.b16 %v28
  %v421 = vunpack.c.l.b16 %v29
  %v422 = vunpack.c.l.b16 %v30
  %v423 = vunpack.c.l.b16 %v31
  %v424 = vunpack.c.l.b16 %v32
  %v425 = vunpack.c.l.b16 %v33
  %v426 = vpack.c.b16 %v411, %v410
  %v427 = vpack.c.b16 %v413, %v412
  %v428 = vpack.c.b16 %v415, %v414
  %v429 = vpack.c.b16 %v417, %v416
  %v430 = vpack.c.b16 %v419, %v418
  %v431 = vpack.c.b16 %v421, %v420
  %v432 = vpack.c.b16 %v423, %v422
  %v433 = vpack.c.b16 %v425, %v424
  %v434 = vunpack.c.l.b16 %v164
  %v435 = vunpack.c.l.b16 %v178
  %v436 = vunpack.c.l.b16 %v192
  %v437 = vunpack.c.l.b16 %v206
  %v438 = vunpack.c.l.b16 %v220
  %v439 = vunpack.c.l.b16 %v234
  %v440 = vunpack.c.l.b16 %v248
  %v441 = vunpack.c.l.b16 %v262
  %v442 = vunpack.c.l.b16 %v276
  %v443 = vunpack.c.l.b16 %v290
  %v444 = vunpack.c.l.b16 %v304
  %v445 = vunpack.c.l.b16 %v318
  %v446 = vunpack.c.l.b16 %v332
  %v447 = vunpack.c.l.b16 %v346
  %v448 = vunpack.c.l.b16 %v360
  %v449 = vunpack.c.l.b16 %v374
  %v450 = vpack.c.b16 %v435, %v434
  %v451 = vpack.c.b16 %v437, %v436
  %v452 = vpack.c.b16 %v439, %v438
  %v453 = vpack.c.b16 %v441, %v440
  %v454 = vpack.c.b16 %v443, %v442
  %v455 = vpack.c.b16 %v445, %v444
  %v456 = vpack.c.b16 %v447, %v446
  %v457 = vpack.c.b16 %v449, %v448
  %458 = vrot.lane.b32.xlu0 %v450, 16
  %v459 = vpop.permute.xlu0 %458
  %460 = vrot.lane.b32.xlu0 %v451, 16
  %v461 = vpop.permute.xlu0 %460
  %462 = vrot.lane.b32.xlu0 %v452, 16
  %v463 = vpop.permute.xlu0 %462
  %464 = vrot.lane.b32.xlu0 %v453, 16
  %v465 = vpop.permute.xlu0 %464
  %466 = vrot.lane.b32.xlu0 %v454, 16
  %v467 = vpop.permute.xlu0 %466
  %468 = vrot.lane.b32.xlu0 %v455, 16
  %v469 = vpop.permute.xlu0 %468
  %470 = vrot.lane.b32.xlu0 %v456, 16
  %v471 = vpop.permute.xlu0 %470
  %472 = vrot.lane.b32.xlu0 %v457, 16
  %v473 = vpop.permute.xlu0 %472
  %v474 = vpack.c.b16 %v88, %v86
  %v475 = vpack.c.b16 %v92, %v90
  %v476 = vpack.c.b16 %v96, %v94
  %v477 = vpack.c.b16 %v376, %v98
  %v478 = vpack.c.b16 %v104, %v102
  %v479 = vpack.c.b16 %v108, %v106
  %v480 = vpack.c.b16 %v112, %v110
  %v481 = vpack.c.b16 %v376, %v114
  %482 = vrot.lane.b32.xlu0 %v474, 32
  %v483 = vpop.permute.xlu0 %482
  %484 = vrot.lane.b32.xlu0 %v475, 32
  %v485 = vpop.permute.xlu0 %484
  %486 = vrot.lane.b32.xlu0 %v476, 32
  %v487 = vpop.permute.xlu0 %486
  %488 = vrot.lane.b32.xlu0 %v477, 32
  %v489 = vpop.permute.xlu0 %488
  %490 = vrot.lane.b32.xlu0 %v478, 32
  %v491 = vpop.permute.xlu0 %490
  %492 = vrot.lane.b32.xlu0 %v479, 32
  %v493 = vpop.permute.xlu0 %492
  %494 = vrot.lane.b32.xlu0 %v480, 32
  %v495 = vpop.permute.xlu0 %494
  %496 = vrot.lane.b32.xlu0 %v481, 32
  %v497 = vpop.permute.xlu0 %496
  %v498 = vunpack.c.l.b16 %v393
  %v499 = vpack.c.b16 %v436, %v435
  %v500 = vpack.c.b16 %v438, %v437
  %v501 = vpack.c.b16 %v440, %v439
  %v502 = vpack.c.b16 %v498, %v441
  %v503 = vpack.c.b16 %v444, %v443
  %v504 = vpack.c.b16 %v446, %v445
  %v505 = vpack.c.b16 %v448, %v447
  %v506 = vpack.c.b16 %v498, %v449
  %507 = vrot.lane.b32.xlu0 %v499, 48
  %v508 = vpop.permute.xlu0 %507
  %509 = vrot.lane.b32.xlu0 %v500, 48
  %v510 = vpop.permute.xlu0 %509
  %511 = vrot.lane.b32.xlu0 %v501, 48
  %v512 = vpop.permute.xlu0 %511
  %513 = vrot.lane.b32.xlu0 %v502, 48
  %v514 = vpop.permute.xlu0 %513
  %515 = vrot.lane.b32.xlu0 %v503, 48
  %v516 = vpop.permute.xlu0 %515
  %517 = vrot.lane.b32.xlu0 %v504, 48
  %v518 = vpop.permute.xlu0 %517
  %519 = vrot.lane.b32.xlu0 %v505, 48
  %v520 = vpop.permute.xlu0 %519
  %521 = vrot.lane.b32.xlu0 %v506, 48
  %v522 = vpop.permute.xlu0 %521
  %vm523 = vcmask 130048
  %v526 = vsel %vm523, %v426, %v459
  %v529 = vsel %vm523, %v427, %v461
  %v532 = vsel %vm523, %v428, %v463
  %v535 = vsel %vm523, %v429, %v465
  %v538 = vsel %vm523, %v430, %v467
  %v541 = vsel %vm523, %v431, %v469
  %v544 = vsel %vm523, %v432, %v471
  %v547 = vsel %vm523, %v433, %v473
  %vm548 = vcmask 261120
  %v550 = vsel %vm548, %v526, %v483
  %v552 = vsel %vm548, %v529, %v485
  %v554 = vsel %vm548, %v532, %v487
  %v556 = vsel %vm548, %v535, %v489
  %v558 = vsel %vm548, %v538, %v491
  %v560 = vsel %vm548, %v541, %v493
  %v562 = vsel %vm548, %v544, %v495
  %v564 = vsel %vm548, %v547, %v497
  %vm565 = vcmask 392192
  %v567 = vsel %vm565, %v550, %v508
  %v569 = vsel %vm565, %v552, %v510
  %v571 = vsel %vm565, %v554, %v512
  %v573 = vsel %vm565, %v556, %v514
  %v575 = vsel %vm565, %v558, %v516
  %v577 = vsel %vm565, %v560, %v518
  %v579 = vsel %vm565, %v562, %v520
  %v581 = vsel %vm565, %v564, %v522
  %v582 = vld [vmem:[%s1] sm:$0xf]
  %v583 = vld [vmem:[%s1 + $0x4] sm:$0xf]
  %v584 = vld [vmem:[%s1 + $0x8] sm:$0xf]
  %v585 = vld [vmem:[%s1 + $0xc] sm:$0xf]
  %v586 = vld [vmem:[%s1 + $0x10] sm:$0xf]
  %v587 = vld [vmem:[%s1 + $0x14] sm:$0xf]
  %v588 = vld [vmem:[%s1 + $0x18] sm:$0xf]
  %v589 = vld [vmem:[%s1 + $0x1c] sm:$0xf]
  %v598 = vunpack.c.l.b16 %v582
  %v599 = vunpack.c.l.b16 %v583
  %v600 = vunpack.c.l.b16 %v584
  %v601 = vunpack.c.l.b16 %v585
  %v602 = vunpack.c.l.b16 %v586
  %v603 = vunpack.c.l.b16 %v587
  %v604 = vunpack.c.l.b16 %v588
  %v605 = vunpack.c.l.b16 %v589
  %v606 = vpack.c.b16 %v599, %v598
  %v607 = vpack.c.b16 %v601, %v600
  %v608 = vpack.c.b16 %v603, %v602
  %v609 = vpack.c.b16 %v605, %v604
  %vm614 = vcmask 523264
  %v615 = vsel %vm614, %v567, 0
  %v617 = vsel %vm614, %v569, 0
  %v619 = vsel %vm614, %v571, 0
  %v621 = vsel %vm614, %v573, 0
  %v623 = vsel %vm614, %v575, 0
  %v625 = vsel %vm614, %v577, 0
  %v627 = vsel %vm614, %v579, 0
  %v629 = vsel %vm614, %v581, 0
  %631 = vmatprep.subr.bf16.mxu0 0
  %632 = vmatpush1.bf16.msra.mxu0 0
  %633 = vmatprep.subr.bf16.mxu0 0
  %634 = vmatpush1.bf16.msra.mxu0 0
  %635 = vmatprep.subr.bf16.mxu0 0
  %636 = vmatpush1.bf16.msra.mxu0 0
  %637 = vmatprep.subr.bf16.mxu0 0
  %638 = vmatpush1.bf16.msra.mxu0 0
  %639 = vmatprep.subr.bf16.mxu0 0
  %640 = vmatpush1.bf16.msra.mxu0 %v609
  %641 = vmatprep.subr.bf16.mxu0 0
  %642 = vmatpush1.bf16.msra.mxu0 %v608
  %643 = vmatprep.subr.bf16.mxu0 0
  %644 = vmatpush1.bf16.msra.mxu0 %v607
  %645 = vmatprep.subr.bf16.mxu0 0
  %646 = vmatpush1.bf16.msra.mxu0 %v606
  %647 = vmatprep.subr.bf16.mxu0 0
  %648 = vmatpush2.bf16.msra.mxu0 0
  %649 = vmatprep.subr.bf16.mxu0 0
  %650 = vmatpush2.bf16.msra.mxu0 0
  %651 = vmatprep.subr.bf16.mxu0 0
  %652 = vmatpush2.bf16.msra.mxu0 0
  %653 = vmatprep.subr.bf16.mxu0 0
  %654 = vmatpush2.bf16.msra.mxu0 0
  %655 = vmatprep.subr.bf16.mxu0 0
  %656 = vmatpush2.bf16.msra.mxu0 0
  %657 = vmatprep.subr.bf16.mxu0 0
  %658 = vmatpush2.bf16.msra.mxu0 0
  %659 = vmatprep.subr.bf16.mxu0 0
  %660 = vmatpush2.bf16.msra.mxu0 0
  %661 = vmatprep.subr.bf16.mxu0 0
  %662 = vmatpush2.bf16.msra.mxu0 0
  %663 = vmatprep.mubr.bf16.mxu0 0
  %664 = vmatmul.mubr.bf16.gmra.mxu0 %v615
  %v665 = vpop.f32.mrf.mxu0
  %v666 = vadd.f32 0.0, %v665
  %v667 = vpop.f32.mrf.mxu0
  %v668 = vpop.f32.mrf.mxu0
  %v669 = vadd.f32 0.0, %v668
  %v670 = vpop.f32.mrf.mxu0
  %671 = vmatprep.mubr.bf16.mxu0 0
  %672 = vmatmul.mubr.bf16.gmra.mxu0 %v617
  %v673 = vpop.f32.mrf.mxu0
  %v674 = vadd.f32 0.0, %v673
  %v675 = vpop.f32.mrf.mxu0
  %v676 = vpop.f32.mrf.mxu0
  %v677 = vadd.f32 0.0, %v676
  %v678 = vpop.f32.mrf.mxu0
  %679 = vmatprep.mubr.bf16.mxu0 0
  %680 = vmatmul.mubr.bf16.gmra.mxu0 %v619
  %v681 = vpop.f32.mrf.mxu0
  %v682 = vadd.f32 0.0, %v681
  %v683 = vpop.f32.mrf.mxu0
  %v684 = vpop.f32.mrf.mxu0
  %v685 = vadd.f32 0.0, %v684
  %v686 = vpop.f32.mrf.mxu0
  %687 = vmatprep.mubr.bf16.mxu0 0
  %688 = vmatmul.mubr.bf16.gmra.mxu0 %v621
  %v689 = vpop.f32.mrf.mxu0
  %v690 = vadd.f32 0.0, %v689
  %v691 = vpop.f32.mrf.mxu0
  %v692 = vpop.f32.mrf.mxu0
  %v693 = vadd.f32 0.0, %v692
  %v694 = vpop.f32.mrf.mxu0
  %695 = vmatprep.mubr.bf16.mxu0 0
  %696 = vmatmul.mubr.bf16.gmra.mxu0 %v623
  %v697 = vpop.f32.mrf.mxu0
  %v698 = vadd.f32 0.0, %v697
  %v699 = vpop.f32.mrf.mxu0
  %v700 = vpop.f32.mrf.mxu0
  %v701 = vadd.f32 0.0, %v700
  %v702 = vpop.f32.mrf.mxu0
  %703 = vmatprep.mubr.bf16.mxu0 0
  %704 = vmatmul.mubr.bf16.gmra.mxu0 %v625
  %v705 = vpop.f32.mrf.mxu0
  %v706 = vadd.f32 0.0, %v705
  %v707 = vpop.f32.mrf.mxu0
  %v708 = vpop.f32.mrf.mxu0
  %v709 = vadd.f32 0.0, %v708
  %v710 = vpop.f32.mrf.mxu0
  %711 = vmatprep.mubr.bf16.mxu0 0
  %712 = vmatmul.mubr.bf16.gmra.mxu0 %v627
  %v713 = vpop.f32.mrf.mxu0
  %v714 = vadd.f32 0.0, %v713
  %v715 = vpop.f32.mrf.mxu0
  %v716 = vpop.f32.mrf.mxu0
  %v717 = vadd.f32 0.0, %v716
  %v718 = vpop.f32.mrf.mxu0
  %719 = vmatprep.mubr.bf16.mxu0 0
  %720 = vmatmul.mubr.bf16.gmra.mxu0 %v629
  %v721 = vpop.f32.mrf.mxu0
  %v722 = vadd.f32 0.0, %v721
  %v723 = vpop.f32.mrf.mxu0
  %v724 = vpop.f32.mrf.mxu0
  %v725 = vadd.f32 0.0, %v724
  %v726 = vpop.f32.mrf.mxu0
  %727 = vdwg.mxu0
  %v728 = vxor.u32 %v666, 2147483648
  %v729 = vxor.u32 %v669, 2147483648
  %v730 = vxor.u32 %v674, 2147483648
  %v731 = vxor.u32 %v677, 2147483648
  %v732 = vxor.u32 %v682, 2147483648
  %v733 = vxor.u32 %v685, 2147483648
  %v734 = vxor.u32 %v690, 2147483648
  %v735 = vxor.u32 %v693, 2147483648
  %v736 = vxor.u32 %v698, 2147483648
  %v737 = vxor.u32 %v701, 2147483648
  %v738 = vxor.u32 %v706, 2147483648
  %v739 = vxor.u32 %v709, 2147483648
  %v740 = vxor.u32 %v714, 2147483648
  %v741 = vxor.u32 %v717, 2147483648
  %v742 = vxor.u32 %v722, 2147483648
  %v743 = vxor.u32 %v725, 2147483648
  %v744 = vmul.f32 %v728, 1.442695
  %v745 = vpow.pop %v744
  %v746 = vmul.f32 %v729, 1.442695
  %v747 = vpow.pop %v746
  %v748 = vmul.f32 %v730, 1.442695
  %v749 = vpow.pop %v748
  %v750 = vmul.f32 %v731, 1.442695
  %v751 = vpow.pop %v750
  %v752 = vmul.f32 %v732, 1.442695
  %v753 = vpow.pop %v752
  %v754 = vmul.f32 %v733, 1.442695
  %v755 = vpow.pop %v754
  %v756 = vmul.f32 %v734, 1.442695
  %v757 = vpow.pop %v756
  %v758 = vmul.f32 %v735, 1.442695
  %v759 = vpow.pop %v758
  %v760 = vmul.f32 %v736, 1.442695
  %v761 = vpow.pop %v760
  %v762 = vmul.f32 %v737, 1.442695
  %v763 = vpow.pop %v762
  %v764 = vmul.f32 %v738, 1.442695
  %v765 = vpow.pop %v764
  %v766 = vmul.f32 %v739, 1.442695
  %v767 = vpow.pop %v766
  %v768 = vmul.f32 %v740, 1.442695
  %v769 = vpow.pop %v768
  %v770 = vmul.f32 %v741, 1.442695
  %v771 = vpow.pop %v770
  %v772 = vmul.f32 %v742, 1.442695
  %v773 = vpow.pop %v772
  %v774 = vmul.f32 %v743, 1.442695
  %v775 = vpow.pop %v774
  %v776 = vadd.f32 %v745, 1.0
  %v777 = vadd.f32 %v747, 1.0
  %v778 = vadd.f32 %v749, 1.0
  %v779 = vadd.f32 %v751, 1.0
  %v780 = vadd.f32 %v753, 1.0
  %v781 = vadd.f32 %v755, 1.0
  %v782 = vadd.f32 %v757, 1.0
  %v783 = vadd.f32 %v759, 1.0
  %v784 = vadd.f32 %v761, 1.0
  %v785 = vadd.f32 %v763, 1.0
  %v786 = vadd.f32 %v765, 1.0
  %v787 = vadd.f32 %v767, 1.0
  %v788 = vadd.f32 %v769, 1.0
  %v789 = vadd.f32 %v771, 1.0
  %v790 = vadd.f32 %v773, 1.0
  %v791 = vadd.f32 %v775, 1.0
  %v792 = vrcp.pop %v776
  %v793 = vmul.f32 1.0, %v792
  %v794 = vrcp.pop %v777
  %v795 = vmul.f32 1.0, %v794
  %v796 = vrcp.pop %v778
  %v797 = vmul.f32 1.0, %v796
  %v798 = vrcp.pop %v779
  %v799 = vmul.f32 1.0, %v798
  %v800 = vrcp.pop %v780
  %v801 = vmul.f32 1.0, %v800
  %v802 = vrcp.pop %v781
  %v803 = vmul.f32 1.0, %v802
  %v804 = vrcp.pop %v782
  %v805 = vmul.f32 1.0, %v804
  %v806 = vrcp.pop %v783
  %v807 = vmul.f32 1.0, %v806
  %v808 = vrcp.pop %v784
  %v809 = vmul.f32 1.0, %v808
  %v810 = vrcp.pop %v785
  %v811 = vmul.f32 1.0, %v810
  %v812 = vrcp.pop %v786
  %v813 = vmul.f32 1.0, %v812
  %v814 = vrcp.pop %v787
  %v815 = vmul.f32 1.0, %v814
  %v816 = vrcp.pop %v788
  %v817 = vmul.f32 1.0, %v816
  %v818 = vrcp.pop %v789
  %v819 = vmul.f32 1.0, %v818
  %v820 = vrcp.pop %v790
  %v821 = vmul.f32 1.0, %v820
  %v822 = vrcp.pop %v791
  %v823 = vmul.f32 1.0, %v822
  %vm824 = vcmask 97280
  %825 = vst.msk [vmem:[%s4] sm:$0xff] %vm824, %v793
  %826 = vst.msk [vmem:[%s4 + $0x8] sm:$0xff] %vm824, %v795
  %827 = vst.msk [vmem:[%s4 + $0x10] sm:$0xff] %vm824, %v797
  %828 = vst.msk [vmem:[%s4 + $0x18] sm:$0xff] %vm824, %v799
  %829 = vst.msk [vmem:[%s4 + $0x20] sm:$0xff] %vm824, %v801
  %830 = vst.msk [vmem:[%s4 + $0x28] sm:$0xff] %vm824, %v803
  %831 = vst.msk [vmem:[%s4 + $0x30] sm:$0xff] %vm824, %v805
  %832 = vst.msk [vmem:[%s4 + $0x38] sm:$0xff] %vm824, %v807
  %833 = vst.msk [vmem:[%s4 + $0x40] sm:$0xff] %vm824, %v809
  %834 = vst.msk [vmem:[%s4 + $0x48] sm:$0xff] %vm824, %v811
  %835 = vst.msk [vmem:[%s4 + $0x50] sm:$0xff] %vm824, %v813
  %836 = vst.msk [vmem:[%s4 + $0x58] sm:$0xff] %vm824, %v815
  %837 = vst.msk [vmem:[%s4 + $0x60] sm:$0xff] %vm824, %v817
  %838 = vst.msk [vmem:[%s4 + $0x68] sm:$0xff] %vm824, %v819
  %839 = vst.msk [vmem:[%s4 + $0x70] sm:$0xff] %vm824, %v821
  %840 = vst.msk [vmem:[%s4 + $0x78] sm:$0xff] %vm824, %v823
  // Predicated region
  $region18: #{faster_style_transfer.13} parent=0 // pred_check
    _
  $region19: #{faster_style_transfer.13} parent=0 // pred_check_branch
    %842 = sbr.rel (0) target = $region21
  $region20: #{faster_style_transfer.13} parent=0 // pred_region
    _
  $region21: #{faster_style_transfer.13} parent=0 // pred_fallthru
    _
  // Predicated region
  $region22: #{faster_style_transfer.13} parent=0 // pred_check
    _
  $region23: #{faster_style_transfer.13} parent=0 // pred_check_branch
    %844 = sbr.rel (0) target = $region25
  $region24: #{faster_style_transfer.13} parent=0 // pred_region
    _
  $region25: #{faster_style_transfer.13} parent=0 // pred_fallthru
    _

// kernel: faster_style_transfer.12
$region0: #{faster_style_transfer.12}
  #allocation0 [shape = 'u32[]', space=smem, size = 0x4, offset = 0x4, fixed_abs, tag = 'smem constant byte address 0x4 - core index']
  #allocation1 [shape = 'u32[144,128]{1,0:T(1,128)}', space=vmem, size = 0x12000, scoped, tag = 'internal scratch']
  %s0 = inlined_call_operand.vmem [shape: bf16[2,4,4,32], index: 0, kind: input, shape index: {}]
  %s1 = inlined_call_operand.vmem [shape: bf16[128,64], index: 1, kind: input, shape index: {}]
  %s2 = inlined_call_operand.vmem [shape: f32[1,16], index: 2, kind: input, shape index: {}]
  %s3 = inlined_call_operand.vmem [shape: f32[1,16], index: 3, kind: input, shape index: {}]
  %s4 = inlined_call_operand.vmem [shape: bf16[2,4,4,64], index: 4, kind: output, shape index: {}]
  %s5 = sld [smem:[#allocation0]]
  $region26: #{faster_style_transfer.12} parent=0
    _
  %s7 = ssub.s32 1, %s5
  %s8 = scalar_select 0, %s7, %s5
  // Predicated region
  $region2: #{faster_style_transfer.12} parent=0 // pred_check
    _
  $region3: #{faster_style_transfer.12} parent=0 // pred_check_branch
    %10 = sbr.rel (0) target = $region5
  $region4: #{faster_style_transfer.12} parent=0 // pred_region
    _
  $region5: #{faster_style_transfer.12} parent=0 // pred_fallthru
    _
  // Predicated region
  $region6: #{faster_style_transfer.12} parent=0 // pred_check
    _
  $region7: #{faster_style_transfer.12} parent=0 // pred_check_branch
    %12 = sbr.rel (0) target = $region9
  $region8: #{faster_style_transfer.12} parent=0 // pred_region
    _
  $region9: #{faster_style_transfer.12} parent=0 // pred_fallthru
    _
  // Predicated region
  $region10: #{faster_style_transfer.12} parent=0 // pred_check
    _
  $region11: #{faster_style_transfer.12} parent=0 // pred_check_branch
    %14 = sbr.rel (0) target = $region13
  $region12: #{faster_style_transfer.12} parent=0 // pred_region
    _
  $region13: #{faster_style_transfer.12} parent=0 // pred_fallthru
    _
  // Predicated region
  $region14: #{faster_style_transfer.12} parent=0 // pred_check
    _
  $region15: #{faster_style_transfer.12} parent=0 // pred_check_branch
    %16 = sbr.rel (0) target = $region17
  $region16: #{faster_style_transfer.12} parent=0 // pred_region
    _
  $region17: #{faster_style_transfer.12} parent=0 // pred_fallthru
    _
  %v18 = vld [vmem:[%s0] sm:$0x3]
  %v19 = vld [vmem:[%s0 + $0x2] sm:$0x3]
  %v20 = vld [vmem:[%s0 + $0x4] sm:$0x3]
  %v21 = vld [vmem:[%s0 + $0x6] sm:$0x3]
  %v22 = vld [vmem:[%s0 + $0x8] sm:$0x3]
  %v23 = vld [vmem:[%s0 + $0xa] sm:$0x3]
  %v24 = vld [vmem:[%s0 + $0xc] sm:$0x3]
  %v25 = vld [vmem:[%s0 + $0xe] sm:$0x3]
  %vm26 = vcmask 1041408
  %v29 = vsel %vm26, %v18, 0
  %v31 = vsel %vm26, %v19, 0
  %v33 = vsel %vm26, %v20, 0
  %v35 = vsel %vm26, %v21, 0
  %v37 = vsel %vm26, %v22, 0
  %v39 = vsel %vm26, %v23, 0
  %v41 = vsel %vm26, %v24, 0
  %v43 = vsel %vm26, %v25, 0
  %v53 = vunpack.c.l.s4 1983009808
  %v54 = vunpack.c.0.s8 %v53
  %v55 = vlaneseq
  %v56 = vshrl.u32 %v55, 7
  %v57 = vsub.s32 %v54, %v56
  %v58 = vrot.slane %v29, %v57
  %v59 = vcombine.high %v58, %v58
  %v61 = vunpack.c.l.s4 1983009808
  %v62 = vunpack.c.0.s8 %v61
  %v63 = vlaneseq
  %v64 = vshrl.u32 %v63, 7
  %v65 = vsub.s32 %v62, %v64
  %v66 = vrot.slane %v31, %v65
  %v67 = vcombine.high %v66, %v66
  %v69 = vunpack.c.l.s4 1983009808
  %v70 = vunpack.c.0.s8 %v69
  %v71 = vlaneseq
  %v72 = vshrl.u32 %v71, 7
  %v73 = vsub.s32 %v70, %v72
  %v74 = vrot.slane %v33, %v73
  %v75 = vcombine.high %v74, %v74
  %v77 = vunpack.c.l.s4 1983009808
  %v78 = vunpack.c.0.s8 %v77
  %v79 = vlaneseq
  %v80 = vshrl.u32 %v79, 7
  %v81 = vsub.s32 %v78, %v80
  %v82 = vrot.slane %v35, %v81
  %v83 = vcombine.high %v82, %v82
  %v85 = vunpack.c.l.s4 1983009808
  %v86 = vunpack.c.0.s8 %v85
  %v87 = vlaneseq
  %v88 = vshrl.u32 %v87, 7
  %v89 = vsub.s32 %v86, %v88
  %v90 = vrot.slane %v37, %v89
  %v91 = vcombine.high %v90, %v90
  %v93 = vunpack.c.l.s4 1983009808
  %v94 = vunpack.c.0.s8 %v93
  %v95 = vlaneseq
  %v96 = vshrl.u32 %v95, 7
  %v97 = vsub.s32 %v94, %v96
  %v98 = vrot.slane %v39, %v97
  %v99 = vcombine.high %v98, %v98
  %v101 = vunpack.c.l.s4 1983009808
  %v102 = vunpack.c.0.s8 %v101
  %v103 = vlaneseq
  %v104 = vshrl.u32 %v103, 7
  %v105 = vsub.s32 %v102, %v104
  %v106 = vrot.slane %v41, %v105
  %v107 = vcombine.high %v106, %v106
  %v109 = vunpack.c.l.s4 1983009808
  %v110 = vunpack.c.0.s8 %v109
  %v111 = vlaneseq
  %v112 = vshrl.u32 %v111, 7
  %v113 = vsub.s32 %v110, %v112
  %v114 = vrot.slane %v43, %v113
  %v115 = vcombine.high %v114, %v114
  %vm116 = vsmask.f32 1280
  %vm117 = vsmask.f32 3336
  %vm118 = vmor %vm116, %vm117
  %vm119 = vsmask.f32 5392
  %vm120 = vmor %vm118, %vm119
  %vm121 = vsmask.f32 7448
  %vm122 = vmor %vm120, %vm121
  %v124 = vshrl.u32 %v58, 16
  %v126 = vrot.slane %v124, 6
  %v127 = vshll.u32 %v58, 16
  %v129 = vrot.slane %v127, 7
  %v130 = vor.u32 %v126, %v129
  %v131 = vrot.slane %v130, 2
  %v133 = vshll.u32 %v59, 16
  %v135 = vrot.slane %v133, 7
  %v136 = vsel %vm122, %v131, %v135
  %v138 = vshrl.u32 %v66, 16
  %v140 = vrot.slane %v138, 6
  %v141 = vshll.u32 %v66, 16
  %v143 = vrot.slane %v141, 7
  %v144 = vor.u32 %v140, %v143
  %v145 = vrot.slane %v144, 2
  %v147 = vshll.u32 %v67, 16
  %v149 = vrot.slane %v147, 7
  %v150 = vsel %vm122, %v145, %v149
  %v152 = vshrl.u32 %v74, 16
  %v154 = vrot.slane %v152, 6
  %v155 = vshll.u32 %v74, 16
  %v157 = vrot.slane %v155, 7
  %v158 = vor.u32 %v154, %v157
  %v159 = vrot.slane %v158, 2
  %v161 = vshll.u32 %v75, 16
  %v163 = vrot.slane %v161, 7
  %v164 = vsel %vm122, %v159, %v163
  %v166 = vshrl.u32 %v82, 16
  %v168 = vrot.slane %v166, 6
  %v169 = vshll.u32 %v82, 16
  %v171 = vrot.slane %v169, 7
  %v172 = vor.u32 %v168, %v171
  %v173 = vrot.slane %v172, 2
  %v175 = vshll.u32 %v83, 16
  %v177 = vrot.slane %v175, 7
  %v178 = vsel %vm122, %v173, %v177
  %v180 = vshrl.u32 %v90, 16
  %v182 = vrot.slane %v180, 6
  %v183 = vshll.u32 %v90, 16
  %v185 = vrot.slane %v183, 7
  %v186 = vor.u32 %v182, %v185
  %v187 = vrot.slane %v186, 2
  %v189 = vshll.u32 %v91, 16
  %v191 = vrot.slane %v189, 7
  %v192 = vsel %vm122, %v187, %v191
  %v194 = vshrl.u32 %v98, 16
  %v196 = vrot.slane %v194, 6
  %v197 = vshll.u32 %v98, 16
  %v199 = vrot.slane %v197, 7
  %v200 = vor.u32 %v196, %v199
  %v201 = vrot.slane %v200, 2
  %v203 = vshll.u32 %v99, 16
  %v205 = vrot.slane %v203, 7
  %v206 = vsel %vm122, %v201, %v205
  %v208 = vshrl.u32 %v106, 16
  %v210 = vrot.slane %v208, 6
  %v211 = vshll.u32 %v106, 16
  %v213 = vrot.slane %v211, 7
  %v214 = vor.u32 %v210, %v213
  %v215 = vrot.slane %v214, 2
  %v217 = vshll.u32 %v107, 16
  %v219 = vrot.slane %v217, 7
  %v220 = vsel %vm122, %v215, %v219
  %v222 = vshrl.u32 %v114, 16
  %v224 = vrot.slane %v222, 6
  %v225 = vshll.u32 %v114, 16
  %v227 = vrot.slane %v225, 7
  %v228 = vor.u32 %v224, %v227
  %v229 = vrot.slane %v228, 2
  %v231 = vshll.u32 %v115, 16
  %v233 = vrot.slane %v231, 7
  %v234 = vsel %vm122, %v229, %v233
  %v237 = vunpack.c.l.s4 1983009808
  %v238 = vunpack.c.0.s8 %v237
  %v239 = vlaneseq
  %v240 = vshrl.u32 %v239, 7
  %v241 = vsub.s32 %v238, %v240
  %v242 = vrot.slane 0, %v241
  %v243 = vcombine.high %v242, %v242
  %v245 = vshrl.u32 %v242, 16
  %v247 = vrot.slane %v245, 6
  %v248 = vshll.u32 %v242, 16
  %v250 = vrot.slane %v248, 7
  %v251 = vor.u32 %v247, %v250
  %v252 = vrot.slane %v251, 2
  %v254 = vshll.u32 %v243, 16
  %v256 = vrot.slane %v254, 7
  %v257 = vsel %vm122, %v252, %v256
  %v266 = vcombine.low %v18, %v19
  %v267 = vcombine.low %v20, %v21
  %v269 = vunpack.c.l.s4 1983009808
  %v270 = vunpack.c.0.s8 %v269
  %v271 = vlaneseq
  %v272 = vshrl.u32 %v271, 7
  %v273 = vsub.s32 %v270, %v272
  %v274 = vrot.slane %v266, %v273
  %v276 = vunpack.c.l.s4 1983009808
  %v277 = vunpack.c.0.s8 %v276
  %v278 = vlaneseq
  %v279 = vshrl.u32 %v278, 7
  %v280 = vsub.s32 %v277, %v279
  %v281 = vrot.slane %v267, %v280
  %v282 = vcombine.low %v274, %v281
  %v283 = vcombine.low %v22, %v23
  %v284 = vcombine.low %v24, %v25
  %v286 = vunpack.c.l.s4 1983009808
  %v287 = vunpack.c.0.s8 %v286
  %v288 = vlaneseq
  %v289 = vshrl.u32 %v288, 7
  %v290 = vsub.s32 %v287, %v289
  %v291 = vrot.slane %v283, %v290
  %v293 = vunpack.c.l.s4 1983009808
  %v294 = vunpack.c.0.s8 %v293
  %v295 = vlaneseq
  %v296 = vshrl.u32 %v295, 7
  %v297 = vsub.s32 %v294, %v296
  %v298 = vrot.slane %v284, %v297
  %v299 = vcombine.low %v291, %v298
  %v300 = vcombine.low %v136, %v150
  %v301 = vcombine.low %v164, %v178
  %v303 = vunpack.c.l.s4 1983009808
  %v304 = vunpack.c.0.s8 %v303
  %v305 = vlaneseq
  %v306 = vshrl.u32 %v305, 7
  %v307 = vsub.s32 %v304, %v306
  %v308 = vrot.slane %v300, %v307
  %v310 = vunpack.c.l.s4 1983009808
  %v311 = vunpack.c.0.s8 %v310
  %v312 = vlaneseq
  %v313 = vshrl.u32 %v312, 7
  %v314 = vsub.s32 %v311, %v313
  %v315 = vrot.slane %v301, %v314
  %v316 = vcombine.low %v308, %v315
  %v317 = vcombine.low %v192, %v206
  %v318 = vcombine.low %v220, %v234
  %v320 = vunpack.c.l.s4 1983009808
  %v321 = vunpack.c.0.s8 %v320
  %v322 = vlaneseq
  %v323 = vshrl.u32 %v322, 7
  %v324 = vsub.s32 %v321, %v323
  %v325 = vrot.slane %v317, %v324
  %v327 = vunpack.c.l.s4 1983009808
  %v328 = vunpack.c.0.s8 %v327
  %v329 = vlaneseq
  %v330 = vshrl.u32 %v329, 7
  %v331 = vsub.s32 %v328, %v330
  %v332 = vrot.slane %v318, %v331
  %v333 = vcombine.low %v325, %v332
  %334 = vrot.lane.b32.xlu0 %v316, 32
  %v335 = vpop.permute.xlu0 %334
  %336 = vrot.lane.b32.xlu0 %v333, 32
  %v337 = vpop.permute.xlu0 %336
  %v338 = vcombine.low %v31, %v33
  %v339 = vcombine.low %v35, 0
  %v341 = vunpack.c.l.s4 1983009808
  %v342 = vunpack.c.0.s8 %v341
  %v343 = vlaneseq
  %v344 = vshrl.u32 %v343, 7
  %v345 = vsub.s32 %v342, %v344
  %v346 = vrot.slane %v338, %v345
  %v348 = vunpack.c.l.s4 1983009808
  %v349 = vunpack.c.0.s8 %v348
  %v350 = vlaneseq
  %v351 = vshrl.u32 %v350, 7
  %v352 = vsub.s32 %v349, %v351
  %v353 = vrot.slane %v339, %v352
  %v354 = vcombine.low %v346, %v353
  %v355 = vcombine.low %v39, %v41
  %v356 = vcombine.low %v43, 0
  %v358 = vunpack.c.l.s4 1983009808
  %v359 = vunpack.c.0.s8 %v358
  %v360 = vlaneseq
  %v361 = vshrl.u32 %v360, 7
  %v362 = vsub.s32 %v359, %v361
  %v363 = vrot.slane %v355, %v362
  %v365 = vunpack.c.l.s4 1983009808
  %v366 = vunpack.c.0.s8 %v365
  %v367 = vlaneseq
  %v368 = vshrl.u32 %v367, 7
  %v369 = vsub.s32 %v366, %v368
  %v370 = vrot.slane %v356, %v369
  %v371 = vcombine.low %v363, %v370
  %372 = vrot.lane.b32.xlu0 %v354, 64
  %v373 = vpop.permute.xlu0 %372
  %374 = vrot.lane.b32.xlu0 %v371, 64
  %v375 = vpop.permute.xlu0 %374
  %v376 = vcombine.low %v150, %v164
  %v377 = vcombine.low %v178, %v257
  %v379 = vunpack.c.l.s4 1983009808
  %v380 = vunpack.c.0.s8 %v379
  %v381 = vlaneseq
  %v382 = vshrl.u32 %v381, 7
  %v383 = vsub.s32 %v380, %v382
  %v384 = vrot.slane %v376, %v383
  %v386 = vunpack.c.l.s4 1983009808
  %v387 = vunpack.c.0.s8 %v386
  %v388 = vlaneseq
  %v389 = vshrl.u32 %v388, 7
  %v390 = vsub.s32 %v387, %v389
  %v391 = vrot.slane %v377, %v390
  %v392 = vcombine.low %v384, %v391
  %v393 = vcombine.low %v206, %v220
  %v394 = vcombine.low %v234, %v257
  %v396 = vunpack.c.l.s4 1983009808
  %v397 = vunpack.c.0.s8 %v396
  %v398 = vlaneseq
  %v399 = vshrl.u32 %v398, 7
  %v400 = vsub.s32 %v397, %v399
  %v401 = vrot.slane %v393, %v400
  %v403 = vunpack.c.l.s4 1983009808
  %v404 = vunpack.c.0.s8 %v403
  %v405 = vlaneseq
  %v406 = vshrl.u32 %v405, 7
  %v407 = vsub.s32 %v404, %v406
  %v408 = vrot.slane %v394, %v407
  %v409 = vcombine.low %v401, %v408
  %410 = vrot.lane.b32.xlu0 %v392, 96
  %v411 = vpop.permute.xlu0 %410
  %412 = vrot.lane.b32.xlu0 %v409, 96
  %v413 = vpop.permute.xlu0 %412
  %vm414 = vcmask 261120
  %v417 = vsel %vm414, %v282, %v335
  %v420 = vsel %vm414, %v299, %v337
  %vm421 = vcmask 523264
  %v423 = vsel %vm421, %v417, %v373
  %v425 = vsel %vm421, %v420, %v375
  %vm426 = vcmask 785408
  %v428 = vsel %vm426, %v423, %v411
  %v431 = vsel %vm426, %v425, %v413
  %v433 = vld [vmem:[%s1] sm:$0xf]
  %v434 = vld [vmem:[%s1 + $0x4] sm:$0xf]
  %v435 = vld [vmem:[%s1 + $0x8] sm:$0xf]
  %v436 = vld [vmem:[%s1 + $0xc] sm:$0xf]
  %v437 = vld [vmem:[%s1 + $0x10] sm:$0xf]
  %v438 = vld [vmem:[%s1 + $0x14] sm:$0xf]
  %v439 = vld [vmem:[%s1 + $0x18] sm:$0xf]
  %v440 = vld [vmem:[%s1 + $0x1c] sm:$0xf]
  %v441 = vld [vmem:[%s1 + $0x20] sm:$0xf]
  %v442 = vld [vmem:[%s1 + $0x24] sm:$0xf]
  %v443 = vld [vmem:[%s1 + $0x28] sm:$0xf]
  %v444 = vld [vmem:[%s1 + $0x2c] sm:$0xf]
  %v445 = vld [vmem:[%s1 + $0x30] sm:$0xf]
  %v446 = vld [vmem:[%s1 + $0x34] sm:$0xf]
  %v447 = vld [vmem:[%s1 + $0x38] sm:$0xf]
  %v448 = vld [vmem:[%s1 + $0x3c] sm:$0xf]
  %v465 = vunpack.c.l.b16 %v433
  %v466 = vunpack.c.l.b16 %v434
  %v467 = vunpack.c.l.b16 %v435
  %v468 = vunpack.c.l.b16 %v436
  %v469 = vunpack.c.l.b16 %v437
  %v470 = vunpack.c.l.b16 %v438
  %v471 = vunpack.c.l.b16 %v439
  %v472 = vunpack.c.l.b16 %v440
  %v473 = vunpack.c.l.b16 %v441
  %v474 = vunpack.c.l.b16 %v442
  %v475 = vunpack.c.l.b16 %v443
  %v476 = vunpack.c.l.b16 %v444
  %v477 = vunpack.c.l.b16 %v445
  %v478 = vunpack.c.l.b16 %v446
  %v479 = vunpack.c.l.b16 %v447
  %v480 = vunpack.c.l.b16 %v448
  %v481 = vpack.c.b16 %v466, %v465
  %v482 = vpack.c.b16 %v468, %v467
  %v483 = vpack.c.b16 %v470, %v469
  %v484 = vpack.c.b16 %v472, %v471
  %v485 = vpack.c.b16 %v474, %v473
  %v486 = vpack.c.b16 %v476, %v475
  %v487 = vpack.c.b16 %v478, %v477
  %v488 = vpack.c.b16 %v480, %v479
  %497 = vmatprep.subr.bf16.mxu0 0
  %498 = vmatpush1.bf16.msra.mxu0 %v488
  %499 = vmatprep.subr.bf16.mxu0 0
  %500 = vmatpush1.bf16.msra.mxu0 %v487
  %501 = vmatprep.subr.bf16.mxu0 0
  %502 = vmatpush1.bf16.msra.mxu0 %v486
  %503 = vmatprep.subr.bf16.mxu0 0
  %504 = vmatpush1.bf16.msra.mxu0 %v485
  %505 = vmatprep.subr.bf16.mxu0 0
  %506 = vmatpush1.bf16.msra.mxu0 %v484
  %507 = vmatprep.subr.bf16.mxu0 0
  %508 = vmatpush1.bf16.msra.mxu0 %v483
  %509 = vmatprep.subr.bf16.mxu0 0
  %510 = vmatpush1.bf16.msra.mxu0 %v482
  %511 = vmatprep.subr.bf16.mxu0 0
  %512 = vmatpush1.bf16.msra.mxu0 %v481
  %513 = vmatprep.subr.bf16.mxu0 0
  %514 = vmatpush2.bf16.msra.mxu0 0
  %515 = vmatprep.subr.bf16.mxu0 0
  %516 = vmatpush2.bf16.msra.mxu0 0
  %517 = vmatprep.subr.bf16.mxu0 0
  %518 = vmatpush2.bf16.msra.mxu0 0
  %519 = vmatprep.subr.bf16.mxu0 0
  %520 = vmatpush2.bf16.msra.mxu0 0
  %521 = vmatprep.subr.bf16.mxu0 0
  %522 = vmatpush2.bf16.msra.mxu0 0
  %523 = vmatprep.subr.bf16.mxu0 0
  %524 = vmatpush2.bf16.msra.mxu0 0
  %525 = vmatprep.subr.bf16.mxu0 0
  %526 = vmatpush2.bf16.msra.mxu0 0
  %527 = vmatprep.subr.bf16.mxu0 0
  %528 = vmatpush2.bf16.msra.mxu0 0
  %529 = vmatprep.mubr.bf16.mxu0 0
  %530 = vmatmul.mubr.bf16.gmra.mxu0 %v428
  %v531 = vpop.f32.mrf.mxu0
  %v532 = vadd.f32 0.0, %v531
  %v533 = vpop.f32.mrf.mxu0
  %v534 = vpop.f32.mrf.mxu0
  %v535 = vadd.f32 0.0, %v534
  %v536 = vpop.f32.mrf.mxu0
  %537 = vmatprep.mubr.bf16.mxu0 0
  %538 = vmatmul.mubr.bf16.gmra.mxu0 %v431
  %v539 = vpop.f32.mrf.mxu0
  %v540 = vadd.f32 0.0, %v539
  %v541 = vpop.f32.mrf.mxu0
  %v542 = vpop.f32.mrf.mxu0
  %v543 = vadd.f32 0.0, %v542
  %v544 = vpop.f32.mrf.mxu0
  %545 = vdwg.mxu0
  %v546 = vsel %vm421, %v532, 0.0
  %v547 = vsel %vm421, %v535, 0.0
  %v548 = vadd.f32 %v546, %v547
  %v549 = vsel %vm421, %v540, 0.0
  %v550 = vadd.f32 %v548, %v549
  %v551 = vsel %vm421, %v543, 0.0
  %v552 = vadd.f32 %v550, %v551
  %v553 = vrot.slane %v552, 4
  %v554 = vadd.f32 %v552, %v553
  %v555 = vrot.slane %v554, 2
  %v556 = vadd.f32 %v554, %v555
  %v557 = vrot.slane %v556, 1
  %v558 = vadd.f32 %v556, %v557
  %v559 = vrcp.pop 32.0
  %v560 = vmul.f32 %v558, %v559
  %v561 = vmul.f32 %v532, %v532
  %v562 = vmul.f32 %v535, %v535
  %v563 = vmul.f32 %v540, %v540
  %v564 = vmul.f32 %v543, %v543
  %v565 = vsel %vm421, %v561, 0.0
  %v566 = vsel %vm421, %v562, 0.0
  %v567 = vadd.f32 %v565, %v566
  %v568 = vsel %vm421, %v563, 0.0
  %v569 = vadd.f32 %v567, %v568
  %v570 = vsel %vm421, %v564, 0.0
  %v571 = vadd.f32 %v569, %v570
  %v572 = vrot.slane %v571, 4
  %v573 = vadd.f32 %v571, %v572
  %v574 = vrot.slane %v573, 2
  %v575 = vadd.f32 %v573, %v574
  %v576 = vrot.slane %v575, 1
  %v577 = vadd.f32 %v575, %v576
  %v578 = vmul.f32 %v577, %v559
  %580 = vrot.lane.b32.xlu0 %v560, 112
  %v581 = vpop.permute.xlu0 %580
  %v583 = vadd.f32 %v560, %v581
  %584 = vrot.lane.b32.xlu0 %v560, 96
  %v585 = vpop.permute.xlu0 %584
  %v587 = vadd.f32 %v583, %v585
  %588 = vrot.lane.b32.xlu0 %v560, 80
  %v589 = vpop.permute.xlu0 %588
  %v591 = vadd.f32 %v587, %v589
  %v592 = vmul.f32 %v591, 0.25
  %594 = vrot.lane.b32.xlu0 %v578, 112
  %v595 = vpop.permute.xlu0 %594
  %v597 = vadd.f32 %v578, %v595
  %598 = vrot.lane.b32.xlu0 %v578, 96
  %v599 = vpop.permute.xlu0 %598
  %v601 = vadd.f32 %v597, %v599
  %602 = vrot.lane.b32.xlu0 %v578, 80
  %v603 = vpop.permute.xlu0 %602
  %v605 = vadd.f32 %v601, %v603
  %v606 = vmul.f32 %v605, 0.25
  %v607 = vmul.f32 %v592, %v592
  %v608 = vsub.f32 %v606, %v607
  %v609 = vmax.f32 %v608, 0.0
  %v610 = vld [vmem:[%s2] sm:$0x1]
  %v611 = vadd.f32 %v609, 1e-05
  %v612 = vrsqrt.pop %v611
  %v613 = vmul.f32 %v610, %v612
  %v614 = vld [vmem:[%s3] sm:$0x1]
  %v615 = vmul.f32 %v592, %v613
  %v616 = vsub.f32 %v614, %v615
  %v618 = vlaneseq
  %v619 = vshrl.u32 %v618, 7
  %v620 = vsub.s32 0, %v619
  %v621 = vrot.slane %v613, %v620
  %622 = vrot.lane.b32.xlu0 %v621, 16
  %v623 = vpop.permute.xlu0 %622
  %625 = vrot.lane.b32.xlu0 %v621, 32
  %v626 = vpop.permute.xlu0 %625
  %628 = vrot.lane.b32.xlu0 %v621, 48
  %v629 = vpop.permute.xlu0 %628
  %vm631 = vcmask 130048
  %v632 = vsel %vm631, %v613, %v623
  %v633 = vsel %vm414, %v632, %v626
  %vm634 = vcmask 392192
  %v635 = vsel %vm634, %v633, %v629
  %v637 = vlaneseq
  %v638 = vshrl.u32 %v637, 7
  %v639 = vsub.s32 0, %v638
  %v640 = vrot.slane %v616, %v639
  %641 = vrot.lane.b32.xlu0 %v640, 16
  %v642 = vpop.permute.xlu0 %641
  %644 = vrot.lane.b32.xlu0 %v640, 32
  %v645 = vpop.permute.xlu0 %644
  %647 = vrot.lane.b32.xlu0 %v640, 48
  %v648 = vpop.permute.xlu0 %647
  %v650 = vsel %vm631, %v616, %v642
  %v651 = vsel %vm414, %v650, %v645
  %v652 = vsel %vm634, %v651, %v648
  %v653 = vlaneseq
  %v654 = vshrl.u32 %v653, 7
  %v655 = vsub.s32 0, %v654
  %v656 = vrot.slane %v635, %v655
  %v657 = vmul.f32 %v532, %v656
  %v658 = vmul.f32 %v535, %v656
  %v659 = vmul.f32 %v540, %v656
  %v660 = vmul.f32 %v543, %v656
  %v661 = vlaneseq
  %v662 = vshrl.u32 %v661, 7
  %v663 = vsub.s32 0, %v662
  %v664 = vrot.slane %v652, %v663
  %v665 = vadd.f32 %v657, %v664
  %v666 = vadd.f32 %v658, %v664
  %v667 = vadd.f32 %v659, %v664
  %v668 = vadd.f32 %v660, %v664
  %v669 = vmax.f32 %v665, 0.0
  %v670 = vmax.f32 %v666, 0.0
  %v671 = vmax.f32 %v667, 0.0
  %v672 = vmax.f32 %v668, 0.0
  %v677 = vcombine.high %v669, %v669
  %v678 = vcombine.high %v670, %v670
  %v679 = vcombine.high %v671, %v671
  %v680 = vcombine.high %v672, %v672
  %v685 = vpack.c.bf16 %v669, %v669
  %v686 = vpack.c.bf16 %v677, %v677
  %v687 = vpack.c.bf16 %v670, %v670
  %v688 = vpack.c.bf16 %v678, %v678
  %v689 = vpack.c.bf16 %v671, %v671
  %v690 = vpack.c.bf16 %v679, %v679
  %v691 = vpack.c.bf16 %v672, %v672
  %v692 = vpack.c.bf16 %v680, %v680
  %vm693 = vcmask 517120
  %694 = vst.msk [vmem:[%s4] sm:$0x3] %vm693, %v685
  %695 = vst.msk [vmem:[%s4 + $0x2] sm:$0x3] %vm693, %v686
  %696 = vst.msk [vmem:[%s4 + $0x4] sm:$0x3] %vm693, %v687
  %697 = vst.msk [vmem:[%s4 + $0x6] sm:$0x3] %vm693, %v688
  %698 = vst.msk [vmem:[%s4 + $0x8] sm:$0x3] %vm693, %v689
  %699 = vst.msk [vmem:[%s4 + $0xa] sm:$0x3] %vm693, %v690
  %700 = vst.msk [vmem:[%s4 + $0xc] sm:$0x3] %vm693, %v691
  %701 = vst.msk [vmem:[%s4 + $0xe] sm:$0x3] %vm693, %v692
  // Predicated region
  $region18: #{faster_style_transfer.12} parent=0 // pred_check
    _
  $region19: #{faster_style_transfer.12} parent=0 // pred_check_branch
    %703 = sbr.rel (0) target = $region21
  $region20: #{faster_style_transfer.12} parent=0 // pred_region
    _
  $region21: #{faster_style_transfer.12} parent=0 // pred_fallthru
    _
  // Predicated region
  $region22: #{faster_style_transfer.12} parent=0 // pred_check
    _
  $region23: #{faster_style_transfer.12} parent=0 // pred_check_branch
    %705 = sbr.rel (0) target = $region25
  $region24: #{faster_style_transfer.12} parent=0 // pred_region
    _
  $region25: #{faster_style_transfer.12} parent=0 // pred_fallthru
    _

</llo_original>
